<compile_context>
chip_gen: v5e
topology: v5e:2x2
jax: 0.10.0
libtpu: 0.0.40
codegen_flags: <defaults>
</compile_context>

<pallas_src>
import functools

import jax
import jax.numpy as jnp
from jax import lax
from jax.experimental import pallas as pl
from jax.experimental.pallas import tpu as pltpu

EPS = 1e-5


def _round_up(v, m):
    return (v + m - 1) // m * m


def bottleneck_kernel(x_ref, g1_ref, b1_ref, w1_ref, g2_ref, b2_ref, w2_ref,
                      o_ref, hbuf_ref, col_ref):
    # x_ref:   (N, H, W, C)       input, NHWC
    # g1/b1:   (1, C)             BN1 gamma/beta
    # w1_ref:  (C, Cint)          1x1 conv weight (matmul form)
    # g2/b2:   (1, Cint)          BN2 gamma/beta
    # w2_ref:  (9*Cint, G)        3x3 conv weight, im2col form (ky, kx, cin) x cout
    # o_ref:   (N, H, W, G)       ONLY the new channels (concat done in wrapper)
    # hbuf_ref:(M + 2P, Cint)     flat row-shift buffer (spare rows uninitialized)
    # col_ref: (M, 9*Cint)        im2col slab
    N, H, W, C = x_ref.shape
    Cint = w1_ref.shape[1]
    G = o_ref.shape[3]
    M = N * H * W
    P = (hbuf_ref.shape[0] - M) // 2
    inv_m = 1.0 / M

    x = x_ref[...].astype(jnp.float32).reshape(M, C)

    # ---- BN1 (training-mode batch stats, single pass) + ReLU ----
    s1 = jnp.sum(x, axis=0, keepdims=True)
    q1 = jnp.sum(x * x, axis=0, keepdims=True)
    mean1 = s1 * inv_m
    var1 = q1 * inv_m - mean1 * mean1
    scale1 = g1_ref[...] * lax.rsqrt(var1 + EPS)
    shift1 = b1_ref[...] - mean1 * scale1
    h = jnp.maximum(x * scale1 + shift1, 0.0)

    # ---- conv1: 1x1 conv == one MXU matmul over channels ----
    h = jnp.dot(h, w1_ref[...], preferred_element_type=jnp.float32)       # (M, Cint)

    # ---- BN2 (single pass) + ReLU ----
    s2 = jnp.sum(h, axis=0, keepdims=True)
    q2 = jnp.sum(h * h, axis=0, keepdims=True)
    mean2 = s2 * inv_m
    var2 = q2 * inv_m - mean2 * mean2
    scale2 = g2_ref[...] * lax.rsqrt(var2 + EPS)
    shift2 = b2_ref[...] - mean2 * scale2
    h2 = jnp.maximum(h * scale2 + shift2, 0.0)                            # (M, Cint)

    # ---- conv2: 3x3, padding=1, as im2col + ONE MXU matmul ----
    # Write h2 once into the middle of the flat buffer.  Each tap (dy, dx) is the
    # row-shifted slice at offset dy*W + dx; rows whose source pixel falls outside
    # the image (or would wrap across an image boundary) are zeroed by the mask,
    # so the spare rows of hbuf never need a zero fill.
    hbuf_ref[P:P + M, :] = h2

    row = lax.broadcasted_iota(jnp.int32, (M, 1), 0)
    xpos = row % W            # column inside the image row
    rpos = row % (H * W)      # flat position inside the image

    t = 0
    for dy in (-1, 0, 1):
        for dx in (-1, 0, 1):
            off = P + dy * W + dx
            patch = hbuf_ref[off:off + M, :]                              # (M, Cint)
            yv = rpos + dy * W
            xv = xpos + dx
            valid = (yv >= 0) & (yv < H * W) & (xv >= 0) & (xv < W)       # (M, 1)
            col_ref[:, t * Cint:(t + 1) * Cint] = jnp.where(valid, patch, 0.0)
            t += 1

    acc = jnp.dot(col_ref[...], w2_ref[...], preferred_element_type=jnp.float32)  # (M, G)

    # Only the G new channels are stored (half the previous output traffic; the
    # pass-through copy of x is gone).
    o_ref[...] = acc.reshape(N, H, W, G).astype(o_ref.dtype)


@functools.partial(jax.jit, static_argnames=("growth_rate",))
def bottleneck_pallas(x_nchw, g1, b1, w1_oihw, g2, b2, w2_oihw, *, growth_rate):
    N, C, H, W = x_nchw.shape
    Cint = 4 * growth_rate
    G = growth_rate
    M = N * H * W
    P = _round_up(W + 1, 8)   # spare rows so every 3x3 tap slice stays in bounds

    # TODO(synk): keep activations NHWC end-to-end across DenseNet blocks so these
    # per-block layout transposes disappear entirely.
    x_nhwc = jnp.transpose(x_nchw, (0, 2, 3, 1))                          # NCHW -> NHWC
    w1_mat = jnp.transpose(w1_oihw[:, :, 0, 0], (1, 0))                   # (Cint,C,1,1) -> (C,Cint)
    w2_col = jnp.transpose(w2_oihw, (2, 3, 1, 0)).reshape(9 * Cint, G)    # (G,Cint,3,3) -> (9*Cint,G)

    new_nhwc = pl.pallas_call(
        bottleneck_kernel,
        out_shape=jax.ShapeDtypeStruct((N, H, W, G), x_nchw.dtype),
        in_specs=[pl.BlockSpec(memory_space=pltpu.MemorySpace.VMEM)] * 7,
        out_specs=pl.BlockSpec(memory_space=pltpu.MemorySpace.VMEM),
        scratch_shapes=[
            pltpu.VMEM((M + 2 * P, Cint), jnp.float32),    # flat row-shift buffer
            pltpu.VMEM((M, 9 * Cint), jnp.float32),        # im2col slab
        ],
    )(x_nhwc, g1.reshape(1, C), b1.reshape(1, C), w1_mat,
      g2.reshape(1, Cint), b2.reshape(1, Cint), w2_col)

    # Concat with the untouched NCHW input outside the kernel; XLA fuses this with
    # the (small, G-channel-only) transpose.
    new_nchw = jnp.transpose(new_nhwc, (0, 3, 1, 2))
    return jnp.concatenate([x_nchw, new_nchw], axis=1)


# ---------------- pure-JAX reference (for sanity check) ----------------
def _bn_train(x_nchw, gamma, beta):
    mean = jnp.mean(x_nchw, axis=(0, 2, 3), keepdims=True)
    var = jnp.mean((x_nchw - mean) ** 2, axis=(0, 2, 3), keepdims=True)
    return ((x_nchw - mean) * lax.rsqrt(var + EPS)
            * gamma.reshape(1, -1, 1, 1) + beta.reshape(1, -1, 1, 1))


def bottleneck_reference(x, g1, b1, w1, g2, b2, w2):
    dn = ("NCHW", "OIHW", "NCHW")
    h = jax.nn.relu(_bn_train(x, g1, b1))
    h = lax.conv_general_dilated(h, w1, (1, 1), "VALID", dimension_numbers=dn)
    h = jax.nn.relu(_bn_train(h, g2, b2))
    h = lax.conv_general_dilated(h, w2, (1, 1), [(1, 1), (1, 1)], dimension_numbers=dn)
    return jnp.concatenate([x, h], axis=1)


if __name__ == "__main__":
    # Small shapes consistent with the module: batch=2, num_channels=4, spatial=16x16,
    # growth_rate=4 -> inter_channels=16, output channels = 4 + 4 = 8.
    N, C, H, W = 2, 4, 16, 16
    growth_rate = 4
    Cint = 4 * growth_rate

    key = jax.random.PRNGKey(0)
    kx, k1, k2, k3, k4, k5, k6 = jax.random.split(key, 7)

    x = jax.random.normal(kx, (N, C, H, W), jnp.float32)
    g1 = 1.0 + 0.1 * jax.random.normal(k1, (C,), jnp.float32)
    b1 = 0.1 * jax.random.normal(k2, (C,), jnp.float32)
    g2 = 1.0 + 0.1 * jax.random.normal(k3, (Cint,), jnp.float32)
    b2 = 0.1 * jax.random.normal(k4, (Cint,), jnp.float32)
    # Conv weights in PyTorch OIHW layout (bias=False in the module)
    w1 = 0.1 * jax.random.normal(k5, (Cint, C, 1, 1), jnp.float32)
    w2 = 0.1 * jax.random.normal(k6, (growth_rate, Cint, 3, 3), jnp.float32)

    out = bottleneck_pallas(x, g1, b1, w1, g2, b2, w2, growth_rate=growth_rate)
    out = jax.block_until_ready(out)

    ref = bottleneck_reference(x, g1, b1, w1, g2, b2, w2)
    assert out.shape == (N, C + growth_rate, H, W), out.shape
    err = float(jnp.max(jnp.abs(out - ref)))
    assert jnp.allclose(out, ref, rtol=1e-4, atol=1e-4), err

    print("KERNEL_OK")
</pallas_src>

<mosaic_0001>
module attributes {stable_mosaic.version = 11 : i64} {
  func.func @bottleneck_kernel(%arg0: memref<2x16x16x4xf32, #tpu.memory_space<vmem>>, %arg1: memref<1x4xf32, #tpu.memory_space<vmem>>, %arg2: memref<1x4xf32, #tpu.memory_space<vmem>>, %arg3: memref<4x16xf32, #tpu.memory_space<vmem>>, %arg4: memref<1x16xf32, #tpu.memory_space<vmem>>, %arg5: memref<1x16xf32, #tpu.memory_space<vmem>>, %arg6: memref<144x4xf32, #tpu.memory_space<vmem>>, %arg7: memref<2x16x16x4xf32, #tpu.memory_space<vmem>>, %arg8: memref<560x16xf32, #tpu.memory_space<vmem>>, %arg9: memref<512x144xf32, #tpu.memory_space<vmem>>) attributes {dimension_semantics = [], scalar_prefetch = 0 : i64, scratch_operands = 2 : i64, tpu.core_type = #tpu.core_type<tc>} {
    %c0 = arith.constant 0 : index
    %c0_0 = arith.constant 0 : index
    %c0_1 = arith.constant 0 : index
    %c0_2 = arith.constant 0 : index
    %0 = vector.load %arg0[%c0, %c0_0, %c0_1, %c0_2] : memref<2x16x16x4xf32, #tpu.memory_space<vmem>>, vector<2x16x16x4xf32>
    %1 = vector.shape_cast %0 : vector<2x16x16x4xf32> to vector<512x4xf32>
    %cst = arith.constant dense<0.000000e+00> : vector<4xf32>
    %2 = vector.multi_reduction <add>, %1, %cst [0] : vector<512x4xf32> to vector<4xf32>
    %3 = vector.shape_cast %2 : vector<4xf32> to vector<1x4xf32>
    %4 = arith.mulf %1, %1 : vector<512x4xf32>
    %cst_3 = arith.constant dense<0.000000e+00> : vector<4xf32>
    %5 = vector.multi_reduction <add>, %4, %cst_3 [0] : vector<512x4xf32> to vector<4xf32>
    %6 = vector.shape_cast %5 : vector<4xf32> to vector<1x4xf32>
    %cst_4 = arith.constant 0.001953125 : f32
    %7 = vector.broadcast %cst_4 : f32 to vector<1x4xf32>
    %8 = arith.mulf %3, %7 : vector<1x4xf32>
    %cst_5 = arith.constant 0.001953125 : f32
    %9 = vector.broadcast %cst_5 : f32 to vector<1x4xf32>
    %10 = arith.mulf %6, %9 : vector<1x4xf32>
    %11 = arith.mulf %8, %8 : vector<1x4xf32>
    %12 = arith.subf %10, %11 : vector<1x4xf32>
    %c0_6 = arith.constant 0 : index
    %c0_7 = arith.constant 0 : index
    %13 = vector.load %arg1[%c0_6, %c0_7] : memref<1x4xf32, #tpu.memory_space<vmem>>, vector<1x4xf32>
    %cst_8 = arith.constant 9.99999974E-6 : f32
    %14 = vector.broadcast %cst_8 : f32 to vector<1x4xf32>
    %15 = arith.addf %12, %14 : vector<1x4xf32>
    %16 = math.rsqrt %15 : vector<1x4xf32>
    %17 = arith.mulf %13, %16 : vector<1x4xf32>
    %c0_9 = arith.constant 0 : index
    %c0_10 = arith.constant 0 : index
    %18 = vector.load %arg2[%c0_9, %c0_10] : memref<1x4xf32, #tpu.memory_space<vmem>>, vector<1x4xf32>
    %19 = arith.mulf %8, %17 : vector<1x4xf32>
    %20 = arith.subf %18, %19 : vector<1x4xf32>
    %21 = vector.broadcast %17 : vector<1x4xf32> to vector<512x4xf32>
    %22 = arith.mulf %1, %21 : vector<512x4xf32>
    %23 = vector.broadcast %20 : vector<1x4xf32> to vector<512x4xf32>
    %24 = arith.addf %22, %23 : vector<512x4xf32>
    %cst_11 = arith.constant 0.000000e+00 : f32
    %25 = vector.broadcast %cst_11 : f32 to vector<512x4xf32>
    %26 = arith.maximumf %24, %25 : vector<512x4xf32>
    %c0_12 = arith.constant 0 : index
    %c0_13 = arith.constant 0 : index
    %27 = vector.load %arg3[%c0_12, %c0_13] : memref<4x16xf32, #tpu.memory_space<vmem>>, vector<4x16xf32>
    %cst_14 = arith.constant dense<0.000000e+00> : vector<512x16xf32>
    %28 = tpu.matmul %26, %27, %cst_14 {dimension_numbers = #tpu.dot_dimension_numbers<[1], [0], [0], [1], [0, 0, 1, 1], [], []>} : vector<512x4xf32>, vector<4x16xf32>, vector<512x16xf32> -> vector<512x16xf32>
    %cst_15 = arith.constant dense<0.000000e+00> : vector<16xf32>
    %29 = vector.multi_reduction <add>, %28, %cst_15 [0] : vector<512x16xf32> to vector<16xf32>
    %30 = vector.shape_cast %29 : vector<16xf32> to vector<1x16xf32>
    %31 = arith.mulf %28, %28 : vector<512x16xf32>
    %cst_16 = arith.constant dense<0.000000e+00> : vector<16xf32>
    %32 = vector.multi_reduction <add>, %31, %cst_16 [0] : vector<512x16xf32> to vector<16xf32>
    %33 = vector.shape_cast %32 : vector<16xf32> to vector<1x16xf32>
    %cst_17 = arith.constant 0.001953125 : f32
    %34 = vector.broadcast %cst_17 : f32 to vector<1x16xf32>
    %35 = arith.mulf %30, %34 : vector<1x16xf32>
    %cst_18 = arith.constant 0.001953125 : f32
    %36 = vector.broadcast %cst_18 : f32 to vector<1x16xf32>
    %37 = arith.mulf %33, %36 : vector<1x16xf32>
    %38 = arith.mulf %35, %35 : vector<1x16xf32>
    %39 = arith.subf %37, %38 : vector<1x16xf32>
    %c0_19 = arith.constant 0 : index
    %c0_20 = arith.constant 0 : index
    %40 = vector.load %arg4[%c0_19, %c0_20] : memref<1x16xf32, #tpu.memory_space<vmem>>, vector<1x16xf32>
    %cst_21 = arith.constant 9.99999974E-6 : f32
    %41 = vector.broadcast %cst_21 : f32 to vector<1x16xf32>
    %42 = arith.addf %39, %41 : vector<1x16xf32>
    %43 = math.rsqrt %42 : vector<1x16xf32>
    %44 = arith.mulf %40, %43 : vector<1x16xf32>
    %c0_22 = arith.constant 0 : index
    %c0_23 = arith.constant 0 : index
    %45 = vector.load %arg5[%c0_22, %c0_23] : memref<1x16xf32, #tpu.memory_space<vmem>>, vector<1x16xf32>
    %46 = arith.mulf %35, %44 : vector<1x16xf32>
    %47 = arith.subf %45, %46 : vector<1x16xf32>
    %48 = vector.broadcast %44 : vector<1x16xf32> to vector<512x16xf32>
    %49 = arith.mulf %28, %48 : vector<512x16xf32>
    %50 = vector.broadcast %47 : vector<1x16xf32> to vector<512x16xf32>
    %51 = arith.addf %49, %50 : vector<512x16xf32>
    %cst_24 = arith.constant 0.000000e+00 : f32
    %52 = vector.broadcast %cst_24 : f32 to vector<512x16xf32>
    %53 = arith.maximumf %51, %52 : vector<512x16xf32>
    %c24 = arith.constant 24 : index
    %c0_25 = arith.constant 0 : index
    %54 = vector.load %arg8[%c24, %c0_25] : memref<560x16xf32, #tpu.memory_space<vmem>>, vector<512x16xf32>
    tpu.vector_store %arg8[%c24, %c0_25], %53 {strides = array<i32>} : memref<560x16xf32, #tpu.memory_space<vmem>>, vector<512x16xf32>,
    %55 = tpu.iota {dimensions = array<i32: 0>} : vector<512x1xi32>
    %c16_i32 = arith.constant 16 : i32
    %c0_i32 = arith.constant 0 : i32
    %56 = arith.cmpi eq, %c16_i32, %c0_i32 : i32
    %c1_i32 = arith.constant 1 : i32
    %57 = arith.select %56, %c1_i32, %c16_i32 : i32
    %58 = vector.broadcast %57 : i32 to vector<512x1xi32>
    %59 = arith.remsi %55, %58 : vector<512x1xi32>
    %c0_i32_26 = arith.constant 0 : i32
    %60 = vector.broadcast %c0_i32_26 : i32 to vector<512x1xi32>
    %61 = arith.cmpi ne, %59, %60 : vector<512x1xi32>
    %c0_i32_27 = arith.constant 0 : i32
    %62 = vector.broadcast %c0_i32_27 : i32 to vector<512x1xi32>
    %63 = arith.cmpi slt, %59, %62 : vector<512x1xi32>
    %c0_i32_28 = arith.constant 0 : i32
    %64 = arith.cmpi slt, %57, %c0_i32_28 : i32
    %65 = vector.broadcast %64 : i1 to vector<512x1xi1>
    %66 = vector.broadcast %65 : vector<512x1xi1> to vector<512x1xi1>
    %67 = arith.xori %63, %66 : vector<512x1xi1>
    %68 = arith.andi %67, %61 : vector<512x1xi1>
    %69 = vector.broadcast %57 : i32 to vector<512x1xi32>
    %70 = arith.addi %59, %69 : vector<512x1xi32>
    %71 = arith.select %68, %70, %59 : vector<512x1xi1>, vector<512x1xi32>
    %c256_i32 = arith.constant 256 : i32
    %c0_i32_29 = arith.constant 0 : i32
    %72 = arith.cmpi eq, %c256_i32, %c0_i32_29 : i32
    %c1_i32_30 = arith.constant 1 : i32
    %73 = arith.select %72, %c1_i32_30, %c256_i32 : i32
    %74 = vector.broadcast %73 : i32 to vector<512x1xi32>
    %75 = arith.remsi %55, %74 : vector<512x1xi32>
    %c0_i32_31 = arith.constant 0 : i32
    %76 = vector.broadcast %c0_i32_31 : i32 to vector<512x1xi32>
    %77 = arith.cmpi ne, %75, %76 : vector<512x1xi32>
    %c0_i32_32 = arith.constant 0 : i32
    %78 = vector.broadcast %c0_i32_32 : i32 to vector<512x1xi32>
    %79 = arith.cmpi slt, %75, %78 : vector<512x1xi32>
    %c0_i32_33 = arith.constant 0 : i32
    %80 = arith.cmpi slt, %73, %c0_i32_33 : i32
    %81 = vector.broadcast %80 : i1 to vector<512x1xi1>
    %82 = vector.broadcast %81 : vector<512x1xi1> to vector<512x1xi1>
    %83 = arith.xori %79, %82 : vector<512x1xi1>
    %84 = arith.andi %83, %77 : vector<512x1xi1>
    %85 = vector.broadcast %73 : i32 to vector<512x1xi32>
    %86 = arith.addi %75, %85 : vector<512x1xi32>
    %87 = arith.select %84, %86, %75 : vector<512x1xi1>, vector<512x1xi32>
    %c7 = arith.constant 7 : index
    %c0_34 = arith.constant 0 : index
    %88 = vector.load %arg8[%c7, %c0_34] : memref<560x16xf32, #tpu.memory_space<vmem>>, vector<512x16xf32>
    %c-16_i32 = arith.constant -16 : i32
    %89 = vector.broadcast %c-16_i32 : i32 to vector<512x1xi32>
    %90 = arith.addi %87, %89 : vector<512x1xi32>
    %c-1_i32 = arith.constant -1 : i32
    %91 = vector.broadcast %c-1_i32 : i32 to vector<512x1xi32>
    %92 = arith.addi %71, %91 : vector<512x1xi32>
    %c0_i32_35 = arith.constant 0 : i32
    %93 = vector.broadcast %c0_i32_35 : i32 to vector<512x1xi32>
    %94 = arith.cmpi sge, %90, %93 : vector<512x1xi32>
    %c256_i32_36 = arith.constant 256 : i32
    %95 = vector.broadcast %c256_i32_36 : i32 to vector<512x1xi32>
    %96 = arith.cmpi slt, %90, %95 : vector<512x1xi32>
    %97 = arith.andi %94, %96 : vector<512x1xi1>
    %c0_i32_37 = arith.constant 0 : i32
    %98 = vector.broadcast %c0_i32_37 : i32 to vector<512x1xi32>
    %99 = arith.cmpi sge, %92, %98 : vector<512x1xi32>
    %100 = arith.andi %97, %99 : vector<512x1xi1>
    %c16_i32_38 = arith.constant 16 : i32
    %101 = vector.broadcast %c16_i32_38 : i32 to vector<512x1xi32>
    %102 = arith.cmpi slt, %92, %101 : vector<512x1xi32>
    %103 = arith.andi %100, %102 : vector<512x1xi1>
    %cst_39 = arith.constant 0.000000e+00 : f32
    %104 = vector.shape_cast %103 : vector<512x1xi1> to vector<512x1xi1>
    %105 = vector.broadcast %104 : vector<512x1xi1> to vector<512x16xi1>
    %106 = vector.broadcast %cst_39 : f32 to vector<512x16xf32>
    %107 = arith.select %105, %88, %106 : vector<512x16xi1>, vector<512x16xf32>
    %c0_40 = arith.constant 0 : index
    %c0_41 = arith.constant 0 : index
    %108 = vector.load %arg9[%c0_40, %c0_41] : memref<512x144xf32, #tpu.memory_space<vmem>>, vector<512x16xf32>
    tpu.vector_store %arg9[%c0_40, %c0_41], %107 {strides = array<i32>} : memref<512x144xf32, #tpu.memory_space<vmem>>, vector<512x16xf32>,
    %c8 = arith.constant 8 : index
    %c0_42 = arith.constant 0 : index
    %109 = vector.load %arg8[%c8, %c0_42] : memref<560x16xf32, #tpu.memory_space<vmem>>, vector<512x16xf32>
    %c-16_i32_43 = arith.constant -16 : i32
    %110 = vector.broadcast %c-16_i32_43 : i32 to vector<512x1xi32>
    %111 = arith.addi %87, %110 : vector<512x1xi32>
    %c0_i32_44 = arith.constant 0 : i32
    %112 = vector.broadcast %c0_i32_44 : i32 to vector<512x1xi32>
    %113 = arith.addi %71, %112 : vector<512x1xi32>
    %c0_i32_45 = arith.constant 0 : i32
    %114 = vector.broadcast %c0_i32_45 : i32 to vector<512x1xi32>
    %115 = arith.cmpi sge, %111, %114 : vector<512x1xi32>
    %c256_i32_46 = arith.constant 256 : i32
    %116 = vector.broadcast %c256_i32_46 : i32 to vector<512x1xi32>
    %117 = arith.cmpi slt, %111, %116 : vector<512x1xi32>
    %118 = arith.andi %115, %117 : vector<512x1xi1>
    %c0_i32_47 = arith.constant 0 : i32
    %119 = vector.broadcast %c0_i32_47 : i32 to vector<512x1xi32>
    %120 = arith.cmpi sge, %113, %119 : vector<512x1xi32>
    %121 = arith.andi %118, %120 : vector<512x1xi1>
    %c16_i32_48 = arith.constant 16 : i32
    %122 = vector.broadcast %c16_i32_48 : i32 to vector<512x1xi32>
    %123 = arith.cmpi slt, %113, %122 : vector<512x1xi32>
    %124 = arith.andi %121, %123 : vector<512x1xi1>
    %cst_49 = arith.constant 0.000000e+00 : f32
    %125 = vector.shape_cast %124 : vector<512x1xi1> to vector<512x1xi1>
    %126 = vector.broadcast %125 : vector<512x1xi1> to vector<512x16xi1>
    %127 = vector.broadcast %cst_49 : f32 to vector<512x16xf32>
    %128 = arith.select %126, %109, %127 : vector<512x16xi1>, vector<512x16xf32>
    %c0_50 = arith.constant 0 : index
    %c16 = arith.constant 16 : index
    %129 = vector.load %arg9[%c0_50, %c16] : memref<512x144xf32, #tpu.memory_space<vmem>>, vector<512x16xf32>
    tpu.vector_store %arg9[%c0_50, %c16], %128 {strides = array<i32>} : memref<512x144xf32, #tpu.memory_space<vmem>>, vector<512x16xf32>,
    %c9 = arith.constant 9 : index
    %c0_51 = arith.constant 0 : index
    %130 = vector.load %arg8[%c9, %c0_51] : memref<560x16xf32, #tpu.memory_space<vmem>>, vector<512x16xf32>
    %c-16_i32_52 = arith.constant -16 : i32
    %131 = vector.broadcast %c-16_i32_52 : i32 to vector<512x1xi32>
    %132 = arith.addi %87, %131 : vector<512x1xi32>
    %c1_i32_53 = arith.constant 1 : i32
    %133 = vector.broadcast %c1_i32_53 : i32 to vector<512x1xi32>
    %134 = arith.addi %71, %133 : vector<512x1xi32>
    %c0_i32_54 = arith.constant 0 : i32
    %135 = vector.broadcast %c0_i32_54 : i32 to vector<512x1xi32>
    %136 = arith.cmpi sge, %132, %135 : vector<512x1xi32>
    %c256_i32_55 = arith.constant 256 : i32
    %137 = vector.broadcast %c256_i32_55 : i32 to vector<512x1xi32>
    %138 = arith.cmpi slt, %132, %137 : vector<512x1xi32>
    %139 = arith.andi %136, %138 : vector<512x1xi1>
    %c0_i32_56 = arith.constant 0 : i32
    %140 = vector.broadcast %c0_i32_56 : i32 to vector<512x1xi32>
    %141 = arith.cmpi sge, %134, %140 : vector<512x1xi32>
    %142 = arith.andi %139, %141 : vector<512x1xi1>
    %c16_i32_57 = arith.constant 16 : i32
    %143 = vector.broadcast %c16_i32_57 : i32 to vector<512x1xi32>
    %144 = arith.cmpi slt, %134, %143 : vector<512x1xi32>
    %145 = arith.andi %142, %144 : vector<512x1xi1>
    %cst_58 = arith.constant 0.000000e+00 : f32
    %146 = vector.shape_cast %145 : vector<512x1xi1> to vector<512x1xi1>
    %147 = vector.broadcast %146 : vector<512x1xi1> to vector<512x16xi1>
    %148 = vector.broadcast %cst_58 : f32 to vector<512x16xf32>
    %149 = arith.select %147, %130, %148 : vector<512x16xi1>, vector<512x16xf32>
    %c0_59 = arith.constant 0 : index
    %c32 = arith.constant 32 : index
    %150 = vector.load %arg9[%c0_59, %c32] : memref<512x144xf32, #tpu.memory_space<vmem>>, vector<512x16xf32>
    tpu.vector_store %arg9[%c0_59, %c32], %149 {strides = array<i32>} : memref<512x144xf32, #tpu.memory_space<vmem>>, vector<512x16xf32>,
    %c23 = arith.constant 23 : index
    %c0_60 = arith.constant 0 : index
    %151 = vector.load %arg8[%c23, %c0_60] : memref<560x16xf32, #tpu.memory_space<vmem>>, vector<512x16xf32>
    %c0_i32_61 = arith.constant 0 : i32
    %152 = vector.broadcast %c0_i32_61 : i32 to vector<512x1xi32>
    %153 = arith.addi %87, %152 : vector<512x1xi32>
    %c-1_i32_62 = arith.constant -1 : i32
    %154 = vector.broadcast %c-1_i32_62 : i32 to vector<512x1xi32>
    %155 = arith.addi %71, %154 : vector<512x1xi32>
    %c0_i32_63 = arith.constant 0 : i32
    %156 = vector.broadcast %c0_i32_63 : i32 to vector<512x1xi32>
    %157 = arith.cmpi sge, %153, %156 : vector<512x1xi32>
    %c256_i32_64 = arith.constant 256 : i32
    %158 = vector.broadcast %c256_i32_64 : i32 to vector<512x1xi32>
    %159 = arith.cmpi slt, %153, %158 : vector<512x1xi32>
    %160 = arith.andi %157, %159 : vector<512x1xi1>
    %c0_i32_65 = arith.constant 0 : i32
    %161 = vector.broadcast %c0_i32_65 : i32 to vector<512x1xi32>
    %162 = arith.cmpi sge, %155, %161 : vector<512x1xi32>
    %163 = arith.andi %160, %162 : vector<512x1xi1>
    %c16_i32_66 = arith.constant 16 : i32
    %164 = vector.broadcast %c16_i32_66 : i32 to vector<512x1xi32>
    %165 = arith.cmpi slt, %155, %164 : vector<512x1xi32>
    %166 = arith.andi %163, %165 : vector<512x1xi1>
    %cst_67 = arith.constant 0.000000e+00 : f32
    %167 = vector.shape_cast %166 : vector<512x1xi1> to vector<512x1xi1>
    %168 = vector.broadcast %167 : vector<512x1xi1> to vector<512x16xi1>
    %169 = vector.broadcast %cst_67 : f32 to vector<512x16xf32>
    %170 = arith.select %168, %151, %169 : vector<512x16xi1>, vector<512x16xf32>
    %c0_68 = arith.constant 0 : index
    %c48 = arith.constant 48 : index
    %171 = vector.load %arg9[%c0_68, %c48] : memref<512x144xf32, #tpu.memory_space<vmem>>, vector<512x16xf32>
    tpu.vector_store %arg9[%c0_68, %c48], %170 {strides = array<i32>} : memref<512x144xf32, #tpu.memory_space<vmem>>, vector<512x16xf32>,
    %c24_69 = arith.constant 24 : index
    %c0_70 = arith.constant 0 : index
    %172 = vector.load %arg8[%c24_69, %c0_70] : memref<560x16xf32, #tpu.memory_space<vmem>>, vector<512x16xf32>
    %c0_i32_71 = arith.constant 0 : i32
    %173 = vector.broadcast %c0_i32_71 : i32 to vector<512x1xi32>
    %174 = arith.addi %87, %173 : vector<512x1xi32>
    %c0_i32_72 = arith.constant 0 : i32
    %175 = vector.broadcast %c0_i32_72 : i32 to vector<512x1xi32>
    %176 = arith.addi %71, %175 : vector<512x1xi32>
    %c0_i32_73 = arith.constant 0 : i32
    %177 = vector.broadcast %c0_i32_73 : i32 to vector<512x1xi32>
    %178 = arith.cmpi sge, %174, %177 : vector<512x1xi32>
    %c256_i32_74 = arith.constant 256 : i32
    %179 = vector.broadcast %c256_i32_74 : i32 to vector<512x1xi32>
    %180 = arith.cmpi slt, %174, %179 : vector<512x1xi32>
    %181 = arith.andi %178, %180 : vector<512x1xi1>
    %c0_i32_75 = arith.constant 0 : i32
    %182 = vector.broadcast %c0_i32_75 : i32 to vector<512x1xi32>
    %183 = arith.cmpi sge, %176, %182 : vector<512x1xi32>
    %184 = arith.andi %181, %183 : vector<512x1xi1>
    %c16_i32_76 = arith.constant 16 : i32
    %185 = vector.broadcast %c16_i32_76 : i32 to vector<512x1xi32>
    %186 = arith.cmpi slt, %176, %185 : vector<512x1xi32>
    %187 = arith.andi %184, %186 : vector<512x1xi1>
    %cst_77 = arith.constant 0.000000e+00 : f32
    %188 = vector.shape_cast %187 : vector<512x1xi1> to vector<512x1xi1>
    %189 = vector.broadcast %188 : vector<512x1xi1> to vector<512x16xi1>
    %190 = vector.broadcast %cst_77 : f32 to vector<512x16xf32>
    %191 = arith.select %189, %172, %190 : vector<512x16xi1>, vector<512x16xf32>
    %c0_78 = arith.constant 0 : index
    %c64 = arith.constant 64 : index
    %192 = vector.load %arg9[%c0_78, %c64] : memref<512x144xf32, #tpu.memory_space<vmem>>, vector<512x16xf32>
    tpu.vector_store %arg9[%c0_78, %c64], %191 {strides = array<i32>} : memref<512x144xf32, #tpu.memory_space<vmem>>, vector<512x16xf32>,
    %c25 = arith.constant 25 : index
    %c0_79 = arith.constant 0 : index
    %193 = vector.load %arg8[%c25, %c0_79] : memref<560x16xf32, #tpu.memory_space<vmem>>, vector<512x16xf32>
    %c0_i32_80 = arith.constant 0 : i32
    %194 = vector.broadcast %c0_i32_80 : i32 to vector<512x1xi32>
    %195 = arith.addi %87, %194 : vector<512x1xi32>
    %c1_i32_81 = arith.constant 1 : i32
    %196 = vector.broadcast %c1_i32_81 : i32 to vector<512x1xi32>
    %197 = arith.addi %71, %196 : vector<512x1xi32>
    %c0_i32_82 = arith.constant 0 : i32
    %198 = vector.broadcast %c0_i32_82 : i32 to vector<512x1xi32>
    %199 = arith.cmpi sge, %195, %198 : vector<512x1xi32>
    %c256_i32_83 = arith.constant 256 : i32
    %200 = vector.broadcast %c256_i32_83 : i32 to vector<512x1xi32>
    %201 = arith.cmpi slt, %195, %200 : vector<512x1xi32>
    %202 = arith.andi %199, %201 : vector<512x1xi1>
    %c0_i32_84 = arith.constant 0 : i32
    %203 = vector.broadcast %c0_i32_84 : i32 to vector<512x1xi32>
    %204 = arith.cmpi sge, %197, %203 : vector<512x1xi32>
    %205 = arith.andi %202, %204 : vector<512x1xi1>
    %c16_i32_85 = arith.constant 16 : i32
    %206 = vector.broadcast %c16_i32_85 : i32 to vector<512x1xi32>
    %207 = arith.cmpi slt, %197, %206 : vector<512x1xi32>
    %208 = arith.andi %205, %207 : vector<512x1xi1>
    %cst_86 = arith.constant 0.000000e+00 : f32
    %209 = vector.shape_cast %208 : vector<512x1xi1> to vector<512x1xi1>
    %210 = vector.broadcast %209 : vector<512x1xi1> to vector<512x16xi1>
    %211 = vector.broadcast %cst_86 : f32 to vector<512x16xf32>
    %212 = arith.select %210, %193, %211 : vector<512x16xi1>, vector<512x16xf32>
    %c0_87 = arith.constant 0 : index
    %c80 = arith.constant 80 : index
    %213 = vector.load %arg9[%c0_87, %c80] : memref<512x144xf32, #tpu.memory_space<vmem>>, vector<512x16xf32>
    tpu.vector_store %arg9[%c0_87, %c80], %212 {strides = array<i32>} : memref<512x144xf32, #tpu.memory_space<vmem>>, vector<512x16xf32>,
    %c39 = arith.constant 39 : index
    %c0_88 = arith.constant 0 : index
    %214 = vector.load %arg8[%c39, %c0_88] : memref<560x16xf32, #tpu.memory_space<vmem>>, vector<512x16xf32>
    %c16_i32_89 = arith.constant 16 : i32
    %215 = vector.broadcast %c16_i32_89 : i32 to vector<512x1xi32>
    %216 = arith.addi %87, %215 : vector<512x1xi32>
    %c-1_i32_90 = arith.constant -1 : i32
    %217 = vector.broadcast %c-1_i32_90 : i32 to vector<512x1xi32>
    %218 = arith.addi %71, %217 : vector<512x1xi32>
    %c0_i32_91 = arith.constant 0 : i32
    %219 = vector.broadcast %c0_i32_91 : i32 to vector<512x1xi32>
    %220 = arith.cmpi sge, %216, %219 : vector<512x1xi32>
    %c256_i32_92 = arith.constant 256 : i32
    %221 = vector.broadcast %c256_i32_92 : i32 to vector<512x1xi32>
    %222 = arith.cmpi slt, %216, %221 : vector<512x1xi32>
    %223 = arith.andi %220, %222 : vector<512x1xi1>
    %c0_i32_93 = arith.constant 0 : i32
    %224 = vector.broadcast %c0_i32_93 : i32 to vector<512x1xi32>
    %225 = arith.cmpi sge, %218, %224 : vector<512x1xi32>
    %226 = arith.andi %223, %225 : vector<512x1xi1>
    %c16_i32_94 = arith.constant 16 : i32
    %227 = vector.broadcast %c16_i32_94 : i32 to vector<512x1xi32>
    %228 = arith.cmpi slt, %218, %227 : vector<512x1xi32>
    %229 = arith.andi %226, %228 : vector<512x1xi1>
    %cst_95 = arith.constant 0.000000e+00 : f32
    %230 = vector.shape_cast %229 : vector<512x1xi1> to vector<512x1xi1>
    %231 = vector.broadcast %230 : vector<512x1xi1> to vector<512x16xi1>
    %232 = vector.broadcast %cst_95 : f32 to vector<512x16xf32>
    %233 = arith.select %231, %214, %232 : vector<512x16xi1>, vector<512x16xf32>
    %c0_96 = arith.constant 0 : index
    %c96 = arith.constant 96 : index
    %234 = vector.load %arg9[%c0_96, %c96] : memref<512x144xf32, #tpu.memory_space<vmem>>, vector<512x16xf32>
    tpu.vector_store %arg9[%c0_96, %c96], %233 {strides = array<i32>} : memref<512x144xf32, #tpu.memory_space<vmem>>, vector<512x16xf32>,
    %c40 = arith.constant 40 : index
    %c0_97 = arith.constant 0 : index
    %235 = vector.load %arg8[%c40, %c0_97] : memref<560x16xf32, #tpu.memory_space<vmem>>, vector<512x16xf32>
    %c16_i32_98 = arith.constant 16 : i32
    %236 = vector.broadcast %c16_i32_98 : i32 to vector<512x1xi32>
    %237 = arith.addi %87, %236 : vector<512x1xi32>
    %c0_i32_99 = arith.constant 0 : i32
    %238 = vector.broadcast %c0_i32_99 : i32 to vector<512x1xi32>
    %239 = arith.addi %71, %238 : vector<512x1xi32>
    %c0_i32_100 = arith.constant 0 : i32
    %240 = vector.broadcast %c0_i32_100 : i32 to vector<512x1xi32>
    %241 = arith.cmpi sge, %237, %240 : vector<512x1xi32>
    %c256_i32_101 = arith.constant 256 : i32
    %242 = vector.broadcast %c256_i32_101 : i32 to vector<512x1xi32>
    %243 = arith.cmpi slt, %237, %242 : vector<512x1xi32>
    %244 = arith.andi %241, %243 : vector<512x1xi1>
    %c0_i32_102 = arith.constant 0 : i32
    %245 = vector.broadcast %c0_i32_102 : i32 to vector<512x1xi32>
    %246 = arith.cmpi sge, %239, %245 : vector<512x1xi32>
    %247 = arith.andi %244, %246 : vector<512x1xi1>
    %c16_i32_103 = arith.constant 16 : i32
    %248 = vector.broadcast %c16_i32_103 : i32 to vector<512x1xi32>
    %249 = arith.cmpi slt, %239, %248 : vector<512x1xi32>
    %250 = arith.andi %247, %249 : vector<512x1xi1>
    %cst_104 = arith.constant 0.000000e+00 : f32
    %251 = vector.shape_cast %250 : vector<512x1xi1> to vector<512x1xi1>
    %252 = vector.broadcast %251 : vector<512x1xi1> to vector<512x16xi1>
    %253 = vector.broadcast %cst_104 : f32 to vector<512x16xf32>
    %254 = arith.select %252, %235, %253 : vector<512x16xi1>, vector<512x16xf32>
    %c0_105 = arith.constant 0 : index
    %c112 = arith.constant 112 : index
    %255 = vector.load %arg9[%c0_105, %c112] : memref<512x144xf32, #tpu.memory_space<vmem>>, vector<512x16xf32>
    tpu.vector_store %arg9[%c0_105, %c112], %254 {strides = array<i32>} : memref<512x144xf32, #tpu.memory_space<vmem>>, vector<512x16xf32>,
    %c41 = arith.constant 41 : index
    %c0_106 = arith.constant 0 : index
    %256 = vector.load %arg8[%c41, %c0_106] : memref<560x16xf32, #tpu.memory_space<vmem>>, vector<512x16xf32>
    %c16_i32_107 = arith.constant 16 : i32
    %257 = vector.broadcast %c16_i32_107 : i32 to vector<512x1xi32>
    %258 = arith.addi %87, %257 : vector<512x1xi32>
    %c1_i32_108 = arith.constant 1 : i32
    %259 = vector.broadcast %c1_i32_108 : i32 to vector<512x1xi32>
    %260 = arith.addi %71, %259 : vector<512x1xi32>
    %c0_i32_109 = arith.constant 0 : i32
    %261 = vector.broadcast %c0_i32_109 : i32 to vector<512x1xi32>
    %262 = arith.cmpi sge, %258, %261 : vector<512x1xi32>
    %c256_i32_110 = arith.constant 256 : i32
    %263 = vector.broadcast %c256_i32_110 : i32 to vector<512x1xi32>
    %264 = arith.cmpi slt, %258, %263 : vector<512x1xi32>
    %265 = arith.andi %262, %264 : vector<512x1xi1>
    %c0_i32_111 = arith.constant 0 : i32
    %266 = vector.broadcast %c0_i32_111 : i32 to vector<512x1xi32>
    %267 = arith.cmpi sge, %260, %266 : vector<512x1xi32>
    %268 = arith.andi %265, %267 : vector<512x1xi1>
    %c16_i32_112 = arith.constant 16 : i32
    %269 = vector.broadcast %c16_i32_112 : i32 to vector<512x1xi32>
    %270 = arith.cmpi slt, %260, %269 : vector<512x1xi32>
    %271 = arith.andi %268, %270 : vector<512x1xi1>
    %cst_113 = arith.constant 0.000000e+00 : f32
    %272 = vector.shape_cast %271 : vector<512x1xi1> to vector<512x1xi1>
    %273 = vector.broadcast %272 : vector<512x1xi1> to vector<512x16xi1>
    %274 = vector.broadcast %cst_113 : f32 to vector<512x16xf32>
    %275 = arith.select %273, %256, %274 : vector<512x16xi1>, vector<512x16xf32>
    %c0_114 = arith.constant 0 : index
    %c128 = arith.constant 128 : index
    %276 = vector.load %arg9[%c0_114, %c128] : memref<512x144xf32, #tpu.memory_space<vmem>>, vector<512x16xf32>
    tpu.vector_store %arg9[%c0_114, %c128], %275 {strides = array<i32>} : memref<512x144xf32, #tpu.memory_space<vmem>>, vector<512x16xf32>,
    %c0_115 = arith.constant 0 : index
    %c0_116 = arith.constant 0 : index
    %277 = vector.load %arg9[%c0_115, %c0_116] : memref<512x144xf32, #tpu.memory_space<vmem>>, vector<512x144xf32>
    %c0_117 = arith.constant 0 : index
    %c0_118 = arith.constant 0 : index
    %278 = vector.load %arg6[%c0_117, %c0_118] : memref<144x4xf32, #tpu.memory_space<vmem>>, vector<144x4xf32>
    %cst_119 = arith.constant dense<0.000000e+00> : vector<512x4xf32>
    %279 = tpu.matmul %277, %278, %cst_119 {dimension_numbers = #tpu.dot_dimension_numbers<[1], [0], [0], [1], [0, 0, 1, 1], [], []>} : vector<512x144xf32>, vector<144x4xf32>, vector<512x4xf32> -> vector<512x4xf32>
    %280 = vector.shape_cast %279 : vector<512x4xf32> to vector<2x16x16x4xf32>
    %c0_120 = arith.constant 0 : index
    %c0_121 = arith.constant 0 : index
    %c0_122 = arith.constant 0 : index
    %c0_123 = arith.constant 0 : index
    %281 = vector.load %arg7[%c0_120, %c0_121, %c0_122, %c0_123] : memref<2x16x16x4xf32, #tpu.memory_space<vmem>>, vector<2x16x16x4xf32>
    tpu.vector_store %arg7[%c0_120, %c0_121, %c0_122, %c0_123], %280 {strides = array<i32>} : memref<2x16x16x4xf32, #tpu.memory_space<vmem>>, vector<2x16x16x4xf32>,
    return
  }
}

</mosaic_0001>

<llo_original>
// kernel: bottleneck_pallas.1
$region0: #{bottleneck_pallas.1}
  #allocation0 [shape = 'u32[]', space=smem, size = 0x4, offset = 0x4, fixed_abs, tag = 'smem constant byte address 0x4 - core index']
  #allocation1 [shape = 'u32[72,128]{1,0:T(1,128)}', space=vmem, size = 0x9000, scoped, tag = 'internal scratch']
  #allocation2 [shape = 'f32[560,16]{1,0:T(8,128)}', space=vmem, size = 0x46000, scoped, tag = 'scratch operand']
  #allocation3 [shape = 'f32[512,144]{1,0:T(8,128)}', space=vmem, size = 0x80000, scoped, tag = 'scratch operand']
  %s0 = inlined_call_operand.vmem [shape: f32[2,16,16,4], index: 0, kind: input, shape index: {}]
  %s1 = inlined_call_operand.vmem [shape: f32[1,4], index: 1, kind: input, shape index: {}]
  %s2 = inlined_call_operand.vmem [shape: f32[1,4], index: 2, kind: input, shape index: {}]
  %s3 = inlined_call_operand.vmem [shape: f32[4,16], index: 3, kind: input, shape index: {}]
  %s4 = inlined_call_operand.vmem [shape: f32[1,16], index: 4, kind: input, shape index: {}]
  %s5 = inlined_call_operand.vmem [shape: f32[1,16], index: 5, kind: input, shape index: {}]
  %s6 = inlined_call_operand.vmem [shape: f32[144,4], index: 6, kind: input, shape index: {}]
  %s7 = inlined_call_operand.vmem [shape: f32[2,16,16,4], index: 7, kind: output, shape index: {}]
  %s8 = sld [smem:[#allocation0]]
  $region38: #{bottleneck_pallas.1} parent=0
    _
  %s10 = ssub.s32 1, %s8
  %s11 = scalar_select 0, %s10, %s8
  // Predicated region
  $region2: #{bottleneck_pallas.1} parent=0 // pred_check
    _
  $region3: #{bottleneck_pallas.1} parent=0 // pred_check_branch
    %13 = sbr.rel (0) target = $region5
  $region4: #{bottleneck_pallas.1} parent=0 // pred_region
    _
  $region5: #{bottleneck_pallas.1} parent=0 // pred_fallthru
    _
  // Predicated region
  $region6: #{bottleneck_pallas.1} parent=0 // pred_check
    _
  $region7: #{bottleneck_pallas.1} parent=0 // pred_check_branch
    %15 = sbr.rel (0) target = $region9
  $region8: #{bottleneck_pallas.1} parent=0 // pred_region
    _
  $region9: #{bottleneck_pallas.1} parent=0 // pred_fallthru
    _
  // Predicated region
  $region10: #{bottleneck_pallas.1} parent=0 // pred_check
    _
  $region11: #{bottleneck_pallas.1} parent=0 // pred_check_branch
    %17 = sbr.rel (0) target = $region13
  $region12: #{bottleneck_pallas.1} parent=0 // pred_region
    _
  $region13: #{bottleneck_pallas.1} parent=0 // pred_fallthru
    _
  // Predicated region
  $region14: #{bottleneck_pallas.1} parent=0 // pred_check
    _
  $region15: #{bottleneck_pallas.1} parent=0 // pred_check_branch
    %19 = sbr.rel (0) target = $region17
  $region16: #{bottleneck_pallas.1} parent=0 // pred_region
    _
  $region17: #{bottleneck_pallas.1} parent=0 // pred_fallthru
    _
  // Predicated region
  $region18: #{bottleneck_pallas.1} parent=0 // pred_check
    _
  $region19: #{bottleneck_pallas.1} parent=0 // pred_check_branch
    %21 = sbr.rel (0) target = $region21
  $region20: #{bottleneck_pallas.1} parent=0 // pred_region
    _
  $region21: #{bottleneck_pallas.1} parent=0 // pred_fallthru
    _
  // Predicated region
  $region22: #{bottleneck_pallas.1} parent=0 // pred_check
    _
  $region23: #{bottleneck_pallas.1} parent=0 // pred_check_branch
    %23 = sbr.rel (0) target = $region25
  $region24: #{bottleneck_pallas.1} parent=0 // pred_region
    _
  $region25: #{bottleneck_pallas.1} parent=0 // pred_fallthru
    _
  // Predicated region
  $region26: #{bottleneck_pallas.1} parent=0 // pred_check
    _
  $region27: #{bottleneck_pallas.1} parent=0 // pred_check_branch
    %25 = sbr.rel (0) target = $region29
  $region28: #{bottleneck_pallas.1} parent=0 // pred_region
    _
  $region29: #{bottleneck_pallas.1} parent=0 // pred_fallthru
    _
  %v26 = vld [vmem:[%s0] sm:$0xff]
  %v27 = vld [vmem:[%s0 + $0x8] sm:$0xff]
  %v28 = vld [vmem:[%s0 + $0x10] sm:$0xff]
  %v29 = vld [vmem:[%s0 + $0x18] sm:$0xff]
  %v30 = vld [vmem:[%s0 + $0x20] sm:$0xff]
  %v31 = vld [vmem:[%s0 + $0x28] sm:$0xff]
  %v32 = vld [vmem:[%s0 + $0x30] sm:$0xff]
  %v33 = vld [vmem:[%s0 + $0x38] sm:$0xff]
  %v34 = vld [vmem:[%s0 + $0x40] sm:$0xff]
  %v35 = vld [vmem:[%s0 + $0x48] sm:$0xff]
  %v36 = vld [vmem:[%s0 + $0x50] sm:$0xff]
  %v37 = vld [vmem:[%s0 + $0x58] sm:$0xff]
  %v38 = vld [vmem:[%s0 + $0x60] sm:$0xff]
  %v39 = vld [vmem:[%s0 + $0x68] sm:$0xff]
  %v40 = vld [vmem:[%s0 + $0x70] sm:$0xff]
  %v41 = vld [vmem:[%s0 + $0x78] sm:$0xff]
  %v42 = vld [vmem:[%s0 + $0x80] sm:$0xff]
  %v43 = vld [vmem:[%s0 + $0x88] sm:$0xff]
  %v44 = vld [vmem:[%s0 + $0x90] sm:$0xff]
  %v45 = vld [vmem:[%s0 + $0x98] sm:$0xff]
  %v46 = vld [vmem:[%s0 + $0xa0] sm:$0xff]
  %v47 = vld [vmem:[%s0 + $0xa8] sm:$0xff]
  %v48 = vld [vmem:[%s0 + $0xb0] sm:$0xff]
  %v49 = vld [vmem:[%s0 + $0xb8] sm:$0xff]
  %v50 = vld [vmem:[%s0 + $0xc0] sm:$0xff]
  %v51 = vld [vmem:[%s0 + $0xc8] sm:$0xff]
  %v52 = vld [vmem:[%s0 + $0xd0] sm:$0xff]
  %v53 = vld [vmem:[%s0 + $0xd8] sm:$0xff]
  %v54 = vld [vmem:[%s0 + $0xe0] sm:$0xff]
  %v55 = vld [vmem:[%s0 + $0xe8] sm:$0xff]
  %v56 = vld [vmem:[%s0 + $0xf0] sm:$0xff]
  %v57 = vld [vmem:[%s0 + $0xf8] sm:$0xff]
  %v58 = vld [vmem:[%s0 + $0x100] sm:$0xff]
  %v59 = vld [vmem:[%s0 + $0x108] sm:$0xff]
  %v60 = vld [vmem:[%s0 + $0x110] sm:$0xff]
  %v61 = vld [vmem:[%s0 + $0x118] sm:$0xff]
  %v62 = vld [vmem:[%s0 + $0x120] sm:$0xff]
  %v63 = vld [vmem:[%s0 + $0x128] sm:$0xff]
  %v64 = vld [vmem:[%s0 + $0x130] sm:$0xff]
  %v65 = vld [vmem:[%s0 + $0x138] sm:$0xff]
  %v66 = vld [vmem:[%s0 + $0x140] sm:$0xff]
  %v67 = vld [vmem:[%s0 + $0x148] sm:$0xff]
  %v68 = vld [vmem:[%s0 + $0x150] sm:$0xff]
  %v69 = vld [vmem:[%s0 + $0x158] sm:$0xff]
  %v70 = vld [vmem:[%s0 + $0x160] sm:$0xff]
  %v71 = vld [vmem:[%s0 + $0x168] sm:$0xff]
  %v72 = vld [vmem:[%s0 + $0x170] sm:$0xff]
  %v73 = vld [vmem:[%s0 + $0x178] sm:$0xff]
  %v74 = vld [vmem:[%s0 + $0x180] sm:$0xff]
  %v75 = vld [vmem:[%s0 + $0x188] sm:$0xff]
  %v76 = vld [vmem:[%s0 + $0x190] sm:$0xff]
  %v77 = vld [vmem:[%s0 + $0x198] sm:$0xff]
  %v78 = vld [vmem:[%s0 + $0x1a0] sm:$0xff]
  %v79 = vld [vmem:[%s0 + $0x1a8] sm:$0xff]
  %v80 = vld [vmem:[%s0 + $0x1b0] sm:$0xff]
  %v81 = vld [vmem:[%s0 + $0x1b8] sm:$0xff]
  %v82 = vld [vmem:[%s0 + $0x1c0] sm:$0xff]
  %v83 = vld [vmem:[%s0 + $0x1c8] sm:$0xff]
  %v84 = vld [vmem:[%s0 + $0x1d0] sm:$0xff]
  %v85 = vld [vmem:[%s0 + $0x1d8] sm:$0xff]
  %v86 = vld [vmem:[%s0 + $0x1e0] sm:$0xff]
  %v87 = vld [vmem:[%s0 + $0x1e8] sm:$0xff]
  %v88 = vld [vmem:[%s0 + $0x1f0] sm:$0xff]
  %v89 = vld [vmem:[%s0 + $0x1f8] sm:$0xff]
  %vm90 = vcmask 31744
  %v91 = vsel %vm90, %v26, 0.0
  %v92 = vsel %vm90, %v27, 0.0
  %v93 = vadd.f32 %v91, %v92
  %v94 = vsel %vm90, %v28, 0.0
  %v95 = vadd.f32 %v93, %v94
  %v96 = vsel %vm90, %v29, 0.0
  %v97 = vadd.f32 %v95, %v96
  %v98 = vsel %vm90, %v30, 0.0
  %v99 = vadd.f32 %v97, %v98
  %v100 = vsel %vm90, %v31, 0.0
  %v101 = vadd.f32 %v99, %v100
  %v102 = vsel %vm90, %v32, 0.0
  %v103 = vadd.f32 %v101, %v102
  %v104 = vsel %vm90, %v33, 0.0
  %v105 = vadd.f32 %v103, %v104
  %v106 = vsel %vm90, %v34, 0.0
  %v107 = vadd.f32 %v105, %v106
  %v108 = vsel %vm90, %v35, 0.0
  %v109 = vadd.f32 %v107, %v108
  %v110 = vsel %vm90, %v36, 0.0
  %v111 = vadd.f32 %v109, %v110
  %v112 = vsel %vm90, %v37, 0.0
  %v113 = vadd.f32 %v111, %v112
  %v114 = vsel %vm90, %v38, 0.0
  %v115 = vadd.f32 %v113, %v114
  %v116 = vsel %vm90, %v39, 0.0
  %v117 = vadd.f32 %v115, %v116
  %v118 = vsel %vm90, %v40, 0.0
  %v119 = vadd.f32 %v117, %v118
  %v120 = vsel %vm90, %v41, 0.0
  %v121 = vadd.f32 %v119, %v120
  %v122 = vsel %vm90, %v42, 0.0
  %v123 = vadd.f32 %v121, %v122
  %v124 = vsel %vm90, %v43, 0.0
  %v125 = vadd.f32 %v123, %v124
  %v126 = vsel %vm90, %v44, 0.0
  %v127 = vadd.f32 %v125, %v126
  %v128 = vsel %vm90, %v45, 0.0
  %v129 = vadd.f32 %v127, %v128
  %v130 = vsel %vm90, %v46, 0.0
  %v131 = vadd.f32 %v129, %v130
  %v132 = vsel %vm90, %v47, 0.0
  %v133 = vadd.f32 %v131, %v132
  %v134 = vsel %vm90, %v48, 0.0
  %v135 = vadd.f32 %v133, %v134
  %v136 = vsel %vm90, %v49, 0.0
  %v137 = vadd.f32 %v135, %v136
  %v138 = vsel %vm90, %v50, 0.0
  %v139 = vadd.f32 %v137, %v138
  %v140 = vsel %vm90, %v51, 0.0
  %v141 = vadd.f32 %v139, %v140
  %v142 = vsel %vm90, %v52, 0.0
  %v143 = vadd.f32 %v141, %v142
  %v144 = vsel %vm90, %v53, 0.0
  %v145 = vadd.f32 %v143, %v144
  %v146 = vsel %vm90, %v54, 0.0
  %v147 = vadd.f32 %v145, %v146
  %v148 = vsel %vm90, %v55, 0.0
  %v149 = vadd.f32 %v147, %v148
  %v150 = vsel %vm90, %v56, 0.0
  %v151 = vadd.f32 %v149, %v150
  %v152 = vsel %vm90, %v57, 0.0
  %v153 = vadd.f32 %v151, %v152
  %v154 = vsel %vm90, %v58, 0.0
  %v155 = vadd.f32 %v153, %v154
  %v156 = vsel %vm90, %v59, 0.0
  %v157 = vadd.f32 %v155, %v156
  %v158 = vsel %vm90, %v60, 0.0
  %v159 = vadd.f32 %v157, %v158
  %v160 = vsel %vm90, %v61, 0.0
  %v161 = vadd.f32 %v159, %v160
  %v162 = vsel %vm90, %v62, 0.0
  %v163 = vadd.f32 %v161, %v162
  %v164 = vsel %vm90, %v63, 0.0
  %v165 = vadd.f32 %v163, %v164
  %v166 = vsel %vm90, %v64, 0.0
  %v167 = vadd.f32 %v165, %v166
  %v168 = vsel %vm90, %v65, 0.0
  %v169 = vadd.f32 %v167, %v168
  %v170 = vsel %vm90, %v66, 0.0
  %v171 = vadd.f32 %v169, %v170
  %v172 = vsel %vm90, %v67, 0.0
  %v173 = vadd.f32 %v171, %v172
  %v174 = vsel %vm90, %v68, 0.0
  %v175 = vadd.f32 %v173, %v174
  %v176 = vsel %vm90, %v69, 0.0
  %v177 = vadd.f32 %v175, %v176
  %v178 = vsel %vm90, %v70, 0.0
  %v179 = vadd.f32 %v177, %v178
  %v180 = vsel %vm90, %v71, 0.0
  %v181 = vadd.f32 %v179, %v180
  %v182 = vsel %vm90, %v72, 0.0
  %v183 = vadd.f32 %v181, %v182
  %v184 = vsel %vm90, %v73, 0.0
  %v185 = vadd.f32 %v183, %v184
  %v186 = vsel %vm90, %v74, 0.0
  %v187 = vadd.f32 %v185, %v186
  %v188 = vsel %vm90, %v75, 0.0
  %v189 = vadd.f32 %v187, %v188
  %v190 = vsel %vm90, %v76, 0.0
  %v191 = vadd.f32 %v189, %v190
  %v192 = vsel %vm90, %v77, 0.0
  %v193 = vadd.f32 %v191, %v192
  %v194 = vsel %vm90, %v78, 0.0
  %v195 = vadd.f32 %v193, %v194
  %v196 = vsel %vm90, %v79, 0.0
  %v197 = vadd.f32 %v195, %v196
  %v198 = vsel %vm90, %v80, 0.0
  %v199 = vadd.f32 %v197, %v198
  %v200 = vsel %vm90, %v81, 0.0
  %v201 = vadd.f32 %v199, %v200
  %v202 = vsel %vm90, %v82, 0.0
  %v203 = vadd.f32 %v201, %v202
  %v204 = vsel %vm90, %v83, 0.0
  %v205 = vadd.f32 %v203, %v204
  %v206 = vsel %vm90, %v84, 0.0
  %v207 = vadd.f32 %v205, %v206
  %v208 = vsel %vm90, %v85, 0.0
  %v209 = vadd.f32 %v207, %v208
  %v210 = vsel %vm90, %v86, 0.0
  %v211 = vadd.f32 %v209, %v210
  %v212 = vsel %vm90, %v87, 0.0
  %v213 = vadd.f32 %v211, %v212
  %v214 = vsel %vm90, %v88, 0.0
  %v215 = vadd.f32 %v213, %v214
  %v216 = vsel %vm90, %v89, 0.0
  %v217 = vadd.f32 %v215, %v216
  %v218 = vrot.slane %v217, 4
  %v219 = vadd.f32 %v217, %v218
  %v220 = vrot.slane %v219, 2
  %v221 = vadd.f32 %v219, %v220
  %v222 = vrot.slane %v221, 1
  %v223 = vadd.f32 %v221, %v222
  %v224 = vmul.f32 %v26, %v26
  %v225 = vmul.f32 %v27, %v27
  %v226 = vmul.f32 %v28, %v28
  %v227 = vmul.f32 %v29, %v29
  %v228 = vmul.f32 %v30, %v30
  %v229 = vmul.f32 %v31, %v31
  %v230 = vmul.f32 %v32, %v32
  %v231 = vmul.f32 %v33, %v33
  %v232 = vmul.f32 %v34, %v34
  %v233 = vmul.f32 %v35, %v35
  %v234 = vmul.f32 %v36, %v36
  %v235 = vmul.f32 %v37, %v37
  %v236 = vmul.f32 %v38, %v38
  %v237 = vmul.f32 %v39, %v39
  %v238 = vmul.f32 %v40, %v40
  %v239 = vmul.f32 %v41, %v41
  %v240 = vmul.f32 %v42, %v42
  %v241 = vmul.f32 %v43, %v43
  %v242 = vmul.f32 %v44, %v44
  %v243 = vmul.f32 %v45, %v45
  %v244 = vmul.f32 %v46, %v46
  %v245 = vmul.f32 %v47, %v47
  %v246 = vmul.f32 %v48, %v48
  %v247 = vmul.f32 %v49, %v49
  %v248 = vmul.f32 %v50, %v50
  %v249 = vmul.f32 %v51, %v51
  %v250 = vmul.f32 %v52, %v52
  %v251 = vmul.f32 %v53, %v53
  %v252 = vmul.f32 %v54, %v54
  %v253 = vmul.f32 %v55, %v55
  %v254 = vmul.f32 %v56, %v56
  %v255 = vmul.f32 %v57, %v57
  %v256 = vmul.f32 %v58, %v58
  %v257 = vmul.f32 %v59, %v59
  %v258 = vmul.f32 %v60, %v60
  %v259 = vmul.f32 %v61, %v61
  %v260 = vmul.f32 %v62, %v62
  %v261 = vmul.f32 %v63, %v63
  %v262 = vmul.f32 %v64, %v64
  %v263 = vmul.f32 %v65, %v65
  %v264 = vmul.f32 %v66, %v66
  %v265 = vmul.f32 %v67, %v67
  %v266 = vmul.f32 %v68, %v68
  %v267 = vmul.f32 %v69, %v69
  %v268 = vmul.f32 %v70, %v70
  %v269 = vmul.f32 %v71, %v71
  %v270 = vmul.f32 %v72, %v72
  %v271 = vmul.f32 %v73, %v73
  %v272 = vmul.f32 %v74, %v74
  %v273 = vmul.f32 %v75, %v75
  %v274 = vmul.f32 %v76, %v76
  %v275 = vmul.f32 %v77, %v77
  %v276 = vmul.f32 %v78, %v78
  %v277 = vmul.f32 %v79, %v79
  %v278 = vmul.f32 %v80, %v80
  %v279 = vmul.f32 %v81, %v81
  %v280 = vmul.f32 %v82, %v82
  %v281 = vmul.f32 %v83, %v83
  %v282 = vmul.f32 %v84, %v84
  %v283 = vmul.f32 %v85, %v85
  %v284 = vmul.f32 %v86, %v86
  %v285 = vmul.f32 %v87, %v87
  %v286 = vmul.f32 %v88, %v88
  %v287 = vmul.f32 %v89, %v89
  %v288 = vsel %vm90, %v224, 0.0
  %v289 = vsel %vm90, %v225, 0.0
  %v290 = vadd.f32 %v288, %v289
  %v291 = vsel %vm90, %v226, 0.0
  %v292 = vadd.f32 %v290, %v291
  %v293 = vsel %vm90, %v227, 0.0
  %v294 = vadd.f32 %v292, %v293
  %v295 = vsel %vm90, %v228, 0.0
  %v296 = vadd.f32 %v294, %v295
  %v297 = vsel %vm90, %v229, 0.0
  %v298 = vadd.f32 %v296, %v297
  %v299 = vsel %vm90, %v230, 0.0
  %v300 = vadd.f32 %v298, %v299
  %v301 = vsel %vm90, %v231, 0.0
  %v302 = vadd.f32 %v300, %v301
  %v303 = vsel %vm90, %v232, 0.0
  %v304 = vadd.f32 %v302, %v303
  %v305 = vsel %vm90, %v233, 0.0
  %v306 = vadd.f32 %v304, %v305
  %v307 = vsel %vm90, %v234, 0.0
  %v308 = vadd.f32 %v306, %v307
  %v309 = vsel %vm90, %v235, 0.0
  %v310 = vadd.f32 %v308, %v309
  %v311 = vsel %vm90, %v236, 0.0
  %v312 = vadd.f32 %v310, %v311
  %v313 = vsel %vm90, %v237, 0.0
  %v314 = vadd.f32 %v312, %v313
  %v315 = vsel %vm90, %v238, 0.0
  %v316 = vadd.f32 %v314, %v315
  %v317 = vsel %vm90, %v239, 0.0
  %v318 = vadd.f32 %v316, %v317
  %v319 = vsel %vm90, %v240, 0.0
  %v320 = vadd.f32 %v318, %v319
  %v321 = vsel %vm90, %v241, 0.0
  %v322 = vadd.f32 %v320, %v321
  %v323 = vsel %vm90, %v242, 0.0
  %v324 = vadd.f32 %v322, %v323
  %v325 = vsel %vm90, %v243, 0.0
  %v326 = vadd.f32 %v324, %v325
  %v327 = vsel %vm90, %v244, 0.0
  %v328 = vadd.f32 %v326, %v327
  %v329 = vsel %vm90, %v245, 0.0
  %v330 = vadd.f32 %v328, %v329
  %v331 = vsel %vm90, %v246, 0.0
  %v332 = vadd.f32 %v330, %v331
  %v333 = vsel %vm90, %v247, 0.0
  %v334 = vadd.f32 %v332, %v333
  %v335 = vsel %vm90, %v248, 0.0
  %v336 = vadd.f32 %v334, %v335
  %v337 = vsel %vm90, %v249, 0.0
  %v338 = vadd.f32 %v336, %v337
  %v339 = vsel %vm90, %v250, 0.0
  %v340 = vadd.f32 %v338, %v339
  %v341 = vsel %vm90, %v251, 0.0
  %v342 = vadd.f32 %v340, %v341
  %v343 = vsel %vm90, %v252, 0.0
  %v344 = vadd.f32 %v342, %v343
  %v345 = vsel %vm90, %v253, 0.0
  %v346 = vadd.f32 %v344, %v345
  %v347 = vsel %vm90, %v254, 0.0
  %v348 = vadd.f32 %v346, %v347
  %v349 = vsel %vm90, %v255, 0.0
  %v350 = vadd.f32 %v348, %v349
  %v351 = vsel %vm90, %v256, 0.0
  %v352 = vadd.f32 %v350, %v351
  %v353 = vsel %vm90, %v257, 0.0
  %v354 = vadd.f32 %v352, %v353
  %v355 = vsel %vm90, %v258, 0.0
  %v356 = vadd.f32 %v354, %v355
  %v357 = vsel %vm90, %v259, 0.0
  %v358 = vadd.f32 %v356, %v357
  %v359 = vsel %vm90, %v260, 0.0
  %v360 = vadd.f32 %v358, %v359
  %v361 = vsel %vm90, %v261, 0.0
  %v362 = vadd.f32 %v360, %v361
  %v363 = vsel %vm90, %v262, 0.0
  %v364 = vadd.f32 %v362, %v363
  %v365 = vsel %vm90, %v263, 0.0
  %v366 = vadd.f32 %v364, %v365
  %v367 = vsel %vm90, %v264, 0.0
  %v368 = vadd.f32 %v366, %v367
  %v369 = vsel %vm90, %v265, 0.0
  %v370 = vadd.f32 %v368, %v369
  %v371 = vsel %vm90, %v266, 0.0
  %v372 = vadd.f32 %v370, %v371
  %v373 = vsel %vm90, %v267, 0.0
  %v374 = vadd.f32 %v372, %v373
  %v375 = vsel %vm90, %v268, 0.0
  %v376 = vadd.f32 %v374, %v375
  %v377 = vsel %vm90, %v269, 0.0
  %v378 = vadd.f32 %v376, %v377
  %v379 = vsel %vm90, %v270, 0.0
  %v380 = vadd.f32 %v378, %v379
  %v381 = vsel %vm90, %v271, 0.0
  %v382 = vadd.f32 %v380, %v381
  %v383 = vsel %vm90, %v272, 0.0
  %v384 = vadd.f32 %v382, %v383
  %v385 = vsel %vm90, %v273, 0.0
  %v386 = vadd.f32 %v384, %v385
  %v387 = vsel %vm90, %v274, 0.0
  %v388 = vadd.f32 %v386, %v387
  %v389 = vsel %vm90, %v275, 0.0
  %v390 = vadd.f32 %v388, %v389
  %v391 = vsel %vm90, %v276, 0.0
  %v392 = vadd.f32 %v390, %v391
  %v393 = vsel %vm90, %v277, 0.0
  %v394 = vadd.f32 %v392, %v393
  %v395 = vsel %vm90, %v278, 0.0
  %v396 = vadd.f32 %v394, %v395
  %v397 = vsel %vm90, %v279, 0.0
  %v398 = vadd.f32 %v396, %v397
  %v399 = vsel %vm90, %v280, 0.0
  %v400 = vadd.f32 %v398, %v399
  %v401 = vsel %vm90, %v281, 0.0
  %v402 = vadd.f32 %v400, %v401
  %v403 = vsel %vm90, %v282, 0.0
  %v404 = vadd.f32 %v402, %v403
  %v405 = vsel %vm90, %v283, 0.0
  %v406 = vadd.f32 %v404, %v405
  %v407 = vsel %vm90, %v284, 0.0
  %v408 = vadd.f32 %v406, %v407
  %v409 = vsel %vm90, %v285, 0.0
  %v410 = vadd.f32 %v408, %v409
  %v411 = vsel %vm90, %v286, 0.0
  %v412 = vadd.f32 %v410, %v411
  %v413 = vsel %vm90, %v287, 0.0
  %v414 = vadd.f32 %v412, %v413
  %v415 = vrot.slane %v414, 4
  %v416 = vadd.f32 %v414, %v415
  %v417 = vrot.slane %v416, 2
  %v418 = vadd.f32 %v416, %v417
  %v419 = vrot.slane %v418, 1
  %v420 = vadd.f32 %v418, %v419
  %v421 = vmul.f32 %v223, 0.001953125
  %v422 = vmul.f32 %v420, 0.001953125
  %v423 = vmul.f32 %v421, %v421
  %v424 = vsub.f32 %v422, %v423
  %v425 = vld [vmem:[%s1] sm:$0x1]
  %v426 = vadd.f32 %v424, 1e-05
  %v427 = vrsqrt.pop %v426
  %v428 = vmul.f32 %v427, %v426
  %v429 = vmul.f32 %v428, %v427
  %v430 = vmul.f32 0.5, %v429
  %v431 = vsub.f32 1.5, %v430
  %v432 = vmul.f32 %v427, %v431
  %vm433 = vweird.f32 %v426
  %vm434 = vweird.f32 %v427
  %vm435 = vmor %vm433, %vm434
  %v436 = vsel %vm435, %v427, %v432
  %v437 = vmul.f32 %v425, %v436
  %v438 = vld [vmem:[%s2] sm:$0x1]
  %v439 = vmul.f32 %v421, %v437
  %v440 = vsub.f32 %v438, %v439
  %v442 = vperm.slane %v437, 0
  %v444 = vmul.f32 %v26, %v442
  %v445 = vmul.f32 %v27, %v442
  %v446 = vmul.f32 %v28, %v442
  %v447 = vmul.f32 %v29, %v442
  %v448 = vmul.f32 %v30, %v442
  %v449 = vmul.f32 %v31, %v442
  %v450 = vmul.f32 %v32, %v442
  %v451 = vmul.f32 %v33, %v442
  %v452 = vmul.f32 %v34, %v442
  %v453 = vmul.f32 %v35, %v442
  %v454 = vmul.f32 %v36, %v442
  %v455 = vmul.f32 %v37, %v442
  %v456 = vmul.f32 %v38, %v442
  %v457 = vmul.f32 %v39, %v442
  %v458 = vmul.f32 %v40, %v442
  %v459 = vmul.f32 %v41, %v442
  %v460 = vmul.f32 %v42, %v442
  %v461 = vmul.f32 %v43, %v442
  %v462 = vmul.f32 %v44, %v442
  %v463 = vmul.f32 %v45, %v442
  %v464 = vmul.f32 %v46, %v442
  %v465 = vmul.f32 %v47, %v442
  %v466 = vmul.f32 %v48, %v442
  %v467 = vmul.f32 %v49, %v442
  %v468 = vmul.f32 %v50, %v442
  %v469 = vmul.f32 %v51, %v442
  %v470 = vmul.f32 %v52, %v442
  %v471 = vmul.f32 %v53, %v442
  %v472 = vmul.f32 %v54, %v442
  %v473 = vmul.f32 %v55, %v442
  %v474 = vmul.f32 %v56, %v442
  %v475 = vmul.f32 %v57, %v442
  %v476 = vmul.f32 %v58, %v442
  %v477 = vmul.f32 %v59, %v442
  %v478 = vmul.f32 %v60, %v442
  %v479 = vmul.f32 %v61, %v442
  %v480 = vmul.f32 %v62, %v442
  %v481 = vmul.f32 %v63, %v442
  %v482 = vmul.f32 %v64, %v442
  %v483 = vmul.f32 %v65, %v442
  %v484 = vmul.f32 %v66, %v442
  %v485 = vmul.f32 %v67, %v442
  %v486 = vmul.f32 %v68, %v442
  %v487 = vmul.f32 %v69, %v442
  %v488 = vmul.f32 %v70, %v442
  %v489 = vmul.f32 %v71, %v442
  %v490 = vmul.f32 %v72, %v442
  %v491 = vmul.f32 %v73, %v442
  %v492 = vmul.f32 %v74, %v442
  %v493 = vmul.f32 %v75, %v442
  %v494 = vmul.f32 %v76, %v442
  %v495 = vmul.f32 %v77, %v442
  %v496 = vmul.f32 %v78, %v442
  %v497 = vmul.f32 %v79, %v442
  %v498 = vmul.f32 %v80, %v442
  %v499 = vmul.f32 %v81, %v442
  %v500 = vmul.f32 %v82, %v442
  %v501 = vmul.f32 %v83, %v442
  %v502 = vmul.f32 %v84, %v442
  %v503 = vmul.f32 %v85, %v442
  %v504 = vmul.f32 %v86, %v442
  %v505 = vmul.f32 %v87, %v442
  %v506 = vmul.f32 %v88, %v442
  %v507 = vmul.f32 %v89, %v442
  %v509 = vperm.slane %v440, 0
  %v511 = vadd.f32 %v444, %v509
  %v512 = vadd.f32 %v445, %v509
  %v513 = vadd.f32 %v446, %v509
  %v514 = vadd.f32 %v447, %v509
  %v515 = vadd.f32 %v448, %v509
  %v516 = vadd.f32 %v449, %v509
  %v517 = vadd.f32 %v450, %v509
  %v518 = vadd.f32 %v451, %v509
  %v519 = vadd.f32 %v452, %v509
  %v520 = vadd.f32 %v453, %v509
  %v521 = vadd.f32 %v454, %v509
  %v522 = vadd.f32 %v455, %v509
  %v523 = vadd.f32 %v456, %v509
  %v524 = vadd.f32 %v457, %v509
  %v525 = vadd.f32 %v458, %v509
  %v526 = vadd.f32 %v459, %v509
  %v527 = vadd.f32 %v460, %v509
  %v528 = vadd.f32 %v461, %v509
  %v529 = vadd.f32 %v462, %v509
  %v530 = vadd.f32 %v463, %v509
  %v531 = vadd.f32 %v464, %v509
  %v532 = vadd.f32 %v465, %v509
  %v533 = vadd.f32 %v466, %v509
  %v534 = vadd.f32 %v467, %v509
  %v535 = vadd.f32 %v468, %v509
  %v536 = vadd.f32 %v469, %v509
  %v537 = vadd.f32 %v470, %v509
  %v538 = vadd.f32 %v471, %v509
  %v539 = vadd.f32 %v472, %v509
  %v540 = vadd.f32 %v473, %v509
  %v541 = vadd.f32 %v474, %v509
  %v542 = vadd.f32 %v475, %v509
  %v543 = vadd.f32 %v476, %v509
  %v544 = vadd.f32 %v477, %v509
  %v545 = vadd.f32 %v478, %v509
  %v546 = vadd.f32 %v479, %v509
  %v547 = vadd.f32 %v480, %v509
  %v548 = vadd.f32 %v481, %v509
  %v549 = vadd.f32 %v482, %v509
  %v550 = vadd.f32 %v483, %v509
  %v551 = vadd.f32 %v484, %v509
  %v552 = vadd.f32 %v485, %v509
  %v553 = vadd.f32 %v486, %v509
  %v554 = vadd.f32 %v487, %v509
  %v555 = vadd.f32 %v488, %v509
  %v556 = vadd.f32 %v489, %v509
  %v557 = vadd.f32 %v490, %v509
  %v558 = vadd.f32 %v491, %v509
  %v559 = vadd.f32 %v492, %v509
  %v560 = vadd.f32 %v493, %v509
  %v561 = vadd.f32 %v494, %v509
  %v562 = vadd.f32 %v495, %v509
  %v563 = vadd.f32 %v496, %v509
  %v564 = vadd.f32 %v497, %v509
  %v565 = vadd.f32 %v498, %v509
  %v566 = vadd.f32 %v499, %v509
  %v567 = vadd.f32 %v500, %v509
  %v568 = vadd.f32 %v501, %v509
  %v569 = vadd.f32 %v502, %v509
  %v570 = vadd.f32 %v503, %v509
  %v571 = vadd.f32 %v504, %v509
  %v572 = vadd.f32 %v505, %v509
  %v573 = vadd.f32 %v506, %v509
  %v574 = vadd.f32 %v507, %v509
  %v575 = vmax.f32 %v511, 0.0
  %v576 = vmax.f32 %v512, 0.0
  %v577 = vmax.f32 %v513, 0.0
  %v578 = vmax.f32 %v514, 0.0
  %v579 = vmax.f32 %v515, 0.0
  %v580 = vmax.f32 %v516, 0.0
  %v581 = vmax.f32 %v517, 0.0
  %v582 = vmax.f32 %v518, 0.0
  %v583 = vmax.f32 %v519, 0.0
  %v584 = vmax.f32 %v520, 0.0
  %v585 = vmax.f32 %v521, 0.0
  %v586 = vmax.f32 %v522, 0.0
  %v587 = vmax.f32 %v523, 0.0
  %v588 = vmax.f32 %v524, 0.0
  %v589 = vmax.f32 %v525, 0.0
  %v590 = vmax.f32 %v526, 0.0
  %v591 = vmax.f32 %v527, 0.0
  %v592 = vmax.f32 %v528, 0.0
  %v593 = vmax.f32 %v529, 0.0
  %v594 = vmax.f32 %v530, 0.0
  %v595 = vmax.f32 %v531, 0.0
  %v596 = vmax.f32 %v532, 0.0
  %v597 = vmax.f32 %v533, 0.0
  %v598 = vmax.f32 %v534, 0.0
  %v599 = vmax.f32 %v535, 0.0
  %v600 = vmax.f32 %v536, 0.0
  %v601 = vmax.f32 %v537, 0.0
  %v602 = vmax.f32 %v538, 0.0
  %v603 = vmax.f32 %v539, 0.0
  %v604 = vmax.f32 %v540, 0.0
  %v605 = vmax.f32 %v541, 0.0
  %v606 = vmax.f32 %v542, 0.0
  %v607 = vmax.f32 %v543, 0.0
  %v608 = vmax.f32 %v544, 0.0
  %v609 = vmax.f32 %v545, 0.0
  %v610 = vmax.f32 %v546, 0.0
  %v611 = vmax.f32 %v547, 0.0
  %v612 = vmax.f32 %v548, 0.0
  %v613 = vmax.f32 %v549, 0.0
  %v614 = vmax.f32 %v550, 0.0
  %v615 = vmax.f32 %v551, 0.0
  %v616 = vmax.f32 %v552, 0.0
  %v617 = vmax.f32 %v553, 0.0
  %v618 = vmax.f32 %v554, 0.0
  %v619 = vmax.f32 %v555, 0.0
  %v620 = vmax.f32 %v556, 0.0
  %v621 = vmax.f32 %v557, 0.0
  %v622 = vmax.f32 %v558, 0.0
  %v623 = vmax.f32 %v559, 0.0
  %v624 = vmax.f32 %v560, 0.0
  %v625 = vmax.f32 %v561, 0.0
  %v626 = vmax.f32 %v562, 0.0
  %v627 = vmax.f32 %v563, 0.0
  %v628 = vmax.f32 %v564, 0.0
  %v629 = vmax.f32 %v565, 0.0
  %v630 = vmax.f32 %v566, 0.0
  %v631 = vmax.f32 %v567, 0.0
  %v632 = vmax.f32 %v568, 0.0
  %v633 = vmax.f32 %v569, 0.0
  %v634 = vmax.f32 %v570, 0.0
  %v635 = vmax.f32 %v571, 0.0
  %v636 = vmax.f32 %v572, 0.0
  %v637 = vmax.f32 %v573, 0.0
  %v638 = vmax.f32 %v574, 0.0
  %v639 = vld [vmem:[%s3] sm:$0xf]
  %v641 = vsel %vm90, %v575, 0
  %v644 = vsel %vm90, %v576, 0
  %v647 = vsel %vm90, %v577, 0
  %v650 = vsel %vm90, %v578, 0
  %v653 = vsel %vm90, %v579, 0
  %v656 = vsel %vm90, %v580, 0
  %v659 = vsel %vm90, %v581, 0
  %v662 = vsel %vm90, %v582, 0
  %v665 = vsel %vm90, %v583, 0
  %v668 = vsel %vm90, %v584, 0
  %v671 = vsel %vm90, %v585, 0
  %v674 = vsel %vm90, %v586, 0
  %v677 = vsel %vm90, %v587, 0
  %v680 = vsel %vm90, %v588, 0
  %v683 = vsel %vm90, %v589, 0
  %v686 = vsel %vm90, %v590, 0
  %v689 = vsel %vm90, %v591, 0
  %v692 = vsel %vm90, %v592, 0
  %v695 = vsel %vm90, %v593, 0
  %v698 = vsel %vm90, %v594, 0
  %v701 = vsel %vm90, %v595, 0
  %v704 = vsel %vm90, %v596, 0
  %v707 = vsel %vm90, %v597, 0
  %v710 = vsel %vm90, %v598, 0
  %v713 = vsel %vm90, %v599, 0
  %v716 = vsel %vm90, %v600, 0
  %v719 = vsel %vm90, %v601, 0
  %v722 = vsel %vm90, %v602, 0
  %v725 = vsel %vm90, %v603, 0
  %v728 = vsel %vm90, %v604, 0
  %v731 = vsel %vm90, %v605, 0
  %v734 = vsel %vm90, %v606, 0
  %v737 = vsel %vm90, %v607, 0
  %v740 = vsel %vm90, %v608, 0
  %v743 = vsel %vm90, %v609, 0
  %v746 = vsel %vm90, %v610, 0
  %v749 = vsel %vm90, %v611, 0
  %v752 = vsel %vm90, %v612, 0
  %v755 = vsel %vm90, %v613, 0
  %v758 = vsel %vm90, %v614, 0
  %v761 = vsel %vm90, %v615, 0
  %v764 = vsel %vm90, %v616, 0
  %v767 = vsel %vm90, %v617, 0
  %v770 = vsel %vm90, %v618, 0
  %v773 = vsel %vm90, %v619, 0
  %v776 = vsel %vm90, %v620, 0
  %v779 = vsel %vm90, %v621, 0
  %v782 = vsel %vm90, %v622, 0
  %v785 = vsel %vm90, %v623, 0
  %v788 = vsel %vm90, %v624, 0
  %v791 = vsel %vm90, %v625, 0
  %v794 = vsel %vm90, %v626, 0
  %v797 = vsel %vm90, %v627, 0
  %v800 = vsel %vm90, %v628, 0
  %v803 = vsel %vm90, %v629, 0
  %v806 = vsel %vm90, %v630, 0
  %v809 = vsel %vm90, %v631, 0
  %v812 = vsel %vm90, %v632, 0
  %v815 = vsel %vm90, %v633, 0
  %v818 = vsel %vm90, %v634, 0
  %v821 = vsel %vm90, %v635, 0
  %v824 = vsel %vm90, %v636, 0
  %v827 = vsel %vm90, %v637, 0
  %v830 = vsel %vm90, %v638, 0
  %vm832 = vcmask 1043456
  %v834 = vsel %vm832, %v639, 0
  %836 = vmatpush.msra.mxu0 0.0
  %837 = vmatpush.msra.mxu0 0.0
  %838 = vmatpush.msra.mxu0 0.0
  %839 = vmatpush.msra.mxu0 0.0
  %840 = vmatpush.msra.mxu0 0.0
  %841 = vmatpush.msra.mxu0 0.0
  %842 = vmatpush.msra.mxu0 0.0
  %843 = vmatpush.msra.mxu0 0.0
  %844 = vmatpush.msra.mxu0 0.0
  %845 = vmatpush.msra.mxu0 0.0
  %846 = vmatpush.msra.mxu0 0.0
  %847 = vmatpush.msra.mxu0 0.0
  %848 = vmatpush.msra.mxu0 0.0
  %849 = vmatpush.msra.mxu0 0.0
  %850 = vmatpush.msra.mxu0 0.0
  %851 = vmatpush.msra.mxu0 %v834
  %852 = vmatmul.f32.gmra.mxu0 %v641
  %v853 = vpop.f32.mrf.mxu0
  %v854 = vadd.f32 0.0, %v853
  %855 = vmatmul.f32.gmra.mxu0 %v644
  %v856 = vpop.f32.mrf.mxu0
  %v857 = vadd.f32 0.0, %v856
  %858 = vmatmul.f32.gmra.mxu0 %v647
  %v859 = vpop.f32.mrf.mxu0
  %v860 = vadd.f32 0.0, %v859
  %861 = vmatmul.f32.gmra.mxu0 %v650
  %v862 = vpop.f32.mrf.mxu0
  %v863 = vadd.f32 0.0, %v862
  %864 = vmatmul.f32.gmra.mxu0 %v653
  %v865 = vpop.f32.mrf.mxu0
  %v866 = vadd.f32 0.0, %v865
  %867 = vmatmul.f32.gmra.mxu0 %v656
  %v868 = vpop.f32.mrf.mxu0
  %v869 = vadd.f32 0.0, %v868
  %870 = vmatmul.f32.gmra.mxu0 %v659
  %v871 = vpop.f32.mrf.mxu0
  %v872 = vadd.f32 0.0, %v871
  %873 = vmatmul.f32.gmra.mxu0 %v662
  %v874 = vpop.f32.mrf.mxu0
  %v875 = vadd.f32 0.0, %v874
  %876 = vmatmul.f32.gmra.mxu0 %v665
  %v877 = vpop.f32.mrf.mxu0
  %v878 = vadd.f32 0.0, %v877
  %879 = vmatmul.f32.gmra.mxu0 %v668
  %v880 = vpop.f32.mrf.mxu0
  %v881 = vadd.f32 0.0, %v880
  %882 = vmatmul.f32.gmra.mxu0 %v671
  %v883 = vpop.f32.mrf.mxu0
  %v884 = vadd.f32 0.0, %v883
  %885 = vmatmul.f32.gmra.mxu0 %v674
  %v886 = vpop.f32.mrf.mxu0
  %v887 = vadd.f32 0.0, %v886
  %888 = vmatmul.f32.gmra.mxu0 %v677
  %v889 = vpop.f32.mrf.mxu0
  %v890 = vadd.f32 0.0, %v889
  %891 = vmatmul.f32.gmra.mxu0 %v680
  %v892 = vpop.f32.mrf.mxu0
  %v893 = vadd.f32 0.0, %v892
  %894 = vmatmul.f32.gmra.mxu0 %v683
  %v895 = vpop.f32.mrf.mxu0
  %v896 = vadd.f32 0.0, %v895
  %897 = vmatmul.f32.gmra.mxu0 %v686
  %v898 = vpop.f32.mrf.mxu0
  %v899 = vadd.f32 0.0, %v898
  %900 = vmatmul.f32.gmra.mxu0 %v689
  %v901 = vpop.f32.mrf.mxu0
  %v902 = vadd.f32 0.0, %v901
  %903 = vmatmul.f32.gmra.mxu0 %v692
  %v904 = vpop.f32.mrf.mxu0
  %v905 = vadd.f32 0.0, %v904
  %906 = vmatmul.f32.gmra.mxu0 %v695
  %v907 = vpop.f32.mrf.mxu0
  %v908 = vadd.f32 0.0, %v907
  %909 = vmatmul.f32.gmra.mxu0 %v698
  %v910 = vpop.f32.mrf.mxu0
  %v911 = vadd.f32 0.0, %v910
  %912 = vmatmul.f32.gmra.mxu0 %v701
  %v913 = vpop.f32.mrf.mxu0
  %v914 = vadd.f32 0.0, %v913
  %915 = vmatmul.f32.gmra.mxu0 %v704
  %v916 = vpop.f32.mrf.mxu0
  %v917 = vadd.f32 0.0, %v916
  %918 = vmatmul.f32.gmra.mxu0 %v707
  %v919 = vpop.f32.mrf.mxu0
  %v920 = vadd.f32 0.0, %v919
  %921 = vmatmul.f32.gmra.mxu0 %v710
  %v922 = vpop.f32.mrf.mxu0
  %v923 = vadd.f32 0.0, %v922
  %924 = vmatmul.f32.gmra.mxu0 %v713
  %v925 = vpop.f32.mrf.mxu0
  %v926 = vadd.f32 0.0, %v925
  %927 = vmatmul.f32.gmra.mxu0 %v716
  %v928 = vpop.f32.mrf.mxu0
  %v929 = vadd.f32 0.0, %v928
  %930 = vmatmul.f32.gmra.mxu0 %v719
  %v931 = vpop.f32.mrf.mxu0
  %v932 = vadd.f32 0.0, %v931
  %933 = vmatmul.f32.gmra.mxu0 %v722
  %v934 = vpop.f32.mrf.mxu0
  %v935 = vadd.f32 0.0, %v934
  %936 = vmatmul.f32.gmra.mxu0 %v725
  %v937 = vpop.f32.mrf.mxu0
  %v938 = vadd.f32 0.0, %v937
  %939 = vmatmul.f32.gmra.mxu0 %v728
  %v940 = vpop.f32.mrf.mxu0
  %v941 = vadd.f32 0.0, %v940
  %942 = vmatmul.f32.gmra.mxu0 %v731
  %v943 = vpop.f32.mrf.mxu0
  %v944 = vadd.f32 0.0, %v943
  %945 = vmatmul.f32.gmra.mxu0 %v734
  %v946 = vpop.f32.mrf.mxu0
  %v947 = vadd.f32 0.0, %v946
  %948 = vmatmul.f32.gmra.mxu0 %v737
  %v949 = vpop.f32.mrf.mxu0
  %v950 = vadd.f32 0.0, %v949
  %951 = vmatmul.f32.gmra.mxu0 %v740
  %v952 = vpop.f32.mrf.mxu0
  %v953 = vadd.f32 0.0, %v952
  %954 = vmatmul.f32.gmra.mxu0 %v743
  %v955 = vpop.f32.mrf.mxu0
  %v956 = vadd.f32 0.0, %v955
  %957 = vmatmul.f32.gmra.mxu0 %v746
  %v958 = vpop.f32.mrf.mxu0
  %v959 = vadd.f32 0.0, %v958
  %960 = vmatmul.f32.gmra.mxu0 %v749
  %v961 = vpop.f32.mrf.mxu0
  %v962 = vadd.f32 0.0, %v961
  %963 = vmatmul.f32.gmra.mxu0 %v752
  %v964 = vpop.f32.mrf.mxu0
  %v965 = vadd.f32 0.0, %v964
  %966 = vmatmul.f32.gmra.mxu0 %v755
  %v967 = vpop.f32.mrf.mxu0
  %v968 = vadd.f32 0.0, %v967
  %969 = vmatmul.f32.gmra.mxu0 %v758
  %v970 = vpop.f32.mrf.mxu0
  %v971 = vadd.f32 0.0, %v970
  %972 = vmatmul.f32.gmra.mxu0 %v761
  %v973 = vpop.f32.mrf.mxu0
  %v974 = vadd.f32 0.0, %v973
  %975 = vmatmul.f32.gmra.mxu0 %v764
  %v976 = vpop.f32.mrf.mxu0
  %v977 = vadd.f32 0.0, %v976
  %978 = vmatmul.f32.gmra.mxu0 %v767
  %v979 = vpop.f32.mrf.mxu0
  %v980 = vadd.f32 0.0, %v979
  %981 = vmatmul.f32.gmra.mxu0 %v770
  %v982 = vpop.f32.mrf.mxu0
  %v983 = vadd.f32 0.0, %v982
  %984 = vmatmul.f32.gmra.mxu0 %v773
  %v985 = vpop.f32.mrf.mxu0
  %v986 = vadd.f32 0.0, %v985
  %987 = vmatmul.f32.gmra.mxu0 %v776
  %v988 = vpop.f32.mrf.mxu0
  %v989 = vadd.f32 0.0, %v988
  %990 = vmatmul.f32.gmra.mxu0 %v779
  %v991 = vpop.f32.mrf.mxu0
  %v992 = vadd.f32 0.0, %v991
  %993 = vmatmul.f32.gmra.mxu0 %v782
  %v994 = vpop.f32.mrf.mxu0
  %v995 = vadd.f32 0.0, %v994
  %996 = vmatmul.f32.gmra.mxu0 %v785
  %v997 = vpop.f32.mrf.mxu0
  %v998 = vadd.f32 0.0, %v997
  %999 = vmatmul.f32.gmra.mxu0 %v788
  %v1000 = vpop.f32.mrf.mxu0
  %v1001 = vadd.f32 0.0, %v1000
  %1002 = vmatmul.f32.gmra.mxu0 %v791
  %v1003 = vpop.f32.mrf.mxu0
  %v1004 = vadd.f32 0.0, %v1003
  %1005 = vmatmul.f32.gmra.mxu0 %v794
  %v1006 = vpop.f32.mrf.mxu0
  %v1007 = vadd.f32 0.0, %v1006
  %1008 = vmatmul.f32.gmra.mxu0 %v797
  %v1009 = vpop.f32.mrf.mxu0
  %v1010 = vadd.f32 0.0, %v1009
  %1011 = vmatmul.f32.gmra.mxu0 %v800
  %v1012 = vpop.f32.mrf.mxu0
  %v1013 = vadd.f32 0.0, %v1012
  %1014 = vmatmul.f32.gmra.mxu0 %v803
  %v1015 = vpop.f32.mrf.mxu0
  %v1016 = vadd.f32 0.0, %v1015
  %1017 = vmatmul.f32.gmra.mxu0 %v806
  %v1018 = vpop.f32.mrf.mxu0
  %v1019 = vadd.f32 0.0, %v1018
  %1020 = vmatmul.f32.gmra.mxu0 %v809
  %v1021 = vpop.f32.mrf.mxu0
  %v1022 = vadd.f32 0.0, %v1021
  %1023 = vmatmul.f32.gmra.mxu0 %v812
  %v1024 = vpop.f32.mrf.mxu0
  %v1025 = vadd.f32 0.0, %v1024
  %1026 = vmatmul.f32.gmra.mxu0 %v815
  %v1027 = vpop.f32.mrf.mxu0
  %v1028 = vadd.f32 0.0, %v1027
  %1029 = vmatmul.f32.gmra.mxu0 %v818
  %v1030 = vpop.f32.mrf.mxu0
  %v1031 = vadd.f32 0.0, %v1030
  %1032 = vmatmul.f32.gmra.mxu0 %v821
  %v1033 = vpop.f32.mrf.mxu0
  %v1034 = vadd.f32 0.0, %v1033
  %1035 = vmatmul.f32.gmra.mxu0 %v824
  %v1036 = vpop.f32.mrf.mxu0
  %v1037 = vadd.f32 0.0, %v1036
  %1038 = vmatmul.f32.gmra.mxu0 %v827
  %v1039 = vpop.f32.mrf.mxu0
  %v1040 = vadd.f32 0.0, %v1039
  %1041 = vmatmul.f32.gmra.mxu0 %v830
  %v1042 = vpop.f32.mrf.mxu0
  %v1043 = vadd.f32 0.0, %v1042
  %1044 = vdwg.mxu0
  %vm1045 = vcmask 130048
  %v1046 = vsel %vm1045, %v854, 0.0
  %v1047 = vsel %vm1045, %v857, 0.0
  %v1048 = vadd.f32 %v1046, %v1047
  %v1049 = vsel %vm1045, %v860, 0.0
  %v1050 = vadd.f32 %v1048, %v1049
  %v1051 = vsel %vm1045, %v863, 0.0
  %v1052 = vadd.f32 %v1050, %v1051
  %v1053 = vsel %vm1045, %v866, 0.0
  %v1054 = vadd.f32 %v1052, %v1053
  %v1055 = vsel %vm1045, %v869, 0.0
  %v1056 = vadd.f32 %v1054, %v1055
  %v1057 = vsel %vm1045, %v872, 0.0
  %v1058 = vadd.f32 %v1056, %v1057
  %v1059 = vsel %vm1045, %v875, 0.0
  %v1060 = vadd.f32 %v1058, %v1059
  %v1061 = vsel %vm1045, %v878, 0.0
  %v1062 = vadd.f32 %v1060, %v1061
  %v1063 = vsel %vm1045, %v881, 0.0
  %v1064 = vadd.f32 %v1062, %v1063
  %v1065 = vsel %vm1045, %v884, 0.0
  %v1066 = vadd.f32 %v1064, %v1065
  %v1067 = vsel %vm1045, %v887, 0.0
  %v1068 = vadd.f32 %v1066, %v1067
  %v1069 = vsel %vm1045, %v890, 0.0
  %v1070 = vadd.f32 %v1068, %v1069
  %v1071 = vsel %vm1045, %v893, 0.0
  %v1072 = vadd.f32 %v1070, %v1071
  %v1073 = vsel %vm1045, %v896, 0.0
  %v1074 = vadd.f32 %v1072, %v1073
  %v1075 = vsel %vm1045, %v899, 0.0
  %v1076 = vadd.f32 %v1074, %v1075
  %v1077 = vsel %vm1045, %v902, 0.0
  %v1078 = vadd.f32 %v1076, %v1077
  %v1079 = vsel %vm1045, %v905, 0.0
  %v1080 = vadd.f32 %v1078, %v1079
  %v1081 = vsel %vm1045, %v908, 0.0
  %v1082 = vadd.f32 %v1080, %v1081
  %v1083 = vsel %vm1045, %v911, 0.0
  %v1084 = vadd.f32 %v1082, %v1083
  %v1085 = vsel %vm1045, %v914, 0.0
  %v1086 = vadd.f32 %v1084, %v1085
  %v1087 = vsel %vm1045, %v917, 0.0
  %v1088 = vadd.f32 %v1086, %v1087
  %v1089 = vsel %vm1045, %v920, 0.0
  %v1090 = vadd.f32 %v1088, %v1089
  %v1091 = vsel %vm1045, %v923, 0.0
  %v1092 = vadd.f32 %v1090, %v1091
  %v1093 = vsel %vm1045, %v926, 0.0
  %v1094 = vadd.f32 %v1092, %v1093
  %v1095 = vsel %vm1045, %v929, 0.0
  %v1096 = vadd.f32 %v1094, %v1095
  %v1097 = vsel %vm1045, %v932, 0.0
  %v1098 = vadd.f32 %v1096, %v1097
  %v1099 = vsel %vm1045, %v935, 0.0
  %v1100 = vadd.f32 %v1098, %v1099
  %v1101 = vsel %vm1045, %v938, 0.0
  %v1102 = vadd.f32 %v1100, %v1101
  %v1103 = vsel %vm1045, %v941, 0.0
  %v1104 = vadd.f32 %v1102, %v1103
  %v1105 = vsel %vm1045, %v944, 0.0
  %v1106 = vadd.f32 %v1104, %v1105
  %v1107 = vsel %vm1045, %v947, 0.0
  %v1108 = vadd.f32 %v1106, %v1107
  %v1109 = vsel %vm1045, %v950, 0.0
  %v1110 = vadd.f32 %v1108, %v1109
  %v1111 = vsel %vm1045, %v953, 0.0
  %v1112 = vadd.f32 %v1110, %v1111
  %v1113 = vsel %vm1045, %v956, 0.0
  %v1114 = vadd.f32 %v1112, %v1113
  %v1115 = vsel %vm1045, %v959, 0.0
  %v1116 = vadd.f32 %v1114, %v1115
  %v1117 = vsel %vm1045, %v962, 0.0
  %v1118 = vadd.f32 %v1116, %v1117
  %v1119 = vsel %vm1045, %v965, 0.0
  %v1120 = vadd.f32 %v1118, %v1119
  %v1121 = vsel %vm1045, %v968, 0.0
  %v1122 = vadd.f32 %v1120, %v1121
  %v1123 = vsel %vm1045, %v971, 0.0
  %v1124 = vadd.f32 %v1122, %v1123
  %v1125 = vsel %vm1045, %v974, 0.0
  %v1126 = vadd.f32 %v1124, %v1125
  %v1127 = vsel %vm1045, %v977, 0.0
  %v1128 = vadd.f32 %v1126, %v1127
  %v1129 = vsel %vm1045, %v980, 0.0
  %v1130 = vadd.f32 %v1128, %v1129
  %v1131 = vsel %vm1045, %v983, 0.0
  %v1132 = vadd.f32 %v1130, %v1131
  %v1133 = vsel %vm1045, %v986, 0.0
  %v1134 = vadd.f32 %v1132, %v1133
  %v1135 = vsel %vm1045, %v989, 0.0
  %v1136 = vadd.f32 %v1134, %v1135
  %v1137 = vsel %vm1045, %v992, 0.0
  %v1138 = vadd.f32 %v1136, %v1137
  %v1139 = vsel %vm1045, %v995, 0.0
  %v1140 = vadd.f32 %v1138, %v1139
  %v1141 = vsel %vm1045, %v998, 0.0
  %v1142 = vadd.f32 %v1140, %v1141
  %v1143 = vsel %vm1045, %v1001, 0.0
  %v1144 = vadd.f32 %v1142, %v1143
  %v1145 = vsel %vm1045, %v1004, 0.0
  %v1146 = vadd.f32 %v1144, %v1145
  %v1147 = vsel %vm1045, %v1007, 0.0
  %v1148 = vadd.f32 %v1146, %v1147
  %v1149 = vsel %vm1045, %v1010, 0.0
  %v1150 = vadd.f32 %v1148, %v1149
  %v1151 = vsel %vm1045, %v1013, 0.0
  %v1152 = vadd.f32 %v1150, %v1151
  %v1153 = vsel %vm1045, %v1016, 0.0
  %v1154 = vadd.f32 %v1152, %v1153
  %v1155 = vsel %vm1045, %v1019, 0.0
  %v1156 = vadd.f32 %v1154, %v1155
  %v1157 = vsel %vm1045, %v1022, 0.0
  %v1158 = vadd.f32 %v1156, %v1157
  %v1159 = vsel %vm1045, %v1025, 0.0
  %v1160 = vadd.f32 %v1158, %v1159
  %v1161 = vsel %vm1045, %v1028, 0.0
  %v1162 = vadd.f32 %v1160, %v1161
  %v1163 = vsel %vm1045, %v1031, 0.0
  %v1164 = vadd.f32 %v1162, %v1163
  %v1165 = vsel %vm1045, %v1034, 0.0
  %v1166 = vadd.f32 %v1164, %v1165
  %v1167 = vsel %vm1045, %v1037, 0.0
  %v1168 = vadd.f32 %v1166, %v1167
  %v1169 = vsel %vm1045, %v1040, 0.0
  %v1170 = vadd.f32 %v1168, %v1169
  %v1171 = vsel %vm1045, %v1043, 0.0
  %v1172 = vadd.f32 %v1170, %v1171
  %v1173 = vrot.slane %v1172, 4
  %v1174 = vadd.f32 %v1172, %v1173
  %v1175 = vrot.slane %v1174, 2
  %v1176 = vadd.f32 %v1174, %v1175
  %v1177 = vrot.slane %v1176, 1
  %v1178 = vadd.f32 %v1176, %v1177
  %v1179 = vmul.f32 %v854, %v854
  %v1180 = vmul.f32 %v857, %v857
  %v1181 = vmul.f32 %v860, %v860
  %v1182 = vmul.f32 %v863, %v863
  %v1183 = vmul.f32 %v866, %v866
  %v1184 = vmul.f32 %v869, %v869
  %v1185 = vmul.f32 %v872, %v872
  %v1186 = vmul.f32 %v875, %v875
  %v1187 = vmul.f32 %v878, %v878
  %v1188 = vmul.f32 %v881, %v881
  %v1189 = vmul.f32 %v884, %v884
  %v1190 = vmul.f32 %v887, %v887
  %v1191 = vmul.f32 %v890, %v890
  %v1192 = vmul.f32 %v893, %v893
  %v1193 = vmul.f32 %v896, %v896
  %v1194 = vmul.f32 %v899, %v899
  %v1195 = vmul.f32 %v902, %v902
  %v1196 = vmul.f32 %v905, %v905
  %v1197 = vmul.f32 %v908, %v908
  %v1198 = vmul.f32 %v911, %v911
  %v1199 = vmul.f32 %v914, %v914
  %v1200 = vmul.f32 %v917, %v917
  %v1201 = vmul.f32 %v920, %v920
  %v1202 = vmul.f32 %v923, %v923
  %v1203 = vmul.f32 %v926, %v926
  %v1204 = vmul.f32 %v929, %v929
  %v1205 = vmul.f32 %v932, %v932
  %v1206 = vmul.f32 %v935, %v935
  %v1207 = vmul.f32 %v938, %v938
  %v1208 = vmul.f32 %v941, %v941
  %v1209 = vmul.f32 %v944, %v944
  %v1210 = vmul.f32 %v947, %v947
  %v1211 = vmul.f32 %v950, %v950
  %v1212 = vmul.f32 %v953, %v953
  %v1213 = vmul.f32 %v956, %v956
  %v1214 = vmul.f32 %v959, %v959
  %v1215 = vmul.f32 %v962, %v962
  %v1216 = vmul.f32 %v965, %v965
  %v1217 = vmul.f32 %v968, %v968
  %v1218 = vmul.f32 %v971, %v971
  %v1219 = vmul.f32 %v974, %v974
  %v1220 = vmul.f32 %v977, %v977
  %v1221 = vmul.f32 %v980, %v980
  %v1222 = vmul.f32 %v983, %v983
  %v1223 = vmul.f32 %v986, %v986
  %v1224 = vmul.f32 %v989, %v989
  %v1225 = vmul.f32 %v992, %v992
  %v1226 = vmul.f32 %v995, %v995
  %v1227 = vmul.f32 %v998, %v998
  %v1228 = vmul.f32 %v1001, %v1001
  %v1229 = vmul.f32 %v1004, %v1004
  %v1230 = vmul.f32 %v1007, %v1007
  %v1231 = vmul.f32 %v1010, %v1010
  %v1232 = vmul.f32 %v1013, %v1013
  %v1233 = vmul.f32 %v1016, %v1016
  %v1234 = vmul.f32 %v1019, %v1019
  %v1235 = vmul.f32 %v1022, %v1022
  %v1236 = vmul.f32 %v1025, %v1025
  %v1237 = vmul.f32 %v1028, %v1028
  %v1238 = vmul.f32 %v1031, %v1031
  %v1239 = vmul.f32 %v1034, %v1034
  %v1240 = vmul.f32 %v1037, %v1037
  %v1241 = vmul.f32 %v1040, %v1040
  %v1242 = vmul.f32 %v1043, %v1043
  %v1243 = vsel %vm1045, %v1179, 0.0
  %v1244 = vsel %vm1045, %v1180, 0.0
  %v1245 = vadd.f32 %v1243, %v1244
  %v1246 = vsel %vm1045, %v1181, 0.0
  %v1247 = vadd.f32 %v1245, %v1246
  %v1248 = vsel %vm1045, %v1182, 0.0
  %v1249 = vadd.f32 %v1247, %v1248
  %v1250 = vsel %vm1045, %v1183, 0.0
  %v1251 = vadd.f32 %v1249, %v1250
  %v1252 = vsel %vm1045, %v1184, 0.0
  %v1253 = vadd.f32 %v1251, %v1252
  %v1254 = vsel %vm1045, %v1185, 0.0
  %v1255 = vadd.f32 %v1253, %v1254
  %v1256 = vsel %vm1045, %v1186, 0.0
  %v1257 = vadd.f32 %v1255, %v1256
  %v1258 = vsel %vm1045, %v1187, 0.0
  %v1259 = vadd.f32 %v1257, %v1258
  %v1260 = vsel %vm1045, %v1188, 0.0
  %v1261 = vadd.f32 %v1259, %v1260
  %v1262 = vsel %vm1045, %v1189, 0.0
  %v1263 = vadd.f32 %v1261, %v1262
  %v1264 = vsel %vm1045, %v1190, 0.0
  %v1265 = vadd.f32 %v1263, %v1264
  %v1266 = vsel %vm1045, %v1191, 0.0
  %v1267 = vadd.f32 %v1265, %v1266
  %v1268 = vsel %vm1045, %v1192, 0.0
  %v1269 = vadd.f32 %v1267, %v1268
  %v1270 = vsel %vm1045, %v1193, 0.0
  %v1271 = vadd.f32 %v1269, %v1270
  %v1272 = vsel %vm1045, %v1194, 0.0
  %v1273 = vadd.f32 %v1271, %v1272
  %v1274 = vsel %vm1045, %v1195, 0.0
  %v1275 = vadd.f32 %v1273, %v1274
  %v1276 = vsel %vm1045, %v1196, 0.0
  %v1277 = vadd.f32 %v1275, %v1276
  %v1278 = vsel %vm1045, %v1197, 0.0
  %v1279 = vadd.f32 %v1277, %v1278
  %v1280 = vsel %vm1045, %v1198, 0.0
  %v1281 = vadd.f32 %v1279, %v1280
  %v1282 = vsel %vm1045, %v1199, 0.0
  %v1283 = vadd.f32 %v1281, %v1282
  %v1284 = vsel %vm1045, %v1200, 0.0
  %v1285 = vadd.f32 %v1283, %v1284
  %v1286 = vsel %vm1045, %v1201, 0.0
  %v1287 = vadd.f32 %v1285, %v1286
  %v1288 = vsel %vm1045, %v1202, 0.0
  %v1289 = vadd.f32 %v1287, %v1288
  %v1290 = vsel %vm1045, %v1203, 0.0
  %v1291 = vadd.f32 %v1289, %v1290
  %v1292 = vsel %vm1045, %v1204, 0.0
  %v1293 = vadd.f32 %v1291, %v1292
  %v1294 = vsel %vm1045, %v1205, 0.0
  %v1295 = vadd.f32 %v1293, %v1294
  %v1296 = vsel %vm1045, %v1206, 0.0
  %v1297 = vadd.f32 %v1295, %v1296
  %v1298 = vsel %vm1045, %v1207, 0.0
  %v1299 = vadd.f32 %v1297, %v1298
  %v1300 = vsel %vm1045, %v1208, 0.0
  %v1301 = vadd.f32 %v1299, %v1300
  %v1302 = vsel %vm1045, %v1209, 0.0
  %v1303 = vadd.f32 %v1301, %v1302
  %v1304 = vsel %vm1045, %v1210, 0.0
  %v1305 = vadd.f32 %v1303, %v1304
  %v1306 = vsel %vm1045, %v1211, 0.0
  %v1307 = vadd.f32 %v1305, %v1306
  %v1308 = vsel %vm1045, %v1212, 0.0
  %v1309 = vadd.f32 %v1307, %v1308
  %v1310 = vsel %vm1045, %v1213, 0.0
  %v1311 = vadd.f32 %v1309, %v1310
  %v1312 = vsel %vm1045, %v1214, 0.0
  %v1313 = vadd.f32 %v1311, %v1312
  %v1314 = vsel %vm1045, %v1215, 0.0
  %v1315 = vadd.f32 %v1313, %v1314
  %v1316 = vsel %vm1045, %v1216, 0.0
  %v1317 = vadd.f32 %v1315, %v1316
  %v1318 = vsel %vm1045, %v1217, 0.0
  %v1319 = vadd.f32 %v1317, %v1318
  %v1320 = vsel %vm1045, %v1218, 0.0
  %v1321 = vadd.f32 %v1319, %v1320
  %v1322 = vsel %vm1045, %v1219, 0.0
  %v1323 = vadd.f32 %v1321, %v1322
  %v1324 = vsel %vm1045, %v1220, 0.0
  %v1325 = vadd.f32 %v1323, %v1324
  %v1326 = vsel %vm1045, %v1221, 0.0
  %v1327 = vadd.f32 %v1325, %v1326
  %v1328 = vsel %vm1045, %v1222, 0.0
  %v1329 = vadd.f32 %v1327, %v1328
  %v1330 = vsel %vm1045, %v1223, 0.0
  %v1331 = vadd.f32 %v1329, %v1330
  %v1332 = vsel %vm1045, %v1224, 0.0
  %v1333 = vadd.f32 %v1331, %v1332
  %v1334 = vsel %vm1045, %v1225, 0.0
  %v1335 = vadd.f32 %v1333, %v1334
  %v1336 = vsel %vm1045, %v1226, 0.0
  %v1337 = vadd.f32 %v1335, %v1336
  %v1338 = vsel %vm1045, %v1227, 0.0
  %v1339 = vadd.f32 %v1337, %v1338
  %v1340 = vsel %vm1045, %v1228, 0.0
  %v1341 = vadd.f32 %v1339, %v1340
  %v1342 = vsel %vm1045, %v1229, 0.0
  %v1343 = vadd.f32 %v1341, %v1342
  %v1344 = vsel %vm1045, %v1230, 0.0
  %v1345 = vadd.f32 %v1343, %v1344
  %v1346 = vsel %vm1045, %v1231, 0.0
  %v1347 = vadd.f32 %v1345, %v1346
  %v1348 = vsel %vm1045, %v1232, 0.0
  %v1349 = vadd.f32 %v1347, %v1348
  %v1350 = vsel %vm1045, %v1233, 0.0
  %v1351 = vadd.f32 %v1349, %v1350
  %v1352 = vsel %vm1045, %v1234, 0.0
  %v1353 = vadd.f32 %v1351, %v1352
  %v1354 = vsel %vm1045, %v1235, 0.0
  %v1355 = vadd.f32 %v1353, %v1354
  %v1356 = vsel %vm1045, %v1236, 0.0
  %v1357 = vadd.f32 %v1355, %v1356
  %v1358 = vsel %vm1045, %v1237, 0.0
  %v1359 = vadd.f32 %v1357, %v1358
  %v1360 = vsel %vm1045, %v1238, 0.0
  %v1361 = vadd.f32 %v1359, %v1360
  %v1362 = vsel %vm1045, %v1239, 0.0
  %v1363 = vadd.f32 %v1361, %v1362
  %v1364 = vsel %vm1045, %v1240, 0.0
  %v1365 = vadd.f32 %v1363, %v1364
  %v1366 = vsel %vm1045, %v1241, 0.0
  %v1367 = vadd.f32 %v1365, %v1366
  %v1368 = vsel %vm1045, %v1242, 0.0
  %v1369 = vadd.f32 %v1367, %v1368
  %v1370 = vrot.slane %v1369, 4
  %v1371 = vadd.f32 %v1369, %v1370
  %v1372 = vrot.slane %v1371, 2
  %v1373 = vadd.f32 %v1371, %v1372
  %v1374 = vrot.slane %v1373, 1
  %v1375 = vadd.f32 %v1373, %v1374
  %v1376 = vmul.f32 %v1178, 0.001953125
  %v1377 = vmul.f32 %v1375, 0.001953125
  %v1378 = vmul.f32 %v1376, %v1376
  %v1379 = vsub.f32 %v1377, %v1378
  %v1380 = vld [vmem:[%s4] sm:$0x1]
  %v1381 = vadd.f32 %v1379, 1e-05
  %v1382 = vrsqrt.pop %v1381
  %v1383 = vmul.f32 %v1382, %v1381
  %v1384 = vmul.f32 %v1383, %v1382
  %v1385 = vmul.f32 0.5, %v1384
  %v1386 = vsub.f32 1.5, %v1385
  %v1387 = vmul.f32 %v1382, %v1386
  %vm1388 = vweird.f32 %v1381
  %vm1389 = vweird.f32 %v1382
  %vm1390 = vmor %vm1388, %vm1389
  %v1391 = vsel %vm1390, %v1382, %v1387
  %v1392 = vmul.f32 %v1380, %v1391
  %v1393 = vld [vmem:[%s5] sm:$0x1]
  %v1394 = vmul.f32 %v1376, %v1392
  %v1395 = vsub.f32 %v1393, %v1394
  %v1397 = vperm.slane %v1392, 0
  %v1399 = vmul.f32 %v854, %v1397
  %v1400 = vmul.f32 %v857, %v1397
  %v1401 = vmul.f32 %v860, %v1397
  %v1402 = vmul.f32 %v863, %v1397
  %v1403 = vmul.f32 %v866, %v1397
  %v1404 = vmul.f32 %v869, %v1397
  %v1405 = vmul.f32 %v872, %v1397
  %v1406 = vmul.f32 %v875, %v1397
  %v1407 = vmul.f32 %v878, %v1397
  %v1408 = vmul.f32 %v881, %v1397
  %v1409 = vmul.f32 %v884, %v1397
  %v1410 = vmul.f32 %v887, %v1397
  %v1411 = vmul.f32 %v890, %v1397
  %v1412 = vmul.f32 %v893, %v1397
  %v1413 = vmul.f32 %v896, %v1397
  %v1414 = vmul.f32 %v899, %v1397
  %v1415 = vmul.f32 %v902, %v1397
  %v1416 = vmul.f32 %v905, %v1397
  %v1417 = vmul.f32 %v908, %v1397
  %v1418 = vmul.f32 %v911, %v1397
  %v1419 = vmul.f32 %v914, %v1397
  %v1420 = vmul.f32 %v917, %v1397
  %v1421 = vmul.f32 %v920, %v1397
  %v1422 = vmul.f32 %v923, %v1397
  %v1423 = vmul.f32 %v926, %v1397
  %v1424 = vmul.f32 %v929, %v1397
  %v1425 = vmul.f32 %v932, %v1397
  %v1426 = vmul.f32 %v935, %v1397
  %v1427 = vmul.f32 %v938, %v1397
  %v1428 = vmul.f32 %v941, %v1397
  %v1429 = vmul.f32 %v944, %v1397
  %v1430 = vmul.f32 %v947, %v1397
  %v1431 = vmul.f32 %v950, %v1397
  %v1432 = vmul.f32 %v953, %v1397
  %v1433 = vmul.f32 %v956, %v1397
  %v1434 = vmul.f32 %v959, %v1397
  %v1435 = vmul.f32 %v962, %v1397
  %v1436 = vmul.f32 %v965, %v1397
  %v1437 = vmul.f32 %v968, %v1397
  %v1438 = vmul.f32 %v971, %v1397
  %v1439 = vmul.f32 %v974, %v1397
  %v1440 = vmul.f32 %v977, %v1397
  %v1441 = vmul.f32 %v980, %v1397
  %v1442 = vmul.f32 %v983, %v1397
  %v1443 = vmul.f32 %v986, %v1397
  %v1444 = vmul.f32 %v989, %v1397
  %v1445 = vmul.f32 %v992, %v1397
  %v1446 = vmul.f32 %v995, %v1397
  %v1447 = vmul.f32 %v998, %v1397
  %v1448 = vmul.f32 %v1001, %v1397
  %v1449 = vmul.f32 %v1004, %v1397
  %v1450 = vmul.f32 %v1007, %v1397
  %v1451 = vmul.f32 %v1010, %v1397
  %v1452 = vmul.f32 %v1013, %v1397
  %v1453 = vmul.f32 %v1016, %v1397
  %v1454 = vmul.f32 %v1019, %v1397
  %v1455 = vmul.f32 %v1022, %v1397
  %v1456 = vmul.f32 %v1025, %v1397
  %v1457 = vmul.f32 %v1028, %v1397
  %v1458 = vmul.f32 %v1031, %v1397
  %v1459 = vmul.f32 %v1034, %v1397
  %v1460 = vmul.f32 %v1037, %v1397
  %v1461 = vmul.f32 %v1040, %v1397
  %v1462 = vmul.f32 %v1043, %v1397
  %v1464 = vperm.slane %v1395, 0
  %v1466 = vadd.f32 %v1399, %v1464
  %v1467 = vadd.f32 %v1400, %v1464
  %v1468 = vadd.f32 %v1401, %v1464
  %v1469 = vadd.f32 %v1402, %v1464
  %v1470 = vadd.f32 %v1403, %v1464
  %v1471 = vadd.f32 %v1404, %v1464
  %v1472 = vadd.f32 %v1405, %v1464
  %v1473 = vadd.f32 %v1406, %v1464
  %v1474 = vadd.f32 %v1407, %v1464
  %v1475 = vadd.f32 %v1408, %v1464
  %v1476 = vadd.f32 %v1409, %v1464
  %v1477 = vadd.f32 %v1410, %v1464
  %v1478 = vadd.f32 %v1411, %v1464
  %v1479 = vadd.f32 %v1412, %v1464
  %v1480 = vadd.f32 %v1413, %v1464
  %v1481 = vadd.f32 %v1414, %v1464
  %v1482 = vadd.f32 %v1415, %v1464
  %v1483 = vadd.f32 %v1416, %v1464
  %v1484 = vadd.f32 %v1417, %v1464
  %v1485 = vadd.f32 %v1418, %v1464
  %v1486 = vadd.f32 %v1419, %v1464
  %v1487 = vadd.f32 %v1420, %v1464
  %v1488 = vadd.f32 %v1421, %v1464
  %v1489 = vadd.f32 %v1422, %v1464
  %v1490 = vadd.f32 %v1423, %v1464
  %v1491 = vadd.f32 %v1424, %v1464
  %v1492 = vadd.f32 %v1425, %v1464
  %v1493 = vadd.f32 %v1426, %v1464
  %v1494 = vadd.f32 %v1427, %v1464
  %v1495 = vadd.f32 %v1428, %v1464
  %v1496 = vadd.f32 %v1429, %v1464
  %v1497 = vadd.f32 %v1430, %v1464
  %v1498 = vadd.f32 %v1431, %v1464
  %v1499 = vadd.f32 %v1432, %v1464
  %v1500 = vadd.f32 %v1433, %v1464
  %v1501 = vadd.f32 %v1434, %v1464
  %v1502 = vadd.f32 %v1435, %v1464
  %v1503 = vadd.f32 %v1436, %v1464
  %v1504 = vadd.f32 %v1437, %v1464
  %v1505 = vadd.f32 %v1438, %v1464
  %v1506 = vadd.f32 %v1439, %v1464
  %v1507 = vadd.f32 %v1440, %v1464
  %v1508 = vadd.f32 %v1441, %v1464
  %v1509 = vadd.f32 %v1442, %v1464
  %v1510 = vadd.f32 %v1443, %v1464
  %v1511 = vadd.f32 %v1444, %v1464
  %v1512 = vadd.f32 %v1445, %v1464
  %v1513 = vadd.f32 %v1446, %v1464
  %v1514 = vadd.f32 %v1447, %v1464
  %v1515 = vadd.f32 %v1448, %v1464
  %v1516 = vadd.f32 %v1449, %v1464
  %v1517 = vadd.f32 %v1450, %v1464
  %v1518 = vadd.f32 %v1451, %v1464
  %v1519 = vadd.f32 %v1452, %v1464
  %v1520 = vadd.f32 %v1453, %v1464
  %v1521 = vadd.f32 %v1454, %v1464
  %v1522 = vadd.f32 %v1455, %v1464
  %v1523 = vadd.f32 %v1456, %v1464
  %v1524 = vadd.f32 %v1457, %v1464
  %v1525 = vadd.f32 %v1458, %v1464
  %v1526 = vadd.f32 %v1459, %v1464
  %v1527 = vadd.f32 %v1460, %v1464
  %v1528 = vadd.f32 %v1461, %v1464
  %v1529 = vadd.f32 %v1462, %v1464
  %v1530 = vmax.f32 %v1466, 0.0
  %v1531 = vmax.f32 %v1467, 0.0
  %v1532 = vmax.f32 %v1468, 0.0
  %v1533 = vmax.f32 %v1469, 0.0
  %v1534 = vmax.f32 %v1470, 0.0
  %v1535 = vmax.f32 %v1471, 0.0
  %v1536 = vmax.f32 %v1472, 0.0
  %v1537 = vmax.f32 %v1473, 0.0
  %v1538 = vmax.f32 %v1474, 0.0
  %v1539 = vmax.f32 %v1475, 0.0
  %v1540 = vmax.f32 %v1476, 0.0
  %v1541 = vmax.f32 %v1477, 0.0
  %v1542 = vmax.f32 %v1478, 0.0
  %v1543 = vmax.f32 %v1479, 0.0
  %v1544 = vmax.f32 %v1480, 0.0
  %v1545 = vmax.f32 %v1481, 0.0
  %v1546 = vmax.f32 %v1482, 0.0
  %v1547 = vmax.f32 %v1483, 0.0
  %v1548 = vmax.f32 %v1484, 0.0
  %v1549 = vmax.f32 %v1485, 0.0
  %v1550 = vmax.f32 %v1486, 0.0
  %v1551 = vmax.f32 %v1487, 0.0
  %v1552 = vmax.f32 %v1488, 0.0
  %v1553 = vmax.f32 %v1489, 0.0
  %v1554 = vmax.f32 %v1490, 0.0
  %v1555 = vmax.f32 %v1491, 0.0
  %v1556 = vmax.f32 %v1492, 0.0
  %v1557 = vmax.f32 %v1493, 0.0
  %v1558 = vmax.f32 %v1494, 0.0
  %v1559 = vmax.f32 %v1495, 0.0
  %v1560 = vmax.f32 %v1496, 0.0
  %v1561 = vmax.f32 %v1497, 0.0
  %v1562 = vmax.f32 %v1498, 0.0
  %v1563 = vmax.f32 %v1499, 0.0
  %v1564 = vmax.f32 %v1500, 0.0
  %v1565 = vmax.f32 %v1501, 0.0
  %v1566 = vmax.f32 %v1502, 0.0
  %v1567 = vmax.f32 %v1503, 0.0
  %v1568 = vmax.f32 %v1504, 0.0
  %v1569 = vmax.f32 %v1505, 0.0
  %v1570 = vmax.f32 %v1506, 0.0
  %v1571 = vmax.f32 %v1507, 0.0
  %v1572 = vmax.f32 %v1508, 0.0
  %v1573 = vmax.f32 %v1509, 0.0
  %v1574 = vmax.f32 %v1510, 0.0
  %v1575 = vmax.f32 %v1511, 0.0
  %v1576 = vmax.f32 %v1512, 0.0
  %v1577 = vmax.f32 %v1513, 0.0
  %v1578 = vmax.f32 %v1514, 0.0
  %v1579 = vmax.f32 %v1515, 0.0
  %v1580 = vmax.f32 %v1516, 0.0
  %v1581 = vmax.f32 %v1517, 0.0
  %v1582 = vmax.f32 %v1518, 0.0
  %v1583 = vmax.f32 %v1519, 0.0
  %v1584 = vmax.f32 %v1520, 0.0
  %v1585 = vmax.f32 %v1521, 0.0
  %v1586 = vmax.f32 %v1522, 0.0
  %v1587 = vmax.f32 %v1523, 0.0
  %v1588 = vmax.f32 %v1524, 0.0
  %v1589 = vmax.f32 %v1525, 0.0
  %v1590 = vmax.f32 %v1526, 0.0
  %v1591 = vmax.f32 %v1527, 0.0
  %v1592 = vmax.f32 %v1528, 0.0
  %v1593 = vmax.f32 %v1529, 0.0
  %1594 = vst.msk [vmem:[#allocation2 + $0x18] sm:$0xff] %vm1045, %v1530
  %1595 = vst.msk [vmem:[#allocation2 + $0x20] sm:$0xff] %vm1045, %v1531
  %1596 = vst.msk [vmem:[#allocation2 + $0x28] sm:$0xff] %vm1045, %v1532
  %1597 = vst.msk [vmem:[#allocation2 + $0x30] sm:$0xff] %vm1045, %v1533
  %1598 = vst.msk [vmem:[#allocation2 + $0x38] sm:$0xff] %vm1045, %v1534
  %1599 = vst.msk [vmem:[#allocation2 + $0x40] sm:$0xff] %vm1045, %v1535
  %1600 = vst.msk [vmem:[#allocation2 + $0x48] sm:$0xff] %vm1045, %v1536
  %1601 = vst.msk [vmem:[#allocation2 + $0x50] sm:$0xff] %vm1045, %v1537
  %1602 = vst.msk [vmem:[#allocation2 + $0x58] sm:$0xff] %vm1045, %v1538
  %1603 = vst.msk [vmem:[#allocation2 + $0x60] sm:$0xff] %vm1045, %v1539
  %1604 = vst.msk [vmem:[#allocation2 + $0x68] sm:$0xff] %vm1045, %v1540
  %1605 = vst.msk [vmem:[#allocation2 + $0x70] sm:$0xff] %vm1045, %v1541
  %1606 = vst.msk [vmem:[#allocation2 + $0x78] sm:$0xff] %vm1045, %v1542
  %1607 = vst.msk [vmem:[#allocation2 + $0x80] sm:$0xff] %vm1045, %v1543
  %1608 = vst.msk [vmem:[#allocation2 + $0x88] sm:$0xff] %vm1045, %v1544
  %1609 = vst.msk [vmem:[#allocation2 + $0x90] sm:$0xff] %vm1045, %v1545
  %1610 = vst.msk [vmem:[#allocation2 + $0x98] sm:$0xff] %vm1045, %v1546
  %1611 = vst.msk [vmem:[#allocation2 + $0xa0] sm:$0xff] %vm1045, %v1547
  %1612 = vst.msk [vmem:[#allocation2 + $0xa8] sm:$0xff] %vm1045, %v1548
  %1613 = vst.msk [vmem:[#allocation2 + $0xb0] sm:$0xff] %vm1045, %v1549
  %1614 = vst.msk [vmem:[#allocation2 + $0xb8] sm:$0xff] %vm1045, %v1550
  %1615 = vst.msk [vmem:[#allocation2 + $0xc0] sm:$0xff] %vm1045, %v1551
  %1616 = vst.msk [vmem:[#allocation2 + $0xc8] sm:$0xff] %vm1045, %v1552
  %1617 = vst.msk [vmem:[#allocation2 + $0xd0] sm:$0xff] %vm1045, %v1553
  %1618 = vst.msk [vmem:[#allocation2 + $0xd8] sm:$0xff] %vm1045, %v1554
  %1619 = vst.msk [vmem:[#allocation2 + $0xe0] sm:$0xff] %vm1045, %v1555
  %1620 = vst.msk [vmem:[#allocation2 + $0xe8] sm:$0xff] %vm1045, %v1556
  %1621 = vst.msk [vmem:[#allocation2 + $0xf0] sm:$0xff] %vm1045, %v1557
  %1622 = vst.msk [vmem:[#allocation2 + $0xf8] sm:$0xff] %vm1045, %v1558
  %1623 = vst.msk [vmem:[#allocation2 + $0x100] sm:$0xff] %vm1045, %v1559
  %1624 = vst.msk [vmem:[#allocation2 + $0x108] sm:$0xff] %vm1045, %v1560
  %1625 = vst.msk [vmem:[#allocation2 + $0x110] sm:$0xff] %vm1045, %v1561
  %1626 = vst.msk [vmem:[#allocation2 + $0x118] sm:$0xff] %vm1045, %v1562
  %1627 = vst.msk [vmem:[#allocation2 + $0x120] sm:$0xff] %vm1045, %v1563
  %1628 = vst.msk [vmem:[#allocation2 + $0x128] sm:$0xff] %vm1045, %v1564
  %1629 = vst.msk [vmem:[#allocation2 + $0x130] sm:$0xff] %vm1045, %v1565
  %1630 = vst.msk [vmem:[#allocation2 + $0x138] sm:$0xff] %vm1045, %v1566
  %1631 = vst.msk [vmem:[#allocation2 + $0x140] sm:$0xff] %vm1045, %v1567
  %1632 = vst.msk [vmem:[#allocation2 + $0x148] sm:$0xff] %vm1045, %v1568
  %1633 = vst.msk [vmem:[#allocation2 + $0x150] sm:$0xff] %vm1045, %v1569
  %1634 = vst.msk [vmem:[#allocation2 + $0x158] sm:$0xff] %vm1045, %v1570
  %1635 = vst.msk [vmem:[#allocation2 + $0x160] sm:$0xff] %vm1045, %v1571
  %1636 = vst.msk [vmem:[#allocation2 + $0x168] sm:$0xff] %vm1045, %v1572
  %1637 = vst.msk [vmem:[#allocation2 + $0x170] sm:$0xff] %vm1045, %v1573
  %1638 = vst.msk [vmem:[#allocation2 + $0x178] sm:$0xff] %vm1045, %v1574
  %1639 = vst.msk [vmem:[#allocation2 + $0x180] sm:$0xff] %vm1045, %v1575
  %1640 = vst.msk [vmem:[#allocation2 + $0x188] sm:$0xff] %vm1045, %v1576
  %1641 = vst.msk [vmem:[#allocation2 + $0x190] sm:$0xff] %vm1045, %v1577
  %1642 = vst.msk [vmem:[#allocation2 + $0x198] sm:$0xff] %vm1045, %v1578
  %1643 = vst.msk [vmem:[#allocation2 + $0x1a0] sm:$0xff] %vm1045, %v1579
  %1644 = vst.msk [vmem:[#allocation2 + $0x1a8] sm:$0xff] %vm1045, %v1580
  %1645 = vst.msk [vmem:[#allocation2 + $0x1b0] sm:$0xff] %vm1045, %v1581
  %1646 = vst.msk [vmem:[#allocation2 + $0x1b8] sm:$0xff] %vm1045, %v1582
  %1647 = vst.msk [vmem:[#allocation2 + $0x1c0] sm:$0xff] %vm1045, %v1583
  %1648 = vst.msk [vmem:[#allocation2 + $0x1c8] sm:$0xff] %vm1045, %v1584
  %1649 = vst.msk [vmem:[#allocation2 + $0x1d0] sm:$0xff] %vm1045, %v1585
  %1650 = vst.msk [vmem:[#allocation2 + $0x1d8] sm:$0xff] %vm1045, %v1586
  %1651 = vst.msk [vmem:[#allocation2 + $0x1e0] sm:$0xff] %vm1045, %v1587
  %1652 = vst.msk [vmem:[#allocation2 + $0x1e8] sm:$0xff] %vm1045, %v1588
  %1653 = vst.msk [vmem:[#allocation2 + $0x1f0] sm:$0xff] %vm1045, %v1589
  %1654 = vst.msk [vmem:[#allocation2 + $0x1f8] sm:$0xff] %vm1045, %v1590
  %1655 = vst.msk [vmem:[#allocation2 + $0x200] sm:$0xff] %vm1045, %v1591
  %1656 = vst.msk [vmem:[#allocation2 + $0x208] sm:$0xff] %vm1045, %v1592
  %1657 = vst.msk [vmem:[#allocation2 + $0x210] sm:$0xff] %vm1045, %v1593
  %v1658 = vlaneseq
  %v1659 = vshrl.u32 %v1658, 7
  %v1660 = vadd.s32 %v1659, 8
  %v1661 = vadd.s32 %v1659, 16
  %v1662 = vadd.s32 %v1659, 24
  %v1663 = vadd.s32 %v1659, 32
  %v1664 = vadd.s32 %v1659, 40
  %v1665 = vadd.s32 %v1659, 48
  %v1666 = vadd.s32 %v1659, 56
  %v1667 = vadd.s32 %v1659, 64
  %v1668 = vadd.s32 %v1659, 72
  %v1669 = vadd.s32 %v1659, 80
  %v1670 = vadd.s32 %v1659, 88
  %v1671 = vadd.s32 %v1659, 96
  %v1672 = vadd.s32 %v1659, 104
  %v1673 = vadd.s32 %v1659, 112
  %v1674 = vadd.s32 %v1659, 120
  %v1675 = vadd.s32 %v1659, 128
  %v1676 = vadd.s32 %v1659, 136
  %v1677 = vadd.s32 %v1659, 144
  %v1678 = vadd.s32 %v1659, 152
  %v1679 = vadd.s32 %v1659, 160
  %v1680 = vadd.s32 %v1659, 168
  %v1681 = vadd.s32 %v1659, 176
  %v1682 = vadd.s32 %v1659, 184
  %v1683 = vadd.s32 %v1659, 192
  %v1684 = vadd.s32 %v1659, 200
  %v1685 = vadd.s32 %v1659, 208
  %v1686 = vadd.s32 %v1659, 216
  %v1687 = vadd.s32 %v1659, 224
  %v1688 = vadd.s32 %v1659, 232
  %v1689 = vadd.s32 %v1659, 240
  %v1690 = vadd.s32 %v1659, 248
  %v1691 = vadd.s32 %v1659, 256
  %v1692 = vadd.s32 %v1659, 264
  %v1693 = vadd.s32 %v1659, 272
  %v1694 = vadd.s32 %v1659, 280
  %v1695 = vadd.s32 %v1659, 288
  %v1696 = vadd.s32 %v1659, 296
  %v1697 = vadd.s32 %v1659, 304
  %v1698 = vadd.s32 %v1659, 312
  %v1699 = vadd.s32 %v1659, 320
  %v1700 = vadd.s32 %v1659, 328
  %v1701 = vadd.s32 %v1659, 336
  %v1702 = vadd.s32 %v1659, 344
  %v1703 = vadd.s32 %v1659, 352
  %v1704 = vadd.s32 %v1659, 360
  %v1705 = vadd.s32 %v1659, 368
  %v1706 = vadd.s32 %v1659, 376
  %v1707 = vadd.s32 %v1659, 384
  %v1708 = vadd.s32 %v1659, 392
  %v1709 = vadd.s32 %v1659, 400
  %v1710 = vadd.s32 %v1659, 408
  %v1711 = vadd.s32 %v1659, 416
  %v1712 = vadd.s32 %v1659, 424
  %v1713 = vadd.s32 %v1659, 432
  %v1714 = vadd.s32 %v1659, 440
  %v1715 = vadd.s32 %v1659, 448
  %v1716 = vadd.s32 %v1659, 456
  %v1717 = vadd.s32 %v1659, 464
  %v1718 = vadd.s32 %v1659, 472
  %v1719 = vadd.s32 %v1659, 480
  %v1720 = vadd.s32 %v1659, 488
  %v1721 = vadd.s32 %v1659, 496
  %v1722 = vadd.s32 %v1659, 504
  %vm1723 = vcmp.lt.s32.totalorder %v1659, 0
  %v1724 = vsub.s32 0, %v1659
  %v1725 = vsel %vm1723, %v1724, %v1659
  %v1726 = vshrl.u32 %v1725, 4
  %v1727 = vand.u32 %v1725, 15
  %v1728 = vsub.s32 0, %v1727
  %v1729 = vsel %vm1723, %v1728, %v1727
  %vm1730 = vcmp.lt.s32.totalorder %v1660, 0
  %v1731 = vsub.s32 0, %v1660
  %v1732 = vsel %vm1730, %v1731, %v1660
  %v1733 = vshrl.u32 %v1732, 4
  %v1734 = vand.u32 %v1732, 15
  %v1735 = vsub.s32 0, %v1734
  %v1736 = vsel %vm1730, %v1735, %v1734
  %vm1737 = vcmp.lt.s32.totalorder %v1661, 0
  %v1738 = vsub.s32 0, %v1661
  %v1739 = vsel %vm1737, %v1738, %v1661
  %v1740 = vshrl.u32 %v1739, 4
  %v1741 = vand.u32 %v1739, 15
  %v1742 = vsub.s32 0, %v1741
  %v1743 = vsel %vm1737, %v1742, %v1741
  %vm1744 = vcmp.lt.s32.totalorder %v1662, 0
  %v1745 = vsub.s32 0, %v1662
  %v1746 = vsel %vm1744, %v1745, %v1662
  %v1747 = vshrl.u32 %v1746, 4
  %v1748 = vand.u32 %v1746, 15
  %v1749 = vsub.s32 0, %v1748
  %v1750 = vsel %vm1744, %v1749, %v1748
  %vm1751 = vcmp.lt.s32.totalorder %v1663, 0
  %v1752 = vsub.s32 0, %v1663
  %v1753 = vsel %vm1751, %v1752, %v1663
  %v1754 = vshrl.u32 %v1753, 4
  %v1755 = vand.u32 %v1753, 15
  %v1756 = vsub.s32 0, %v1755
  %v1757 = vsel %vm1751, %v1756, %v1755
  %vm1758 = vcmp.lt.s32.totalorder %v1664, 0
  %v1759 = vsub.s32 0, %v1664
  %v1760 = vsel %vm1758, %v1759, %v1664
  %v1761 = vshrl.u32 %v1760, 4
  %v1762 = vand.u32 %v1760, 15
  %v1763 = vsub.s32 0, %v1762
  %v1764 = vsel %vm1758, %v1763, %v1762
  %vm1765 = vcmp.lt.s32.totalorder %v1665, 0
  %v1766 = vsub.s32 0, %v1665
  %v1767 = vsel %vm1765, %v1766, %v1665
  %v1768 = vshrl.u32 %v1767, 4
  %v1769 = vand.u32 %v1767, 15
  %v1770 = vsub.s32 0, %v1769
  %v1771 = vsel %vm1765, %v1770, %v1769
  %vm1772 = vcmp.lt.s32.totalorder %v1666, 0
  %v1773 = vsub.s32 0, %v1666
  %v1774 = vsel %vm1772, %v1773, %v1666
  %v1775 = vshrl.u32 %v1774, 4
  %v1776 = vand.u32 %v1774, 15
  %v1777 = vsub.s32 0, %v1776
  %v1778 = vsel %vm1772, %v1777, %v1776
  %vm1779 = vcmp.lt.s32.totalorder %v1667, 0
  %v1780 = vsub.s32 0, %v1667
  %v1781 = vsel %vm1779, %v1780, %v1667
  %v1782 = vshrl.u32 %v1781, 4
  %v1783 = vand.u32 %v1781, 15
  %v1784 = vsub.s32 0, %v1783
  %v1785 = vsel %vm1779, %v1784, %v1783
  %vm1786 = vcmp.lt.s32.totalorder %v1668, 0
  %v1787 = vsub.s32 0, %v1668
  %v1788 = vsel %vm1786, %v1787, %v1668
  %v1789 = vshrl.u32 %v1788, 4
  %v1790 = vand.u32 %v1788, 15
  %v1791 = vsub.s32 0, %v1790
  %v1792 = vsel %vm1786, %v1791, %v1790
  %vm1793 = vcmp.lt.s32.totalorder %v1669, 0
  %v1794 = vsub.s32 0, %v1669
  %v1795 = vsel %vm1793, %v1794, %v1669
  %v1796 = vshrl.u32 %v1795, 4
  %v1797 = vand.u32 %v1795, 15
  %v1798 = vsub.s32 0, %v1797
  %v1799 = vsel %vm1793, %v1798, %v1797
  %vm1800 = vcmp.lt.s32.totalorder %v1670, 0
  %v1801 = vsub.s32 0, %v1670
  %v1802 = vsel %vm1800, %v1801, %v1670
  %v1803 = vshrl.u32 %v1802, 4
  %v1804 = vand.u32 %v1802, 15
  %v1805 = vsub.s32 0, %v1804
  %v1806 = vsel %vm1800, %v1805, %v1804
  %vm1807 = vcmp.lt.s32.totalorder %v1671, 0
  %v1808 = vsub.s32 0, %v1671
  %v1809 = vsel %vm1807, %v1808, %v1671
  %v1810 = vshrl.u32 %v1809, 4
  %v1811 = vand.u32 %v1809, 15
  %v1812 = vsub.s32 0, %v1811
  %v1813 = vsel %vm1807, %v1812, %v1811
  %vm1814 = vcmp.lt.s32.totalorder %v1672, 0
  %v1815 = vsub.s32 0, %v1672
  %v1816 = vsel %vm1814, %v1815, %v1672
  %v1817 = vshrl.u32 %v1816, 4
  %v1818 = vand.u32 %v1816, 15
  %v1819 = vsub.s32 0, %v1818
  %v1820 = vsel %vm1814, %v1819, %v1818
  %vm1821 = vcmp.lt.s32.totalorder %v1673, 0
  %v1822 = vsub.s32 0, %v1673
  %v1823 = vsel %vm1821, %v1822, %v1673
  %v1824 = vshrl.u32 %v1823, 4
  %v1825 = vand.u32 %v1823, 15
  %v1826 = vsub.s32 0, %v1825
  %v1827 = vsel %vm1821, %v1826, %v1825
  %vm1828 = vcmp.lt.s32.totalorder %v1674, 0
  %v1829 = vsub.s32 0, %v1674
  %v1830 = vsel %vm1828, %v1829, %v1674
  %v1831 = vshrl.u32 %v1830, 4
  %v1832 = vand.u32 %v1830, 15
  %v1833 = vsub.s32 0, %v1832
  %v1834 = vsel %vm1828, %v1833, %v1832
  %vm1835 = vcmp.lt.s32.totalorder %v1675, 0
  %v1836 = vsub.s32 0, %v1675
  %v1837 = vsel %vm1835, %v1836, %v1675
  %v1838 = vshrl.u32 %v1837, 4
  %v1839 = vand.u32 %v1837, 15
  %v1840 = vsub.s32 0, %v1839
  %v1841 = vsel %vm1835, %v1840, %v1839
  %vm1842 = vcmp.lt.s32.totalorder %v1676, 0
  %v1843 = vsub.s32 0, %v1676
  %v1844 = vsel %vm1842, %v1843, %v1676
  %v1845 = vshrl.u32 %v1844, 4
  %v1846 = vand.u32 %v1844, 15
  %v1847 = vsub.s32 0, %v1846
  %v1848 = vsel %vm1842, %v1847, %v1846
  %vm1849 = vcmp.lt.s32.totalorder %v1677, 0
  %v1850 = vsub.s32 0, %v1677
  %v1851 = vsel %vm1849, %v1850, %v1677
  %v1852 = vshrl.u32 %v1851, 4
  %v1853 = vand.u32 %v1851, 15
  %v1854 = vsub.s32 0, %v1853
  %v1855 = vsel %vm1849, %v1854, %v1853
  %vm1856 = vcmp.lt.s32.totalorder %v1678, 0
  %v1857 = vsub.s32 0, %v1678
  %v1858 = vsel %vm1856, %v1857, %v1678
  %v1859 = vshrl.u32 %v1858, 4
  %v1860 = vand.u32 %v1858, 15
  %v1861 = vsub.s32 0, %v1860
  %v1862 = vsel %vm1856, %v1861, %v1860
  %vm1863 = vcmp.lt.s32.totalorder %v1679, 0
  %v1864 = vsub.s32 0, %v1679
  %v1865 = vsel %vm1863, %v1864, %v1679
  %v1866 = vshrl.u32 %v1865, 4
  %v1867 = vand.u32 %v1865, 15
  %v1868 = vsub.s32 0, %v1867
  %v1869 = vsel %vm1863, %v1868, %v1867
  %vm1870 = vcmp.lt.s32.totalorder %v1680, 0
  %v1871 = vsub.s32 0, %v1680
  %v1872 = vsel %vm1870, %v1871, %v1680
  %v1873 = vshrl.u32 %v1872, 4
  %v1874 = vand.u32 %v1872, 15
  %v1875 = vsub.s32 0, %v1874
  %v1876 = vsel %vm1870, %v1875, %v1874
  %vm1877 = vcmp.lt.s32.totalorder %v1681, 0
  %v1878 = vsub.s32 0, %v1681
  %v1879 = vsel %vm1877, %v1878, %v1681
  %v1880 = vshrl.u32 %v1879, 4
  %v1881 = vand.u32 %v1879, 15
  %v1882 = vsub.s32 0, %v1881
  %v1883 = vsel %vm1877, %v1882, %v1881
  %vm1884 = vcmp.lt.s32.totalorder %v1682, 0
  %v1885 = vsub.s32 0, %v1682
  %v1886 = vsel %vm1884, %v1885, %v1682
  %v1887 = vshrl.u32 %v1886, 4
  %v1888 = vand.u32 %v1886, 15
  %v1889 = vsub.s32 0, %v1888
  %v1890 = vsel %vm1884, %v1889, %v1888
  %vm1891 = vcmp.lt.s32.totalorder %v1683, 0
  %v1892 = vsub.s32 0, %v1683
  %v1893 = vsel %vm1891, %v1892, %v1683
  %v1894 = vshrl.u32 %v1893, 4
  %v1895 = vand.u32 %v1893, 15
  %v1896 = vsub.s32 0, %v1895
  %v1897 = vsel %vm1891, %v1896, %v1895
  %vm1898 = vcmp.lt.s32.totalorder %v1684, 0
  %v1899 = vsub.s32 0, %v1684
  %v1900 = vsel %vm1898, %v1899, %v1684
  %v1901 = vshrl.u32 %v1900, 4
  %v1902 = vand.u32 %v1900, 15
  %v1903 = vsub.s32 0, %v1902
  %v1904 = vsel %vm1898, %v1903, %v1902
  %vm1905 = vcmp.lt.s32.totalorder %v1685, 0
  %v1906 = vsub.s32 0, %v1685
  %v1907 = vsel %vm1905, %v1906, %v1685
  %v1908 = vshrl.u32 %v1907, 4
  %v1909 = vand.u32 %v1907, 15
  %v1910 = vsub.s32 0, %v1909
  %v1911 = vsel %vm1905, %v1910, %v1909
  %vm1912 = vcmp.lt.s32.totalorder %v1686, 0
  %v1913 = vsub.s32 0, %v1686
  %v1914 = vsel %vm1912, %v1913, %v1686
  %v1915 = vshrl.u32 %v1914, 4
  %v1916 = vand.u32 %v1914, 15
  %v1917 = vsub.s32 0, %v1916
  %v1918 = vsel %vm1912, %v1917, %v1916
  %vm1919 = vcmp.lt.s32.totalorder %v1687, 0
  %v1920 = vsub.s32 0, %v1687
  %v1921 = vsel %vm1919, %v1920, %v1687
  %v1922 = vshrl.u32 %v1921, 4
  %v1923 = vand.u32 %v1921, 15
  %v1924 = vsub.s32 0, %v1923
  %v1925 = vsel %vm1919, %v1924, %v1923
  %vm1926 = vcmp.lt.s32.totalorder %v1688, 0
  %v1927 = vsub.s32 0, %v1688
  %v1928 = vsel %vm1926, %v1927, %v1688
  %v1929 = vshrl.u32 %v1928, 4
  %v1930 = vand.u32 %v1928, 15
  %v1931 = vsub.s32 0, %v1930
  %v1932 = vsel %vm1926, %v1931, %v1930
  %vm1933 = vcmp.lt.s32.totalorder %v1689, 0
  %v1934 = vsub.s32 0, %v1689
  %v1935 = vsel %vm1933, %v1934, %v1689
  %v1936 = vshrl.u32 %v1935, 4
  %v1937 = vand.u32 %v1935, 15
  %v1938 = vsub.s32 0, %v1937
  %v1939 = vsel %vm1933, %v1938, %v1937
  %vm1940 = vcmp.lt.s32.totalorder %v1690, 0
  %v1941 = vsub.s32 0, %v1690
  %v1942 = vsel %vm1940, %v1941, %v1690
  %v1943 = vshrl.u32 %v1942, 4
  %v1944 = vand.u32 %v1942, 15
  %v1945 = vsub.s32 0, %v1944
  %v1946 = vsel %vm1940, %v1945, %v1944
  %vm1947 = vcmp.lt.s32.totalorder %v1691, 0
  %v1948 = vsub.s32 0, %v1691
  %v1949 = vsel %vm1947, %v1948, %v1691
  %v1950 = vshrl.u32 %v1949, 4
  %v1951 = vand.u32 %v1949, 15
  %v1952 = vsub.s32 0, %v1951
  %v1953 = vsel %vm1947, %v1952, %v1951
  %vm1954 = vcmp.lt.s32.totalorder %v1692, 0
  %v1955 = vsub.s32 0, %v1692
  %v1956 = vsel %vm1954, %v1955, %v1692
  %v1957 = vshrl.u32 %v1956, 4
  %v1958 = vand.u32 %v1956, 15
  %v1959 = vsub.s32 0, %v1958
  %v1960 = vsel %vm1954, %v1959, %v1958
  %vm1961 = vcmp.lt.s32.totalorder %v1693, 0
  %v1962 = vsub.s32 0, %v1693
  %v1963 = vsel %vm1961, %v1962, %v1693
  %v1964 = vshrl.u32 %v1963, 4
  %v1965 = vand.u32 %v1963, 15
  %v1966 = vsub.s32 0, %v1965
  %v1967 = vsel %vm1961, %v1966, %v1965
  %vm1968 = vcmp.lt.s32.totalorder %v1694, 0
  %v1969 = vsub.s32 0, %v1694
  %v1970 = vsel %vm1968, %v1969, %v1694
  %v1971 = vshrl.u32 %v1970, 4
  %v1972 = vand.u32 %v1970, 15
  %v1973 = vsub.s32 0, %v1972
  %v1974 = vsel %vm1968, %v1973, %v1972
  %vm1975 = vcmp.lt.s32.totalorder %v1695, 0
  %v1976 = vsub.s32 0, %v1695
  %v1977 = vsel %vm1975, %v1976, %v1695
  %v1978 = vshrl.u32 %v1977, 4
  %v1979 = vand.u32 %v1977, 15
  %v1980 = vsub.s32 0, %v1979
  %v1981 = vsel %vm1975, %v1980, %v1979
  %vm1982 = vcmp.lt.s32.totalorder %v1696, 0
  %v1983 = vsub.s32 0, %v1696
  %v1984 = vsel %vm1982, %v1983, %v1696
  %v1985 = vshrl.u32 %v1984, 4
  %v1986 = vand.u32 %v1984, 15
  %v1987 = vsub.s32 0, %v1986
  %v1988 = vsel %vm1982, %v1987, %v1986
  %vm1989 = vcmp.lt.s32.totalorder %v1697, 0
  %v1990 = vsub.s32 0, %v1697
  %v1991 = vsel %vm1989, %v1990, %v1697
  %v1992 = vshrl.u32 %v1991, 4
  %v1993 = vand.u32 %v1991, 15
  %v1994 = vsub.s32 0, %v1993
  %v1995 = vsel %vm1989, %v1994, %v1993
  %vm1996 = vcmp.lt.s32.totalorder %v1698, 0
  %v1997 = vsub.s32 0, %v1698
  %v1998 = vsel %vm1996, %v1997, %v1698
  %v1999 = vshrl.u32 %v1998, 4
  %v2000 = vand.u32 %v1998, 15
  %v2001 = vsub.s32 0, %v2000
  %v2002 = vsel %vm1996, %v2001, %v2000
  %vm2003 = vcmp.lt.s32.totalorder %v1699, 0
  %v2004 = vsub.s32 0, %v1699
  %v2005 = vsel %vm2003, %v2004, %v1699
  %v2006 = vshrl.u32 %v2005, 4
  %v2007 = vand.u32 %v2005, 15
  %v2008 = vsub.s32 0, %v2007
  %v2009 = vsel %vm2003, %v2008, %v2007
  %vm2010 = vcmp.lt.s32.totalorder %v1700, 0
  %v2011 = vsub.s32 0, %v1700
  %v2012 = vsel %vm2010, %v2011, %v1700
  %v2013 = vshrl.u32 %v2012, 4
  %v2014 = vand.u32 %v2012, 15
  %v2015 = vsub.s32 0, %v2014
  %v2016 = vsel %vm2010, %v2015, %v2014
  %vm2017 = vcmp.lt.s32.totalorder %v1701, 0
  %v2018 = vsub.s32 0, %v1701
  %v2019 = vsel %vm2017, %v2018, %v1701
  %v2020 = vshrl.u32 %v2019, 4
  %v2021 = vand.u32 %v2019, 15
  %v2022 = vsub.s32 0, %v2021
  %v2023 = vsel %vm2017, %v2022, %v2021
  %vm2024 = vcmp.lt.s32.totalorder %v1702, 0
  %v2025 = vsub.s32 0, %v1702
  %v2026 = vsel %vm2024, %v2025, %v1702
  %v2027 = vshrl.u32 %v2026, 4
  %v2028 = vand.u32 %v2026, 15
  %v2029 = vsub.s32 0, %v2028
  %v2030 = vsel %vm2024, %v2029, %v2028
  %vm2031 = vcmp.lt.s32.totalorder %v1703, 0
  %v2032 = vsub.s32 0, %v1703
  %v2033 = vsel %vm2031, %v2032, %v1703
  %v2034 = vshrl.u32 %v2033, 4
  %v2035 = vand.u32 %v2033, 15
  %v2036 = vsub.s32 0, %v2035
  %v2037 = vsel %vm2031, %v2036, %v2035
  %vm2038 = vcmp.lt.s32.totalorder %v1704, 0
  %v2039 = vsub.s32 0, %v1704
  %v2040 = vsel %vm2038, %v2039, %v1704
  %v2041 = vshrl.u32 %v2040, 4
  %v2042 = vand.u32 %v2040, 15
  %v2043 = vsub.s32 0, %v2042
  %v2044 = vsel %vm2038, %v2043, %v2042
  %vm2045 = vcmp.lt.s32.totalorder %v1705, 0
  %v2046 = vsub.s32 0, %v1705
  %v2047 = vsel %vm2045, %v2046, %v1705
  %v2048 = vshrl.u32 %v2047, 4
  %v2049 = vand.u32 %v2047, 15
  %v2050 = vsub.s32 0, %v2049
  %v2051 = vsel %vm2045, %v2050, %v2049
  %vm2052 = vcmp.lt.s32.totalorder %v1706, 0
  %v2053 = vsub.s32 0, %v1706
  %v2054 = vsel %vm2052, %v2053, %v1706
  %v2055 = vshrl.u32 %v2054, 4
  %v2056 = vand.u32 %v2054, 15
  %v2057 = vsub.s32 0, %v2056
  %v2058 = vsel %vm2052, %v2057, %v2056
  %vm2059 = vcmp.lt.s32.totalorder %v1707, 0
  %v2060 = vsub.s32 0, %v1707
  %v2061 = vsel %vm2059, %v2060, %v1707
  %v2062 = vshrl.u32 %v2061, 4
  %v2063 = vand.u32 %v2061, 15
  %v2064 = vsub.s32 0, %v2063
  %v2065 = vsel %vm2059, %v2064, %v2063
  %vm2066 = vcmp.lt.s32.totalorder %v1708, 0
  %v2067 = vsub.s32 0, %v1708
  %v2068 = vsel %vm2066, %v2067, %v1708
  %v2069 = vshrl.u32 %v2068, 4
  %v2070 = vand.u32 %v2068, 15
  %v2071 = vsub.s32 0, %v2070
  %v2072 = vsel %vm2066, %v2071, %v2070
  %vm2073 = vcmp.lt.s32.totalorder %v1709, 0
  %v2074 = vsub.s32 0, %v1709
  %v2075 = vsel %vm2073, %v2074, %v1709
  %v2076 = vshrl.u32 %v2075, 4
  %v2077 = vand.u32 %v2075, 15
  %v2078 = vsub.s32 0, %v2077
  %v2079 = vsel %vm2073, %v2078, %v2077
  %vm2080 = vcmp.lt.s32.totalorder %v1710, 0
  %v2081 = vsub.s32 0, %v1710
  %v2082 = vsel %vm2080, %v2081, %v1710
  %v2083 = vshrl.u32 %v2082, 4
  %v2084 = vand.u32 %v2082, 15
  %v2085 = vsub.s32 0, %v2084
  %v2086 = vsel %vm2080, %v2085, %v2084
  %vm2087 = vcmp.lt.s32.totalorder %v1711, 0
  %v2088 = vsub.s32 0, %v1711
  %v2089 = vsel %vm2087, %v2088, %v1711
  %v2090 = vshrl.u32 %v2089, 4
  %v2091 = vand.u32 %v2089, 15
  %v2092 = vsub.s32 0, %v2091
  %v2093 = vsel %vm2087, %v2092, %v2091
  %vm2094 = vcmp.lt.s32.totalorder %v1712, 0
  %v2095 = vsub.s32 0, %v1712
  %v2096 = vsel %vm2094, %v2095, %v1712
  %v2097 = vshrl.u32 %v2096, 4
  %v2098 = vand.u32 %v2096, 15
  %v2099 = vsub.s32 0, %v2098
  %v2100 = vsel %vm2094, %v2099, %v2098
  %vm2101 = vcmp.lt.s32.totalorder %v1713, 0
  %v2102 = vsub.s32 0, %v1713
  %v2103 = vsel %vm2101, %v2102, %v1713
  %v2104 = vshrl.u32 %v2103, 4
  %v2105 = vand.u32 %v2103, 15
  %v2106 = vsub.s32 0, %v2105
  %v2107 = vsel %vm2101, %v2106, %v2105
  %vm2108 = vcmp.lt.s32.totalorder %v1714, 0
  %v2109 = vsub.s32 0, %v1714
  %v2110 = vsel %vm2108, %v2109, %v1714
  %v2111 = vshrl.u32 %v2110, 4
  %v2112 = vand.u32 %v2110, 15
  %v2113 = vsub.s32 0, %v2112
  %v2114 = vsel %vm2108, %v2113, %v2112
  %vm2115 = vcmp.lt.s32.totalorder %v1715, 0
  %v2116 = vsub.s32 0, %v1715
  %v2117 = vsel %vm2115, %v2116, %v1715
  %v2118 = vshrl.u32 %v2117, 4
  %v2119 = vand.u32 %v2117, 15
  %v2120 = vsub.s32 0, %v2119
  %v2121 = vsel %vm2115, %v2120, %v2119
  %vm2122 = vcmp.lt.s32.totalorder %v1716, 0
  %v2123 = vsub.s32 0, %v1716
  %v2124 = vsel %vm2122, %v2123, %v1716
  %v2125 = vshrl.u32 %v2124, 4
  %v2126 = vand.u32 %v2124, 15
  %v2127 = vsub.s32 0, %v2126
  %v2128 = vsel %vm2122, %v2127, %v2126
  %vm2129 = vcmp.lt.s32.totalorder %v1717, 0
  %v2130 = vsub.s32 0, %v1717
  %v2131 = vsel %vm2129, %v2130, %v1717
  %v2132 = vshrl.u32 %v2131, 4
  %v2133 = vand.u32 %v2131, 15
  %v2134 = vsub.s32 0, %v2133
  %v2135 = vsel %vm2129, %v2134, %v2133
  %vm2136 = vcmp.lt.s32.totalorder %v1718, 0
  %v2137 = vsub.s32 0, %v1718
  %v2138 = vsel %vm2136, %v2137, %v1718
  %v2139 = vshrl.u32 %v2138, 4
  %v2140 = vand.u32 %v2138, 15
  %v2141 = vsub.s32 0, %v2140
  %v2142 = vsel %vm2136, %v2141, %v2140
  %vm2143 = vcmp.lt.s32.totalorder %v1719, 0
  %v2144 = vsub.s32 0, %v1719
  %v2145 = vsel %vm2143, %v2144, %v1719
  %v2146 = vshrl.u32 %v2145, 4
  %v2147 = vand.u32 %v2145, 15
  %v2148 = vsub.s32 0, %v2147
  %v2149 = vsel %vm2143, %v2148, %v2147
  %vm2150 = vcmp.lt.s32.totalorder %v1720, 0
  %v2151 = vsub.s32 0, %v1720
  %v2152 = vsel %vm2150, %v2151, %v1720
  %v2153 = vshrl.u32 %v2152, 4
  %v2154 = vand.u32 %v2152, 15
  %v2155 = vsub.s32 0, %v2154
  %v2156 = vsel %vm2150, %v2155, %v2154
  %vm2157 = vcmp.lt.s32.totalorder %v1721, 0
  %v2158 = vsub.s32 0, %v1721
  %v2159 = vsel %vm2157, %v2158, %v1721
  %v2160 = vshrl.u32 %v2159, 4
  %v2161 = vand.u32 %v2159, 15
  %v2162 = vsub.s32 0, %v2161
  %v2163 = vsel %vm2157, %v2162, %v2161
  %vm2164 = vcmp.lt.s32.totalorder %v1722, 0
  %v2165 = vsub.s32 0, %v1722
  %v2166 = vsel %vm2164, %v2165, %v1722
  %v2167 = vshrl.u32 %v2166, 4
  %v2168 = vand.u32 %v2166, 15
  %v2169 = vsub.s32 0, %v2168
  %v2170 = vsel %vm2164, %v2169, %v2168
  %vm2171 = vcmp.ne.s32.totalorder %v1729, 0
  %vm2172 = vcmp.ne.s32.totalorder %v1736, 0
  %vm2173 = vcmp.ne.s32.totalorder %v1743, 0
  %vm2174 = vcmp.ne.s32.totalorder %v1750, 0
  %vm2175 = vcmp.ne.s32.totalorder %v1757, 0
  %vm2176 = vcmp.ne.s32.totalorder %v1764, 0
  %vm2177 = vcmp.ne.s32.totalorder %v1771, 0
  %vm2178 = vcmp.ne.s32.totalorder %v1778, 0
  %vm2179 = vcmp.ne.s32.totalorder %v1785, 0
  %vm2180 = vcmp.ne.s32.totalorder %v1792, 0
  %vm2181 = vcmp.ne.s32.totalorder %v1799, 0
  %vm2182 = vcmp.ne.s32.totalorder %v1806, 0
  %vm2183 = vcmp.ne.s32.totalorder %v1813, 0
  %vm2184 = vcmp.ne.s32.totalorder %v1820, 0
  %vm2185 = vcmp.ne.s32.totalorder %v1827, 0
  %vm2186 = vcmp.ne.s32.totalorder %v1834, 0
  %vm2187 = vcmp.ne.s32.totalorder %v1841, 0
  %vm2188 = vcmp.ne.s32.totalorder %v1848, 0
  %vm2189 = vcmp.ne.s32.totalorder %v1855, 0
  %vm2190 = vcmp.ne.s32.totalorder %v1862, 0
  %vm2191 = vcmp.ne.s32.totalorder %v1869, 0
  %vm2192 = vcmp.ne.s32.totalorder %v1876, 0
  %vm2193 = vcmp.ne.s32.totalorder %v1883, 0
  %vm2194 = vcmp.ne.s32.totalorder %v1890, 0
  %vm2195 = vcmp.ne.s32.totalorder %v1897, 0
  %vm2196 = vcmp.ne.s32.totalorder %v1904, 0
  %vm2197 = vcmp.ne.s32.totalorder %v1911, 0
  %vm2198 = vcmp.ne.s32.totalorder %v1918, 0
  %vm2199 = vcmp.ne.s32.totalorder %v1925, 0
  %vm2200 = vcmp.ne.s32.totalorder %v1932, 0
  %vm2201 = vcmp.ne.s32.totalorder %v1939, 0
  %vm2202 = vcmp.ne.s32.totalorder %v1946, 0
  %vm2203 = vcmp.ne.s32.totalorder %v1953, 0
  %vm2204 = vcmp.ne.s32.totalorder %v1960, 0
  %vm2205 = vcmp.ne.s32.totalorder %v1967, 0
  %vm2206 = vcmp.ne.s32.totalorder %v1974, 0
  %vm2207 = vcmp.ne.s32.totalorder %v1981, 0
  %vm2208 = vcmp.ne.s32.totalorder %v1988, 0
  %vm2209 = vcmp.ne.s32.totalorder %v1995, 0
  %vm2210 = vcmp.ne.s32.totalorder %v2002, 0
  %vm2211 = vcmp.ne.s32.totalorder %v2009, 0
  %vm2212 = vcmp.ne.s32.totalorder %v2016, 0
  %vm2213 = vcmp.ne.s32.totalorder %v2023, 0
  %vm2214 = vcmp.ne.s32.totalorder %v2030, 0
  %vm2215 = vcmp.ne.s32.totalorder %v2037, 0
  %vm2216 = vcmp.ne.s32.totalorder %v2044, 0
  %vm2217 = vcmp.ne.s32.totalorder %v2051, 0
  %vm2218 = vcmp.ne.s32.totalorder %v2058, 0
  %vm2219 = vcmp.ne.s32.totalorder %v2065, 0
  %vm2220 = vcmp.ne.s32.totalorder %v2072, 0
  %vm2221 = vcmp.ne.s32.totalorder %v2079, 0
  %vm2222 = vcmp.ne.s32.totalorder %v2086, 0
  %vm2223 = vcmp.ne.s32.totalorder %v2093, 0
  %vm2224 = vcmp.ne.s32.totalorder %v2100, 0
  %vm2225 = vcmp.ne.s32.totalorder %v2107, 0
  %vm2226 = vcmp.ne.s32.totalorder %v2114, 0
  %vm2227 = vcmp.ne.s32.totalorder %v2121, 0
  %vm2228 = vcmp.ne.s32.totalorder %v2128, 0
  %vm2229 = vcmp.ne.s32.totalorder %v2135, 0
  %vm2230 = vcmp.ne.s32.totalorder %v2142, 0
  %vm2231 = vcmp.ne.s32.totalorder %v2149, 0
  %vm2232 = vcmp.ne.s32.totalorder %v2156, 0
  %vm2233 = vcmp.ne.s32.totalorder %v2163, 0
  %vm2234 = vcmp.ne.s32.totalorder %v2170, 0
  %vm2235 = vcmp.lt.s32.totalorder %v1729, 0
  %vm2236 = vcmp.lt.s32.totalorder %v1736, 0
  %vm2237 = vcmp.lt.s32.totalorder %v1743, 0
  %vm2238 = vcmp.lt.s32.totalorder %v1750, 0
  %vm2239 = vcmp.lt.s32.totalorder %v1757, 0
  %vm2240 = vcmp.lt.s32.totalorder %v1764, 0
  %vm2241 = vcmp.lt.s32.totalorder %v1771, 0
  %vm2242 = vcmp.lt.s32.totalorder %v1778, 0
  %vm2243 = vcmp.lt.s32.totalorder %v1785, 0
  %vm2244 = vcmp.lt.s32.totalorder %v1792, 0
  %vm2245 = vcmp.lt.s32.totalorder %v1799, 0
  %vm2246 = vcmp.lt.s32.totalorder %v1806, 0
  %vm2247 = vcmp.lt.s32.totalorder %v1813, 0
  %vm2248 = vcmp.lt.s32.totalorder %v1820, 0
  %vm2249 = vcmp.lt.s32.totalorder %v1827, 0
  %vm2250 = vcmp.lt.s32.totalorder %v1834, 0
  %vm2251 = vcmp.lt.s32.totalorder %v1841, 0
  %vm2252 = vcmp.lt.s32.totalorder %v1848, 0
  %vm2253 = vcmp.lt.s32.totalorder %v1855, 0
  %vm2254 = vcmp.lt.s32.totalorder %v1862, 0
  %vm2255 = vcmp.lt.s32.totalorder %v1869, 0
  %vm2256 = vcmp.lt.s32.totalorder %v1876, 0
  %vm2257 = vcmp.lt.s32.totalorder %v1883, 0
  %vm2258 = vcmp.lt.s32.totalorder %v1890, 0
  %vm2259 = vcmp.lt.s32.totalorder %v1897, 0
  %vm2260 = vcmp.lt.s32.totalorder %v1904, 0
  %vm2261 = vcmp.lt.s32.totalorder %v1911, 0
  %vm2262 = vcmp.lt.s32.totalorder %v1918, 0
  %vm2263 = vcmp.lt.s32.totalorder %v1925, 0
  %vm2264 = vcmp.lt.s32.totalorder %v1932, 0
  %vm2265 = vcmp.lt.s32.totalorder %v1939, 0
  %vm2266 = vcmp.lt.s32.totalorder %v1946, 0
  %vm2267 = vcmp.lt.s32.totalorder %v1953, 0
  %vm2268 = vcmp.lt.s32.totalorder %v1960, 0
  %vm2269 = vcmp.lt.s32.totalorder %v1967, 0
  %vm2270 = vcmp.lt.s32.totalorder %v1974, 0
  %vm2271 = vcmp.lt.s32.totalorder %v1981, 0
  %vm2272 = vcmp.lt.s32.totalorder %v1988, 0
  %vm2273 = vcmp.lt.s32.totalorder %v1995, 0
  %vm2274 = vcmp.lt.s32.totalorder %v2002, 0
  %vm2275 = vcmp.lt.s32.totalorder %v2009, 0
  %vm2276 = vcmp.lt.s32.totalorder %v2016, 0
  %vm2277 = vcmp.lt.s32.totalorder %v2023, 0
  %vm2278 = vcmp.lt.s32.totalorder %v2030, 0
  %vm2279 = vcmp.lt.s32.totalorder %v2037, 0
  %vm2280 = vcmp.lt.s32.totalorder %v2044, 0
  %vm2281 = vcmp.lt.s32.totalorder %v2051, 0
  %vm2282 = vcmp.lt.s32.totalorder %v2058, 0
  %vm2283 = vcmp.lt.s32.totalorder %v2065, 0
  %vm2284 = vcmp.lt.s32.totalorder %v2072, 0
  %vm2285 = vcmp.lt.s32.totalorder %v2079, 0
  %vm2286 = vcmp.lt.s32.totalorder %v2086, 0
  %vm2287 = vcmp.lt.s32.totalorder %v2093, 0
  %vm2288 = vcmp.lt.s32.totalorder %v2100, 0
  %vm2289 = vcmp.lt.s32.totalorder %v2107, 0
  %vm2290 = vcmp.lt.s32.totalorder %v2114, 0
  %vm2291 = vcmp.lt.s32.totalorder %v2121, 0
  %vm2292 = vcmp.lt.s32.totalorder %v2128, 0
  %vm2293 = vcmp.lt.s32.totalorder %v2135, 0
  %vm2294 = vcmp.lt.s32.totalorder %v2142, 0
  %vm2295 = vcmp.lt.s32.totalorder %v2149, 0
  %vm2296 = vcmp.lt.s32.totalorder %v2156, 0
  %vm2297 = vcmp.lt.s32.totalorder %v2163, 0
  %vm2298 = vcmp.lt.s32.totalorder %v2170, 0
  %vm2299 = vmand %vm2235, %vm2171
  %vm2300 = vmand %vm2236, %vm2172
  %vm2301 = vmand %vm2237, %vm2173
  %vm2302 = vmand %vm2238, %vm2174
  %vm2303 = vmand %vm2239, %vm2175
  %vm2304 = vmand %vm2240, %vm2176
  %vm2305 = vmand %vm2241, %vm2177
  %vm2306 = vmand %vm2242, %vm2178
  %vm2307 = vmand %vm2243, %vm2179
  %vm2308 = vmand %vm2244, %vm2180
  %vm2309 = vmand %vm2245, %vm2181
  %vm2310 = vmand %vm2246, %vm2182
  %vm2311 = vmand %vm2247, %vm2183
  %vm2312 = vmand %vm2248, %vm2184
  %vm2313 = vmand %vm2249, %vm2185
  %vm2314 = vmand %vm2250, %vm2186
  %vm2315 = vmand %vm2251, %vm2187
  %vm2316 = vmand %vm2252, %vm2188
  %vm2317 = vmand %vm2253, %vm2189
  %vm2318 = vmand %vm2254, %vm2190
  %vm2319 = vmand %vm2255, %vm2191
  %vm2320 = vmand %vm2256, %vm2192
  %vm2321 = vmand %vm2257, %vm2193
  %vm2322 = vmand %vm2258, %vm2194
  %vm2323 = vmand %vm2259, %vm2195
  %vm2324 = vmand %vm2260, %vm2196
  %vm2325 = vmand %vm2261, %vm2197
  %vm2326 = vmand %vm2262, %vm2198
  %vm2327 = vmand %vm2263, %vm2199
  %vm2328 = vmand %vm2264, %vm2200
  %vm2329 = vmand %vm2265, %vm2201
  %vm2330 = vmand %vm2266, %vm2202
  %vm2331 = vmand %vm2267, %vm2203
  %vm2332 = vmand %vm2268, %vm2204
  %vm2333 = vmand %vm2269, %vm2205
  %vm2334 = vmand %vm2270, %vm2206
  %vm2335 = vmand %vm2271, %vm2207
  %vm2336 = vmand %vm2272, %vm2208
  %vm2337 = vmand %vm2273, %vm2209
  %vm2338 = vmand %vm2274, %vm2210
  %vm2339 = vmand %vm2275, %vm2211
  %vm2340 = vmand %vm2276, %vm2212
  %vm2341 = vmand %vm2277, %vm2213
  %vm2342 = vmand %vm2278, %vm2214
  %vm2343 = vmand %vm2279, %vm2215
  %vm2344 = vmand %vm2280, %vm2216
  %vm2345 = vmand %vm2281, %vm2217
  %vm2346 = vmand %vm2282, %vm2218
  %vm2347 = vmand %vm2283, %vm2219
  %vm2348 = vmand %vm2284, %vm2220
  %vm2349 = vmand %vm2285, %vm2221
  %vm2350 = vmand %vm2286, %vm2222
  %vm2351 = vmand %vm2287, %vm2223
  %vm2352 = vmand %vm2288, %vm2224
  %vm2353 = vmand %vm2289, %vm2225
  %vm2354 = vmand %vm2290, %vm2226
  %vm2355 = vmand %vm2291, %vm2227
  %vm2356 = vmand %vm2292, %vm2228
  %vm2357 = vmand %vm2293, %vm2229
  %vm2358 = vmand %vm2294, %vm2230
  %vm2359 = vmand %vm2295, %vm2231
  %vm2360 = vmand %vm2296, %vm2232
  %vm2361 = vmand %vm2297, %vm2233
  %vm2362 = vmand %vm2298, %vm2234
  %v2363 = vadd.s32 %v1729, 16
  %v2364 = vadd.s32 %v1736, 16
  %v2365 = vadd.s32 %v1743, 16
  %v2366 = vadd.s32 %v1750, 16
  %v2367 = vadd.s32 %v1757, 16
  %v2368 = vadd.s32 %v1764, 16
  %v2369 = vadd.s32 %v1771, 16
  %v2370 = vadd.s32 %v1778, 16
  %v2371 = vadd.s32 %v1785, 16
  %v2372 = vadd.s32 %v1792, 16
  %v2373 = vadd.s32 %v1799, 16
  %v2374 = vadd.s32 %v1806, 16
  %v2375 = vadd.s32 %v1813, 16
  %v2376 = vadd.s32 %v1820, 16
  %v2377 = vadd.s32 %v1827, 16
  %v2378 = vadd.s32 %v1834, 16
  %v2379 = vadd.s32 %v1841, 16
  %v2380 = vadd.s32 %v1848, 16
  %v2381 = vadd.s32 %v1855, 16
  %v2382 = vadd.s32 %v1862, 16
  %v2383 = vadd.s32 %v1869, 16
  %v2384 = vadd.s32 %v1876, 16
  %v2385 = vadd.s32 %v1883, 16
  %v2386 = vadd.s32 %v1890, 16
  %v2387 = vadd.s32 %v1897, 16
  %v2388 = vadd.s32 %v1904, 16
  %v2389 = vadd.s32 %v1911, 16
  %v2390 = vadd.s32 %v1918, 16
  %v2391 = vadd.s32 %v1925, 16
  %v2392 = vadd.s32 %v1932, 16
  %v2393 = vadd.s32 %v1939, 16
  %v2394 = vadd.s32 %v1946, 16
  %v2395 = vadd.s32 %v1953, 16
  %v2396 = vadd.s32 %v1960, 16
  %v2397 = vadd.s32 %v1967, 16
  %v2398 = vadd.s32 %v1974, 16
  %v2399 = vadd.s32 %v1981, 16
  %v2400 = vadd.s32 %v1988, 16
  %v2401 = vadd.s32 %v1995, 16
  %v2402 = vadd.s32 %v2002, 16
  %v2403 = vadd.s32 %v2009, 16
  %v2404 = vadd.s32 %v2016, 16
  %v2405 = vadd.s32 %v2023, 16
  %v2406 = vadd.s32 %v2030, 16
  %v2407 = vadd.s32 %v2037, 16
  %v2408 = vadd.s32 %v2044, 16
  %v2409 = vadd.s32 %v2051, 16
  %v2410 = vadd.s32 %v2058, 16
  %v2411 = vadd.s32 %v2065, 16
  %v2412 = vadd.s32 %v2072, 16
  %v2413 = vadd.s32 %v2079, 16
  %v2414 = vadd.s32 %v2086, 16
  %v2415 = vadd.s32 %v2093, 16
  %v2416 = vadd.s32 %v2100, 16
  %v2417 = vadd.s32 %v2107, 16
  %v2418 = vadd.s32 %v2114, 16
  %v2419 = vadd.s32 %v2121, 16
  %v2420 = vadd.s32 %v2128, 16
  %v2421 = vadd.s32 %v2135, 16
  %v2422 = vadd.s32 %v2142, 16
  %v2423 = vadd.s32 %v2149, 16
  %v2424 = vadd.s32 %v2156, 16
  %v2425 = vadd.s32 %v2163, 16
  %v2426 = vadd.s32 %v2170, 16
  %v2427 = vsel %vm2299, %v2363, %v1729
  %v2428 = vsel %vm2300, %v2364, %v1736
  %v2429 = vsel %vm2301, %v2365, %v1743
  %v2430 = vsel %vm2302, %v2366, %v1750
  %v2431 = vsel %vm2303, %v2367, %v1757
  %v2432 = vsel %vm2304, %v2368, %v1764
  %v2433 = vsel %vm2305, %v2369, %v1771
  %v2434 = vsel %vm2306, %v2370, %v1778
  %v2435 = vsel %vm2307, %v2371, %v1785
  %v2436 = vsel %vm2308, %v2372, %v1792
  %v2437 = vsel %vm2309, %v2373, %v1799
  %v2438 = vsel %vm2310, %v2374, %v1806
  %v2439 = vsel %vm2311, %v2375, %v1813
  %v2440 = vsel %vm2312, %v2376, %v1820
  %v2441 = vsel %vm2313, %v2377, %v1827
  %v2442 = vsel %vm2314, %v2378, %v1834
  %v2443 = vsel %vm2315, %v2379, %v1841
  %v2444 = vsel %vm2316, %v2380, %v1848
  %v2445 = vsel %vm2317, %v2381, %v1855
  %v2446 = vsel %vm2318, %v2382, %v1862
  %v2447 = vsel %vm2319, %v2383, %v1869
  %v2448 = vsel %vm2320, %v2384, %v1876
  %v2449 = vsel %vm2321, %v2385, %v1883
  %v2450 = vsel %vm2322, %v2386, %v1890
  %v2451 = vsel %vm2323, %v2387, %v1897
  %v2452 = vsel %vm2324, %v2388, %v1904
  %v2453 = vsel %vm2325, %v2389, %v1911
  %v2454 = vsel %vm2326, %v2390, %v1918
  %v2455 = vsel %vm2327, %v2391, %v1925
  %v2456 = vsel %vm2328, %v2392, %v1932
  %v2457 = vsel %vm2329, %v2393, %v1939
  %v2458 = vsel %vm2330, %v2394, %v1946
  %v2459 = vsel %vm2331, %v2395, %v1953
  %v2460 = vsel %vm2332, %v2396, %v1960
  %v2461 = vsel %vm2333, %v2397, %v1967
  %v2462 = vsel %vm2334, %v2398, %v1974
  %v2463 = vsel %vm2335, %v2399, %v1981
  %v2464 = vsel %vm2336, %v2400, %v1988
  %v2465 = vsel %vm2337, %v2401, %v1995
  %v2466 = vsel %vm2338, %v2402, %v2002
  %v2467 = vsel %vm2339, %v2403, %v2009
  %v2468 = vsel %vm2340, %v2404, %v2016
  %v2469 = vsel %vm2341, %v2405, %v2023
  %v2470 = vsel %vm2342, %v2406, %v2030
  %v2471 = vsel %vm2343, %v2407, %v2037
  %v2472 = vsel %vm2344, %v2408, %v2044
  %v2473 = vsel %vm2345, %v2409, %v2051
  %v2474 = vsel %vm2346, %v2410, %v2058
  %v2475 = vsel %vm2347, %v2411, %v2065
  %v2476 = vsel %vm2348, %v2412, %v2072
  %v2477 = vsel %vm2349, %v2413, %v2079
  %v2478 = vsel %vm2350, %v2414, %v2086
  %v2479 = vsel %vm2351, %v2415, %v2093
  %v2480 = vsel %vm2352, %v2416, %v2100
  %v2481 = vsel %vm2353, %v2417, %v2107
  %v2482 = vsel %vm2354, %v2418, %v2114
  %v2483 = vsel %vm2355, %v2419, %v2121
  %v2484 = vsel %vm2356, %v2420, %v2128
  %v2485 = vsel %vm2357, %v2421, %v2135
  %v2486 = vsel %vm2358, %v2422, %v2142
  %v2487 = vsel %vm2359, %v2423, %v2149
  %v2488 = vsel %vm2360, %v2424, %v2156
  %v2489 = vsel %vm2361, %v2425, %v2163
  %v2490 = vsel %vm2362, %v2426, %v2170
  %vm2491 = vcmp.lt.s32.totalorder %v1659, 0
  %v2492 = vsub.s32 0, %v1659
  %v2493 = vsel %vm2491, %v2492, %v1659
  %v2494 = vshrl.u32 %v2493, 8
  %v2495 = vand.u32 %v2493, 255
  %v2496 = vsub.s32 0, %v2495
  %v2497 = vsel %vm2491, %v2496, %v2495
  %vm2498 = vcmp.lt.s32.totalorder %v1660, 0
  %v2499 = vsub.s32 0, %v1660
  %v2500 = vsel %vm2498, %v2499, %v1660
  %v2501 = vshrl.u32 %v2500, 8
  %v2502 = vand.u32 %v2500, 255
  %v2503 = vsub.s32 0, %v2502
  %v2504 = vsel %vm2498, %v2503, %v2502
  %vm2505 = vcmp.lt.s32.totalorder %v1661, 0
  %v2506 = vsub.s32 0, %v1661
  %v2507 = vsel %vm2505, %v2506, %v1661
  %v2508 = vshrl.u32 %v2507, 8
  %v2509 = vand.u32 %v2507, 255
  %v2510 = vsub.s32 0, %v2509
  %v2511 = vsel %vm2505, %v2510, %v2509
  %vm2512 = vcmp.lt.s32.totalorder %v1662, 0
  %v2513 = vsub.s32 0, %v1662
  %v2514 = vsel %vm2512, %v2513, %v1662
  %v2515 = vshrl.u32 %v2514, 8
  %v2516 = vand.u32 %v2514, 255
  %v2517 = vsub.s32 0, %v2516
  %v2518 = vsel %vm2512, %v2517, %v2516
  %vm2519 = vcmp.lt.s32.totalorder %v1663, 0
  %v2520 = vsub.s32 0, %v1663
  %v2521 = vsel %vm2519, %v2520, %v1663
  %v2522 = vshrl.u32 %v2521, 8
  %v2523 = vand.u32 %v2521, 255
  %v2524 = vsub.s32 0, %v2523
  %v2525 = vsel %vm2519, %v2524, %v2523
  %vm2526 = vcmp.lt.s32.totalorder %v1664, 0
  %v2527 = vsub.s32 0, %v1664
  %v2528 = vsel %vm2526, %v2527, %v1664
  %v2529 = vshrl.u32 %v2528, 8
  %v2530 = vand.u32 %v2528, 255
  %v2531 = vsub.s32 0, %v2530
  %v2532 = vsel %vm2526, %v2531, %v2530
  %vm2533 = vcmp.lt.s32.totalorder %v1665, 0
  %v2534 = vsub.s32 0, %v1665
  %v2535 = vsel %vm2533, %v2534, %v1665
  %v2536 = vshrl.u32 %v2535, 8
  %v2537 = vand.u32 %v2535, 255
  %v2538 = vsub.s32 0, %v2537
  %v2539 = vsel %vm2533, %v2538, %v2537
  %vm2540 = vcmp.lt.s32.totalorder %v1666, 0
  %v2541 = vsub.s32 0, %v1666
  %v2542 = vsel %vm2540, %v2541, %v1666
  %v2543 = vshrl.u32 %v2542, 8
  %v2544 = vand.u32 %v2542, 255
  %v2545 = vsub.s32 0, %v2544
  %v2546 = vsel %vm2540, %v2545, %v2544
  %vm2547 = vcmp.lt.s32.totalorder %v1667, 0
  %v2548 = vsub.s32 0, %v1667
  %v2549 = vsel %vm2547, %v2548, %v1667
  %v2550 = vshrl.u32 %v2549, 8
  %v2551 = vand.u32 %v2549, 255
  %v2552 = vsub.s32 0, %v2551
  %v2553 = vsel %vm2547, %v2552, %v2551
  %vm2554 = vcmp.lt.s32.totalorder %v1668, 0
  %v2555 = vsub.s32 0, %v1668
  %v2556 = vsel %vm2554, %v2555, %v1668
  %v2557 = vshrl.u32 %v2556, 8
  %v2558 = vand.u32 %v2556, 255
  %v2559 = vsub.s32 0, %v2558
  %v2560 = vsel %vm2554, %v2559, %v2558
  %vm2561 = vcmp.lt.s32.totalorder %v1669, 0
  %v2562 = vsub.s32 0, %v1669
  %v2563 = vsel %vm2561, %v2562, %v1669
  %v2564 = vshrl.u32 %v2563, 8
  %v2565 = vand.u32 %v2563, 255
  %v2566 = vsub.s32 0, %v2565
  %v2567 = vsel %vm2561, %v2566, %v2565
  %vm2568 = vcmp.lt.s32.totalorder %v1670, 0
  %v2569 = vsub.s32 0, %v1670
  %v2570 = vsel %vm2568, %v2569, %v1670
  %v2571 = vshrl.u32 %v2570, 8
  %v2572 = vand.u32 %v2570, 255
  %v2573 = vsub.s32 0, %v2572
  %v2574 = vsel %vm2568, %v2573, %v2572
  %vm2575 = vcmp.lt.s32.totalorder %v1671, 0
  %v2576 = vsub.s32 0, %v1671
  %v2577 = vsel %vm2575, %v2576, %v1671
  %v2578 = vshrl.u32 %v2577, 8
  %v2579 = vand.u32 %v2577, 255
  %v2580 = vsub.s32 0, %v2579
  %v2581 = vsel %vm2575, %v2580, %v2579
  %vm2582 = vcmp.lt.s32.totalorder %v1672, 0
  %v2583 = vsub.s32 0, %v1672
  %v2584 = vsel %vm2582, %v2583, %v1672
  %v2585 = vshrl.u32 %v2584, 8
  %v2586 = vand.u32 %v2584, 255
  %v2587 = vsub.s32 0, %v2586
  %v2588 = vsel %vm2582, %v2587, %v2586
  %vm2589 = vcmp.lt.s32.totalorder %v1673, 0
  %v2590 = vsub.s32 0, %v1673
  %v2591 = vsel %vm2589, %v2590, %v1673
  %v2592 = vshrl.u32 %v2591, 8
  %v2593 = vand.u32 %v2591, 255
  %v2594 = vsub.s32 0, %v2593
  %v2595 = vsel %vm2589, %v2594, %v2593
  %vm2596 = vcmp.lt.s32.totalorder %v1674, 0
  %v2597 = vsub.s32 0, %v1674
  %v2598 = vsel %vm2596, %v2597, %v1674
  %v2599 = vshrl.u32 %v2598, 8
  %v2600 = vand.u32 %v2598, 255
  %v2601 = vsub.s32 0, %v2600
  %v2602 = vsel %vm2596, %v2601, %v2600
  %vm2603 = vcmp.lt.s32.totalorder %v1675, 0
  %v2604 = vsub.s32 0, %v1675
  %v2605 = vsel %vm2603, %v2604, %v1675
  %v2606 = vshrl.u32 %v2605, 8
  %v2607 = vand.u32 %v2605, 255
  %v2608 = vsub.s32 0, %v2607
  %v2609 = vsel %vm2603, %v2608, %v2607
  %vm2610 = vcmp.lt.s32.totalorder %v1676, 0
  %v2611 = vsub.s32 0, %v1676
  %v2612 = vsel %vm2610, %v2611, %v1676
  %v2613 = vshrl.u32 %v2612, 8
  %v2614 = vand.u32 %v2612, 255
  %v2615 = vsub.s32 0, %v2614
  %v2616 = vsel %vm2610, %v2615, %v2614
  %vm2617 = vcmp.lt.s32.totalorder %v1677, 0
  %v2618 = vsub.s32 0, %v1677
  %v2619 = vsel %vm2617, %v2618, %v1677
  %v2620 = vshrl.u32 %v2619, 8
  %v2621 = vand.u32 %v2619, 255
  %v2622 = vsub.s32 0, %v2621
  %v2623 = vsel %vm2617, %v2622, %v2621
  %vm2624 = vcmp.lt.s32.totalorder %v1678, 0
  %v2625 = vsub.s32 0, %v1678
  %v2626 = vsel %vm2624, %v2625, %v1678
  %v2627 = vshrl.u32 %v2626, 8
  %v2628 = vand.u32 %v2626, 255
  %v2629 = vsub.s32 0, %v2628
  %v2630 = vsel %vm2624, %v2629, %v2628
  %vm2631 = vcmp.lt.s32.totalorder %v1679, 0
  %v2632 = vsub.s32 0, %v1679
  %v2633 = vsel %vm2631, %v2632, %v1679
  %v2634 = vshrl.u32 %v2633, 8
  %v2635 = vand.u32 %v2633, 255
  %v2636 = vsub.s32 0, %v2635
  %v2637 = vsel %vm2631, %v2636, %v2635
  %vm2638 = vcmp.lt.s32.totalorder %v1680, 0
  %v2639 = vsub.s32 0, %v1680
  %v2640 = vsel %vm2638, %v2639, %v1680
  %v2641 = vshrl.u32 %v2640, 8
  %v2642 = vand.u32 %v2640, 255
  %v2643 = vsub.s32 0, %v2642
  %v2644 = vsel %vm2638, %v2643, %v2642
  %vm2645 = vcmp.lt.s32.totalorder %v1681, 0
  %v2646 = vsub.s32 0, %v1681
  %v2647 = vsel %vm2645, %v2646, %v1681
  %v2648 = vshrl.u32 %v2647, 8
  %v2649 = vand.u32 %v2647, 255
  %v2650 = vsub.s32 0, %v2649
  %v2651 = vsel %vm2645, %v2650, %v2649
  %vm2652 = vcmp.lt.s32.totalorder %v1682, 0
  %v2653 = vsub.s32 0, %v1682
  %v2654 = vsel %vm2652, %v2653, %v1682
  %v2655 = vshrl.u32 %v2654, 8
  %v2656 = vand.u32 %v2654, 255
  %v2657 = vsub.s32 0, %v2656
  %v2658 = vsel %vm2652, %v2657, %v2656
  %vm2659 = vcmp.lt.s32.totalorder %v1683, 0
  %v2660 = vsub.s32 0, %v1683
  %v2661 = vsel %vm2659, %v2660, %v1683
  %v2662 = vshrl.u32 %v2661, 8
  %v2663 = vand.u32 %v2661, 255
  %v2664 = vsub.s32 0, %v2663
  %v2665 = vsel %vm2659, %v2664, %v2663
  %vm2666 = vcmp.lt.s32.totalorder %v1684, 0
  %v2667 = vsub.s32 0, %v1684
  %v2668 = vsel %vm2666, %v2667, %v1684
  %v2669 = vshrl.u32 %v2668, 8
  %v2670 = vand.u32 %v2668, 255
  %v2671 = vsub.s32 0, %v2670
  %v2672 = vsel %vm2666, %v2671, %v2670
  %vm2673 = vcmp.lt.s32.totalorder %v1685, 0
  %v2674 = vsub.s32 0, %v1685
  %v2675 = vsel %vm2673, %v2674, %v1685
  %v2676 = vshrl.u32 %v2675, 8
  %v2677 = vand.u32 %v2675, 255
  %v2678 = vsub.s32 0, %v2677
  %v2679 = vsel %vm2673, %v2678, %v2677
  %vm2680 = vcmp.lt.s32.totalorder %v1686, 0
  %v2681 = vsub.s32 0, %v1686
  %v2682 = vsel %vm2680, %v2681, %v1686
  %v2683 = vshrl.u32 %v2682, 8
  %v2684 = vand.u32 %v2682, 255
  %v2685 = vsub.s32 0, %v2684
  %v2686 = vsel %vm2680, %v2685, %v2684
  %vm2687 = vcmp.lt.s32.totalorder %v1687, 0
  %v2688 = vsub.s32 0, %v1687
  %v2689 = vsel %vm2687, %v2688, %v1687
  %v2690 = vshrl.u32 %v2689, 8
  %v2691 = vand.u32 %v2689, 255
  %v2692 = vsub.s32 0, %v2691
  %v2693 = vsel %vm2687, %v2692, %v2691
  %vm2694 = vcmp.lt.s32.totalorder %v1688, 0
  %v2695 = vsub.s32 0, %v1688
  %v2696 = vsel %vm2694, %v2695, %v1688
  %v2697 = vshrl.u32 %v2696, 8
  %v2698 = vand.u32 %v2696, 255
  %v2699 = vsub.s32 0, %v2698
  %v2700 = vsel %vm2694, %v2699, %v2698
  %vm2701 = vcmp.lt.s32.totalorder %v1689, 0
  %v2702 = vsub.s32 0, %v1689
  %v2703 = vsel %vm2701, %v2702, %v1689
  %v2704 = vshrl.u32 %v2703, 8
  %v2705 = vand.u32 %v2703, 255
  %v2706 = vsub.s32 0, %v2705
  %v2707 = vsel %vm2701, %v2706, %v2705
  %vm2708 = vcmp.lt.s32.totalorder %v1690, 0
  %v2709 = vsub.s32 0, %v1690
  %v2710 = vsel %vm2708, %v2709, %v1690
  %v2711 = vshrl.u32 %v2710, 8
  %v2712 = vand.u32 %v2710, 255
  %v2713 = vsub.s32 0, %v2712
  %v2714 = vsel %vm2708, %v2713, %v2712
  %vm2715 = vcmp.lt.s32.totalorder %v1691, 0
  %v2716 = vsub.s32 0, %v1691
  %v2717 = vsel %vm2715, %v2716, %v1691
  %v2718 = vshrl.u32 %v2717, 8
  %v2719 = vand.u32 %v2717, 255
  %v2720 = vsub.s32 0, %v2719
  %v2721 = vsel %vm2715, %v2720, %v2719
  %vm2722 = vcmp.lt.s32.totalorder %v1692, 0
  %v2723 = vsub.s32 0, %v1692
  %v2724 = vsel %vm2722, %v2723, %v1692
  %v2725 = vshrl.u32 %v2724, 8
  %v2726 = vand.u32 %v2724, 255
  %v2727 = vsub.s32 0, %v2726
  %v2728 = vsel %vm2722, %v2727, %v2726
  %vm2729 = vcmp.lt.s32.totalorder %v1693, 0
  %v2730 = vsub.s32 0, %v1693
  %v2731 = vsel %vm2729, %v2730, %v1693
  %v2732 = vshrl.u32 %v2731, 8
  %v2733 = vand.u32 %v2731, 255
  %v2734 = vsub.s32 0, %v2733
  %v2735 = vsel %vm2729, %v2734, %v2733
  %vm2736 = vcmp.lt.s32.totalorder %v1694, 0
  %v2737 = vsub.s32 0, %v1694
  %v2738 = vsel %vm2736, %v2737, %v1694
  %v2739 = vshrl.u32 %v2738, 8
  %v2740 = vand.u32 %v2738, 255
  %v2741 = vsub.s32 0, %v2740
  %v2742 = vsel %vm2736, %v2741, %v2740
  %vm2743 = vcmp.lt.s32.totalorder %v1695, 0
  %v2744 = vsub.s32 0, %v1695
  %v2745 = vsel %vm2743, %v2744, %v1695
  %v2746 = vshrl.u32 %v2745, 8
  %v2747 = vand.u32 %v2745, 255
  %v2748 = vsub.s32 0, %v2747
  %v2749 = vsel %vm2743, %v2748, %v2747
  %vm2750 = vcmp.lt.s32.totalorder %v1696, 0
  %v2751 = vsub.s32 0, %v1696
  %v2752 = vsel %vm2750, %v2751, %v1696
  %v2753 = vshrl.u32 %v2752, 8
  %v2754 = vand.u32 %v2752, 255
  %v2755 = vsub.s32 0, %v2754
  %v2756 = vsel %vm2750, %v2755, %v2754
  %vm2757 = vcmp.lt.s32.totalorder %v1697, 0
  %v2758 = vsub.s32 0, %v1697
  %v2759 = vsel %vm2757, %v2758, %v1697
  %v2760 = vshrl.u32 %v2759, 8
  %v2761 = vand.u32 %v2759, 255
  %v2762 = vsub.s32 0, %v2761
  %v2763 = vsel %vm2757, %v2762, %v2761
  %vm2764 = vcmp.lt.s32.totalorder %v1698, 0
  %v2765 = vsub.s32 0, %v1698
  %v2766 = vsel %vm2764, %v2765, %v1698
  %v2767 = vshrl.u32 %v2766, 8
  %v2768 = vand.u32 %v2766, 255
  %v2769 = vsub.s32 0, %v2768
  %v2770 = vsel %vm2764, %v2769, %v2768
  %vm2771 = vcmp.lt.s32.totalorder %v1699, 0
  %v2772 = vsub.s32 0, %v1699
  %v2773 = vsel %vm2771, %v2772, %v1699
  %v2774 = vshrl.u32 %v2773, 8
  %v2775 = vand.u32 %v2773, 255
  %v2776 = vsub.s32 0, %v2775
  %v2777 = vsel %vm2771, %v2776, %v2775
  %vm2778 = vcmp.lt.s32.totalorder %v1700, 0
  %v2779 = vsub.s32 0, %v1700
  %v2780 = vsel %vm2778, %v2779, %v1700
  %v2781 = vshrl.u32 %v2780, 8
  %v2782 = vand.u32 %v2780, 255
  %v2783 = vsub.s32 0, %v2782
  %v2784 = vsel %vm2778, %v2783, %v2782
  %vm2785 = vcmp.lt.s32.totalorder %v1701, 0
  %v2786 = vsub.s32 0, %v1701
  %v2787 = vsel %vm2785, %v2786, %v1701
  %v2788 = vshrl.u32 %v2787, 8
  %v2789 = vand.u32 %v2787, 255
  %v2790 = vsub.s32 0, %v2789
  %v2791 = vsel %vm2785, %v2790, %v2789
  %vm2792 = vcmp.lt.s32.totalorder %v1702, 0
  %v2793 = vsub.s32 0, %v1702
  %v2794 = vsel %vm2792, %v2793, %v1702
  %v2795 = vshrl.u32 %v2794, 8
  %v2796 = vand.u32 %v2794, 255
  %v2797 = vsub.s32 0, %v2796
  %v2798 = vsel %vm2792, %v2797, %v2796
  %vm2799 = vcmp.lt.s32.totalorder %v1703, 0
  %v2800 = vsub.s32 0, %v1703
  %v2801 = vsel %vm2799, %v2800, %v1703
  %v2802 = vshrl.u32 %v2801, 8
  %v2803 = vand.u32 %v2801, 255
  %v2804 = vsub.s32 0, %v2803
  %v2805 = vsel %vm2799, %v2804, %v2803
  %vm2806 = vcmp.lt.s32.totalorder %v1704, 0
  %v2807 = vsub.s32 0, %v1704
  %v2808 = vsel %vm2806, %v2807, %v1704
  %v2809 = vshrl.u32 %v2808, 8
  %v2810 = vand.u32 %v2808, 255
  %v2811 = vsub.s32 0, %v2810
  %v2812 = vsel %vm2806, %v2811, %v2810
  %vm2813 = vcmp.lt.s32.totalorder %v1705, 0
  %v2814 = vsub.s32 0, %v1705
  %v2815 = vsel %vm2813, %v2814, %v1705
  %v2816 = vshrl.u32 %v2815, 8
  %v2817 = vand.u32 %v2815, 255
  %v2818 = vsub.s32 0, %v2817
  %v2819 = vsel %vm2813, %v2818, %v2817
  %vm2820 = vcmp.lt.s32.totalorder %v1706, 0
  %v2821 = vsub.s32 0, %v1706
  %v2822 = vsel %vm2820, %v2821, %v1706
  %v2823 = vshrl.u32 %v2822, 8
  %v2824 = vand.u32 %v2822, 255
  %v2825 = vsub.s32 0, %v2824
  %v2826 = vsel %vm2820, %v2825, %v2824
  %vm2827 = vcmp.lt.s32.totalorder %v1707, 0
  %v2828 = vsub.s32 0, %v1707
  %v2829 = vsel %vm2827, %v2828, %v1707
  %v2830 = vshrl.u32 %v2829, 8
  %v2831 = vand.u32 %v2829, 255
  %v2832 = vsub.s32 0, %v2831
  %v2833 = vsel %vm2827, %v2832, %v2831
  %vm2834 = vcmp.lt.s32.totalorder %v1708, 0
  %v2835 = vsub.s32 0, %v1708
  %v2836 = vsel %vm2834, %v2835, %v1708
  %v2837 = vshrl.u32 %v2836, 8
  %v2838 = vand.u32 %v2836, 255
  %v2839 = vsub.s32 0, %v2838
  %v2840 = vsel %vm2834, %v2839, %v2838
  %vm2841 = vcmp.lt.s32.totalorder %v1709, 0
  %v2842 = vsub.s32 0, %v1709
  %v2843 = vsel %vm2841, %v2842, %v1709
  %v2844 = vshrl.u32 %v2843, 8
  %v2845 = vand.u32 %v2843, 255
  %v2846 = vsub.s32 0, %v2845
  %v2847 = vsel %vm2841, %v2846, %v2845
  %vm2848 = vcmp.lt.s32.totalorder %v1710, 0
  %v2849 = vsub.s32 0, %v1710
  %v2850 = vsel %vm2848, %v2849, %v1710
  %v2851 = vshrl.u32 %v2850, 8
  %v2852 = vand.u32 %v2850, 255
  %v2853 = vsub.s32 0, %v2852
  %v2854 = vsel %vm2848, %v2853, %v2852
  %vm2855 = vcmp.lt.s32.totalorder %v1711, 0
  %v2856 = vsub.s32 0, %v1711
  %v2857 = vsel %vm2855, %v2856, %v1711
  %v2858 = vshrl.u32 %v2857, 8
  %v2859 = vand.u32 %v2857, 255
  %v2860 = vsub.s32 0, %v2859
  %v2861 = vsel %vm2855, %v2860, %v2859
  %vm2862 = vcmp.lt.s32.totalorder %v1712, 0
  %v2863 = vsub.s32 0, %v1712
  %v2864 = vsel %vm2862, %v2863, %v1712
  %v2865 = vshrl.u32 %v2864, 8
  %v2866 = vand.u32 %v2864, 255
  %v2867 = vsub.s32 0, %v2866
  %v2868 = vsel %vm2862, %v2867, %v2866
  %vm2869 = vcmp.lt.s32.totalorder %v1713, 0
  %v2870 = vsub.s32 0, %v1713
  %v2871 = vsel %vm2869, %v2870, %v1713
  %v2872 = vshrl.u32 %v2871, 8
  %v2873 = vand.u32 %v2871, 255
  %v2874 = vsub.s32 0, %v2873
  %v2875 = vsel %vm2869, %v2874, %v2873
  %vm2876 = vcmp.lt.s32.totalorder %v1714, 0
  %v2877 = vsub.s32 0, %v1714
  %v2878 = vsel %vm2876, %v2877, %v1714
  %v2879 = vshrl.u32 %v2878, 8
  %v2880 = vand.u32 %v2878, 255
  %v2881 = vsub.s32 0, %v2880
  %v2882 = vsel %vm2876, %v2881, %v2880
  %vm2883 = vcmp.lt.s32.totalorder %v1715, 0
  %v2884 = vsub.s32 0, %v1715
  %v2885 = vsel %vm2883, %v2884, %v1715
  %v2886 = vshrl.u32 %v2885, 8
  %v2887 = vand.u32 %v2885, 255
  %v2888 = vsub.s32 0, %v2887
  %v2889 = vsel %vm2883, %v2888, %v2887
  %vm2890 = vcmp.lt.s32.totalorder %v1716, 0
  %v2891 = vsub.s32 0, %v1716
  %v2892 = vsel %vm2890, %v2891, %v1716
  %v2893 = vshrl.u32 %v2892, 8
  %v2894 = vand.u32 %v2892, 255
  %v2895 = vsub.s32 0, %v2894
  %v2896 = vsel %vm2890, %v2895, %v2894
  %vm2897 = vcmp.lt.s32.totalorder %v1717, 0
  %v2898 = vsub.s32 0, %v1717
  %v2899 = vsel %vm2897, %v2898, %v1717
  %v2900 = vshrl.u32 %v2899, 8
  %v2901 = vand.u32 %v2899, 255
  %v2902 = vsub.s32 0, %v2901
  %v2903 = vsel %vm2897, %v2902, %v2901
  %vm2904 = vcmp.lt.s32.totalorder %v1718, 0
  %v2905 = vsub.s32 0, %v1718
  %v2906 = vsel %vm2904, %v2905, %v1718
  %v2907 = vshrl.u32 %v2906, 8
  %v2908 = vand.u32 %v2906, 255
  %v2909 = vsub.s32 0, %v2908
  %v2910 = vsel %vm2904, %v2909, %v2908
  %vm2911 = vcmp.lt.s32.totalorder %v1719, 0
  %v2912 = vsub.s32 0, %v1719
  %v2913 = vsel %vm2911, %v2912, %v1719
  %v2914 = vshrl.u32 %v2913, 8
  %v2915 = vand.u32 %v2913, 255
  %v2916 = vsub.s32 0, %v2915
  %v2917 = vsel %vm2911, %v2916, %v2915
  %vm2918 = vcmp.lt.s32.totalorder %v1720, 0
  %v2919 = vsub.s32 0, %v1720
  %v2920 = vsel %vm2918, %v2919, %v1720
  %v2921 = vshrl.u32 %v2920, 8
  %v2922 = vand.u32 %v2920, 255
  %v2923 = vsub.s32 0, %v2922
  %v2924 = vsel %vm2918, %v2923, %v2922
  %vm2925 = vcmp.lt.s32.totalorder %v1721, 0
  %v2926 = vsub.s32 0, %v1721
  %v2927 = vsel %vm2925, %v2926, %v1721
  %v2928 = vshrl.u32 %v2927, 8
  %v2929 = vand.u32 %v2927, 255
  %v2930 = vsub.s32 0, %v2929
  %v2931 = vsel %vm2925, %v2930, %v2929
  %vm2932 = vcmp.lt.s32.totalorder %v1722, 0
  %v2933 = vsub.s32 0, %v1722
  %v2934 = vsel %vm2932, %v2933, %v1722
  %v2935 = vshrl.u32 %v2934, 8
  %v2936 = vand.u32 %v2934, 255
  %v2937 = vsub.s32 0, %v2936
  %v2938 = vsel %vm2932, %v2937, %v2936
  %vm2939 = vcmp.ne.s32.totalorder %v2497, 0
  %vm2940 = vcmp.ne.s32.totalorder %v2504, 0
  %vm2941 = vcmp.ne.s32.totalorder %v2511, 0
  %vm2942 = vcmp.ne.s32.totalorder %v2518, 0
  %vm2943 = vcmp.ne.s32.totalorder %v2525, 0
  %vm2944 = vcmp.ne.s32.totalorder %v2532, 0
  %vm2945 = vcmp.ne.s32.totalorder %v2539, 0
  %vm2946 = vcmp.ne.s32.totalorder %v2546, 0
  %vm2947 = vcmp.ne.s32.totalorder %v2553, 0
  %vm2948 = vcmp.ne.s32.totalorder %v2560, 0
  %vm2949 = vcmp.ne.s32.totalorder %v2567, 0
  %vm2950 = vcmp.ne.s32.totalorder %v2574, 0
  %vm2951 = vcmp.ne.s32.totalorder %v2581, 0
  %vm2952 = vcmp.ne.s32.totalorder %v2588, 0
  %vm2953 = vcmp.ne.s32.totalorder %v2595, 0
  %vm2954 = vcmp.ne.s32.totalorder %v2602, 0
  %vm2955 = vcmp.ne.s32.totalorder %v2609, 0
  %vm2956 = vcmp.ne.s32.totalorder %v2616, 0
  %vm2957 = vcmp.ne.s32.totalorder %v2623, 0
  %vm2958 = vcmp.ne.s32.totalorder %v2630, 0
  %vm2959 = vcmp.ne.s32.totalorder %v2637, 0
  %vm2960 = vcmp.ne.s32.totalorder %v2644, 0
  %vm2961 = vcmp.ne.s32.totalorder %v2651, 0
  %vm2962 = vcmp.ne.s32.totalorder %v2658, 0
  %vm2963 = vcmp.ne.s32.totalorder %v2665, 0
  %vm2964 = vcmp.ne.s32.totalorder %v2672, 0
  %vm2965 = vcmp.ne.s32.totalorder %v2679, 0
  %vm2966 = vcmp.ne.s32.totalorder %v2686, 0
  %vm2967 = vcmp.ne.s32.totalorder %v2693, 0
  %vm2968 = vcmp.ne.s32.totalorder %v2700, 0
  %vm2969 = vcmp.ne.s32.totalorder %v2707, 0
  %vm2970 = vcmp.ne.s32.totalorder %v2714, 0
  %vm2971 = vcmp.ne.s32.totalorder %v2721, 0
  %vm2972 = vcmp.ne.s32.totalorder %v2728, 0
  %vm2973 = vcmp.ne.s32.totalorder %v2735, 0
  %vm2974 = vcmp.ne.s32.totalorder %v2742, 0
  %vm2975 = vcmp.ne.s32.totalorder %v2749, 0
  %vm2976 = vcmp.ne.s32.totalorder %v2756, 0
  %vm2977 = vcmp.ne.s32.totalorder %v2763, 0
  %vm2978 = vcmp.ne.s32.totalorder %v2770, 0
  %vm2979 = vcmp.ne.s32.totalorder %v2777, 0
  %vm2980 = vcmp.ne.s32.totalorder %v2784, 0
  %vm2981 = vcmp.ne.s32.totalorder %v2791, 0
  %vm2982 = vcmp.ne.s32.totalorder %v2798, 0
  %vm2983 = vcmp.ne.s32.totalorder %v2805, 0
  %vm2984 = vcmp.ne.s32.totalorder %v2812, 0
  %vm2985 = vcmp.ne.s32.totalorder %v2819, 0
  %vm2986 = vcmp.ne.s32.totalorder %v2826, 0
  %vm2987 = vcmp.ne.s32.totalorder %v2833, 0
  %vm2988 = vcmp.ne.s32.totalorder %v2840, 0
  %vm2989 = vcmp.ne.s32.totalorder %v2847, 0
  %vm2990 = vcmp.ne.s32.totalorder %v2854, 0
  %vm2991 = vcmp.ne.s32.totalorder %v2861, 0
  %vm2992 = vcmp.ne.s32.totalorder %v2868, 0
  %vm2993 = vcmp.ne.s32.totalorder %v2875, 0
  %vm2994 = vcmp.ne.s32.totalorder %v2882, 0
  %vm2995 = vcmp.ne.s32.totalorder %v2889, 0
  %vm2996 = vcmp.ne.s32.totalorder %v2896, 0
  %vm2997 = vcmp.ne.s32.totalorder %v2903, 0
  %vm2998 = vcmp.ne.s32.totalorder %v2910, 0
  %vm2999 = vcmp.ne.s32.totalorder %v2917, 0
  %vm3000 = vcmp.ne.s32.totalorder %v2924, 0
  %vm3001 = vcmp.ne.s32.totalorder %v2931, 0
  %vm3002 = vcmp.ne.s32.totalorder %v2938, 0
  %vm3003 = vcmp.lt.s32.totalorder %v2497, 0
  %vm3004 = vcmp.lt.s32.totalorder %v2504, 0
  %vm3005 = vcmp.lt.s32.totalorder %v2511, 0
  %vm3006 = vcmp.lt.s32.totalorder %v2518, 0
  %vm3007 = vcmp.lt.s32.totalorder %v2525, 0
  %vm3008 = vcmp.lt.s32.totalorder %v2532, 0
  %vm3009 = vcmp.lt.s32.totalorder %v2539, 0
  %vm3010 = vcmp.lt.s32.totalorder %v2546, 0
  %vm3011 = vcmp.lt.s32.totalorder %v2553, 0
  %vm3012 = vcmp.lt.s32.totalorder %v2560, 0
  %vm3013 = vcmp.lt.s32.totalorder %v2567, 0
  %vm3014 = vcmp.lt.s32.totalorder %v2574, 0
  %vm3015 = vcmp.lt.s32.totalorder %v2581, 0
  %vm3016 = vcmp.lt.s32.totalorder %v2588, 0
  %vm3017 = vcmp.lt.s32.totalorder %v2595, 0
  %vm3018 = vcmp.lt.s32.totalorder %v2602, 0
  %vm3019 = vcmp.lt.s32.totalorder %v2609, 0
  %vm3020 = vcmp.lt.s32.totalorder %v2616, 0
  %vm3021 = vcmp.lt.s32.totalorder %v2623, 0
  %vm3022 = vcmp.lt.s32.totalorder %v2630, 0
  %vm3023 = vcmp.lt.s32.totalorder %v2637, 0
  %vm3024 = vcmp.lt.s32.totalorder %v2644, 0
  %vm3025 = vcmp.lt.s32.totalorder %v2651, 0
  %vm3026 = vcmp.lt.s32.totalorder %v2658, 0
  %vm3027 = vcmp.lt.s32.totalorder %v2665, 0
  %vm3028 = vcmp.lt.s32.totalorder %v2672, 0
  %vm3029 = vcmp.lt.s32.totalorder %v2679, 0
  %vm3030 = vcmp.lt.s32.totalorder %v2686, 0
  %vm3031 = vcmp.lt.s32.totalorder %v2693, 0
  %vm3032 = vcmp.lt.s32.totalorder %v2700, 0
  %vm3033 = vcmp.lt.s32.totalorder %v2707, 0
  %vm3034 = vcmp.lt.s32.totalorder %v2714, 0
  %vm3035 = vcmp.lt.s32.totalorder %v2721, 0
  %vm3036 = vcmp.lt.s32.totalorder %v2728, 0
  %vm3037 = vcmp.lt.s32.totalorder %v2735, 0
  %vm3038 = vcmp.lt.s32.totalorder %v2742, 0
  %vm3039 = vcmp.lt.s32.totalorder %v2749, 0
  %vm3040 = vcmp.lt.s32.totalorder %v2756, 0
  %vm3041 = vcmp.lt.s32.totalorder %v2763, 0
  %vm3042 = vcmp.lt.s32.totalorder %v2770, 0
  %vm3043 = vcmp.lt.s32.totalorder %v2777, 0
  %vm3044 = vcmp.lt.s32.totalorder %v2784, 0
  %vm3045 = vcmp.lt.s32.totalorder %v2791, 0
  %vm3046 = vcmp.lt.s32.totalorder %v2798, 0
  %vm3047 = vcmp.lt.s32.totalorder %v2805, 0
  %vm3048 = vcmp.lt.s32.totalorder %v2812, 0
  %vm3049 = vcmp.lt.s32.totalorder %v2819, 0
  %vm3050 = vcmp.lt.s32.totalorder %v2826, 0
  %vm3051 = vcmp.lt.s32.totalorder %v2833, 0
  %vm3052 = vcmp.lt.s32.totalorder %v2840, 0
  %vm3053 = vcmp.lt.s32.totalorder %v2847, 0
  %vm3054 = vcmp.lt.s32.totalorder %v2854, 0
  %vm3055 = vcmp.lt.s32.totalorder %v2861, 0
  %vm3056 = vcmp.lt.s32.totalorder %v2868, 0
  %vm3057 = vcmp.lt.s32.totalorder %v2875, 0
  %vm3058 = vcmp.lt.s32.totalorder %v2882, 0
  %vm3059 = vcmp.lt.s32.totalorder %v2889, 0
  %vm3060 = vcmp.lt.s32.totalorder %v2896, 0
  %vm3061 = vcmp.lt.s32.totalorder %v2903, 0
  %vm3062 = vcmp.lt.s32.totalorder %v2910, 0
  %vm3063 = vcmp.lt.s32.totalorder %v2917, 0
  %vm3064 = vcmp.lt.s32.totalorder %v2924, 0
  %vm3065 = vcmp.lt.s32.totalorder %v2931, 0
  %vm3066 = vcmp.lt.s32.totalorder %v2938, 0
  %vm3067 = vmand %vm3003, %vm2939
  %vm3068 = vmand %vm3004, %vm2940
  %vm3069 = vmand %vm3005, %vm2941
  %vm3070 = vmand %vm3006, %vm2942
  %vm3071 = vmand %vm3007, %vm2943
  %vm3072 = vmand %vm3008, %vm2944
  %vm3073 = vmand %vm3009, %vm2945
  %vm3074 = vmand %vm3010, %vm2946
  %vm3075 = vmand %vm3011, %vm2947
  %vm3076 = vmand %vm3012, %vm2948
  %vm3077 = vmand %vm3013, %vm2949
  %vm3078 = vmand %vm3014, %vm2950
  %vm3079 = vmand %vm3015, %vm2951
  %vm3080 = vmand %vm3016, %vm2952
  %vm3081 = vmand %vm3017, %vm2953
  %vm3082 = vmand %vm3018, %vm2954
  %vm3083 = vmand %vm3019, %vm2955
  %vm3084 = vmand %vm3020, %vm2956
  %vm3085 = vmand %vm3021, %vm2957
  %vm3086 = vmand %vm3022, %vm2958
  %vm3087 = vmand %vm3023, %vm2959
  %vm3088 = vmand %vm3024, %vm2960
  %vm3089 = vmand %vm3025, %vm2961
  %vm3090 = vmand %vm3026, %vm2962
  %vm3091 = vmand %vm3027, %vm2963
  %vm3092 = vmand %vm3028, %vm2964
  %vm3093 = vmand %vm3029, %vm2965
  %vm3094 = vmand %vm3030, %vm2966
  %vm3095 = vmand %vm3031, %vm2967
  %vm3096 = vmand %vm3032, %vm2968
  %vm3097 = vmand %vm3033, %vm2969
  %vm3098 = vmand %vm3034, %vm2970
  %vm3099 = vmand %vm3035, %vm2971
  %vm3100 = vmand %vm3036, %vm2972
  %vm3101 = vmand %vm3037, %vm2973
  %vm3102 = vmand %vm3038, %vm2974
  %vm3103 = vmand %vm3039, %vm2975
  %vm3104 = vmand %vm3040, %vm2976
  %vm3105 = vmand %vm3041, %vm2977
  %vm3106 = vmand %vm3042, %vm2978
  %vm3107 = vmand %vm3043, %vm2979
  %vm3108 = vmand %vm3044, %vm2980
  %vm3109 = vmand %vm3045, %vm2981
  %vm3110 = vmand %vm3046, %vm2982
  %vm3111 = vmand %vm3047, %vm2983
  %vm3112 = vmand %vm3048, %vm2984
  %vm3113 = vmand %vm3049, %vm2985
  %vm3114 = vmand %vm3050, %vm2986
  %vm3115 = vmand %vm3051, %vm2987
  %vm3116 = vmand %vm3052, %vm2988
  %vm3117 = vmand %vm3053, %vm2989
  %vm3118 = vmand %vm3054, %vm2990
  %vm3119 = vmand %vm3055, %vm2991
  %vm3120 = vmand %vm3056, %vm2992
  %vm3121 = vmand %vm3057, %vm2993
  %vm3122 = vmand %vm3058, %vm2994
  %vm3123 = vmand %vm3059, %vm2995
  %vm3124 = vmand %vm3060, %vm2996
  %vm3125 = vmand %vm3061, %vm2997
  %vm3126 = vmand %vm3062, %vm2998
  %vm3127 = vmand %vm3063, %vm2999
  %vm3128 = vmand %vm3064, %vm3000
  %vm3129 = vmand %vm3065, %vm3001
  %vm3130 = vmand %vm3066, %vm3002
  %v3131 = vadd.s32 %v2497, 256
  %v3132 = vadd.s32 %v2504, 256
  %v3133 = vadd.s32 %v2511, 256
  %v3134 = vadd.s32 %v2518, 256
  %v3135 = vadd.s32 %v2525, 256
  %v3136 = vadd.s32 %v2532, 256
  %v3137 = vadd.s32 %v2539, 256
  %v3138 = vadd.s32 %v2546, 256
  %v3139 = vadd.s32 %v2553, 256
  %v3140 = vadd.s32 %v2560, 256
  %v3141 = vadd.s32 %v2567, 256
  %v3142 = vadd.s32 %v2574, 256
  %v3143 = vadd.s32 %v2581, 256
  %v3144 = vadd.s32 %v2588, 256
  %v3145 = vadd.s32 %v2595, 256
  %v3146 = vadd.s32 %v2602, 256
  %v3147 = vadd.s32 %v2609, 256
  %v3148 = vadd.s32 %v2616, 256
  %v3149 = vadd.s32 %v2623, 256
  %v3150 = vadd.s32 %v2630, 256
  %v3151 = vadd.s32 %v2637, 256
  %v3152 = vadd.s32 %v2644, 256
  %v3153 = vadd.s32 %v2651, 256
  %v3154 = vadd.s32 %v2658, 256
  %v3155 = vadd.s32 %v2665, 256
  %v3156 = vadd.s32 %v2672, 256
  %v3157 = vadd.s32 %v2679, 256
  %v3158 = vadd.s32 %v2686, 256
  %v3159 = vadd.s32 %v2693, 256
  %v3160 = vadd.s32 %v2700, 256
  %v3161 = vadd.s32 %v2707, 256
  %v3162 = vadd.s32 %v2714, 256
  %v3163 = vadd.s32 %v2721, 256
  %v3164 = vadd.s32 %v2728, 256
  %v3165 = vadd.s32 %v2735, 256
  %v3166 = vadd.s32 %v2742, 256
  %v3167 = vadd.s32 %v2749, 256
  %v3168 = vadd.s32 %v2756, 256
  %v3169 = vadd.s32 %v2763, 256
  %v3170 = vadd.s32 %v2770, 256
  %v3171 = vadd.s32 %v2777, 256
  %v3172 = vadd.s32 %v2784, 256
  %v3173 = vadd.s32 %v2791, 256
  %v3174 = vadd.s32 %v2798, 256
  %v3175 = vadd.s32 %v2805, 256
  %v3176 = vadd.s32 %v2812, 256
  %v3177 = vadd.s32 %v2819, 256
  %v3178 = vadd.s32 %v2826, 256
  %v3179 = vadd.s32 %v2833, 256
  %v3180 = vadd.s32 %v2840, 256
  %v3181 = vadd.s32 %v2847, 256
  %v3182 = vadd.s32 %v2854, 256
  %v3183 = vadd.s32 %v2861, 256
  %v3184 = vadd.s32 %v2868, 256
  %v3185 = vadd.s32 %v2875, 256
  %v3186 = vadd.s32 %v2882, 256
  %v3187 = vadd.s32 %v2889, 256
  %v3188 = vadd.s32 %v2896, 256
  %v3189 = vadd.s32 %v2903, 256
  %v3190 = vadd.s32 %v2910, 256
  %v3191 = vadd.s32 %v2917, 256
  %v3192 = vadd.s32 %v2924, 256
  %v3193 = vadd.s32 %v2931, 256
  %v3194 = vadd.s32 %v2938, 256
  %v3195 = vsel %vm3067, %v3131, %v2497
  %v3196 = vsel %vm3068, %v3132, %v2504
  %v3197 = vsel %vm3069, %v3133, %v2511
  %v3198 = vsel %vm3070, %v3134, %v2518
  %v3199 = vsel %vm3071, %v3135, %v2525
  %v3200 = vsel %vm3072, %v3136, %v2532
  %v3201 = vsel %vm3073, %v3137, %v2539
  %v3202 = vsel %vm3074, %v3138, %v2546
  %v3203 = vsel %vm3075, %v3139, %v2553
  %v3204 = vsel %vm3076, %v3140, %v2560
  %v3205 = vsel %vm3077, %v3141, %v2567
  %v3206 = vsel %vm3078, %v3142, %v2574
  %v3207 = vsel %vm3079, %v3143, %v2581
  %v3208 = vsel %vm3080, %v3144, %v2588
  %v3209 = vsel %vm3081, %v3145, %v2595
  %v3210 = vsel %vm3082, %v3146, %v2602
  %v3211 = vsel %vm3083, %v3147, %v2609
  %v3212 = vsel %vm3084, %v3148, %v2616
  %v3213 = vsel %vm3085, %v3149, %v2623
  %v3214 = vsel %vm3086, %v3150, %v2630
  %v3215 = vsel %vm3087, %v3151, %v2637
  %v3216 = vsel %vm3088, %v3152, %v2644
  %v3217 = vsel %vm3089, %v3153, %v2651
  %v3218 = vsel %vm3090, %v3154, %v2658
  %v3219 = vsel %vm3091, %v3155, %v2665
  %v3220 = vsel %vm3092, %v3156, %v2672
  %v3221 = vsel %vm3093, %v3157, %v2679
  %v3222 = vsel %vm3094, %v3158, %v2686
  %v3223 = vsel %vm3095, %v3159, %v2693
  %v3224 = vsel %vm3096, %v3160, %v2700
  %v3225 = vsel %vm3097, %v3161, %v2707
  %v3226 = vsel %vm3098, %v3162, %v2714
  %v3227 = vsel %vm3099, %v3163, %v2721
  %v3228 = vsel %vm3100, %v3164, %v2728
  %v3229 = vsel %vm3101, %v3165, %v2735
  %v3230 = vsel %vm3102, %v3166, %v2742
  %v3231 = vsel %vm3103, %v3167, %v2749
  %v3232 = vsel %vm3104, %v3168, %v2756
  %v3233 = vsel %vm3105, %v3169, %v2763
  %v3234 = vsel %vm3106, %v3170, %v2770
  %v3235 = vsel %vm3107, %v3171, %v2777
  %v3236 = vsel %vm3108, %v3172, %v2784
  %v3237 = vsel %vm3109, %v3173, %v2791
  %v3238 = vsel %vm3110, %v3174, %v2798
  %v3239 = vsel %vm3111, %v3175, %v2805
  %v3240 = vsel %vm3112, %v3176, %v2812
  %v3241 = vsel %vm3113, %v3177, %v2819
  %v3242 = vsel %vm3114, %v3178, %v2826
  %v3243 = vsel %vm3115, %v3179, %v2833
  %v3244 = vsel %vm3116, %v3180, %v2840
  %v3245 = vsel %vm3117, %v3181, %v2847
  %v3246 = vsel %vm3118, %v3182, %v2854
  %v3247 = vsel %vm3119, %v3183, %v2861
  %v3248 = vsel %vm3120, %v3184, %v2868
  %v3249 = vsel %vm3121, %v3185, %v2875
  %v3250 = vsel %vm3122, %v3186, %v2882
  %v3251 = vsel %vm3123, %v3187, %v2889
  %v3252 = vsel %vm3124, %v3188, %v2896
  %v3253 = vsel %vm3125, %v3189, %v2903
  %v3254 = vsel %vm3126, %v3190, %v2910
  %v3255 = vsel %vm3127, %v3191, %v2917
  %v3256 = vsel %vm3128, %v3192, %v2924
  %v3257 = vsel %vm3129, %v3193, %v2931
  %v3258 = vsel %vm3130, %v3194, %v2938
  %v3259 = vld [vmem:[#allocation2 + $0x7] sm:$0xff]
  %v3260 = vld [vmem:[#allocation2 + $0xf] sm:$0xff]
  %v3261 = vld [vmem:[#allocation2 + $0x17] sm:$0xff]
  %v3262 = vld [vmem:[#allocation2 + $0x1f] sm:$0xff]
  %v3263 = vld [vmem:[#allocation2 + $0x27] sm:$0xff]
  %v3264 = vld [vmem:[#allocation2 + $0x2f] sm:$0xff]
  %v3265 = vld [vmem:[#allocation2 + $0x37] sm:$0xff]
  %v3266 = vld [vmem:[#allocation2 + $0x3f] sm:$0xff]
  %v3267 = vld [vmem:[#allocation2 + $0x47] sm:$0xff]
  %v3268 = vld [vmem:[#allocation2 + $0x4f] sm:$0xff]
  %v3269 = vld [vmem:[#allocation2 + $0x57] sm:$0xff]
  %v3270 = vld [vmem:[#allocation2 + $0x5f] sm:$0xff]
  %v3271 = vld [vmem:[#allocation2 + $0x67] sm:$0xff]
  %v3272 = vld [vmem:[#allocation2 + $0x6f] sm:$0xff]
  %v3273 = vld [vmem:[#allocation2 + $0x77] sm:$0xff]
  %v3274 = vld [vmem:[#allocation2 + $0x7f] sm:$0xff]
  %v3275 = vld [vmem:[#allocation2 + $0x87] sm:$0xff]
  %v3276 = vld [vmem:[#allocation2 + $0x8f] sm:$0xff]
  %v3277 = vld [vmem:[#allocation2 + $0x97] sm:$0xff]
  %v3278 = vld [vmem:[#allocation2 + $0x9f] sm:$0xff]
  %v3279 = vld [vmem:[#allocation2 + $0xa7] sm:$0xff]
  %v3280 = vld [vmem:[#allocation2 + $0xaf] sm:$0xff]
  %v3281 = vld [vmem:[#allocation2 + $0xb7] sm:$0xff]
  %v3282 = vld [vmem:[#allocation2 + $0xbf] sm:$0xff]
  %v3283 = vld [vmem:[#allocation2 + $0xc7] sm:$0xff]
  %v3284 = vld [vmem:[#allocation2 + $0xcf] sm:$0xff]
  %v3285 = vld [vmem:[#allocation2 + $0xd7] sm:$0xff]
  %v3286 = vld [vmem:[#allocation2 + $0xdf] sm:$0xff]
  %v3287 = vld [vmem:[#allocation2 + $0xe7] sm:$0xff]
  %v3288 = vld [vmem:[#allocation2 + $0xef] sm:$0xff]
  %v3289 = vld [vmem:[#allocation2 + $0xf7] sm:$0xff]
  %v3290 = vld [vmem:[#allocation2 + $0xff] sm:$0xff]
  %v3291 = vld [vmem:[#allocation2 + $0x107] sm:$0xff]
  %v3292 = vld [vmem:[#allocation2 + $0x10f] sm:$0xff]
  %v3293 = vld [vmem:[#allocation2 + $0x117] sm:$0xff]
  %v3294 = vld [vmem:[#allocation2 + $0x11f] sm:$0xff]
  %v3295 = vld [vmem:[#allocation2 + $0x127] sm:$0xff]
  %v3296 = vld [vmem:[#allocation2 + $0x12f] sm:$0xff]
  %v3297 = vld [vmem:[#allocation2 + $0x137] sm:$0xff]
  %v3298 = vld [vmem:[#allocation2 + $0x13f] sm:$0xff]
  %v3299 = vld [vmem:[#allocation2 + $0x147] sm:$0xff]
  %v3300 = vld [vmem:[#allocation2 + $0x14f] sm:$0xff]
  %v3301 = vld [vmem:[#allocation2 + $0x157] sm:$0xff]
  %v3302 = vld [vmem:[#allocation2 + $0x15f] sm:$0xff]
  %v3303 = vld [vmem:[#allocation2 + $0x167] sm:$0xff]
  %v3304 = vld [vmem:[#allocation2 + $0x16f] sm:$0xff]
  %v3305 = vld [vmem:[#allocation2 + $0x177] sm:$0xff]
  %v3306 = vld [vmem:[#allocation2 + $0x17f] sm:$0xff]
  %v3307 = vld [vmem:[#allocation2 + $0x187] sm:$0xff]
  %v3308 = vld [vmem:[#allocation2 + $0x18f] sm:$0xff]
  %v3309 = vld [vmem:[#allocation2 + $0x197] sm:$0xff]
  %v3310 = vld [vmem:[#allocation2 + $0x19f] sm:$0xff]
  %v3311 = vld [vmem:[#allocation2 + $0x1a7] sm:$0xff]
  %v3312 = vld [vmem:[#allocation2 + $0x1af] sm:$0xff]
  %v3313 = vld [vmem:[#allocation2 + $0x1b7] sm:$0xff]
  %v3314 = vld [vmem:[#allocation2 + $0x1bf] sm:$0xff]
  %v3315 = vld [vmem:[#allocation2 + $0x1c7] sm:$0xff]
  %v3316 = vld [vmem:[#allocation2 + $0x1cf] sm:$0xff]
  %v3317 = vld [vmem:[#allocation2 + $0x1d7] sm:$0xff]
  %v3318 = vld [vmem:[#allocation2 + $0x1df] sm:$0xff]
  %v3319 = vld [vmem:[#allocation2 + $0x1e7] sm:$0xff]
  %v3320 = vld [vmem:[#allocation2 + $0x1ef] sm:$0xff]
  %v3321 = vld [vmem:[#allocation2 + $0x1f7] sm:$0xff]
  %v3322 = vld [vmem:[#allocation2 + $0x1ff] sm:$0xff]
  %v3323 = vadd.s32 %v3195, 4294967280
  %v3324 = vadd.s32 %v3196, 4294967280
  %v3325 = vadd.s32 %v3197, 4294967280
  %v3326 = vadd.s32 %v3198, 4294967280
  %v3327 = vadd.s32 %v3199, 4294967280
  %v3328 = vadd.s32 %v3200, 4294967280
  %v3329 = vadd.s32 %v3201, 4294967280
  %v3330 = vadd.s32 %v3202, 4294967280
  %v3331 = vadd.s32 %v3203, 4294967280
  %v3332 = vadd.s32 %v3204, 4294967280
  %v3333 = vadd.s32 %v3205, 4294967280
  %v3334 = vadd.s32 %v3206, 4294967280
  %v3335 = vadd.s32 %v3207, 4294967280
  %v3336 = vadd.s32 %v3208, 4294967280
  %v3337 = vadd.s32 %v3209, 4294967280
  %v3338 = vadd.s32 %v3210, 4294967280
  %v3339 = vadd.s32 %v3211, 4294967280
  %v3340 = vadd.s32 %v3212, 4294967280
  %v3341 = vadd.s32 %v3213, 4294967280
  %v3342 = vadd.s32 %v3214, 4294967280
  %v3343 = vadd.s32 %v3215, 4294967280
  %v3344 = vadd.s32 %v3216, 4294967280
  %v3345 = vadd.s32 %v3217, 4294967280
  %v3346 = vadd.s32 %v3218, 4294967280
  %v3347 = vadd.s32 %v3219, 4294967280
  %v3348 = vadd.s32 %v3220, 4294967280
  %v3349 = vadd.s32 %v3221, 4294967280
  %v3350 = vadd.s32 %v3222, 4294967280
  %v3351 = vadd.s32 %v3223, 4294967280
  %v3352 = vadd.s32 %v3224, 4294967280
  %v3353 = vadd.s32 %v3225, 4294967280
  %v3354 = vadd.s32 %v3226, 4294967280
  %v3355 = vadd.s32 %v3227, 4294967280
  %v3356 = vadd.s32 %v3228, 4294967280
  %v3357 = vadd.s32 %v3229, 4294967280
  %v3358 = vadd.s32 %v3230, 4294967280
  %v3359 = vadd.s32 %v3231, 4294967280
  %v3360 = vadd.s32 %v3232, 4294967280
  %v3361 = vadd.s32 %v3233, 4294967280
  %v3362 = vadd.s32 %v3234, 4294967280
  %v3363 = vadd.s32 %v3235, 4294967280
  %v3364 = vadd.s32 %v3236, 4294967280
  %v3365 = vadd.s32 %v3237, 4294967280
  %v3366 = vadd.s32 %v3238, 4294967280
  %v3367 = vadd.s32 %v3239, 4294967280
  %v3368 = vadd.s32 %v3240, 4294967280
  %v3369 = vadd.s32 %v3241, 4294967280
  %v3370 = vadd.s32 %v3242, 4294967280
  %v3371 = vadd.s32 %v3243, 4294967280
  %v3372 = vadd.s32 %v3244, 4294967280
  %v3373 = vadd.s32 %v3245, 4294967280
  %v3374 = vadd.s32 %v3246, 4294967280
  %v3375 = vadd.s32 %v3247, 4294967280
  %v3376 = vadd.s32 %v3248, 4294967280
  %v3377 = vadd.s32 %v3249, 4294967280
  %v3378 = vadd.s32 %v3250, 4294967280
  %v3379 = vadd.s32 %v3251, 4294967280
  %v3380 = vadd.s32 %v3252, 4294967280
  %v3381 = vadd.s32 %v3253, 4294967280
  %v3382 = vadd.s32 %v3254, 4294967280
  %v3383 = vadd.s32 %v3255, 4294967280
  %v3384 = vadd.s32 %v3256, 4294967280
  %v3385 = vadd.s32 %v3257, 4294967280
  %v3386 = vadd.s32 %v3258, 4294967280
  %v3387 = vadd.s32 %v2427, 4294967295
  %v3388 = vadd.s32 %v2428, 4294967295
  %v3389 = vadd.s32 %v2429, 4294967295
  %v3390 = vadd.s32 %v2430, 4294967295
  %v3391 = vadd.s32 %v2431, 4294967295
  %v3392 = vadd.s32 %v2432, 4294967295
  %v3393 = vadd.s32 %v2433, 4294967295
  %v3394 = vadd.s32 %v2434, 4294967295
  %v3395 = vadd.s32 %v2435, 4294967295
  %v3396 = vadd.s32 %v2436, 4294967295
  %v3397 = vadd.s32 %v2437, 4294967295
  %v3398 = vadd.s32 %v2438, 4294967295
  %v3399 = vadd.s32 %v2439, 4294967295
  %v3400 = vadd.s32 %v2440, 4294967295
  %v3401 = vadd.s32 %v2441, 4294967295
  %v3402 = vadd.s32 %v2442, 4294967295
  %v3403 = vadd.s32 %v2443, 4294967295
  %v3404 = vadd.s32 %v2444, 4294967295
  %v3405 = vadd.s32 %v2445, 4294967295
  %v3406 = vadd.s32 %v2446, 4294967295
  %v3407 = vadd.s32 %v2447, 4294967295
  %v3408 = vadd.s32 %v2448, 4294967295
  %v3409 = vadd.s32 %v2449, 4294967295
  %v3410 = vadd.s32 %v2450, 4294967295
  %v3411 = vadd.s32 %v2451, 4294967295
  %v3412 = vadd.s32 %v2452, 4294967295
  %v3413 = vadd.s32 %v2453, 4294967295
  %v3414 = vadd.s32 %v2454, 4294967295
  %v3415 = vadd.s32 %v2455, 4294967295
  %v3416 = vadd.s32 %v2456, 4294967295
  %v3417 = vadd.s32 %v2457, 4294967295
  %v3418 = vadd.s32 %v2458, 4294967295
  %v3419 = vadd.s32 %v2459, 4294967295
  %v3420 = vadd.s32 %v2460, 4294967295
  %v3421 = vadd.s32 %v2461, 4294967295
  %v3422 = vadd.s32 %v2462, 4294967295
  %v3423 = vadd.s32 %v2463, 4294967295
  %v3424 = vadd.s32 %v2464, 4294967295
  %v3425 = vadd.s32 %v2465, 4294967295
  %v3426 = vadd.s32 %v2466, 4294967295
  %v3427 = vadd.s32 %v2467, 4294967295
  %v3428 = vadd.s32 %v2468, 4294967295
  %v3429 = vadd.s32 %v2469, 4294967295
  %v3430 = vadd.s32 %v2470, 4294967295
  %v3431 = vadd.s32 %v2471, 4294967295
  %v3432 = vadd.s32 %v2472, 4294967295
  %v3433 = vadd.s32 %v2473, 4294967295
  %v3434 = vadd.s32 %v2474, 4294967295
  %v3435 = vadd.s32 %v2475, 4294967295
  %v3436 = vadd.s32 %v2476, 4294967295
  %v3437 = vadd.s32 %v2477, 4294967295
  %v3438 = vadd.s32 %v2478, 4294967295
  %v3439 = vadd.s32 %v2479, 4294967295
  %v3440 = vadd.s32 %v2480, 4294967295
  %v3441 = vadd.s32 %v2481, 4294967295
  %v3442 = vadd.s32 %v2482, 4294967295
  %v3443 = vadd.s32 %v2483, 4294967295
  %v3444 = vadd.s32 %v2484, 4294967295
  %v3445 = vadd.s32 %v2485, 4294967295
  %v3446 = vadd.s32 %v2486, 4294967295
  %v3447 = vadd.s32 %v2487, 4294967295
  %v3448 = vadd.s32 %v2488, 4294967295
  %v3449 = vadd.s32 %v2489, 4294967295
  %v3450 = vadd.s32 %v2490, 4294967295
  %vm3451 = vcmp.ge.s32.totalorder %v3323, 0
  %vm3452 = vcmp.ge.s32.totalorder %v3324, 0
  %vm3453 = vcmp.ge.s32.totalorder %v3325, 0
  %vm3454 = vcmp.ge.s32.totalorder %v3326, 0
  %vm3455 = vcmp.ge.s32.totalorder %v3327, 0
  %vm3456 = vcmp.ge.s32.totalorder %v3328, 0
  %vm3457 = vcmp.ge.s32.totalorder %v3329, 0
  %vm3458 = vcmp.ge.s32.totalorder %v3330, 0
  %vm3459 = vcmp.ge.s32.totalorder %v3331, 0
  %vm3460 = vcmp.ge.s32.totalorder %v3332, 0
  %vm3461 = vcmp.ge.s32.totalorder %v3333, 0
  %vm3462 = vcmp.ge.s32.totalorder %v3334, 0
  %vm3463 = vcmp.ge.s32.totalorder %v3335, 0
  %vm3464 = vcmp.ge.s32.totalorder %v3336, 0
  %vm3465 = vcmp.ge.s32.totalorder %v3337, 0
  %vm3466 = vcmp.ge.s32.totalorder %v3338, 0
  %vm3467 = vcmp.ge.s32.totalorder %v3339, 0
  %vm3468 = vcmp.ge.s32.totalorder %v3340, 0
  %vm3469 = vcmp.ge.s32.totalorder %v3341, 0
  %vm3470 = vcmp.ge.s32.totalorder %v3342, 0
  %vm3471 = vcmp.ge.s32.totalorder %v3343, 0
  %vm3472 = vcmp.ge.s32.totalorder %v3344, 0
  %vm3473 = vcmp.ge.s32.totalorder %v3345, 0
  %vm3474 = vcmp.ge.s32.totalorder %v3346, 0
  %vm3475 = vcmp.ge.s32.totalorder %v3347, 0
  %vm3476 = vcmp.ge.s32.totalorder %v3348, 0
  %vm3477 = vcmp.ge.s32.totalorder %v3349, 0
  %vm3478 = vcmp.ge.s32.totalorder %v3350, 0
  %vm3479 = vcmp.ge.s32.totalorder %v3351, 0
  %vm3480 = vcmp.ge.s32.totalorder %v3352, 0
  %vm3481 = vcmp.ge.s32.totalorder %v3353, 0
  %vm3482 = vcmp.ge.s32.totalorder %v3354, 0
  %vm3483 = vcmp.ge.s32.totalorder %v3355, 0
  %vm3484 = vcmp.ge.s32.totalorder %v3356, 0
  %vm3485 = vcmp.ge.s32.totalorder %v3357, 0
  %vm3486 = vcmp.ge.s32.totalorder %v3358, 0
  %vm3487 = vcmp.ge.s32.totalorder %v3359, 0
  %vm3488 = vcmp.ge.s32.totalorder %v3360, 0
  %vm3489 = vcmp.ge.s32.totalorder %v3361, 0
  %vm3490 = vcmp.ge.s32.totalorder %v3362, 0
  %vm3491 = vcmp.ge.s32.totalorder %v3363, 0
  %vm3492 = vcmp.ge.s32.totalorder %v3364, 0
  %vm3493 = vcmp.ge.s32.totalorder %v3365, 0
  %vm3494 = vcmp.ge.s32.totalorder %v3366, 0
  %vm3495 = vcmp.ge.s32.totalorder %v3367, 0
  %vm3496 = vcmp.ge.s32.totalorder %v3368, 0
  %vm3497 = vcmp.ge.s32.totalorder %v3369, 0
  %vm3498 = vcmp.ge.s32.totalorder %v3370, 0
  %vm3499 = vcmp.ge.s32.totalorder %v3371, 0
  %vm3500 = vcmp.ge.s32.totalorder %v3372, 0
  %vm3501 = vcmp.ge.s32.totalorder %v3373, 0
  %vm3502 = vcmp.ge.s32.totalorder %v3374, 0
  %vm3503 = vcmp.ge.s32.totalorder %v3375, 0
  %vm3504 = vcmp.ge.s32.totalorder %v3376, 0
  %vm3505 = vcmp.ge.s32.totalorder %v3377, 0
  %vm3506 = vcmp.ge.s32.totalorder %v3378, 0
  %vm3507 = vcmp.ge.s32.totalorder %v3379, 0
  %vm3508 = vcmp.ge.s32.totalorder %v3380, 0
  %vm3509 = vcmp.ge.s32.totalorder %v3381, 0
  %vm3510 = vcmp.ge.s32.totalorder %v3382, 0
  %vm3511 = vcmp.ge.s32.totalorder %v3383, 0
  %vm3512 = vcmp.ge.s32.totalorder %v3384, 0
  %vm3513 = vcmp.ge.s32.totalorder %v3385, 0
  %vm3514 = vcmp.ge.s32.totalorder %v3386, 0
  %vm3515 = vcmp.lt.s32.totalorder %v3323, 256
  %vm3516 = vcmp.lt.s32.totalorder %v3324, 256
  %vm3517 = vcmp.lt.s32.totalorder %v3325, 256
  %vm3518 = vcmp.lt.s32.totalorder %v3326, 256
  %vm3519 = vcmp.lt.s32.totalorder %v3327, 256
  %vm3520 = vcmp.lt.s32.totalorder %v3328, 256
  %vm3521 = vcmp.lt.s32.totalorder %v3329, 256
  %vm3522 = vcmp.lt.s32.totalorder %v3330, 256
  %vm3523 = vcmp.lt.s32.totalorder %v3331, 256
  %vm3524 = vcmp.lt.s32.totalorder %v3332, 256
  %vm3525 = vcmp.lt.s32.totalorder %v3333, 256
  %vm3526 = vcmp.lt.s32.totalorder %v3334, 256
  %vm3527 = vcmp.lt.s32.totalorder %v3335, 256
  %vm3528 = vcmp.lt.s32.totalorder %v3336, 256
  %vm3529 = vcmp.lt.s32.totalorder %v3337, 256
  %vm3530 = vcmp.lt.s32.totalorder %v3338, 256
  %vm3531 = vcmp.lt.s32.totalorder %v3339, 256
  %vm3532 = vcmp.lt.s32.totalorder %v3340, 256
  %vm3533 = vcmp.lt.s32.totalorder %v3341, 256
  %vm3534 = vcmp.lt.s32.totalorder %v3342, 256
  %vm3535 = vcmp.lt.s32.totalorder %v3343, 256
  %vm3536 = vcmp.lt.s32.totalorder %v3344, 256
  %vm3537 = vcmp.lt.s32.totalorder %v3345, 256
  %vm3538 = vcmp.lt.s32.totalorder %v3346, 256
  %vm3539 = vcmp.lt.s32.totalorder %v3347, 256
  %vm3540 = vcmp.lt.s32.totalorder %v3348, 256
  %vm3541 = vcmp.lt.s32.totalorder %v3349, 256
  %vm3542 = vcmp.lt.s32.totalorder %v3350, 256
  %vm3543 = vcmp.lt.s32.totalorder %v3351, 256
  %vm3544 = vcmp.lt.s32.totalorder %v3352, 256
  %vm3545 = vcmp.lt.s32.totalorder %v3353, 256
  %vm3546 = vcmp.lt.s32.totalorder %v3354, 256
  %vm3547 = vcmp.lt.s32.totalorder %v3355, 256
  %vm3548 = vcmp.lt.s32.totalorder %v3356, 256
  %vm3549 = vcmp.lt.s32.totalorder %v3357, 256
  %vm3550 = vcmp.lt.s32.totalorder %v3358, 256
  %vm3551 = vcmp.lt.s32.totalorder %v3359, 256
  %vm3552 = vcmp.lt.s32.totalorder %v3360, 256
  %vm3553 = vcmp.lt.s32.totalorder %v3361, 256
  %vm3554 = vcmp.lt.s32.totalorder %v3362, 256
  %vm3555 = vcmp.lt.s32.totalorder %v3363, 256
  %vm3556 = vcmp.lt.s32.totalorder %v3364, 256
  %vm3557 = vcmp.lt.s32.totalorder %v3365, 256
  %vm3558 = vcmp.lt.s32.totalorder %v3366, 256
  %vm3559 = vcmp.lt.s32.totalorder %v3367, 256
  %vm3560 = vcmp.lt.s32.totalorder %v3368, 256
  %vm3561 = vcmp.lt.s32.totalorder %v3369, 256
  %vm3562 = vcmp.lt.s32.totalorder %v3370, 256
  %vm3563 = vcmp.lt.s32.totalorder %v3371, 256
  %vm3564 = vcmp.lt.s32.totalorder %v3372, 256
  %vm3565 = vcmp.lt.s32.totalorder %v3373, 256
  %vm3566 = vcmp.lt.s32.totalorder %v3374, 256
  %vm3567 = vcmp.lt.s32.totalorder %v3375, 256
  %vm3568 = vcmp.lt.s32.totalorder %v3376, 256
  %vm3569 = vcmp.lt.s32.totalorder %v3377, 256
  %vm3570 = vcmp.lt.s32.totalorder %v3378, 256
  %vm3571 = vcmp.lt.s32.totalorder %v3379, 256
  %vm3572 = vcmp.lt.s32.totalorder %v3380, 256
  %vm3573 = vcmp.lt.s32.totalorder %v3381, 256
  %vm3574 = vcmp.lt.s32.totalorder %v3382, 256
  %vm3575 = vcmp.lt.s32.totalorder %v3383, 256
  %vm3576 = vcmp.lt.s32.totalorder %v3384, 256
  %vm3577 = vcmp.lt.s32.totalorder %v3385, 256
  %vm3578 = vcmp.lt.s32.totalorder %v3386, 256
  %vm3579 = vmand %vm3451, %vm3515
  %vm3580 = vmand %vm3452, %vm3516
  %vm3581 = vmand %vm3453, %vm3517
  %vm3582 = vmand %vm3454, %vm3518
  %vm3583 = vmand %vm3455, %vm3519
  %vm3584 = vmand %vm3456, %vm3520
  %vm3585 = vmand %vm3457, %vm3521
  %vm3586 = vmand %vm3458, %vm3522
  %vm3587 = vmand %vm3459, %vm3523
  %vm3588 = vmand %vm3460, %vm3524
  %vm3589 = vmand %vm3461, %vm3525
  %vm3590 = vmand %vm3462, %vm3526
  %vm3591 = vmand %vm3463, %vm3527
  %vm3592 = vmand %vm3464, %vm3528
  %vm3593 = vmand %vm3465, %vm3529
  %vm3594 = vmand %vm3466, %vm3530
  %vm3595 = vmand %vm3467, %vm3531
  %vm3596 = vmand %vm3468, %vm3532
  %vm3597 = vmand %vm3469, %vm3533
  %vm3598 = vmand %vm3470, %vm3534
  %vm3599 = vmand %vm3471, %vm3535
  %vm3600 = vmand %vm3472, %vm3536
  %vm3601 = vmand %vm3473, %vm3537
  %vm3602 = vmand %vm3474, %vm3538
  %vm3603 = vmand %vm3475, %vm3539
  %vm3604 = vmand %vm3476, %vm3540
  %vm3605 = vmand %vm3477, %vm3541
  %vm3606 = vmand %vm3478, %vm3542
  %vm3607 = vmand %vm3479, %vm3543
  %vm3608 = vmand %vm3480, %vm3544
  %vm3609 = vmand %vm3481, %vm3545
  %vm3610 = vmand %vm3482, %vm3546
  %vm3611 = vmand %vm3483, %vm3547
  %vm3612 = vmand %vm3484, %vm3548
  %vm3613 = vmand %vm3485, %vm3549
  %vm3614 = vmand %vm3486, %vm3550
  %vm3615 = vmand %vm3487, %vm3551
  %vm3616 = vmand %vm3488, %vm3552
  %vm3617 = vmand %vm3489, %vm3553
  %vm3618 = vmand %vm3490, %vm3554
  %vm3619 = vmand %vm3491, %vm3555
  %vm3620 = vmand %vm3492, %vm3556
  %vm3621 = vmand %vm3493, %vm3557
  %vm3622 = vmand %vm3494, %vm3558
  %vm3623 = vmand %vm3495, %vm3559
  %vm3624 = vmand %vm3496, %vm3560
  %vm3625 = vmand %vm3497, %vm3561
  %vm3626 = vmand %vm3498, %vm3562
  %vm3627 = vmand %vm3499, %vm3563
  %vm3628 = vmand %vm3500, %vm3564
  %vm3629 = vmand %vm3501, %vm3565
  %vm3630 = vmand %vm3502, %vm3566
  %vm3631 = vmand %vm3503, %vm3567
  %vm3632 = vmand %vm3504, %vm3568
  %vm3633 = vmand %vm3505, %vm3569
  %vm3634 = vmand %vm3506, %vm3570
  %vm3635 = vmand %vm3507, %vm3571
  %vm3636 = vmand %vm3508, %vm3572
  %vm3637 = vmand %vm3509, %vm3573
  %vm3638 = vmand %vm3510, %vm3574
  %vm3639 = vmand %vm3511, %vm3575
  %vm3640 = vmand %vm3512, %vm3576
  %vm3641 = vmand %vm3513, %vm3577
  %vm3642 = vmand %vm3514, %vm3578
  %vm3643 = vcmp.ge.s32.totalorder %v3387, 0
  %vm3644 = vcmp.ge.s32.totalorder %v3388, 0
  %vm3645 = vcmp.ge.s32.totalorder %v3389, 0
  %vm3646 = vcmp.ge.s32.totalorder %v3390, 0
  %vm3647 = vcmp.ge.s32.totalorder %v3391, 0
  %vm3648 = vcmp.ge.s32.totalorder %v3392, 0
  %vm3649 = vcmp.ge.s32.totalorder %v3393, 0
  %vm3650 = vcmp.ge.s32.totalorder %v3394, 0
  %vm3651 = vcmp.ge.s32.totalorder %v3395, 0
  %vm3652 = vcmp.ge.s32.totalorder %v3396, 0
  %vm3653 = vcmp.ge.s32.totalorder %v3397, 0
  %vm3654 = vcmp.ge.s32.totalorder %v3398, 0
  %vm3655 = vcmp.ge.s32.totalorder %v3399, 0
  %vm3656 = vcmp.ge.s32.totalorder %v3400, 0
  %vm3657 = vcmp.ge.s32.totalorder %v3401, 0
  %vm3658 = vcmp.ge.s32.totalorder %v3402, 0
  %vm3659 = vcmp.ge.s32.totalorder %v3403, 0
  %vm3660 = vcmp.ge.s32.totalorder %v3404, 0
  %vm3661 = vcmp.ge.s32.totalorder %v3405, 0
  %vm3662 = vcmp.ge.s32.totalorder %v3406, 0
  %vm3663 = vcmp.ge.s32.totalorder %v3407, 0
  %vm3664 = vcmp.ge.s32.totalorder %v3408, 0
  %vm3665 = vcmp.ge.s32.totalorder %v3409, 0
  %vm3666 = vcmp.ge.s32.totalorder %v3410, 0
  %vm3667 = vcmp.ge.s32.totalorder %v3411, 0
  %vm3668 = vcmp.ge.s32.totalorder %v3412, 0
  %vm3669 = vcmp.ge.s32.totalorder %v3413, 0
  %vm3670 = vcmp.ge.s32.totalorder %v3414, 0
  %vm3671 = vcmp.ge.s32.totalorder %v3415, 0
  %vm3672 = vcmp.ge.s32.totalorder %v3416, 0
  %vm3673 = vcmp.ge.s32.totalorder %v3417, 0
  %vm3674 = vcmp.ge.s32.totalorder %v3418, 0
  %vm3675 = vcmp.ge.s32.totalorder %v3419, 0
  %vm3676 = vcmp.ge.s32.totalorder %v3420, 0
  %vm3677 = vcmp.ge.s32.totalorder %v3421, 0
  %vm3678 = vcmp.ge.s32.totalorder %v3422, 0
  %vm3679 = vcmp.ge.s32.totalorder %v3423, 0
  %vm3680 = vcmp.ge.s32.totalorder %v3424, 0
  %vm3681 = vcmp.ge.s32.totalorder %v3425, 0
  %vm3682 = vcmp.ge.s32.totalorder %v3426, 0
  %vm3683 = vcmp.ge.s32.totalorder %v3427, 0
  %vm3684 = vcmp.ge.s32.totalorder %v3428, 0
  %vm3685 = vcmp.ge.s32.totalorder %v3429, 0
  %vm3686 = vcmp.ge.s32.totalorder %v3430, 0
  %vm3687 = vcmp.ge.s32.totalorder %v3431, 0
  %vm3688 = vcmp.ge.s32.totalorder %v3432, 0
  %vm3689 = vcmp.ge.s32.totalorder %v3433, 0
  %vm3690 = vcmp.ge.s32.totalorder %v3434, 0
  %vm3691 = vcmp.ge.s32.totalorder %v3435, 0
  %vm3692 = vcmp.ge.s32.totalorder %v3436, 0
  %vm3693 = vcmp.ge.s32.totalorder %v3437, 0
  %vm3694 = vcmp.ge.s32.totalorder %v3438, 0
  %vm3695 = vcmp.ge.s32.totalorder %v3439, 0
  %vm3696 = vcmp.ge.s32.totalorder %v3440, 0
  %vm3697 = vcmp.ge.s32.totalorder %v3441, 0
  %vm3698 = vcmp.ge.s32.totalorder %v3442, 0
  %vm3699 = vcmp.ge.s32.totalorder %v3443, 0
  %vm3700 = vcmp.ge.s32.totalorder %v3444, 0
  %vm3701 = vcmp.ge.s32.totalorder %v3445, 0
  %vm3702 = vcmp.ge.s32.totalorder %v3446, 0
  %vm3703 = vcmp.ge.s32.totalorder %v3447, 0
  %vm3704 = vcmp.ge.s32.totalorder %v3448, 0
  %vm3705 = vcmp.ge.s32.totalorder %v3449, 0
  %vm3706 = vcmp.ge.s32.totalorder %v3450, 0
  %vm3707 = vmand %vm3579, %vm3643
  %vm3708 = vmand %vm3580, %vm3644
  %vm3709 = vmand %vm3581, %vm3645
  %vm3710 = vmand %vm3582, %vm3646
  %vm3711 = vmand %vm3583, %vm3647
  %vm3712 = vmand %vm3584, %vm3648
  %vm3713 = vmand %vm3585, %vm3649
  %vm3714 = vmand %vm3586, %vm3650
  %vm3715 = vmand %vm3587, %vm3651
  %vm3716 = vmand %vm3588, %vm3652
  %vm3717 = vmand %vm3589, %vm3653
  %vm3718 = vmand %vm3590, %vm3654
  %vm3719 = vmand %vm3591, %vm3655
  %vm3720 = vmand %vm3592, %vm3656
  %vm3721 = vmand %vm3593, %vm3657
  %vm3722 = vmand %vm3594, %vm3658
  %vm3723 = vmand %vm3595, %vm3659
  %vm3724 = vmand %vm3596, %vm3660
  %vm3725 = vmand %vm3597, %vm3661
  %vm3726 = vmand %vm3598, %vm3662
  %vm3727 = vmand %vm3599, %vm3663
  %vm3728 = vmand %vm3600, %vm3664
  %vm3729 = vmand %vm3601, %vm3665
  %vm3730 = vmand %vm3602, %vm3666
  %vm3731 = vmand %vm3603, %vm3667
  %vm3732 = vmand %vm3604, %vm3668
  %vm3733 = vmand %vm3605, %vm3669
  %vm3734 = vmand %vm3606, %vm3670
  %vm3735 = vmand %vm3607, %vm3671
  %vm3736 = vmand %vm3608, %vm3672
  %vm3737 = vmand %vm3609, %vm3673
  %vm3738 = vmand %vm3610, %vm3674
  %vm3739 = vmand %vm3611, %vm3675
  %vm3740 = vmand %vm3612, %vm3676
  %vm3741 = vmand %vm3613, %vm3677
  %vm3742 = vmand %vm3614, %vm3678
  %vm3743 = vmand %vm3615, %vm3679
  %vm3744 = vmand %vm3616, %vm3680
  %vm3745 = vmand %vm3617, %vm3681
  %vm3746 = vmand %vm3618, %vm3682
  %vm3747 = vmand %vm3619, %vm3683
  %vm3748 = vmand %vm3620, %vm3684
  %vm3749 = vmand %vm3621, %vm3685
  %vm3750 = vmand %vm3622, %vm3686
  %vm3751 = vmand %vm3623, %vm3687
  %vm3752 = vmand %vm3624, %vm3688
  %vm3753 = vmand %vm3625, %vm3689
  %vm3754 = vmand %vm3626, %vm3690
  %vm3755 = vmand %vm3627, %vm3691
  %vm3756 = vmand %vm3628, %vm3692
  %vm3757 = vmand %vm3629, %vm3693
  %vm3758 = vmand %vm3630, %vm3694
  %vm3759 = vmand %vm3631, %vm3695
  %vm3760 = vmand %vm3632, %vm3696
  %vm3761 = vmand %vm3633, %vm3697
  %vm3762 = vmand %vm3634, %vm3698
  %vm3763 = vmand %vm3635, %vm3699
  %vm3764 = vmand %vm3636, %vm3700
  %vm3765 = vmand %vm3637, %vm3701
  %vm3766 = vmand %vm3638, %vm3702
  %vm3767 = vmand %vm3639, %vm3703
  %vm3768 = vmand %vm3640, %vm3704
  %vm3769 = vmand %vm3641, %vm3705
  %vm3770 = vmand %vm3642, %vm3706
  %vm3771 = vcmp.lt.s32.totalorder %v3387, 16
  %vm3772 = vcmp.lt.s32.totalorder %v3388, 16
  %vm3773 = vcmp.lt.s32.totalorder %v3389, 16
  %vm3774 = vcmp.lt.s32.totalorder %v3390, 16
  %vm3775 = vcmp.lt.s32.totalorder %v3391, 16
  %vm3776 = vcmp.lt.s32.totalorder %v3392, 16
  %vm3777 = vcmp.lt.s32.totalorder %v3393, 16
  %vm3778 = vcmp.lt.s32.totalorder %v3394, 16
  %vm3779 = vcmp.lt.s32.totalorder %v3395, 16
  %vm3780 = vcmp.lt.s32.totalorder %v3396, 16
  %vm3781 = vcmp.lt.s32.totalorder %v3397, 16
  %vm3782 = vcmp.lt.s32.totalorder %v3398, 16
  %vm3783 = vcmp.lt.s32.totalorder %v3399, 16
  %vm3784 = vcmp.lt.s32.totalorder %v3400, 16
  %vm3785 = vcmp.lt.s32.totalorder %v3401, 16
  %vm3786 = vcmp.lt.s32.totalorder %v3402, 16
  %vm3787 = vcmp.lt.s32.totalorder %v3403, 16
  %vm3788 = vcmp.lt.s32.totalorder %v3404, 16
  %vm3789 = vcmp.lt.s32.totalorder %v3405, 16
  %vm3790 = vcmp.lt.s32.totalorder %v3406, 16
  %vm3791 = vcmp.lt.s32.totalorder %v3407, 16
  %vm3792 = vcmp.lt.s32.totalorder %v3408, 16
  %vm3793 = vcmp.lt.s32.totalorder %v3409, 16
  %vm3794 = vcmp.lt.s32.totalorder %v3410, 16
  %vm3795 = vcmp.lt.s32.totalorder %v3411, 16
  %vm3796 = vcmp.lt.s32.totalorder %v3412, 16
  %vm3797 = vcmp.lt.s32.totalorder %v3413, 16
  %vm3798 = vcmp.lt.s32.totalorder %v3414, 16
  %vm3799 = vcmp.lt.s32.totalorder %v3415, 16
  %vm3800 = vcmp.lt.s32.totalorder %v3416, 16
  %vm3801 = vcmp.lt.s32.totalorder %v3417, 16
  %vm3802 = vcmp.lt.s32.totalorder %v3418, 16
  %vm3803 = vcmp.lt.s32.totalorder %v3419, 16
  %vm3804 = vcmp.lt.s32.totalorder %v3420, 16
  %vm3805 = vcmp.lt.s32.totalorder %v3421, 16
  %vm3806 = vcmp.lt.s32.totalorder %v3422, 16
  %vm3807 = vcmp.lt.s32.totalorder %v3423, 16
  %vm3808 = vcmp.lt.s32.totalorder %v3424, 16
  %vm3809 = vcmp.lt.s32.totalorder %v3425, 16
  %vm3810 = vcmp.lt.s32.totalorder %v3426, 16
  %vm3811 = vcmp.lt.s32.totalorder %v3427, 16
  %vm3812 = vcmp.lt.s32.totalorder %v3428, 16
  %vm3813 = vcmp.lt.s32.totalorder %v3429, 16
  %vm3814 = vcmp.lt.s32.totalorder %v3430, 16
  %vm3815 = vcmp.lt.s32.totalorder %v3431, 16
  %vm3816 = vcmp.lt.s32.totalorder %v3432, 16
  %vm3817 = vcmp.lt.s32.totalorder %v3433, 16
  %vm3818 = vcmp.lt.s32.totalorder %v3434, 16
  %vm3819 = vcmp.lt.s32.totalorder %v3435, 16
  %vm3820 = vcmp.lt.s32.totalorder %v3436, 16
  %vm3821 = vcmp.lt.s32.totalorder %v3437, 16
  %vm3822 = vcmp.lt.s32.totalorder %v3438, 16
  %vm3823 = vcmp.lt.s32.totalorder %v3439, 16
  %vm3824 = vcmp.lt.s32.totalorder %v3440, 16
  %vm3825 = vcmp.lt.s32.totalorder %v3441, 16
  %vm3826 = vcmp.lt.s32.totalorder %v3442, 16
  %vm3827 = vcmp.lt.s32.totalorder %v3443, 16
  %vm3828 = vcmp.lt.s32.totalorder %v3444, 16
  %vm3829 = vcmp.lt.s32.totalorder %v3445, 16
  %vm3830 = vcmp.lt.s32.totalorder %v3446, 16
  %vm3831 = vcmp.lt.s32.totalorder %v3447, 16
  %vm3832 = vcmp.lt.s32.totalorder %v3448, 16
  %vm3833 = vcmp.lt.s32.totalorder %v3449, 16
  %vm3834 = vcmp.lt.s32.totalorder %v3450, 16
  %vm3835 = vmand %vm3707, %vm3771
  %vm3836 = vmand %vm3708, %vm3772
  %vm3837 = vmand %vm3709, %vm3773
  %vm3838 = vmand %vm3710, %vm3774
  %vm3839 = vmand %vm3711, %vm3775
  %vm3840 = vmand %vm3712, %vm3776
  %vm3841 = vmand %vm3713, %vm3777
  %vm3842 = vmand %vm3714, %vm3778
  %vm3843 = vmand %vm3715, %vm3779
  %vm3844 = vmand %vm3716, %vm3780
  %vm3845 = vmand %vm3717, %vm3781
  %vm3846 = vmand %vm3718, %vm3782
  %vm3847 = vmand %vm3719, %vm3783
  %vm3848 = vmand %vm3720, %vm3784
  %vm3849 = vmand %vm3721, %vm3785
  %vm3850 = vmand %vm3722, %vm3786
  %vm3851 = vmand %vm3723, %vm3787
  %vm3852 = vmand %vm3724, %vm3788
  %vm3853 = vmand %vm3725, %vm3789
  %vm3854 = vmand %vm3726, %vm3790
  %vm3855 = vmand %vm3727, %vm3791
  %vm3856 = vmand %vm3728, %vm3792
  %vm3857 = vmand %vm3729, %vm3793
  %vm3858 = vmand %vm3730, %vm3794
  %vm3859 = vmand %vm3731, %vm3795
  %vm3860 = vmand %vm3732, %vm3796
  %vm3861 = vmand %vm3733, %vm3797
  %vm3862 = vmand %vm3734, %vm3798
  %vm3863 = vmand %vm3735, %vm3799
  %vm3864 = vmand %vm3736, %vm3800
  %vm3865 = vmand %vm3737, %vm3801
  %vm3866 = vmand %vm3738, %vm3802
  %vm3867 = vmand %vm3739, %vm3803
  %vm3868 = vmand %vm3740, %vm3804
  %vm3869 = vmand %vm3741, %vm3805
  %vm3870 = vmand %vm3742, %vm3806
  %vm3871 = vmand %vm3743, %vm3807
  %vm3872 = vmand %vm3744, %vm3808
  %vm3873 = vmand %vm3745, %vm3809
  %vm3874 = vmand %vm3746, %vm3810
  %vm3875 = vmand %vm3747, %vm3811
  %vm3876 = vmand %vm3748, %vm3812
  %vm3877 = vmand %vm3749, %vm3813
  %vm3878 = vmand %vm3750, %vm3814
  %vm3879 = vmand %vm3751, %vm3815
  %vm3880 = vmand %vm3752, %vm3816
  %vm3881 = vmand %vm3753, %vm3817
  %vm3882 = vmand %vm3754, %vm3818
  %vm3883 = vmand %vm3755, %vm3819
  %vm3884 = vmand %vm3756, %vm3820
  %vm3885 = vmand %vm3757, %vm3821
  %vm3886 = vmand %vm3758, %vm3822
  %vm3887 = vmand %vm3759, %vm3823
  %vm3888 = vmand %vm3760, %vm3824
  %vm3889 = vmand %vm3761, %vm3825
  %vm3890 = vmand %vm3762, %vm3826
  %vm3891 = vmand %vm3763, %vm3827
  %vm3892 = vmand %vm3764, %vm3828
  %vm3893 = vmand %vm3765, %vm3829
  %vm3894 = vmand %vm3766, %vm3830
  %vm3895 = vmand %vm3767, %vm3831
  %vm3896 = vmand %vm3768, %vm3832
  %vm3897 = vmand %vm3769, %vm3833
  %vm3898 = vmand %vm3770, %vm3834
  %v3899 = vsel %vm3835, 1, 0
  %v3900 = vsel %vm3836, 1, 0
  %v3901 = vsel %vm3837, 1, 0
  %v3902 = vsel %vm3838, 1, 0
  %v3903 = vsel %vm3839, 1, 0
  %v3904 = vsel %vm3840, 1, 0
  %v3905 = vsel %vm3841, 1, 0
  %v3906 = vsel %vm3842, 1, 0
  %v3907 = vsel %vm3843, 1, 0
  %v3908 = vsel %vm3844, 1, 0
  %v3909 = vsel %vm3845, 1, 0
  %v3910 = vsel %vm3846, 1, 0
  %v3911 = vsel %vm3847, 1, 0
  %v3912 = vsel %vm3848, 1, 0
  %v3913 = vsel %vm3849, 1, 0
  %v3914 = vsel %vm3850, 1, 0
  %v3915 = vsel %vm3851, 1, 0
  %v3916 = vsel %vm3852, 1, 0
  %v3917 = vsel %vm3853, 1, 0
  %v3918 = vsel %vm3854, 1, 0
  %v3919 = vsel %vm3855, 1, 0
  %v3920 = vsel %vm3856, 1, 0
  %v3921 = vsel %vm3857, 1, 0
  %v3922 = vsel %vm3858, 1, 0
  %v3923 = vsel %vm3859, 1, 0
  %v3924 = vsel %vm3860, 1, 0
  %v3925 = vsel %vm3861, 1, 0
  %v3926 = vsel %vm3862, 1, 0
  %v3927 = vsel %vm3863, 1, 0
  %v3928 = vsel %vm3864, 1, 0
  %v3929 = vsel %vm3865, 1, 0
  %v3930 = vsel %vm3866, 1, 0
  %v3931 = vsel %vm3867, 1, 0
  %v3932 = vsel %vm3868, 1, 0
  %v3933 = vsel %vm3869, 1, 0
  %v3934 = vsel %vm3870, 1, 0
  %v3935 = vsel %vm3871, 1, 0
  %v3936 = vsel %vm3872, 1, 0
  %v3937 = vsel %vm3873, 1, 0
  %v3938 = vsel %vm3874, 1, 0
  %v3939 = vsel %vm3875, 1, 0
  %v3940 = vsel %vm3876, 1, 0
  %v3941 = vsel %vm3877, 1, 0
  %v3942 = vsel %vm3878, 1, 0
  %v3943 = vsel %vm3879, 1, 0
  %v3944 = vsel %vm3880, 1, 0
  %v3945 = vsel %vm3881, 1, 0
  %v3946 = vsel %vm3882, 1, 0
  %v3947 = vsel %vm3883, 1, 0
  %v3948 = vsel %vm3884, 1, 0
  %v3949 = vsel %vm3885, 1, 0
  %v3950 = vsel %vm3886, 1, 0
  %v3951 = vsel %vm3887, 1, 0
  %v3952 = vsel %vm3888, 1, 0
  %v3953 = vsel %vm3889, 1, 0
  %v3954 = vsel %vm3890, 1, 0
  %v3955 = vsel %vm3891, 1, 0
  %v3956 = vsel %vm3892, 1, 0
  %v3957 = vsel %vm3893, 1, 0
  %v3958 = vsel %vm3894, 1, 0
  %v3959 = vsel %vm3895, 1, 0
  %v3960 = vsel %vm3896, 1, 0
  %v3961 = vsel %vm3897, 1, 0
  %v3962 = vsel %vm3898, 1, 0
  %vm3963 = vcmp.eq.s32.totalorder %v3899, 1
  %vm3964 = vcmp.eq.s32.totalorder %v3900, 1
  %vm3965 = vcmp.eq.s32.totalorder %v3901, 1
  %vm3966 = vcmp.eq.s32.totalorder %v3902, 1
  %vm3967 = vcmp.eq.s32.totalorder %v3903, 1
  %vm3968 = vcmp.eq.s32.totalorder %v3904, 1
  %vm3969 = vcmp.eq.s32.totalorder %v3905, 1
  %vm3970 = vcmp.eq.s32.totalorder %v3906, 1
  %vm3971 = vcmp.eq.s32.totalorder %v3907, 1
  %vm3972 = vcmp.eq.s32.totalorder %v3908, 1
  %vm3973 = vcmp.eq.s32.totalorder %v3909, 1
  %vm3974 = vcmp.eq.s32.totalorder %v3910, 1
  %vm3975 = vcmp.eq.s32.totalorder %v3911, 1
  %vm3976 = vcmp.eq.s32.totalorder %v3912, 1
  %vm3977 = vcmp.eq.s32.totalorder %v3913, 1
  %vm3978 = vcmp.eq.s32.totalorder %v3914, 1
  %vm3979 = vcmp.eq.s32.totalorder %v3915, 1
  %vm3980 = vcmp.eq.s32.totalorder %v3916, 1
  %vm3981 = vcmp.eq.s32.totalorder %v3917, 1
  %vm3982 = vcmp.eq.s32.totalorder %v3918, 1
  %vm3983 = vcmp.eq.s32.totalorder %v3919, 1
  %vm3984 = vcmp.eq.s32.totalorder %v3920, 1
  %vm3985 = vcmp.eq.s32.totalorder %v3921, 1
  %vm3986 = vcmp.eq.s32.totalorder %v3922, 1
  %vm3987 = vcmp.eq.s32.totalorder %v3923, 1
  %vm3988 = vcmp.eq.s32.totalorder %v3924, 1
  %vm3989 = vcmp.eq.s32.totalorder %v3925, 1
  %vm3990 = vcmp.eq.s32.totalorder %v3926, 1
  %vm3991 = vcmp.eq.s32.totalorder %v3927, 1
  %vm3992 = vcmp.eq.s32.totalorder %v3928, 1
  %vm3993 = vcmp.eq.s32.totalorder %v3929, 1
  %vm3994 = vcmp.eq.s32.totalorder %v3930, 1
  %vm3995 = vcmp.eq.s32.totalorder %v3931, 1
  %vm3996 = vcmp.eq.s32.totalorder %v3932, 1
  %vm3997 = vcmp.eq.s32.totalorder %v3933, 1
  %vm3998 = vcmp.eq.s32.totalorder %v3934, 1
  %vm3999 = vcmp.eq.s32.totalorder %v3935, 1
  %vm4000 = vcmp.eq.s32.totalorder %v3936, 1
  %vm4001 = vcmp.eq.s32.totalorder %v3937, 1
  %vm4002 = vcmp.eq.s32.totalorder %v3938, 1
  %vm4003 = vcmp.eq.s32.totalorder %v3939, 1
  %vm4004 = vcmp.eq.s32.totalorder %v3940, 1
  %vm4005 = vcmp.eq.s32.totalorder %v3941, 1
  %vm4006 = vcmp.eq.s32.totalorder %v3942, 1
  %vm4007 = vcmp.eq.s32.totalorder %v3943, 1
  %vm4008 = vcmp.eq.s32.totalorder %v3944, 1
  %vm4009 = vcmp.eq.s32.totalorder %v3945, 1
  %vm4010 = vcmp.eq.s32.totalorder %v3946, 1
  %vm4011 = vcmp.eq.s32.totalorder %v3947, 1
  %vm4012 = vcmp.eq.s32.totalorder %v3948, 1
  %vm4013 = vcmp.eq.s32.totalorder %v3949, 1
  %vm4014 = vcmp.eq.s32.totalorder %v3950, 1
  %vm4015 = vcmp.eq.s32.totalorder %v3951, 1
  %vm4016 = vcmp.eq.s32.totalorder %v3952, 1
  %vm4017 = vcmp.eq.s32.totalorder %v3953, 1
  %vm4018 = vcmp.eq.s32.totalorder %v3954, 1
  %vm4019 = vcmp.eq.s32.totalorder %v3955, 1
  %vm4020 = vcmp.eq.s32.totalorder %v3956, 1
  %vm4021 = vcmp.eq.s32.totalorder %v3957, 1
  %vm4022 = vcmp.eq.s32.totalorder %v3958, 1
  %vm4023 = vcmp.eq.s32.totalorder %v3959, 1
  %vm4024 = vcmp.eq.s32.totalorder %v3960, 1
  %vm4025 = vcmp.eq.s32.totalorder %v3961, 1
  %vm4026 = vcmp.eq.s32.totalorder %v3962, 1
  %v4027 = vsel %vm3963, %v3259, 0.0
  %v4028 = vsel %vm3964, %v3260, 0.0
  %v4029 = vsel %vm3965, %v3261, 0.0
  %v4030 = vsel %vm3966, %v3262, 0.0
  %v4031 = vsel %vm3967, %v3263, 0.0
  %v4032 = vsel %vm3968, %v3264, 0.0
  %v4033 = vsel %vm3969, %v3265, 0.0
  %v4034 = vsel %vm3970, %v3266, 0.0
  %v4035 = vsel %vm3971, %v3267, 0.0
  %v4036 = vsel %vm3972, %v3268, 0.0
  %v4037 = vsel %vm3973, %v3269, 0.0
  %v4038 = vsel %vm3974, %v3270, 0.0
  %v4039 = vsel %vm3975, %v3271, 0.0
  %v4040 = vsel %vm3976, %v3272, 0.0
  %v4041 = vsel %vm3977, %v3273, 0.0
  %v4042 = vsel %vm3978, %v3274, 0.0
  %v4043 = vsel %vm3979, %v3275, 0.0
  %v4044 = vsel %vm3980, %v3276, 0.0
  %v4045 = vsel %vm3981, %v3277, 0.0
  %v4046 = vsel %vm3982, %v3278, 0.0
  %v4047 = vsel %vm3983, %v3279, 0.0
  %v4048 = vsel %vm3984, %v3280, 0.0
  %v4049 = vsel %vm3985, %v3281, 0.0
  %v4050 = vsel %vm3986, %v3282, 0.0
  %v4051 = vsel %vm3987, %v3283, 0.0
  %v4052 = vsel %vm3988, %v3284, 0.0
  %v4053 = vsel %vm3989, %v3285, 0.0
  %v4054 = vsel %vm3990, %v3286, 0.0
  %v4055 = vsel %vm3991, %v3287, 0.0
  %v4056 = vsel %vm3992, %v3288, 0.0
  %v4057 = vsel %vm3993, %v3289, 0.0
  %v4058 = vsel %vm3994, %v3290, 0.0
  %v4059 = vsel %vm3995, %v3291, 0.0
  %v4060 = vsel %vm3996, %v3292, 0.0
  %v4061 = vsel %vm3997, %v3293, 0.0
  %v4062 = vsel %vm3998, %v3294, 0.0
  %v4063 = vsel %vm3999, %v3295, 0.0
  %v4064 = vsel %vm4000, %v3296, 0.0
  %v4065 = vsel %vm4001, %v3297, 0.0
  %v4066 = vsel %vm4002, %v3298, 0.0
  %v4067 = vsel %vm4003, %v3299, 0.0
  %v4068 = vsel %vm4004, %v3300, 0.0
  %v4069 = vsel %vm4005, %v3301, 0.0
  %v4070 = vsel %vm4006, %v3302, 0.0
  %v4071 = vsel %vm4007, %v3303, 0.0
  %v4072 = vsel %vm4008, %v3304, 0.0
  %v4073 = vsel %vm4009, %v3305, 0.0
  %v4074 = vsel %vm4010, %v3306, 0.0
  %v4075 = vsel %vm4011, %v3307, 0.0
  %v4076 = vsel %vm4012, %v3308, 0.0
  %v4077 = vsel %vm4013, %v3309, 0.0
  %v4078 = vsel %vm4014, %v3310, 0.0
  %v4079 = vsel %vm4015, %v3311, 0.0
  %v4080 = vsel %vm4016, %v3312, 0.0
  %v4081 = vsel %vm4017, %v3313, 0.0
  %v4082 = vsel %vm4018, %v3314, 0.0
  %v4083 = vsel %vm4019, %v3315, 0.0
  %v4084 = vsel %vm4020, %v3316, 0.0
  %v4085 = vsel %vm4021, %v3317, 0.0
  %v4086 = vsel %vm4022, %v3318, 0.0
  %v4087 = vsel %vm4023, %v3319, 0.0
  %v4088 = vsel %vm4024, %v3320, 0.0
  %v4089 = vsel %vm4025, %v3321, 0.0
  %v4090 = vsel %vm4026, %v3322, 0.0
  %4091 = vst.msk [vmem:[#allocation3] sm:$0xff] %vm1045, %v4027
  %4092 = vst.msk [vmem:[#allocation3 + $0x10] sm:$0xff] %vm1045, %v4028
  %4093 = vst.msk [vmem:[#allocation3 + $0x20] sm:$0xff] %vm1045, %v4029
  %4094 = vst.msk [vmem:[#allocation3 + $0x30] sm:$0xff] %vm1045, %v4030
  %4095 = vst.msk [vmem:[#allocation3 + $0x40] sm:$0xff] %vm1045, %v4031
  %4096 = vst.msk [vmem:[#allocation3 + $0x50] sm:$0xff] %vm1045, %v4032
  %4097 = vst.msk [vmem:[#allocation3 + $0x60] sm:$0xff] %vm1045, %v4033
  %4098 = vst.msk [vmem:[#allocation3 + $0x70] sm:$0xff] %vm1045, %v4034
  %4099 = vst.msk [vmem:[#allocation3 + $0x80] sm:$0xff] %vm1045, %v4035
  %4100 = vst.msk [vmem:[#allocation3 + $0x90] sm:$0xff] %vm1045, %v4036
  %4101 = vst.msk [vmem:[#allocation3 + $0xa0] sm:$0xff] %vm1045, %v4037
  %4102 = vst.msk [vmem:[#allocation3 + $0xb0] sm:$0xff] %vm1045, %v4038
  %4103 = vst.msk [vmem:[#allocation3 + $0xc0] sm:$0xff] %vm1045, %v4039
  %4104 = vst.msk [vmem:[#allocation3 + $0xd0] sm:$0xff] %vm1045, %v4040
  %4105 = vst.msk [vmem:[#allocation3 + $0xe0] sm:$0xff] %vm1045, %v4041
  %4106 = vst.msk [vmem:[#allocation3 + $0xf0] sm:$0xff] %vm1045, %v4042
  %4107 = vst.msk [vmem:[#allocation3 + $0x100] sm:$0xff] %vm1045, %v4043
  %4108 = vst.msk [vmem:[#allocation3 + $0x110] sm:$0xff] %vm1045, %v4044
  %4109 = vst.msk [vmem:[#allocation3 + $0x120] sm:$0xff] %vm1045, %v4045
  %4110 = vst.msk [vmem:[#allocation3 + $0x130] sm:$0xff] %vm1045, %v4046
  %4111 = vst.msk [vmem:[#allocation3 + $0x140] sm:$0xff] %vm1045, %v4047
  %4112 = vst.msk [vmem:[#allocation3 + $0x150] sm:$0xff] %vm1045, %v4048
  %4113 = vst.msk [vmem:[#allocation3 + $0x160] sm:$0xff] %vm1045, %v4049
  %4114 = vst.msk [vmem:[#allocation3 + $0x170] sm:$0xff] %vm1045, %v4050
  %4115 = vst.msk [vmem:[#allocation3 + $0x180] sm:$0xff] %vm1045, %v4051
  %4116 = vst.msk [vmem:[#allocation3 + $0x190] sm:$0xff] %vm1045, %v4052
  %4117 = vst.msk [vmem:[#allocation3 + $0x1a0] sm:$0xff] %vm1045, %v4053
  %4118 = vst.msk [vmem:[#allocation3 + $0x1b0] sm:$0xff] %vm1045, %v4054
  %4119 = vst.msk [vmem:[#allocation3 + $0x1c0] sm:$0xff] %vm1045, %v4055
  %4120 = vst.msk [vmem:[#allocation3 + $0x1d0] sm:$0xff] %vm1045, %v4056
  %4121 = vst.msk [vmem:[#allocation3 + $0x1e0] sm:$0xff] %vm1045, %v4057
  %4122 = vst.msk [vmem:[#allocation3 + $0x1f0] sm:$0xff] %vm1045, %v4058
  %4123 = vst.msk [vmem:[#allocation3 + $0x200] sm:$0xff] %vm1045, %v4059
  %4124 = vst.msk [vmem:[#allocation3 + $0x210] sm:$0xff] %vm1045, %v4060
  %4125 = vst.msk [vmem:[#allocation3 + $0x220] sm:$0xff] %vm1045, %v4061
  %4126 = vst.msk [vmem:[#allocation3 + $0x230] sm:$0xff] %vm1045, %v4062
  %4127 = vst.msk [vmem:[#allocation3 + $0x240] sm:$0xff] %vm1045, %v4063
  %4128 = vst.msk [vmem:[#allocation3 + $0x250] sm:$0xff] %vm1045, %v4064
  %4129 = vst.msk [vmem:[#allocation3 + $0x260] sm:$0xff] %vm1045, %v4065
  %4130 = vst.msk [vmem:[#allocation3 + $0x270] sm:$0xff] %vm1045, %v4066
  %4131 = vst.msk [vmem:[#allocation3 + $0x280] sm:$0xff] %vm1045, %v4067
  %4132 = vst.msk [vmem:[#allocation3 + $0x290] sm:$0xff] %vm1045, %v4068
  %4133 = vst.msk [vmem:[#allocation3 + $0x2a0] sm:$0xff] %vm1045, %v4069
  %4134 = vst.msk [vmem:[#allocation3 + $0x2b0] sm:$0xff] %vm1045, %v4070
  %4135 = vst.msk [vmem:[#allocation3 + $0x2c0] sm:$0xff] %vm1045, %v4071
  %4136 = vst.msk [vmem:[#allocation3 + $0x2d0] sm:$0xff] %vm1045, %v4072
  %4137 = vst.msk [vmem:[#allocation3 + $0x2e0] sm:$0xff] %vm1045, %v4073
  %4138 = vst.msk [vmem:[#allocation3 + $0x2f0] sm:$0xff] %vm1045, %v4074
  %4139 = vst.msk [vmem:[#allocation3 + $0x300] sm:$0xff] %vm1045, %v4075
  %4140 = vst.msk [vmem:[#allocation3 + $0x310] sm:$0xff] %vm1045, %v4076
  %4141 = vst.msk [vmem:[#allocation3 + $0x320] sm:$0xff] %vm1045, %v4077
  %4142 = vst.msk [vmem:[#allocation3 + $0x330] sm:$0xff] %vm1045, %v4078
  %4143 = vst.msk [vmem:[#allocation3 + $0x340] sm:$0xff] %vm1045, %v4079
  %4144 = vst.msk [vmem:[#allocation3 + $0x350] sm:$0xff] %vm1045, %v4080
  %4145 = vst.msk [vmem:[#allocation3 + $0x360] sm:$0xff] %vm1045, %v4081
  %4146 = vst.msk [vmem:[#allocation3 + $0x370] sm:$0xff] %vm1045, %v4082
  %4147 = vst.msk [vmem:[#allocation3 + $0x380] sm:$0xff] %vm1045, %v4083
  %4148 = vst.msk [vmem:[#allocation3 + $0x390] sm:$0xff] %vm1045, %v4084
  %4149 = vst.msk [vmem:[#allocation3 + $0x3a0] sm:$0xff] %vm1045, %v4085
  %4150 = vst.msk [vmem:[#allocation3 + $0x3b0] sm:$0xff] %vm1045, %v4086
  %4151 = vst.msk [vmem:[#allocation3 + $0x3c0] sm:$0xff] %vm1045, %v4087
  %4152 = vst.msk [vmem:[#allocation3 + $0x3d0] sm:$0xff] %vm1045, %v4088
  %4153 = vst.msk [vmem:[#allocation3 + $0x3e0] sm:$0xff] %vm1045, %v4089
  %4154 = vst.msk [vmem:[#allocation3 + $0x3f0] sm:$0xff] %vm1045, %v4090
  %v4155 = vld [vmem:[#allocation2 + $0x8] sm:$0xff]
  %v4156 = vld [vmem:[#allocation2 + $0x10] sm:$0xff]
  %v4157 = vld [vmem:[#allocation2 + $0x18] sm:$0xff]
  %v4158 = vld [vmem:[#allocation2 + $0x20] sm:$0xff]
  %v4159 = vld [vmem:[#allocation2 + $0x28] sm:$0xff]
  %v4160 = vld [vmem:[#allocation2 + $0x30] sm:$0xff]
  %v4161 = vld [vmem:[#allocation2 + $0x38] sm:$0xff]
  %v4162 = vld [vmem:[#allocation2 + $0x40] sm:$0xff]
  %v4163 = vld [vmem:[#allocation2 + $0x48] sm:$0xff]
  %v4164 = vld [vmem:[#allocation2 + $0x50] sm:$0xff]
  %v4165 = vld [vmem:[#allocation2 + $0x58] sm:$0xff]
  %v4166 = vld [vmem:[#allocation2 + $0x60] sm:$0xff]
  %v4167 = vld [vmem:[#allocation2 + $0x68] sm:$0xff]
  %v4168 = vld [vmem:[#allocation2 + $0x70] sm:$0xff]
  %v4169 = vld [vmem:[#allocation2 + $0x78] sm:$0xff]
  %v4170 = vld [vmem:[#allocation2 + $0x80] sm:$0xff]
  %v4171 = vld [vmem:[#allocation2 + $0x88] sm:$0xff]
  %v4172 = vld [vmem:[#allocation2 + $0x90] sm:$0xff]
  %v4173 = vld [vmem:[#allocation2 + $0x98] sm:$0xff]
  %v4174 = vld [vmem:[#allocation2 + $0xa0] sm:$0xff]
  %v4175 = vld [vmem:[#allocation2 + $0xa8] sm:$0xff]
  %v4176 = vld [vmem:[#allocation2 + $0xb0] sm:$0xff]
  %v4177 = vld [vmem:[#allocation2 + $0xb8] sm:$0xff]
  %v4178 = vld [vmem:[#allocation2 + $0xc0] sm:$0xff]
  %v4179 = vld [vmem:[#allocation2 + $0xc8] sm:$0xff]
  %v4180 = vld [vmem:[#allocation2 + $0xd0] sm:$0xff]
  %v4181 = vld [vmem:[#allocation2 + $0xd8] sm:$0xff]
  %v4182 = vld [vmem:[#allocation2 + $0xe0] sm:$0xff]
  %v4183 = vld [vmem:[#allocation2 + $0xe8] sm:$0xff]
  %v4184 = vld [vmem:[#allocation2 + $0xf0] sm:$0xff]
  %v4185 = vld [vmem:[#allocation2 + $0xf8] sm:$0xff]
  %v4186 = vld [vmem:[#allocation2 + $0x100] sm:$0xff]
  %v4187 = vld [vmem:[#allocation2 + $0x108] sm:$0xff]
  %v4188 = vld [vmem:[#allocation2 + $0x110] sm:$0xff]
  %v4189 = vld [vmem:[#allocation2 + $0x118] sm:$0xff]
  %v4190 = vld [vmem:[#allocation2 + $0x120] sm:$0xff]
  %v4191 = vld [vmem:[#allocation2 + $0x128] sm:$0xff]
  %v4192 = vld [vmem:[#allocation2 + $0x130] sm:$0xff]
  %v4193 = vld [vmem:[#allocation2 + $0x138] sm:$0xff]
  %v4194 = vld [vmem:[#allocation2 + $0x140] sm:$0xff]
  %v4195 = vld [vmem:[#allocation2 + $0x148] sm:$0xff]
  %v4196 = vld [vmem:[#allocation2 + $0x150] sm:$0xff]
  %v4197 = vld [vmem:[#allocation2 + $0x158] sm:$0xff]
  %v4198 = vld [vmem:[#allocation2 + $0x160] sm:$0xff]
  %v4199 = vld [vmem:[#allocation2 + $0x168] sm:$0xff]
  %v4200 = vld [vmem:[#allocation2 + $0x170] sm:$0xff]
  %v4201 = vld [vmem:[#allocation2 + $0x178] sm:$0xff]
  %v4202 = vld [vmem:[#allocation2 + $0x180] sm:$0xff]
  %v4203 = vld [vmem:[#allocation2 + $0x188] sm:$0xff]
  %v4204 = vld [vmem:[#allocation2 + $0x190] sm:$0xff]
  %v4205 = vld [vmem:[#allocation2 + $0x198] sm:$0xff]
  %v4206 = vld [vmem:[#allocation2 + $0x1a0] sm:$0xff]
  %v4207 = vld [vmem:[#allocation2 + $0x1a8] sm:$0xff]
  %v4208 = vld [vmem:[#allocation2 + $0x1b0] sm:$0xff]
  %v4209 = vld [vmem:[#allocation2 + $0x1b8] sm:$0xff]
  %v4210 = vld [vmem:[#allocation2 + $0x1c0] sm:$0xff]
  %v4211 = vld [vmem:[#allocation2 + $0x1c8] sm:$0xff]
  %v4212 = vld [vmem:[#allocation2 + $0x1d0] sm:$0xff]
  %v4213 = vld [vmem:[#allocation2 + $0x1d8] sm:$0xff]
  %v4214 = vld [vmem:[#allocation2 + $0x1e0] sm:$0xff]
  %v4215 = vld [vmem:[#allocation2 + $0x1e8] sm:$0xff]
  %v4216 = vld [vmem:[#allocation2 + $0x1f0] sm:$0xff]
  %v4217 = vld [vmem:[#allocation2 + $0x1f8] sm:$0xff]
  %v4218 = vld [vmem:[#allocation2 + $0x200] sm:$0xff]
  %vm4219 = vcmp.ge.s32.totalorder %v2427, 0
  %vm4220 = vcmp.ge.s32.totalorder %v2428, 0
  %vm4221 = vcmp.ge.s32.totalorder %v2429, 0
  %vm4222 = vcmp.ge.s32.totalorder %v2430, 0
  %vm4223 = vcmp.ge.s32.totalorder %v2431, 0
  %vm4224 = vcmp.ge.s32.totalorder %v2432, 0
  %vm4225 = vcmp.ge.s32.totalorder %v2433, 0
  %vm4226 = vcmp.ge.s32.totalorder %v2434, 0
  %vm4227 = vcmp.ge.s32.totalorder %v2435, 0
  %vm4228 = vcmp.ge.s32.totalorder %v2436, 0
  %vm4229 = vcmp.ge.s32.totalorder %v2437, 0
  %vm4230 = vcmp.ge.s32.totalorder %v2438, 0
  %vm4231 = vcmp.ge.s32.totalorder %v2439, 0
  %vm4232 = vcmp.ge.s32.totalorder %v2440, 0
  %vm4233 = vcmp.ge.s32.totalorder %v2441, 0
  %vm4234 = vcmp.ge.s32.totalorder %v2442, 0
  %vm4235 = vcmp.ge.s32.totalorder %v2443, 0
  %vm4236 = vcmp.ge.s32.totalorder %v2444, 0
  %vm4237 = vcmp.ge.s32.totalorder %v2445, 0
  %vm4238 = vcmp.ge.s32.totalorder %v2446, 0
  %vm4239 = vcmp.ge.s32.totalorder %v2447, 0
  %vm4240 = vcmp.ge.s32.totalorder %v2448, 0
  %vm4241 = vcmp.ge.s32.totalorder %v2449, 0
  %vm4242 = vcmp.ge.s32.totalorder %v2450, 0
  %vm4243 = vcmp.ge.s32.totalorder %v2451, 0
  %vm4244 = vcmp.ge.s32.totalorder %v2452, 0
  %vm4245 = vcmp.ge.s32.totalorder %v2453, 0
  %vm4246 = vcmp.ge.s32.totalorder %v2454, 0
  %vm4247 = vcmp.ge.s32.totalorder %v2455, 0
  %vm4248 = vcmp.ge.s32.totalorder %v2456, 0
  %vm4249 = vcmp.ge.s32.totalorder %v2457, 0
  %vm4250 = vcmp.ge.s32.totalorder %v2458, 0
  %vm4251 = vcmp.ge.s32.totalorder %v2459, 0
  %vm4252 = vcmp.ge.s32.totalorder %v2460, 0
  %vm4253 = vcmp.ge.s32.totalorder %v2461, 0
  %vm4254 = vcmp.ge.s32.totalorder %v2462, 0
  %vm4255 = vcmp.ge.s32.totalorder %v2463, 0
  %vm4256 = vcmp.ge.s32.totalorder %v2464, 0
  %vm4257 = vcmp.ge.s32.totalorder %v2465, 0
  %vm4258 = vcmp.ge.s32.totalorder %v2466, 0
  %vm4259 = vcmp.ge.s32.totalorder %v2467, 0
  %vm4260 = vcmp.ge.s32.totalorder %v2468, 0
  %vm4261 = vcmp.ge.s32.totalorder %v2469, 0
  %vm4262 = vcmp.ge.s32.totalorder %v2470, 0
  %vm4263 = vcmp.ge.s32.totalorder %v2471, 0
  %vm4264 = vcmp.ge.s32.totalorder %v2472, 0
  %vm4265 = vcmp.ge.s32.totalorder %v2473, 0
  %vm4266 = vcmp.ge.s32.totalorder %v2474, 0
  %vm4267 = vcmp.ge.s32.totalorder %v2475, 0
  %vm4268 = vcmp.ge.s32.totalorder %v2476, 0
  %vm4269 = vcmp.ge.s32.totalorder %v2477, 0
  %vm4270 = vcmp.ge.s32.totalorder %v2478, 0
  %vm4271 = vcmp.ge.s32.totalorder %v2479, 0
  %vm4272 = vcmp.ge.s32.totalorder %v2480, 0
  %vm4273 = vcmp.ge.s32.totalorder %v2481, 0
  %vm4274 = vcmp.ge.s32.totalorder %v2482, 0
  %vm4275 = vcmp.ge.s32.totalorder %v2483, 0
  %vm4276 = vcmp.ge.s32.totalorder %v2484, 0
  %vm4277 = vcmp.ge.s32.totalorder %v2485, 0
  %vm4278 = vcmp.ge.s32.totalorder %v2486, 0
  %vm4279 = vcmp.ge.s32.totalorder %v2487, 0
  %vm4280 = vcmp.ge.s32.totalorder %v2488, 0
  %vm4281 = vcmp.ge.s32.totalorder %v2489, 0
  %vm4282 = vcmp.ge.s32.totalorder %v2490, 0
  %vm4283 = vmand %vm3579, %vm4219
  %vm4284 = vmand %vm3580, %vm4220
  %vm4285 = vmand %vm3581, %vm4221
  %vm4286 = vmand %vm3582, %vm4222
  %vm4287 = vmand %vm3583, %vm4223
  %vm4288 = vmand %vm3584, %vm4224
  %vm4289 = vmand %vm3585, %vm4225
  %vm4290 = vmand %vm3586, %vm4226
  %vm4291 = vmand %vm3587, %vm4227
  %vm4292 = vmand %vm3588, %vm4228
  %vm4293 = vmand %vm3589, %vm4229
  %vm4294 = vmand %vm3590, %vm4230
  %vm4295 = vmand %vm3591, %vm4231
  %vm4296 = vmand %vm3592, %vm4232
  %vm4297 = vmand %vm3593, %vm4233
  %vm4298 = vmand %vm3594, %vm4234
  %vm4299 = vmand %vm3595, %vm4235
  %vm4300 = vmand %vm3596, %vm4236
  %vm4301 = vmand %vm3597, %vm4237
  %vm4302 = vmand %vm3598, %vm4238
  %vm4303 = vmand %vm3599, %vm4239
  %vm4304 = vmand %vm3600, %vm4240
  %vm4305 = vmand %vm3601, %vm4241
  %vm4306 = vmand %vm3602, %vm4242
  %vm4307 = vmand %vm3603, %vm4243
  %vm4308 = vmand %vm3604, %vm4244
  %vm4309 = vmand %vm3605, %vm4245
  %vm4310 = vmand %vm3606, %vm4246
  %vm4311 = vmand %vm3607, %vm4247
  %vm4312 = vmand %vm3608, %vm4248
  %vm4313 = vmand %vm3609, %vm4249
  %vm4314 = vmand %vm3610, %vm4250
  %vm4315 = vmand %vm3611, %vm4251
  %vm4316 = vmand %vm3612, %vm4252
  %vm4317 = vmand %vm3613, %vm4253
  %vm4318 = vmand %vm3614, %vm4254
  %vm4319 = vmand %vm3615, %vm4255
  %vm4320 = vmand %vm3616, %vm4256
  %vm4321 = vmand %vm3617, %vm4257
  %vm4322 = vmand %vm3618, %vm4258
  %vm4323 = vmand %vm3619, %vm4259
  %vm4324 = vmand %vm3620, %vm4260
  %vm4325 = vmand %vm3621, %vm4261
  %vm4326 = vmand %vm3622, %vm4262
  %vm4327 = vmand %vm3623, %vm4263
  %vm4328 = vmand %vm3624, %vm4264
  %vm4329 = vmand %vm3625, %vm4265
  %vm4330 = vmand %vm3626, %vm4266
  %vm4331 = vmand %vm3627, %vm4267
  %vm4332 = vmand %vm3628, %vm4268
  %vm4333 = vmand %vm3629, %vm4269
  %vm4334 = vmand %vm3630, %vm4270
  %vm4335 = vmand %vm3631, %vm4271
  %vm4336 = vmand %vm3632, %vm4272
  %vm4337 = vmand %vm3633, %vm4273
  %vm4338 = vmand %vm3634, %vm4274
  %vm4339 = vmand %vm3635, %vm4275
  %vm4340 = vmand %vm3636, %vm4276
  %vm4341 = vmand %vm3637, %vm4277
  %vm4342 = vmand %vm3638, %vm4278
  %vm4343 = vmand %vm3639, %vm4279
  %vm4344 = vmand %vm3640, %vm4280
  %vm4345 = vmand %vm3641, %vm4281
  %vm4346 = vmand %vm3642, %vm4282
  %vm4347 = vcmp.lt.s32.totalorder %v2427, 16
  %vm4348 = vcmp.lt.s32.totalorder %v2428, 16
  %vm4349 = vcmp.lt.s32.totalorder %v2429, 16
  %vm4350 = vcmp.lt.s32.totalorder %v2430, 16
  %vm4351 = vcmp.lt.s32.totalorder %v2431, 16
  %vm4352 = vcmp.lt.s32.totalorder %v2432, 16
  %vm4353 = vcmp.lt.s32.totalorder %v2433, 16
  %vm4354 = vcmp.lt.s32.totalorder %v2434, 16
  %vm4355 = vcmp.lt.s32.totalorder %v2435, 16
  %vm4356 = vcmp.lt.s32.totalorder %v2436, 16
  %vm4357 = vcmp.lt.s32.totalorder %v2437, 16
  %vm4358 = vcmp.lt.s32.totalorder %v2438, 16
  %vm4359 = vcmp.lt.s32.totalorder %v2439, 16
  %vm4360 = vcmp.lt.s32.totalorder %v2440, 16
  %vm4361 = vcmp.lt.s32.totalorder %v2441, 16
  %vm4362 = vcmp.lt.s32.totalorder %v2442, 16
  %vm4363 = vcmp.lt.s32.totalorder %v2443, 16
  %vm4364 = vcmp.lt.s32.totalorder %v2444, 16
  %vm4365 = vcmp.lt.s32.totalorder %v2445, 16
  %vm4366 = vcmp.lt.s32.totalorder %v2446, 16
  %vm4367 = vcmp.lt.s32.totalorder %v2447, 16
  %vm4368 = vcmp.lt.s32.totalorder %v2448, 16
  %vm4369 = vcmp.lt.s32.totalorder %v2449, 16
  %vm4370 = vcmp.lt.s32.totalorder %v2450, 16
  %vm4371 = vcmp.lt.s32.totalorder %v2451, 16
  %vm4372 = vcmp.lt.s32.totalorder %v2452, 16
  %vm4373 = vcmp.lt.s32.totalorder %v2453, 16
  %vm4374 = vcmp.lt.s32.totalorder %v2454, 16
  %vm4375 = vcmp.lt.s32.totalorder %v2455, 16
  %vm4376 = vcmp.lt.s32.totalorder %v2456, 16
  %vm4377 = vcmp.lt.s32.totalorder %v2457, 16
  %vm4378 = vcmp.lt.s32.totalorder %v2458, 16
  %vm4379 = vcmp.lt.s32.totalorder %v2459, 16
  %vm4380 = vcmp.lt.s32.totalorder %v2460, 16
  %vm4381 = vcmp.lt.s32.totalorder %v2461, 16
  %vm4382 = vcmp.lt.s32.totalorder %v2462, 16
  %vm4383 = vcmp.lt.s32.totalorder %v2463, 16
  %vm4384 = vcmp.lt.s32.totalorder %v2464, 16
  %vm4385 = vcmp.lt.s32.totalorder %v2465, 16
  %vm4386 = vcmp.lt.s32.totalorder %v2466, 16
  %vm4387 = vcmp.lt.s32.totalorder %v2467, 16
  %vm4388 = vcmp.lt.s32.totalorder %v2468, 16
  %vm4389 = vcmp.lt.s32.totalorder %v2469, 16
  %vm4390 = vcmp.lt.s32.totalorder %v2470, 16
  %vm4391 = vcmp.lt.s32.totalorder %v2471, 16
  %vm4392 = vcmp.lt.s32.totalorder %v2472, 16
  %vm4393 = vcmp.lt.s32.totalorder %v2473, 16
  %vm4394 = vcmp.lt.s32.totalorder %v2474, 16
  %vm4395 = vcmp.lt.s32.totalorder %v2475, 16
  %vm4396 = vcmp.lt.s32.totalorder %v2476, 16
  %vm4397 = vcmp.lt.s32.totalorder %v2477, 16
  %vm4398 = vcmp.lt.s32.totalorder %v2478, 16
  %vm4399 = vcmp.lt.s32.totalorder %v2479, 16
  %vm4400 = vcmp.lt.s32.totalorder %v2480, 16
  %vm4401 = vcmp.lt.s32.totalorder %v2481, 16
  %vm4402 = vcmp.lt.s32.totalorder %v2482, 16
  %vm4403 = vcmp.lt.s32.totalorder %v2483, 16
  %vm4404 = vcmp.lt.s32.totalorder %v2484, 16
  %vm4405 = vcmp.lt.s32.totalorder %v2485, 16
  %vm4406 = vcmp.lt.s32.totalorder %v2486, 16
  %vm4407 = vcmp.lt.s32.totalorder %v2487, 16
  %vm4408 = vcmp.lt.s32.totalorder %v2488, 16
  %vm4409 = vcmp.lt.s32.totalorder %v2489, 16
  %vm4410 = vcmp.lt.s32.totalorder %v2490, 16
  %vm4411 = vmand %vm4283, %vm4347
  %vm4412 = vmand %vm4284, %vm4348
  %vm4413 = vmand %vm4285, %vm4349
  %vm4414 = vmand %vm4286, %vm4350
  %vm4415 = vmand %vm4287, %vm4351
  %vm4416 = vmand %vm4288, %vm4352
  %vm4417 = vmand %vm4289, %vm4353
  %vm4418 = vmand %vm4290, %vm4354
  %vm4419 = vmand %vm4291, %vm4355
  %vm4420 = vmand %vm4292, %vm4356
  %vm4421 = vmand %vm4293, %vm4357
  %vm4422 = vmand %vm4294, %vm4358
  %vm4423 = vmand %vm4295, %vm4359
  %vm4424 = vmand %vm4296, %vm4360
  %vm4425 = vmand %vm4297, %vm4361
  %vm4426 = vmand %vm4298, %vm4362
  %vm4427 = vmand %vm4299, %vm4363
  %vm4428 = vmand %vm4300, %vm4364
  %vm4429 = vmand %vm4301, %vm4365
  %vm4430 = vmand %vm4302, %vm4366
  %vm4431 = vmand %vm4303, %vm4367
  %vm4432 = vmand %vm4304, %vm4368
  %vm4433 = vmand %vm4305, %vm4369
  %vm4434 = vmand %vm4306, %vm4370
  %vm4435 = vmand %vm4307, %vm4371
  %vm4436 = vmand %vm4308, %vm4372
  %vm4437 = vmand %vm4309, %vm4373
  %vm4438 = vmand %vm4310, %vm4374
  %vm4439 = vmand %vm4311, %vm4375
  %vm4440 = vmand %vm4312, %vm4376
  %vm4441 = vmand %vm4313, %vm4377
  %vm4442 = vmand %vm4314, %vm4378
  %vm4443 = vmand %vm4315, %vm4379
  %vm4444 = vmand %vm4316, %vm4380
  %vm4445 = vmand %vm4317, %vm4381
  %vm4446 = vmand %vm4318, %vm4382
  %vm4447 = vmand %vm4319, %vm4383
  %vm4448 = vmand %vm4320, %vm4384
  %vm4449 = vmand %vm4321, %vm4385
  %vm4450 = vmand %vm4322, %vm4386
  %vm4451 = vmand %vm4323, %vm4387
  %vm4452 = vmand %vm4324, %vm4388
  %vm4453 = vmand %vm4325, %vm4389
  %vm4454 = vmand %vm4326, %vm4390
  %vm4455 = vmand %vm4327, %vm4391
  %vm4456 = vmand %vm4328, %vm4392
  %vm4457 = vmand %vm4329, %vm4393
  %vm4458 = vmand %vm4330, %vm4394
  %vm4459 = vmand %vm4331, %vm4395
  %vm4460 = vmand %vm4332, %vm4396
  %vm4461 = vmand %vm4333, %vm4397
  %vm4462 = vmand %vm4334, %vm4398
  %vm4463 = vmand %vm4335, %vm4399
  %vm4464 = vmand %vm4336, %vm4400
  %vm4465 = vmand %vm4337, %vm4401
  %vm4466 = vmand %vm4338, %vm4402
  %vm4467 = vmand %vm4339, %vm4403
  %vm4468 = vmand %vm4340, %vm4404
  %vm4469 = vmand %vm4341, %vm4405
  %vm4470 = vmand %vm4342, %vm4406
  %vm4471 = vmand %vm4343, %vm4407
  %vm4472 = vmand %vm4344, %vm4408
  %vm4473 = vmand %vm4345, %vm4409
  %vm4474 = vmand %vm4346, %vm4410
  %v4475 = vsel %vm4411, 1, 0
  %v4476 = vsel %vm4412, 1, 0
  %v4477 = vsel %vm4413, 1, 0
  %v4478 = vsel %vm4414, 1, 0
  %v4479 = vsel %vm4415, 1, 0
  %v4480 = vsel %vm4416, 1, 0
  %v4481 = vsel %vm4417, 1, 0
  %v4482 = vsel %vm4418, 1, 0
  %v4483 = vsel %vm4419, 1, 0
  %v4484 = vsel %vm4420, 1, 0
  %v4485 = vsel %vm4421, 1, 0
  %v4486 = vsel %vm4422, 1, 0
  %v4487 = vsel %vm4423, 1, 0
  %v4488 = vsel %vm4424, 1, 0
  %v4489 = vsel %vm4425, 1, 0
  %v4490 = vsel %vm4426, 1, 0
  %v4491 = vsel %vm4427, 1, 0
  %v4492 = vsel %vm4428, 1, 0
  %v4493 = vsel %vm4429, 1, 0
  %v4494 = vsel %vm4430, 1, 0
  %v4495 = vsel %vm4431, 1, 0
  %v4496 = vsel %vm4432, 1, 0
  %v4497 = vsel %vm4433, 1, 0
  %v4498 = vsel %vm4434, 1, 0
  %v4499 = vsel %vm4435, 1, 0
  %v4500 = vsel %vm4436, 1, 0
  %v4501 = vsel %vm4437, 1, 0
  %v4502 = vsel %vm4438, 1, 0
  %v4503 = vsel %vm4439, 1, 0
  %v4504 = vsel %vm4440, 1, 0
  %v4505 = vsel %vm4441, 1, 0
  %v4506 = vsel %vm4442, 1, 0
  %v4507 = vsel %vm4443, 1, 0
  %v4508 = vsel %vm4444, 1, 0
  %v4509 = vsel %vm4445, 1, 0
  %v4510 = vsel %vm4446, 1, 0
  %v4511 = vsel %vm4447, 1, 0
  %v4512 = vsel %vm4448, 1, 0
  %v4513 = vsel %vm4449, 1, 0
  %v4514 = vsel %vm4450, 1, 0
  %v4515 = vsel %vm4451, 1, 0
  %v4516 = vsel %vm4452, 1, 0
  %v4517 = vsel %vm4453, 1, 0
  %v4518 = vsel %vm4454, 1, 0
  %v4519 = vsel %vm4455, 1, 0
  %v4520 = vsel %vm4456, 1, 0
  %v4521 = vsel %vm4457, 1, 0
  %v4522 = vsel %vm4458, 1, 0
  %v4523 = vsel %vm4459, 1, 0
  %v4524 = vsel %vm4460, 1, 0
  %v4525 = vsel %vm4461, 1, 0
  %v4526 = vsel %vm4462, 1, 0
  %v4527 = vsel %vm4463, 1, 0
  %v4528 = vsel %vm4464, 1, 0
  %v4529 = vsel %vm4465, 1, 0
  %v4530 = vsel %vm4466, 1, 0
  %v4531 = vsel %vm4467, 1, 0
  %v4532 = vsel %vm4468, 1, 0
  %v4533 = vsel %vm4469, 1, 0
  %v4534 = vsel %vm4470, 1, 0
  %v4535 = vsel %vm4471, 1, 0
  %v4536 = vsel %vm4472, 1, 0
  %v4537 = vsel %vm4473, 1, 0
  %v4538 = vsel %vm4474, 1, 0
  %vm4539 = vcmp.eq.s32.totalorder %v4475, 1
  %vm4540 = vcmp.eq.s32.totalorder %v4476, 1
  %vm4541 = vcmp.eq.s32.totalorder %v4477, 1
  %vm4542 = vcmp.eq.s32.totalorder %v4478, 1
  %vm4543 = vcmp.eq.s32.totalorder %v4479, 1
  %vm4544 = vcmp.eq.s32.totalorder %v4480, 1
  %vm4545 = vcmp.eq.s32.totalorder %v4481, 1
  %vm4546 = vcmp.eq.s32.totalorder %v4482, 1
  %vm4547 = vcmp.eq.s32.totalorder %v4483, 1
  %vm4548 = vcmp.eq.s32.totalorder %v4484, 1
  %vm4549 = vcmp.eq.s32.totalorder %v4485, 1
  %vm4550 = vcmp.eq.s32.totalorder %v4486, 1
  %vm4551 = vcmp.eq.s32.totalorder %v4487, 1
  %vm4552 = vcmp.eq.s32.totalorder %v4488, 1
  %vm4553 = vcmp.eq.s32.totalorder %v4489, 1
  %vm4554 = vcmp.eq.s32.totalorder %v4490, 1
  %vm4555 = vcmp.eq.s32.totalorder %v4491, 1
  %vm4556 = vcmp.eq.s32.totalorder %v4492, 1
  %vm4557 = vcmp.eq.s32.totalorder %v4493, 1
  %vm4558 = vcmp.eq.s32.totalorder %v4494, 1
  %vm4559 = vcmp.eq.s32.totalorder %v4495, 1
  %vm4560 = vcmp.eq.s32.totalorder %v4496, 1
  %vm4561 = vcmp.eq.s32.totalorder %v4497, 1
  %vm4562 = vcmp.eq.s32.totalorder %v4498, 1
  %vm4563 = vcmp.eq.s32.totalorder %v4499, 1
  %vm4564 = vcmp.eq.s32.totalorder %v4500, 1
  %vm4565 = vcmp.eq.s32.totalorder %v4501, 1
  %vm4566 = vcmp.eq.s32.totalorder %v4502, 1
  %vm4567 = vcmp.eq.s32.totalorder %v4503, 1
  %vm4568 = vcmp.eq.s32.totalorder %v4504, 1
  %vm4569 = vcmp.eq.s32.totalorder %v4505, 1
  %vm4570 = vcmp.eq.s32.totalorder %v4506, 1
  %vm4571 = vcmp.eq.s32.totalorder %v4507, 1
  %vm4572 = vcmp.eq.s32.totalorder %v4508, 1
  %vm4573 = vcmp.eq.s32.totalorder %v4509, 1
  %vm4574 = vcmp.eq.s32.totalorder %v4510, 1
  %vm4575 = vcmp.eq.s32.totalorder %v4511, 1
  %vm4576 = vcmp.eq.s32.totalorder %v4512, 1
  %vm4577 = vcmp.eq.s32.totalorder %v4513, 1
  %vm4578 = vcmp.eq.s32.totalorder %v4514, 1
  %vm4579 = vcmp.eq.s32.totalorder %v4515, 1
  %vm4580 = vcmp.eq.s32.totalorder %v4516, 1
  %vm4581 = vcmp.eq.s32.totalorder %v4517, 1
  %vm4582 = vcmp.eq.s32.totalorder %v4518, 1
  %vm4583 = vcmp.eq.s32.totalorder %v4519, 1
  %vm4584 = vcmp.eq.s32.totalorder %v4520, 1
  %vm4585 = vcmp.eq.s32.totalorder %v4521, 1
  %vm4586 = vcmp.eq.s32.totalorder %v4522, 1
  %vm4587 = vcmp.eq.s32.totalorder %v4523, 1
  %vm4588 = vcmp.eq.s32.totalorder %v4524, 1
  %vm4589 = vcmp.eq.s32.totalorder %v4525, 1
  %vm4590 = vcmp.eq.s32.totalorder %v4526, 1
  %vm4591 = vcmp.eq.s32.totalorder %v4527, 1
  %vm4592 = vcmp.eq.s32.totalorder %v4528, 1
  %vm4593 = vcmp.eq.s32.totalorder %v4529, 1
  %vm4594 = vcmp.eq.s32.totalorder %v4530, 1
  %vm4595 = vcmp.eq.s32.totalorder %v4531, 1
  %vm4596 = vcmp.eq.s32.totalorder %v4532, 1
  %vm4597 = vcmp.eq.s32.totalorder %v4533, 1
  %vm4598 = vcmp.eq.s32.totalorder %v4534, 1
  %vm4599 = vcmp.eq.s32.totalorder %v4535, 1
  %vm4600 = vcmp.eq.s32.totalorder %v4536, 1
  %vm4601 = vcmp.eq.s32.totalorder %v4537, 1
  %vm4602 = vcmp.eq.s32.totalorder %v4538, 1
  %v4603 = vsel %vm4539, %v4155, 0.0
  %v4604 = vsel %vm4540, %v4156, 0.0
  %v4605 = vsel %vm4541, %v4157, 0.0
  %v4606 = vsel %vm4542, %v4158, 0.0
  %v4607 = vsel %vm4543, %v4159, 0.0
  %v4608 = vsel %vm4544, %v4160, 0.0
  %v4609 = vsel %vm4545, %v4161, 0.0
  %v4610 = vsel %vm4546, %v4162, 0.0
  %v4611 = vsel %vm4547, %v4163, 0.0
  %v4612 = vsel %vm4548, %v4164, 0.0
  %v4613 = vsel %vm4549, %v4165, 0.0
  %v4614 = vsel %vm4550, %v4166, 0.0
  %v4615 = vsel %vm4551, %v4167, 0.0
  %v4616 = vsel %vm4552, %v4168, 0.0
  %v4617 = vsel %vm4553, %v4169, 0.0
  %v4618 = vsel %vm4554, %v4170, 0.0
  %v4619 = vsel %vm4555, %v4171, 0.0
  %v4620 = vsel %vm4556, %v4172, 0.0
  %v4621 = vsel %vm4557, %v4173, 0.0
  %v4622 = vsel %vm4558, %v4174, 0.0
  %v4623 = vsel %vm4559, %v4175, 0.0
  %v4624 = vsel %vm4560, %v4176, 0.0
  %v4625 = vsel %vm4561, %v4177, 0.0
  %v4626 = vsel %vm4562, %v4178, 0.0
  %v4627 = vsel %vm4563, %v4179, 0.0
  %v4628 = vsel %vm4564, %v4180, 0.0
  %v4629 = vsel %vm4565, %v4181, 0.0
  %v4630 = vsel %vm4566, %v4182, 0.0
  %v4631 = vsel %vm4567, %v4183, 0.0
  %v4632 = vsel %vm4568, %v4184, 0.0
  %v4633 = vsel %vm4569, %v4185, 0.0
  %v4634 = vsel %vm4570, %v4186, 0.0
  %v4635 = vsel %vm4571, %v4187, 0.0
  %v4636 = vsel %vm4572, %v4188, 0.0
  %v4637 = vsel %vm4573, %v4189, 0.0
  %v4638 = vsel %vm4574, %v4190, 0.0
  %v4639 = vsel %vm4575, %v4191, 0.0
  %v4640 = vsel %vm4576, %v4192, 0.0
  %v4641 = vsel %vm4577, %v4193, 0.0
  %v4642 = vsel %vm4578, %v4194, 0.0
  %v4643 = vsel %vm4579, %v4195, 0.0
  %v4644 = vsel %vm4580, %v4196, 0.0
  %v4645 = vsel %vm4581, %v4197, 0.0
  %v4646 = vsel %vm4582, %v4198, 0.0
  %v4647 = vsel %vm4583, %v4199, 0.0
  %v4648 = vsel %vm4584, %v4200, 0.0
  %v4649 = vsel %vm4585, %v4201, 0.0
  %v4650 = vsel %vm4586, %v4202, 0.0
  %v4651 = vsel %vm4587, %v4203, 0.0
  %v4652 = vsel %vm4588, %v4204, 0.0
  %v4653 = vsel %vm4589, %v4205, 0.0
  %v4654 = vsel %vm4590, %v4206, 0.0
  %v4655 = vsel %vm4591, %v4207, 0.0
  %v4656 = vsel %vm4592, %v4208, 0.0
  %v4657 = vsel %vm4593, %v4209, 0.0
  %v4658 = vsel %vm4594, %v4210, 0.0
  %v4659 = vsel %vm4595, %v4211, 0.0
  %v4660 = vsel %vm4596, %v4212, 0.0
  %v4661 = vsel %vm4597, %v4213, 0.0
  %v4662 = vsel %vm4598, %v4214, 0.0
  %v4663 = vsel %vm4599, %v4215, 0.0
  %v4664 = vsel %vm4600, %v4216, 0.0
  %v4665 = vsel %vm4601, %v4217, 0.0
  %v4666 = vsel %vm4602, %v4218, 0.0
  %4731 = vrot.lane.b32.xlu0 %v4603, 16
  %v4732 = vpop.permute.xlu0 %4731
  %4733 = vrot.lane.b32.xlu0 %v4604, 16
  %v4734 = vpop.permute.xlu0 %4733
  %4735 = vrot.lane.b32.xlu0 %v4605, 16
  %v4736 = vpop.permute.xlu0 %4735
  %4737 = vrot.lane.b32.xlu0 %v4606, 16
  %v4738 = vpop.permute.xlu0 %4737
  %4739 = vrot.lane.b32.xlu0 %v4607, 16
  %v4740 = vpop.permute.xlu0 %4739
  %4741 = vrot.lane.b32.xlu0 %v4608, 16
  %v4742 = vpop.permute.xlu0 %4741
  %4743 = vrot.lane.b32.xlu0 %v4609, 16
  %v4744 = vpop.permute.xlu0 %4743
  %4745 = vrot.lane.b32.xlu0 %v4610, 16
  %v4746 = vpop.permute.xlu0 %4745
  %4747 = vrot.lane.b32.xlu0 %v4611, 16
  %v4748 = vpop.permute.xlu0 %4747
  %4749 = vrot.lane.b32.xlu0 %v4612, 16
  %v4750 = vpop.permute.xlu0 %4749
  %4751 = vrot.lane.b32.xlu0 %v4613, 16
  %v4752 = vpop.permute.xlu0 %4751
  %4753 = vrot.lane.b32.xlu0 %v4614, 16
  %v4754 = vpop.permute.xlu0 %4753
  %4755 = vrot.lane.b32.xlu0 %v4615, 16
  %v4756 = vpop.permute.xlu0 %4755
  %4757 = vrot.lane.b32.xlu0 %v4616, 16
  %v4758 = vpop.permute.xlu0 %4757
  %4759 = vrot.lane.b32.xlu0 %v4617, 16
  %v4760 = vpop.permute.xlu0 %4759
  %4761 = vrot.lane.b32.xlu0 %v4618, 16
  %v4762 = vpop.permute.xlu0 %4761
  %4763 = vrot.lane.b32.xlu0 %v4619, 16
  %v4764 = vpop.permute.xlu0 %4763
  %4765 = vrot.lane.b32.xlu0 %v4620, 16
  %v4766 = vpop.permute.xlu0 %4765
  %4767 = vrot.lane.b32.xlu0 %v4621, 16
  %v4768 = vpop.permute.xlu0 %4767
  %4769 = vrot.lane.b32.xlu0 %v4622, 16
  %v4770 = vpop.permute.xlu0 %4769
  %4771 = vrot.lane.b32.xlu0 %v4623, 16
  %v4772 = vpop.permute.xlu0 %4771
  %4773 = vrot.lane.b32.xlu0 %v4624, 16
  %v4774 = vpop.permute.xlu0 %4773
  %4775 = vrot.lane.b32.xlu0 %v4625, 16
  %v4776 = vpop.permute.xlu0 %4775
  %4777 = vrot.lane.b32.xlu0 %v4626, 16
  %v4778 = vpop.permute.xlu0 %4777
  %4779 = vrot.lane.b32.xlu0 %v4627, 16
  %v4780 = vpop.permute.xlu0 %4779
  %4781 = vrot.lane.b32.xlu0 %v4628, 16
  %v4782 = vpop.permute.xlu0 %4781
  %4783 = vrot.lane.b32.xlu0 %v4629, 16
  %v4784 = vpop.permute.xlu0 %4783
  %4785 = vrot.lane.b32.xlu0 %v4630, 16
  %v4786 = vpop.permute.xlu0 %4785
  %4787 = vrot.lane.b32.xlu0 %v4631, 16
  %v4788 = vpop.permute.xlu0 %4787
  %4789 = vrot.lane.b32.xlu0 %v4632, 16
  %v4790 = vpop.permute.xlu0 %4789
  %4791 = vrot.lane.b32.xlu0 %v4633, 16
  %v4792 = vpop.permute.xlu0 %4791
  %4793 = vrot.lane.b32.xlu0 %v4634, 16
  %v4794 = vpop.permute.xlu0 %4793
  %4795 = vrot.lane.b32.xlu0 %v4635, 16
  %v4796 = vpop.permute.xlu0 %4795
  %4797 = vrot.lane.b32.xlu0 %v4636, 16
  %v4798 = vpop.permute.xlu0 %4797
  %4799 = vrot.lane.b32.xlu0 %v4637, 16
  %v4800 = vpop.permute.xlu0 %4799
  %4801 = vrot.lane.b32.xlu0 %v4638, 16
  %v4802 = vpop.permute.xlu0 %4801
  %4803 = vrot.lane.b32.xlu0 %v4639, 16
  %v4804 = vpop.permute.xlu0 %4803
  %4805 = vrot.lane.b32.xlu0 %v4640, 16
  %v4806 = vpop.permute.xlu0 %4805
  %4807 = vrot.lane.b32.xlu0 %v4641, 16
  %v4808 = vpop.permute.xlu0 %4807
  %4809 = vrot.lane.b32.xlu0 %v4642, 16
  %v4810 = vpop.permute.xlu0 %4809
  %4811 = vrot.lane.b32.xlu0 %v4643, 16
  %v4812 = vpop.permute.xlu0 %4811
  %4813 = vrot.lane.b32.xlu0 %v4644, 16
  %v4814 = vpop.permute.xlu0 %4813
  %4815 = vrot.lane.b32.xlu0 %v4645, 16
  %v4816 = vpop.permute.xlu0 %4815
  %4817 = vrot.lane.b32.xlu0 %v4646, 16
  %v4818 = vpop.permute.xlu0 %4817
  %4819 = vrot.lane.b32.xlu0 %v4647, 16
  %v4820 = vpop.permute.xlu0 %4819
  %4821 = vrot.lane.b32.xlu0 %v4648, 16
  %v4822 = vpop.permute.xlu0 %4821
  %4823 = vrot.lane.b32.xlu0 %v4649, 16
  %v4824 = vpop.permute.xlu0 %4823
  %4825 = vrot.lane.b32.xlu0 %v4650, 16
  %v4826 = vpop.permute.xlu0 %4825
  %4827 = vrot.lane.b32.xlu0 %v4651, 16
  %v4828 = vpop.permute.xlu0 %4827
  %4829 = vrot.lane.b32.xlu0 %v4652, 16
  %v4830 = vpop.permute.xlu0 %4829
  %4831 = vrot.lane.b32.xlu0 %v4653, 16
  %v4832 = vpop.permute.xlu0 %4831
  %4833 = vrot.lane.b32.xlu0 %v4654, 16
  %v4834 = vpop.permute.xlu0 %4833
  %4835 = vrot.lane.b32.xlu0 %v4655, 16
  %v4836 = vpop.permute.xlu0 %4835
  %4837 = vrot.lane.b32.xlu0 %v4656, 16
  %v4838 = vpop.permute.xlu0 %4837
  %4839 = vrot.lane.b32.xlu0 %v4657, 16
  %v4840 = vpop.permute.xlu0 %4839
  %4841 = vrot.lane.b32.xlu0 %v4658, 16
  %v4842 = vpop.permute.xlu0 %4841
  %4843 = vrot.lane.b32.xlu0 %v4659, 16
  %v4844 = vpop.permute.xlu0 %4843
  %4845 = vrot.lane.b32.xlu0 %v4660, 16
  %v4846 = vpop.permute.xlu0 %4845
  %4847 = vrot.lane.b32.xlu0 %v4661, 16
  %v4848 = vpop.permute.xlu0 %4847
  %4849 = vrot.lane.b32.xlu0 %v4662, 16
  %v4850 = vpop.permute.xlu0 %4849
  %4851 = vrot.lane.b32.xlu0 %v4663, 16
  %v4852 = vpop.permute.xlu0 %4851
  %4853 = vrot.lane.b32.xlu0 %v4664, 16
  %v4854 = vpop.permute.xlu0 %4853
  %4855 = vrot.lane.b32.xlu0 %v4665, 16
  %v4856 = vpop.permute.xlu0 %4855
  %4857 = vrot.lane.b32.xlu0 %v4666, 16
  %v4858 = vpop.permute.xlu0 %4857
  %vm4923 = vcmask 261248
  %4924 = vst.msk [vmem:[#allocation3] sm:$0xff] %vm4923, %v4732
  %4925 = vst.msk [vmem:[#allocation3 + $0x10] sm:$0xff] %vm4923, %v4734
  %4926 = vst.msk [vmem:[#allocation3 + $0x20] sm:$0xff] %vm4923, %v4736
  %4927 = vst.msk [vmem:[#allocation3 + $0x30] sm:$0xff] %vm4923, %v4738
  %4928 = vst.msk [vmem:[#allocation3 + $0x40] sm:$0xff] %vm4923, %v4740
  %4929 = vst.msk [vmem:[#allocation3 + $0x50] sm:$0xff] %vm4923, %v4742
  %4930 = vst.msk [vmem:[#allocation3 + $0x60] sm:$0xff] %vm4923, %v4744
  %4931 = vst.msk [vmem:[#allocation3 + $0x70] sm:$0xff] %vm4923, %v4746
  %4932 = vst.msk [vmem:[#allocation3 + $0x80] sm:$0xff] %vm4923, %v4748
  %4933 = vst.msk [vmem:[#allocation3 + $0x90] sm:$0xff] %vm4923, %v4750
  %4934 = vst.msk [vmem:[#allocation3 + $0xa0] sm:$0xff] %vm4923, %v4752
  %4935 = vst.msk [vmem:[#allocation3 + $0xb0] sm:$0xff] %vm4923, %v4754
  %4936 = vst.msk [vmem:[#allocation3 + $0xc0] sm:$0xff] %vm4923, %v4756
  %4937 = vst.msk [vmem:[#allocation3 + $0xd0] sm:$0xff] %vm4923, %v4758
  %4938 = vst.msk [vmem:[#allocation3 + $0xe0] sm:$0xff] %vm4923, %v4760
  %4939 = vst.msk [vmem:[#allocation3 + $0xf0] sm:$0xff] %vm4923, %v4762
  %4940 = vst.msk [vmem:[#allocation3 + $0x100] sm:$0xff] %vm4923, %v4764
  %4941 = vst.msk [vmem:[#allocation3 + $0x110] sm:$0xff] %vm4923, %v4766
  %4942 = vst.msk [vmem:[#allocation3 + $0x120] sm:$0xff] %vm4923, %v4768
  %4943 = vst.msk [vmem:[#allocation3 + $0x130] sm:$0xff] %vm4923, %v4770
  %4944 = vst.msk [vmem:[#allocation3 + $0x140] sm:$0xff] %vm4923, %v4772
  %4945 = vst.msk [vmem:[#allocation3 + $0x150] sm:$0xff] %vm4923, %v4774
  %4946 = vst.msk [vmem:[#allocation3 + $0x160] sm:$0xff] %vm4923, %v4776
  %4947 = vst.msk [vmem:[#allocation3 + $0x170] sm:$0xff] %vm4923, %v4778
  %4948 = vst.msk [vmem:[#allocation3 + $0x180] sm:$0xff] %vm4923, %v4780
  %4949 = vst.msk [vmem:[#allocation3 + $0x190] sm:$0xff] %vm4923, %v4782
  %4950 = vst.msk [vmem:[#allocation3 + $0x1a0] sm:$0xff] %vm4923, %v4784
  %4951 = vst.msk [vmem:[#allocation3 + $0x1b0] sm:$0xff] %vm4923, %v4786
  %4952 = vst.msk [vmem:[#allocation3 + $0x1c0] sm:$0xff] %vm4923, %v4788
  %4953 = vst.msk [vmem:[#allocation3 + $0x1d0] sm:$0xff] %vm4923, %v4790
  %4954 = vst.msk [vmem:[#allocation3 + $0x1e0] sm:$0xff] %vm4923, %v4792
  %4955 = vst.msk [vmem:[#allocation3 + $0x1f0] sm:$0xff] %vm4923, %v4794
  %4956 = vst.msk [vmem:[#allocation3 + $0x200] sm:$0xff] %vm4923, %v4796
  %4957 = vst.msk [vmem:[#allocation3 + $0x210] sm:$0xff] %vm4923, %v4798
  %4958 = vst.msk [vmem:[#allocation3 + $0x220] sm:$0xff] %vm4923, %v4800
  %4959 = vst.msk [vmem:[#allocation3 + $0x230] sm:$0xff] %vm4923, %v4802
  %4960 = vst.msk [vmem:[#allocation3 + $0x240] sm:$0xff] %vm4923, %v4804
  %4961 = vst.msk [vmem:[#allocation3 + $0x250] sm:$0xff] %vm4923, %v4806
  %4962 = vst.msk [vmem:[#allocation3 + $0x260] sm:$0xff] %vm4923, %v4808
  %4963 = vst.msk [vmem:[#allocation3 + $0x270] sm:$0xff] %vm4923, %v4810
  %4964 = vst.msk [vmem:[#allocation3 + $0x280] sm:$0xff] %vm4923, %v4812
  %4965 = vst.msk [vmem:[#allocation3 + $0x290] sm:$0xff] %vm4923, %v4814
  %4966 = vst.msk [vmem:[#allocation3 + $0x2a0] sm:$0xff] %vm4923, %v4816
  %4967 = vst.msk [vmem:[#allocation3 + $0x2b0] sm:$0xff] %vm4923, %v4818
  %4968 = vst.msk [vmem:[#allocation3 + $0x2c0] sm:$0xff] %vm4923, %v4820
  %4969 = vst.msk [vmem:[#allocation3 + $0x2d0] sm:$0xff] %vm4923, %v4822
  %4970 = vst.msk [vmem:[#allocation3 + $0x2e0] sm:$0xff] %vm4923, %v4824
  %4971 = vst.msk [vmem:[#allocation3 + $0x2f0] sm:$0xff] %vm4923, %v4826
  %4972 = vst.msk [vmem:[#allocation3 + $0x300] sm:$0xff] %vm4923, %v4828
  %4973 = vst.msk [vmem:[#allocation3 + $0x310] sm:$0xff] %vm4923, %v4830
  %4974 = vst.msk [vmem:[#allocation3 + $0x320] sm:$0xff] %vm4923, %v4832
  %4975 = vst.msk [vmem:[#allocation3 + $0x330] sm:$0xff] %vm4923, %v4834
  %4976 = vst.msk [vmem:[#allocation3 + $0x340] sm:$0xff] %vm4923, %v4836
  %4977 = vst.msk [vmem:[#allocation3 + $0x350] sm:$0xff] %vm4923, %v4838
  %4978 = vst.msk [vmem:[#allocation3 + $0x360] sm:$0xff] %vm4923, %v4840
  %4979 = vst.msk [vmem:[#allocation3 + $0x370] sm:$0xff] %vm4923, %v4842
  %4980 = vst.msk [vmem:[#allocation3 + $0x380] sm:$0xff] %vm4923, %v4844
  %4981 = vst.msk [vmem:[#allocation3 + $0x390] sm:$0xff] %vm4923, %v4846
  %4982 = vst.msk [vmem:[#allocation3 + $0x3a0] sm:$0xff] %vm4923, %v4848
  %4983 = vst.msk [vmem:[#allocation3 + $0x3b0] sm:$0xff] %vm4923, %v4850
  %4984 = vst.msk [vmem:[#allocation3 + $0x3c0] sm:$0xff] %vm4923, %v4852
  %4985 = vst.msk [vmem:[#allocation3 + $0x3d0] sm:$0xff] %vm4923, %v4854
  %4986 = vst.msk [vmem:[#allocation3 + $0x3e0] sm:$0xff] %vm4923, %v4856
  %4987 = vst.msk [vmem:[#allocation3 + $0x3f0] sm:$0xff] %vm4923, %v4858
  %v4988 = vld [vmem:[#allocation2 + $0x9] sm:$0xff]
  %v4989 = vld [vmem:[#allocation2 + $0x11] sm:$0xff]
  %v4990 = vld [vmem:[#allocation2 + $0x19] sm:$0xff]
  %v4991 = vld [vmem:[#allocation2 + $0x21] sm:$0xff]
  %v4992 = vld [vmem:[#allocation2 + $0x29] sm:$0xff]
  %v4993 = vld [vmem:[#allocation2 + $0x31] sm:$0xff]
  %v4994 = vld [vmem:[#allocation2 + $0x39] sm:$0xff]
  %v4995 = vld [vmem:[#allocation2 + $0x41] sm:$0xff]
  %v4996 = vld [vmem:[#allocation2 + $0x49] sm:$0xff]
  %v4997 = vld [vmem:[#allocation2 + $0x51] sm:$0xff]
  %v4998 = vld [vmem:[#allocation2 + $0x59] sm:$0xff]
  %v4999 = vld [vmem:[#allocation2 + $0x61] sm:$0xff]
  %v5000 = vld [vmem:[#allocation2 + $0x69] sm:$0xff]
  %v5001 = vld [vmem:[#allocation2 + $0x71] sm:$0xff]
  %v5002 = vld [vmem:[#allocation2 + $0x79] sm:$0xff]
  %v5003 = vld [vmem:[#allocation2 + $0x81] sm:$0xff]
  %v5004 = vld [vmem:[#allocation2 + $0x89] sm:$0xff]
  %v5005 = vld [vmem:[#allocation2 + $0x91] sm:$0xff]
  %v5006 = vld [vmem:[#allocation2 + $0x99] sm:$0xff]
  %v5007 = vld [vmem:[#allocation2 + $0xa1] sm:$0xff]
  %v5008 = vld [vmem:[#allocation2 + $0xa9] sm:$0xff]
  %v5009 = vld [vmem:[#allocation2 + $0xb1] sm:$0xff]
  %v5010 = vld [vmem:[#allocation2 + $0xb9] sm:$0xff]
  %v5011 = vld [vmem:[#allocation2 + $0xc1] sm:$0xff]
  %v5012 = vld [vmem:[#allocation2 + $0xc9] sm:$0xff]
  %v5013 = vld [vmem:[#allocation2 + $0xd1] sm:$0xff]
  %v5014 = vld [vmem:[#allocation2 + $0xd9] sm:$0xff]
  %v5015 = vld [vmem:[#allocation2 + $0xe1] sm:$0xff]
  %v5016 = vld [vmem:[#allocation2 + $0xe9] sm:$0xff]
  %v5017 = vld [vmem:[#allocation2 + $0xf1] sm:$0xff]
  %v5018 = vld [vmem:[#allocation2 + $0xf9] sm:$0xff]
  %v5019 = vld [vmem:[#allocation2 + $0x101] sm:$0xff]
  %v5020 = vld [vmem:[#allocation2 + $0x109] sm:$0xff]
  %v5021 = vld [vmem:[#allocation2 + $0x111] sm:$0xff]
  %v5022 = vld [vmem:[#allocation2 + $0x119] sm:$0xff]
  %v5023 = vld [vmem:[#allocation2 + $0x121] sm:$0xff]
  %v5024 = vld [vmem:[#allocation2 + $0x129] sm:$0xff]
  %v5025 = vld [vmem:[#allocation2 + $0x131] sm:$0xff]
  %v5026 = vld [vmem:[#allocation2 + $0x139] sm:$0xff]
  %v5027 = vld [vmem:[#allocation2 + $0x141] sm:$0xff]
  %v5028 = vld [vmem:[#allocation2 + $0x149] sm:$0xff]
  %v5029 = vld [vmem:[#allocation2 + $0x151] sm:$0xff]
  %v5030 = vld [vmem:[#allocation2 + $0x159] sm:$0xff]
  %v5031 = vld [vmem:[#allocation2 + $0x161] sm:$0xff]
  %v5032 = vld [vmem:[#allocation2 + $0x169] sm:$0xff]
  %v5033 = vld [vmem:[#allocation2 + $0x171] sm:$0xff]
  %v5034 = vld [vmem:[#allocation2 + $0x179] sm:$0xff]
  %v5035 = vld [vmem:[#allocation2 + $0x181] sm:$0xff]
  %v5036 = vld [vmem:[#allocation2 + $0x189] sm:$0xff]
  %v5037 = vld [vmem:[#allocation2 + $0x191] sm:$0xff]
  %v5038 = vld [vmem:[#allocation2 + $0x199] sm:$0xff]
  %v5039 = vld [vmem:[#allocation2 + $0x1a1] sm:$0xff]
  %v5040 = vld [vmem:[#allocation2 + $0x1a9] sm:$0xff]
  %v5041 = vld [vmem:[#allocation2 + $0x1b1] sm:$0xff]
  %v5042 = vld [vmem:[#allocation2 + $0x1b9] sm:$0xff]
  %v5043 = vld [vmem:[#allocation2 + $0x1c1] sm:$0xff]
  %v5044 = vld [vmem:[#allocation2 + $0x1c9] sm:$0xff]
  %v5045 = vld [vmem:[#allocation2 + $0x1d1] sm:$0xff]
  %v5046 = vld [vmem:[#allocation2 + $0x1d9] sm:$0xff]
  %v5047 = vld [vmem:[#allocation2 + $0x1e1] sm:$0xff]
  %v5048 = vld [vmem:[#allocation2 + $0x1e9] sm:$0xff]
  %v5049 = vld [vmem:[#allocation2 + $0x1f1] sm:$0xff]
  %v5050 = vld [vmem:[#allocation2 + $0x1f9] sm:$0xff]
  %v5051 = vld [vmem:[#allocation2 + $0x201] sm:$0xff]
  %v5052 = vadd.s32 %v2427, 1
  %v5053 = vadd.s32 %v2428, 1
  %v5054 = vadd.s32 %v2429, 1
  %v5055 = vadd.s32 %v2430, 1
  %v5056 = vadd.s32 %v2431, 1
  %v5057 = vadd.s32 %v2432, 1
  %v5058 = vadd.s32 %v2433, 1
  %v5059 = vadd.s32 %v2434, 1
  %v5060 = vadd.s32 %v2435, 1
  %v5061 = vadd.s32 %v2436, 1
  %v5062 = vadd.s32 %v2437, 1
  %v5063 = vadd.s32 %v2438, 1
  %v5064 = vadd.s32 %v2439, 1
  %v5065 = vadd.s32 %v2440, 1
  %v5066 = vadd.s32 %v2441, 1
  %v5067 = vadd.s32 %v2442, 1
  %v5068 = vadd.s32 %v2443, 1
  %v5069 = vadd.s32 %v2444, 1
  %v5070 = vadd.s32 %v2445, 1
  %v5071 = vadd.s32 %v2446, 1
  %v5072 = vadd.s32 %v2447, 1
  %v5073 = vadd.s32 %v2448, 1
  %v5074 = vadd.s32 %v2449, 1
  %v5075 = vadd.s32 %v2450, 1
  %v5076 = vadd.s32 %v2451, 1
  %v5077 = vadd.s32 %v2452, 1
  %v5078 = vadd.s32 %v2453, 1
  %v5079 = vadd.s32 %v2454, 1
  %v5080 = vadd.s32 %v2455, 1
  %v5081 = vadd.s32 %v2456, 1
  %v5082 = vadd.s32 %v2457, 1
  %v5083 = vadd.s32 %v2458, 1
  %v5084 = vadd.s32 %v2459, 1
  %v5085 = vadd.s32 %v2460, 1
  %v5086 = vadd.s32 %v2461, 1
  %v5087 = vadd.s32 %v2462, 1
  %v5088 = vadd.s32 %v2463, 1
  %v5089 = vadd.s32 %v2464, 1
  %v5090 = vadd.s32 %v2465, 1
  %v5091 = vadd.s32 %v2466, 1
  %v5092 = vadd.s32 %v2467, 1
  %v5093 = vadd.s32 %v2468, 1
  %v5094 = vadd.s32 %v2469, 1
  %v5095 = vadd.s32 %v2470, 1
  %v5096 = vadd.s32 %v2471, 1
  %v5097 = vadd.s32 %v2472, 1
  %v5098 = vadd.s32 %v2473, 1
  %v5099 = vadd.s32 %v2474, 1
  %v5100 = vadd.s32 %v2475, 1
  %v5101 = vadd.s32 %v2476, 1
  %v5102 = vadd.s32 %v2477, 1
  %v5103 = vadd.s32 %v2478, 1
  %v5104 = vadd.s32 %v2479, 1
  %v5105 = vadd.s32 %v2480, 1
  %v5106 = vadd.s32 %v2481, 1
  %v5107 = vadd.s32 %v2482, 1
  %v5108 = vadd.s32 %v2483, 1
  %v5109 = vadd.s32 %v2484, 1
  %v5110 = vadd.s32 %v2485, 1
  %v5111 = vadd.s32 %v2486, 1
  %v5112 = vadd.s32 %v2487, 1
  %v5113 = vadd.s32 %v2488, 1
  %v5114 = vadd.s32 %v2489, 1
  %v5115 = vadd.s32 %v2490, 1
  %vm5116 = vcmp.ge.s32.totalorder %v5052, 0
  %vm5117 = vcmp.ge.s32.totalorder %v5053, 0
  %vm5118 = vcmp.ge.s32.totalorder %v5054, 0
  %vm5119 = vcmp.ge.s32.totalorder %v5055, 0
  %vm5120 = vcmp.ge.s32.totalorder %v5056, 0
  %vm5121 = vcmp.ge.s32.totalorder %v5057, 0
  %vm5122 = vcmp.ge.s32.totalorder %v5058, 0
  %vm5123 = vcmp.ge.s32.totalorder %v5059, 0
  %vm5124 = vcmp.ge.s32.totalorder %v5060, 0
  %vm5125 = vcmp.ge.s32.totalorder %v5061, 0
  %vm5126 = vcmp.ge.s32.totalorder %v5062, 0
  %vm5127 = vcmp.ge.s32.totalorder %v5063, 0
  %vm5128 = vcmp.ge.s32.totalorder %v5064, 0
  %vm5129 = vcmp.ge.s32.totalorder %v5065, 0
  %vm5130 = vcmp.ge.s32.totalorder %v5066, 0
  %vm5131 = vcmp.ge.s32.totalorder %v5067, 0
  %vm5132 = vcmp.ge.s32.totalorder %v5068, 0
  %vm5133 = vcmp.ge.s32.totalorder %v5069, 0
  %vm5134 = vcmp.ge.s32.totalorder %v5070, 0
  %vm5135 = vcmp.ge.s32.totalorder %v5071, 0
  %vm5136 = vcmp.ge.s32.totalorder %v5072, 0
  %vm5137 = vcmp.ge.s32.totalorder %v5073, 0
  %vm5138 = vcmp.ge.s32.totalorder %v5074, 0
  %vm5139 = vcmp.ge.s32.totalorder %v5075, 0
  %vm5140 = vcmp.ge.s32.totalorder %v5076, 0
  %vm5141 = vcmp.ge.s32.totalorder %v5077, 0
  %vm5142 = vcmp.ge.s32.totalorder %v5078, 0
  %vm5143 = vcmp.ge.s32.totalorder %v5079, 0
  %vm5144 = vcmp.ge.s32.totalorder %v5080, 0
  %vm5145 = vcmp.ge.s32.totalorder %v5081, 0
  %vm5146 = vcmp.ge.s32.totalorder %v5082, 0
  %vm5147 = vcmp.ge.s32.totalorder %v5083, 0
  %vm5148 = vcmp.ge.s32.totalorder %v5084, 0
  %vm5149 = vcmp.ge.s32.totalorder %v5085, 0
  %vm5150 = vcmp.ge.s32.totalorder %v5086, 0
  %vm5151 = vcmp.ge.s32.totalorder %v5087, 0
  %vm5152 = vcmp.ge.s32.totalorder %v5088, 0
  %vm5153 = vcmp.ge.s32.totalorder %v5089, 0
  %vm5154 = vcmp.ge.s32.totalorder %v5090, 0
  %vm5155 = vcmp.ge.s32.totalorder %v5091, 0
  %vm5156 = vcmp.ge.s32.totalorder %v5092, 0
  %vm5157 = vcmp.ge.s32.totalorder %v5093, 0
  %vm5158 = vcmp.ge.s32.totalorder %v5094, 0
  %vm5159 = vcmp.ge.s32.totalorder %v5095, 0
  %vm5160 = vcmp.ge.s32.totalorder %v5096, 0
  %vm5161 = vcmp.ge.s32.totalorder %v5097, 0
  %vm5162 = vcmp.ge.s32.totalorder %v5098, 0
  %vm5163 = vcmp.ge.s32.totalorder %v5099, 0
  %vm5164 = vcmp.ge.s32.totalorder %v5100, 0
  %vm5165 = vcmp.ge.s32.totalorder %v5101, 0
  %vm5166 = vcmp.ge.s32.totalorder %v5102, 0
  %vm5167 = vcmp.ge.s32.totalorder %v5103, 0
  %vm5168 = vcmp.ge.s32.totalorder %v5104, 0
  %vm5169 = vcmp.ge.s32.totalorder %v5105, 0
  %vm5170 = vcmp.ge.s32.totalorder %v5106, 0
  %vm5171 = vcmp.ge.s32.totalorder %v5107, 0
  %vm5172 = vcmp.ge.s32.totalorder %v5108, 0
  %vm5173 = vcmp.ge.s32.totalorder %v5109, 0
  %vm5174 = vcmp.ge.s32.totalorder %v5110, 0
  %vm5175 = vcmp.ge.s32.totalorder %v5111, 0
  %vm5176 = vcmp.ge.s32.totalorder %v5112, 0
  %vm5177 = vcmp.ge.s32.totalorder %v5113, 0
  %vm5178 = vcmp.ge.s32.totalorder %v5114, 0
  %vm5179 = vcmp.ge.s32.totalorder %v5115, 0
  %vm5180 = vmand %vm3579, %vm5116
  %vm5181 = vmand %vm3580, %vm5117
  %vm5182 = vmand %vm3581, %vm5118
  %vm5183 = vmand %vm3582, %vm5119
  %vm5184 = vmand %vm3583, %vm5120
  %vm5185 = vmand %vm3584, %vm5121
  %vm5186 = vmand %vm3585, %vm5122
  %vm5187 = vmand %vm3586, %vm5123
  %vm5188 = vmand %vm3587, %vm5124
  %vm5189 = vmand %vm3588, %vm5125
  %vm5190 = vmand %vm3589, %vm5126
  %vm5191 = vmand %vm3590, %vm5127
  %vm5192 = vmand %vm3591, %vm5128
  %vm5193 = vmand %vm3592, %vm5129
  %vm5194 = vmand %vm3593, %vm5130
  %vm5195 = vmand %vm3594, %vm5131
  %vm5196 = vmand %vm3595, %vm5132
  %vm5197 = vmand %vm3596, %vm5133
  %vm5198 = vmand %vm3597, %vm5134
  %vm5199 = vmand %vm3598, %vm5135
  %vm5200 = vmand %vm3599, %vm5136
  %vm5201 = vmand %vm3600, %vm5137
  %vm5202 = vmand %vm3601, %vm5138
  %vm5203 = vmand %vm3602, %vm5139
  %vm5204 = vmand %vm3603, %vm5140
  %vm5205 = vmand %vm3604, %vm5141
  %vm5206 = vmand %vm3605, %vm5142
  %vm5207 = vmand %vm3606, %vm5143
  %vm5208 = vmand %vm3607, %vm5144
  %vm5209 = vmand %vm3608, %vm5145
  %vm5210 = vmand %vm3609, %vm5146
  %vm5211 = vmand %vm3610, %vm5147
  %vm5212 = vmand %vm3611, %vm5148
  %vm5213 = vmand %vm3612, %vm5149
  %vm5214 = vmand %vm3613, %vm5150
  %vm5215 = vmand %vm3614, %vm5151
  %vm5216 = vmand %vm3615, %vm5152
  %vm5217 = vmand %vm3616, %vm5153
  %vm5218 = vmand %vm3617, %vm5154
  %vm5219 = vmand %vm3618, %vm5155
  %vm5220 = vmand %vm3619, %vm5156
  %vm5221 = vmand %vm3620, %vm5157
  %vm5222 = vmand %vm3621, %vm5158
  %vm5223 = vmand %vm3622, %vm5159
  %vm5224 = vmand %vm3623, %vm5160
  %vm5225 = vmand %vm3624, %vm5161
  %vm5226 = vmand %vm3625, %vm5162
  %vm5227 = vmand %vm3626, %vm5163
  %vm5228 = vmand %vm3627, %vm5164
  %vm5229 = vmand %vm3628, %vm5165
  %vm5230 = vmand %vm3629, %vm5166
  %vm5231 = vmand %vm3630, %vm5167
  %vm5232 = vmand %vm3631, %vm5168
  %vm5233 = vmand %vm3632, %vm5169
  %vm5234 = vmand %vm3633, %vm5170
  %vm5235 = vmand %vm3634, %vm5171
  %vm5236 = vmand %vm3635, %vm5172
  %vm5237 = vmand %vm3636, %vm5173
  %vm5238 = vmand %vm3637, %vm5174
  %vm5239 = vmand %vm3638, %vm5175
  %vm5240 = vmand %vm3639, %vm5176
  %vm5241 = vmand %vm3640, %vm5177
  %vm5242 = vmand %vm3641, %vm5178
  %vm5243 = vmand %vm3642, %vm5179
  %vm5244 = vcmp.lt.s32.totalorder %v5052, 16
  %vm5245 = vcmp.lt.s32.totalorder %v5053, 16
  %vm5246 = vcmp.lt.s32.totalorder %v5054, 16
  %vm5247 = vcmp.lt.s32.totalorder %v5055, 16
  %vm5248 = vcmp.lt.s32.totalorder %v5056, 16
  %vm5249 = vcmp.lt.s32.totalorder %v5057, 16
  %vm5250 = vcmp.lt.s32.totalorder %v5058, 16
  %vm5251 = vcmp.lt.s32.totalorder %v5059, 16
  %vm5252 = vcmp.lt.s32.totalorder %v5060, 16
  %vm5253 = vcmp.lt.s32.totalorder %v5061, 16
  %vm5254 = vcmp.lt.s32.totalorder %v5062, 16
  %vm5255 = vcmp.lt.s32.totalorder %v5063, 16
  %vm5256 = vcmp.lt.s32.totalorder %v5064, 16
  %vm5257 = vcmp.lt.s32.totalorder %v5065, 16
  %vm5258 = vcmp.lt.s32.totalorder %v5066, 16
  %vm5259 = vcmp.lt.s32.totalorder %v5067, 16
  %vm5260 = vcmp.lt.s32.totalorder %v5068, 16
  %vm5261 = vcmp.lt.s32.totalorder %v5069, 16
  %vm5262 = vcmp.lt.s32.totalorder %v5070, 16
  %vm5263 = vcmp.lt.s32.totalorder %v5071, 16
  %vm5264 = vcmp.lt.s32.totalorder %v5072, 16
  %vm5265 = vcmp.lt.s32.totalorder %v5073, 16
  %vm5266 = vcmp.lt.s32.totalorder %v5074, 16
  %vm5267 = vcmp.lt.s32.totalorder %v5075, 16
  %vm5268 = vcmp.lt.s32.totalorder %v5076, 16
  %vm5269 = vcmp.lt.s32.totalorder %v5077, 16
  %vm5270 = vcmp.lt.s32.totalorder %v5078, 16
  %vm5271 = vcmp.lt.s32.totalorder %v5079, 16
  %vm5272 = vcmp.lt.s32.totalorder %v5080, 16
  %vm5273 = vcmp.lt.s32.totalorder %v5081, 16
  %vm5274 = vcmp.lt.s32.totalorder %v5082, 16
  %vm5275 = vcmp.lt.s32.totalorder %v5083, 16
  %vm5276 = vcmp.lt.s32.totalorder %v5084, 16
  %vm5277 = vcmp.lt.s32.totalorder %v5085, 16
  %vm5278 = vcmp.lt.s32.totalorder %v5086, 16
  %vm5279 = vcmp.lt.s32.totalorder %v5087, 16
  %vm5280 = vcmp.lt.s32.totalorder %v5088, 16
  %vm5281 = vcmp.lt.s32.totalorder %v5089, 16
  %vm5282 = vcmp.lt.s32.totalorder %v5090, 16
  %vm5283 = vcmp.lt.s32.totalorder %v5091, 16
  %vm5284 = vcmp.lt.s32.totalorder %v5092, 16
  %vm5285 = vcmp.lt.s32.totalorder %v5093, 16
  %vm5286 = vcmp.lt.s32.totalorder %v5094, 16
  %vm5287 = vcmp.lt.s32.totalorder %v5095, 16
  %vm5288 = vcmp.lt.s32.totalorder %v5096, 16
  %vm5289 = vcmp.lt.s32.totalorder %v5097, 16
  %vm5290 = vcmp.lt.s32.totalorder %v5098, 16
  %vm5291 = vcmp.lt.s32.totalorder %v5099, 16
  %vm5292 = vcmp.lt.s32.totalorder %v5100, 16
  %vm5293 = vcmp.lt.s32.totalorder %v5101, 16
  %vm5294 = vcmp.lt.s32.totalorder %v5102, 16
  %vm5295 = vcmp.lt.s32.totalorder %v5103, 16
  %vm5296 = vcmp.lt.s32.totalorder %v5104, 16
  %vm5297 = vcmp.lt.s32.totalorder %v5105, 16
  %vm5298 = vcmp.lt.s32.totalorder %v5106, 16
  %vm5299 = vcmp.lt.s32.totalorder %v5107, 16
  %vm5300 = vcmp.lt.s32.totalorder %v5108, 16
  %vm5301 = vcmp.lt.s32.totalorder %v5109, 16
  %vm5302 = vcmp.lt.s32.totalorder %v5110, 16
  %vm5303 = vcmp.lt.s32.totalorder %v5111, 16
  %vm5304 = vcmp.lt.s32.totalorder %v5112, 16
  %vm5305 = vcmp.lt.s32.totalorder %v5113, 16
  %vm5306 = vcmp.lt.s32.totalorder %v5114, 16
  %vm5307 = vcmp.lt.s32.totalorder %v5115, 16
  %vm5308 = vmand %vm5180, %vm5244
  %vm5309 = vmand %vm5181, %vm5245
  %vm5310 = vmand %vm5182, %vm5246
  %vm5311 = vmand %vm5183, %vm5247
  %vm5312 = vmand %vm5184, %vm5248
  %vm5313 = vmand %vm5185, %vm5249
  %vm5314 = vmand %vm5186, %vm5250
  %vm5315 = vmand %vm5187, %vm5251
  %vm5316 = vmand %vm5188, %vm5252
  %vm5317 = vmand %vm5189, %vm5253
  %vm5318 = vmand %vm5190, %vm5254
  %vm5319 = vmand %vm5191, %vm5255
  %vm5320 = vmand %vm5192, %vm5256
  %vm5321 = vmand %vm5193, %vm5257
  %vm5322 = vmand %vm5194, %vm5258
  %vm5323 = vmand %vm5195, %vm5259
  %vm5324 = vmand %vm5196, %vm5260
  %vm5325 = vmand %vm5197, %vm5261
  %vm5326 = vmand %vm5198, %vm5262
  %vm5327 = vmand %vm5199, %vm5263
  %vm5328 = vmand %vm5200, %vm5264
  %vm5329 = vmand %vm5201, %vm5265
  %vm5330 = vmand %vm5202, %vm5266
  %vm5331 = vmand %vm5203, %vm5267
  %vm5332 = vmand %vm5204, %vm5268
  %vm5333 = vmand %vm5205, %vm5269
  %vm5334 = vmand %vm5206, %vm5270
  %vm5335 = vmand %vm5207, %vm5271
  %vm5336 = vmand %vm5208, %vm5272
  %vm5337 = vmand %vm5209, %vm5273
  %vm5338 = vmand %vm5210, %vm5274
  %vm5339 = vmand %vm5211, %vm5275
  %vm5340 = vmand %vm5212, %vm5276
  %vm5341 = vmand %vm5213, %vm5277
  %vm5342 = vmand %vm5214, %vm5278
  %vm5343 = vmand %vm5215, %vm5279
  %vm5344 = vmand %vm5216, %vm5280
  %vm5345 = vmand %vm5217, %vm5281
  %vm5346 = vmand %vm5218, %vm5282
  %vm5347 = vmand %vm5219, %vm5283
  %vm5348 = vmand %vm5220, %vm5284
  %vm5349 = vmand %vm5221, %vm5285
  %vm5350 = vmand %vm5222, %vm5286
  %vm5351 = vmand %vm5223, %vm5287
  %vm5352 = vmand %vm5224, %vm5288
  %vm5353 = vmand %vm5225, %vm5289
  %vm5354 = vmand %vm5226, %vm5290
  %vm5355 = vmand %vm5227, %vm5291
  %vm5356 = vmand %vm5228, %vm5292
  %vm5357 = vmand %vm5229, %vm5293
  %vm5358 = vmand %vm5230, %vm5294
  %vm5359 = vmand %vm5231, %vm5295
  %vm5360 = vmand %vm5232, %vm5296
  %vm5361 = vmand %vm5233, %vm5297
  %vm5362 = vmand %vm5234, %vm5298
  %vm5363 = vmand %vm5235, %vm5299
  %vm5364 = vmand %vm5236, %vm5300
  %vm5365 = vmand %vm5237, %vm5301
  %vm5366 = vmand %vm5238, %vm5302
  %vm5367 = vmand %vm5239, %vm5303
  %vm5368 = vmand %vm5240, %vm5304
  %vm5369 = vmand %vm5241, %vm5305
  %vm5370 = vmand %vm5242, %vm5306
  %vm5371 = vmand %vm5243, %vm5307
  %v5372 = vsel %vm5308, 1, 0
  %v5373 = vsel %vm5309, 1, 0
  %v5374 = vsel %vm5310, 1, 0
  %v5375 = vsel %vm5311, 1, 0
  %v5376 = vsel %vm5312, 1, 0
  %v5377 = vsel %vm5313, 1, 0
  %v5378 = vsel %vm5314, 1, 0
  %v5379 = vsel %vm5315, 1, 0
  %v5380 = vsel %vm5316, 1, 0
  %v5381 = vsel %vm5317, 1, 0
  %v5382 = vsel %vm5318, 1, 0
  %v5383 = vsel %vm5319, 1, 0
  %v5384 = vsel %vm5320, 1, 0
  %v5385 = vsel %vm5321, 1, 0
  %v5386 = vsel %vm5322, 1, 0
  %v5387 = vsel %vm5323, 1, 0
  %v5388 = vsel %vm5324, 1, 0
  %v5389 = vsel %vm5325, 1, 0
  %v5390 = vsel %vm5326, 1, 0
  %v5391 = vsel %vm5327, 1, 0
  %v5392 = vsel %vm5328, 1, 0
  %v5393 = vsel %vm5329, 1, 0
  %v5394 = vsel %vm5330, 1, 0
  %v5395 = vsel %vm5331, 1, 0
  %v5396 = vsel %vm5332, 1, 0
  %v5397 = vsel %vm5333, 1, 0
  %v5398 = vsel %vm5334, 1, 0
  %v5399 = vsel %vm5335, 1, 0
  %v5400 = vsel %vm5336, 1, 0
  %v5401 = vsel %vm5337, 1, 0
  %v5402 = vsel %vm5338, 1, 0
  %v5403 = vsel %vm5339, 1, 0
  %v5404 = vsel %vm5340, 1, 0
  %v5405 = vsel %vm5341, 1, 0
  %v5406 = vsel %vm5342, 1, 0
  %v5407 = vsel %vm5343, 1, 0
  %v5408 = vsel %vm5344, 1, 0
  %v5409 = vsel %vm5345, 1, 0
  %v5410 = vsel %vm5346, 1, 0
  %v5411 = vsel %vm5347, 1, 0
  %v5412 = vsel %vm5348, 1, 0
  %v5413 = vsel %vm5349, 1, 0
  %v5414 = vsel %vm5350, 1, 0
  %v5415 = vsel %vm5351, 1, 0
  %v5416 = vsel %vm5352, 1, 0
  %v5417 = vsel %vm5353, 1, 0
  %v5418 = vsel %vm5354, 1, 0
  %v5419 = vsel %vm5355, 1, 0
  %v5420 = vsel %vm5356, 1, 0
  %v5421 = vsel %vm5357, 1, 0
  %v5422 = vsel %vm5358, 1, 0
  %v5423 = vsel %vm5359, 1, 0
  %v5424 = vsel %vm5360, 1, 0
  %v5425 = vsel %vm5361, 1, 0
  %v5426 = vsel %vm5362, 1, 0
  %v5427 = vsel %vm5363, 1, 0
  %v5428 = vsel %vm5364, 1, 0
  %v5429 = vsel %vm5365, 1, 0
  %v5430 = vsel %vm5366, 1, 0
  %v5431 = vsel %vm5367, 1, 0
  %v5432 = vsel %vm5368, 1, 0
  %v5433 = vsel %vm5369, 1, 0
  %v5434 = vsel %vm5370, 1, 0
  %v5435 = vsel %vm5371, 1, 0
  %vm5436 = vcmp.eq.s32.totalorder %v5372, 1
  %vm5437 = vcmp.eq.s32.totalorder %v5373, 1
  %vm5438 = vcmp.eq.s32.totalorder %v5374, 1
  %vm5439 = vcmp.eq.s32.totalorder %v5375, 1
  %vm5440 = vcmp.eq.s32.totalorder %v5376, 1
  %vm5441 = vcmp.eq.s32.totalorder %v5377, 1
  %vm5442 = vcmp.eq.s32.totalorder %v5378, 1
  %vm5443 = vcmp.eq.s32.totalorder %v5379, 1
  %vm5444 = vcmp.eq.s32.totalorder %v5380, 1
  %vm5445 = vcmp.eq.s32.totalorder %v5381, 1
  %vm5446 = vcmp.eq.s32.totalorder %v5382, 1
  %vm5447 = vcmp.eq.s32.totalorder %v5383, 1
  %vm5448 = vcmp.eq.s32.totalorder %v5384, 1
  %vm5449 = vcmp.eq.s32.totalorder %v5385, 1
  %vm5450 = vcmp.eq.s32.totalorder %v5386, 1
  %vm5451 = vcmp.eq.s32.totalorder %v5387, 1
  %vm5452 = vcmp.eq.s32.totalorder %v5388, 1
  %vm5453 = vcmp.eq.s32.totalorder %v5389, 1
  %vm5454 = vcmp.eq.s32.totalorder %v5390, 1
  %vm5455 = vcmp.eq.s32.totalorder %v5391, 1
  %vm5456 = vcmp.eq.s32.totalorder %v5392, 1
  %vm5457 = vcmp.eq.s32.totalorder %v5393, 1
  %vm5458 = vcmp.eq.s32.totalorder %v5394, 1
  %vm5459 = vcmp.eq.s32.totalorder %v5395, 1
  %vm5460 = vcmp.eq.s32.totalorder %v5396, 1
  %vm5461 = vcmp.eq.s32.totalorder %v5397, 1
  %vm5462 = vcmp.eq.s32.totalorder %v5398, 1
  %vm5463 = vcmp.eq.s32.totalorder %v5399, 1
  %vm5464 = vcmp.eq.s32.totalorder %v5400, 1
  %vm5465 = vcmp.eq.s32.totalorder %v5401, 1
  %vm5466 = vcmp.eq.s32.totalorder %v5402, 1
  %vm5467 = vcmp.eq.s32.totalorder %v5403, 1
  %vm5468 = vcmp.eq.s32.totalorder %v5404, 1
  %vm5469 = vcmp.eq.s32.totalorder %v5405, 1
  %vm5470 = vcmp.eq.s32.totalorder %v5406, 1
  %vm5471 = vcmp.eq.s32.totalorder %v5407, 1
  %vm5472 = vcmp.eq.s32.totalorder %v5408, 1
  %vm5473 = vcmp.eq.s32.totalorder %v5409, 1
  %vm5474 = vcmp.eq.s32.totalorder %v5410, 1
  %vm5475 = vcmp.eq.s32.totalorder %v5411, 1
  %vm5476 = vcmp.eq.s32.totalorder %v5412, 1
  %vm5477 = vcmp.eq.s32.totalorder %v5413, 1
  %vm5478 = vcmp.eq.s32.totalorder %v5414, 1
  %vm5479 = vcmp.eq.s32.totalorder %v5415, 1
  %vm5480 = vcmp.eq.s32.totalorder %v5416, 1
  %vm5481 = vcmp.eq.s32.totalorder %v5417, 1
  %vm5482 = vcmp.eq.s32.totalorder %v5418, 1
  %vm5483 = vcmp.eq.s32.totalorder %v5419, 1
  %vm5484 = vcmp.eq.s32.totalorder %v5420, 1
  %vm5485 = vcmp.eq.s32.totalorder %v5421, 1
  %vm5486 = vcmp.eq.s32.totalorder %v5422, 1
  %vm5487 = vcmp.eq.s32.totalorder %v5423, 1
  %vm5488 = vcmp.eq.s32.totalorder %v5424, 1
  %vm5489 = vcmp.eq.s32.totalorder %v5425, 1
  %vm5490 = vcmp.eq.s32.totalorder %v5426, 1
  %vm5491 = vcmp.eq.s32.totalorder %v5427, 1
  %vm5492 = vcmp.eq.s32.totalorder %v5428, 1
  %vm5493 = vcmp.eq.s32.totalorder %v5429, 1
  %vm5494 = vcmp.eq.s32.totalorder %v5430, 1
  %vm5495 = vcmp.eq.s32.totalorder %v5431, 1
  %vm5496 = vcmp.eq.s32.totalorder %v5432, 1
  %vm5497 = vcmp.eq.s32.totalorder %v5433, 1
  %vm5498 = vcmp.eq.s32.totalorder %v5434, 1
  %vm5499 = vcmp.eq.s32.totalorder %v5435, 1
  %v5500 = vsel %vm5436, %v4988, 0.0
  %v5501 = vsel %vm5437, %v4989, 0.0
  %v5502 = vsel %vm5438, %v4990, 0.0
  %v5503 = vsel %vm5439, %v4991, 0.0
  %v5504 = vsel %vm5440, %v4992, 0.0
  %v5505 = vsel %vm5441, %v4993, 0.0
  %v5506 = vsel %vm5442, %v4994, 0.0
  %v5507 = vsel %vm5443, %v4995, 0.0
  %v5508 = vsel %vm5444, %v4996, 0.0
  %v5509 = vsel %vm5445, %v4997, 0.0
  %v5510 = vsel %vm5446, %v4998, 0.0
  %v5511 = vsel %vm5447, %v4999, 0.0
  %v5512 = vsel %vm5448, %v5000, 0.0
  %v5513 = vsel %vm5449, %v5001, 0.0
  %v5514 = vsel %vm5450, %v5002, 0.0
  %v5515 = vsel %vm5451, %v5003, 0.0
  %v5516 = vsel %vm5452, %v5004, 0.0
  %v5517 = vsel %vm5453, %v5005, 0.0
  %v5518 = vsel %vm5454, %v5006, 0.0
  %v5519 = vsel %vm5455, %v5007, 0.0
  %v5520 = vsel %vm5456, %v5008, 0.0
  %v5521 = vsel %vm5457, %v5009, 0.0
  %v5522 = vsel %vm5458, %v5010, 0.0
  %v5523 = vsel %vm5459, %v5011, 0.0
  %v5524 = vsel %vm5460, %v5012, 0.0
  %v5525 = vsel %vm5461, %v5013, 0.0
  %v5526 = vsel %vm5462, %v5014, 0.0
  %v5527 = vsel %vm5463, %v5015, 0.0
  %v5528 = vsel %vm5464, %v5016, 0.0
  %v5529 = vsel %vm5465, %v5017, 0.0
  %v5530 = vsel %vm5466, %v5018, 0.0
  %v5531 = vsel %vm5467, %v5019, 0.0
  %v5532 = vsel %vm5468, %v5020, 0.0
  %v5533 = vsel %vm5469, %v5021, 0.0
  %v5534 = vsel %vm5470, %v5022, 0.0
  %v5535 = vsel %vm5471, %v5023, 0.0
  %v5536 = vsel %vm5472, %v5024, 0.0
  %v5537 = vsel %vm5473, %v5025, 0.0
  %v5538 = vsel %vm5474, %v5026, 0.0
  %v5539 = vsel %vm5475, %v5027, 0.0
  %v5540 = vsel %vm5476, %v5028, 0.0
  %v5541 = vsel %vm5477, %v5029, 0.0
  %v5542 = vsel %vm5478, %v5030, 0.0
  %v5543 = vsel %vm5479, %v5031, 0.0
  %v5544 = vsel %vm5480, %v5032, 0.0
  %v5545 = vsel %vm5481, %v5033, 0.0
  %v5546 = vsel %vm5482, %v5034, 0.0
  %v5547 = vsel %vm5483, %v5035, 0.0
  %v5548 = vsel %vm5484, %v5036, 0.0
  %v5549 = vsel %vm5485, %v5037, 0.0
  %v5550 = vsel %vm5486, %v5038, 0.0
  %v5551 = vsel %vm5487, %v5039, 0.0
  %v5552 = vsel %vm5488, %v5040, 0.0
  %v5553 = vsel %vm5489, %v5041, 0.0
  %v5554 = vsel %vm5490, %v5042, 0.0
  %v5555 = vsel %vm5491, %v5043, 0.0
  %v5556 = vsel %vm5492, %v5044, 0.0
  %v5557 = vsel %vm5493, %v5045, 0.0
  %v5558 = vsel %vm5494, %v5046, 0.0
  %v5559 = vsel %vm5495, %v5047, 0.0
  %v5560 = vsel %vm5496, %v5048, 0.0
  %v5561 = vsel %vm5497, %v5049, 0.0
  %v5562 = vsel %vm5498, %v5050, 0.0
  %v5563 = vsel %vm5499, %v5051, 0.0
  %5628 = vrot.lane.b32.xlu0 %v5500, 32
  %v5629 = vpop.permute.xlu0 %5628
  %5630 = vrot.lane.b32.xlu0 %v5501, 32
  %v5631 = vpop.permute.xlu0 %5630
  %5632 = vrot.lane.b32.xlu0 %v5502, 32
  %v5633 = vpop.permute.xlu0 %5632
  %5634 = vrot.lane.b32.xlu0 %v5503, 32
  %v5635 = vpop.permute.xlu0 %5634
  %5636 = vrot.lane.b32.xlu0 %v5504, 32
  %v5637 = vpop.permute.xlu0 %5636
  %5638 = vrot.lane.b32.xlu0 %v5505, 32
  %v5639 = vpop.permute.xlu0 %5638
  %5640 = vrot.lane.b32.xlu0 %v5506, 32
  %v5641 = vpop.permute.xlu0 %5640
  %5642 = vrot.lane.b32.xlu0 %v5507, 32
  %v5643 = vpop.permute.xlu0 %5642
  %5644 = vrot.lane.b32.xlu0 %v5508, 32
  %v5645 = vpop.permute.xlu0 %5644
  %5646 = vrot.lane.b32.xlu0 %v5509, 32
  %v5647 = vpop.permute.xlu0 %5646
  %5648 = vrot.lane.b32.xlu0 %v5510, 32
  %v5649 = vpop.permute.xlu0 %5648
  %5650 = vrot.lane.b32.xlu0 %v5511, 32
  %v5651 = vpop.permute.xlu0 %5650
  %5652 = vrot.lane.b32.xlu0 %v5512, 32
  %v5653 = vpop.permute.xlu0 %5652
  %5654 = vrot.lane.b32.xlu0 %v5513, 32
  %v5655 = vpop.permute.xlu0 %5654
  %5656 = vrot.lane.b32.xlu0 %v5514, 32
  %v5657 = vpop.permute.xlu0 %5656
  %5658 = vrot.lane.b32.xlu0 %v5515, 32
  %v5659 = vpop.permute.xlu0 %5658
  %5660 = vrot.lane.b32.xlu0 %v5516, 32
  %v5661 = vpop.permute.xlu0 %5660
  %5662 = vrot.lane.b32.xlu0 %v5517, 32
  %v5663 = vpop.permute.xlu0 %5662
  %5664 = vrot.lane.b32.xlu0 %v5518, 32
  %v5665 = vpop.permute.xlu0 %5664
  %5666 = vrot.lane.b32.xlu0 %v5519, 32
  %v5667 = vpop.permute.xlu0 %5666
  %5668 = vrot.lane.b32.xlu0 %v5520, 32
  %v5669 = vpop.permute.xlu0 %5668
  %5670 = vrot.lane.b32.xlu0 %v5521, 32
  %v5671 = vpop.permute.xlu0 %5670
  %5672 = vrot.lane.b32.xlu0 %v5522, 32
  %v5673 = vpop.permute.xlu0 %5672
  %5674 = vrot.lane.b32.xlu0 %v5523, 32
  %v5675 = vpop.permute.xlu0 %5674
  %5676 = vrot.lane.b32.xlu0 %v5524, 32
  %v5677 = vpop.permute.xlu0 %5676
  %5678 = vrot.lane.b32.xlu0 %v5525, 32
  %v5679 = vpop.permute.xlu0 %5678
  %5680 = vrot.lane.b32.xlu0 %v5526, 32
  %v5681 = vpop.permute.xlu0 %5680
  %5682 = vrot.lane.b32.xlu0 %v5527, 32
  %v5683 = vpop.permute.xlu0 %5682
  %5684 = vrot.lane.b32.xlu0 %v5528, 32
  %v5685 = vpop.permute.xlu0 %5684
  %5686 = vrot.lane.b32.xlu0 %v5529, 32
  %v5687 = vpop.permute.xlu0 %5686
  %5688 = vrot.lane.b32.xlu0 %v5530, 32
  %v5689 = vpop.permute.xlu0 %5688
  %5690 = vrot.lane.b32.xlu0 %v5531, 32
  %v5691 = vpop.permute.xlu0 %5690
  %5692 = vrot.lane.b32.xlu0 %v5532, 32
  %v5693 = vpop.permute.xlu0 %5692
  %5694 = vrot.lane.b32.xlu0 %v5533, 32
  %v5695 = vpop.permute.xlu0 %5694
  %5696 = vrot.lane.b32.xlu0 %v5534, 32
  %v5697 = vpop.permute.xlu0 %5696
  %5698 = vrot.lane.b32.xlu0 %v5535, 32
  %v5699 = vpop.permute.xlu0 %5698
  %5700 = vrot.lane.b32.xlu0 %v5536, 32
  %v5701 = vpop.permute.xlu0 %5700
  %5702 = vrot.lane.b32.xlu0 %v5537, 32
  %v5703 = vpop.permute.xlu0 %5702
  %5704 = vrot.lane.b32.xlu0 %v5538, 32
  %v5705 = vpop.permute.xlu0 %5704
  %5706 = vrot.lane.b32.xlu0 %v5539, 32
  %v5707 = vpop.permute.xlu0 %5706
  %5708 = vrot.lane.b32.xlu0 %v5540, 32
  %v5709 = vpop.permute.xlu0 %5708
  %5710 = vrot.lane.b32.xlu0 %v5541, 32
  %v5711 = vpop.permute.xlu0 %5710
  %5712 = vrot.lane.b32.xlu0 %v5542, 32
  %v5713 = vpop.permute.xlu0 %5712
  %5714 = vrot.lane.b32.xlu0 %v5543, 32
  %v5715 = vpop.permute.xlu0 %5714
  %5716 = vrot.lane.b32.xlu0 %v5544, 32
  %v5717 = vpop.permute.xlu0 %5716
  %5718 = vrot.lane.b32.xlu0 %v5545, 32
  %v5719 = vpop.permute.xlu0 %5718
  %5720 = vrot.lane.b32.xlu0 %v5546, 32
  %v5721 = vpop.permute.xlu0 %5720
  %5722 = vrot.lane.b32.xlu0 %v5547, 32
  %v5723 = vpop.permute.xlu0 %5722
  %5724 = vrot.lane.b32.xlu0 %v5548, 32
  %v5725 = vpop.permute.xlu0 %5724
  %5726 = vrot.lane.b32.xlu0 %v5549, 32
  %v5727 = vpop.permute.xlu0 %5726
  %5728 = vrot.lane.b32.xlu0 %v5550, 32
  %v5729 = vpop.permute.xlu0 %5728
  %5730 = vrot.lane.b32.xlu0 %v5551, 32
  %v5731 = vpop.permute.xlu0 %5730
  %5732 = vrot.lane.b32.xlu0 %v5552, 32
  %v5733 = vpop.permute.xlu0 %5732
  %5734 = vrot.lane.b32.xlu0 %v5553, 32
  %v5735 = vpop.permute.xlu0 %5734
  %5736 = vrot.lane.b32.xlu0 %v5554, 32
  %v5737 = vpop.permute.xlu0 %5736
  %5738 = vrot.lane.b32.xlu0 %v5555, 32
  %v5739 = vpop.permute.xlu0 %5738
  %5740 = vrot.lane.b32.xlu0 %v5556, 32
  %v5741 = vpop.permute.xlu0 %5740
  %5742 = vrot.lane.b32.xlu0 %v5557, 32
  %v5743 = vpop.permute.xlu0 %5742
  %5744 = vrot.lane.b32.xlu0 %v5558, 32
  %v5745 = vpop.permute.xlu0 %5744
  %5746 = vrot.lane.b32.xlu0 %v5559, 32
  %v5747 = vpop.permute.xlu0 %5746
  %5748 = vrot.lane.b32.xlu0 %v5560, 32
  %v5749 = vpop.permute.xlu0 %5748
  %5750 = vrot.lane.b32.xlu0 %v5561, 32
  %v5751 = vpop.permute.xlu0 %5750
  %5752 = vrot.lane.b32.xlu0 %v5562, 32
  %v5753 = vpop.permute.xlu0 %5752
  %5754 = vrot.lane.b32.xlu0 %v5563, 32
  %v5755 = vpop.permute.xlu0 %5754
  %vm5820 = vcmask 392448
  %5821 = vst.msk [vmem:[#allocation3] sm:$0xff] %vm5820, %v5629
  %5822 = vst.msk [vmem:[#allocation3 + $0x10] sm:$0xff] %vm5820, %v5631
  %5823 = vst.msk [vmem:[#allocation3 + $0x20] sm:$0xff] %vm5820, %v5633
  %5824 = vst.msk [vmem:[#allocation3 + $0x30] sm:$0xff] %vm5820, %v5635
  %5825 = vst.msk [vmem:[#allocation3 + $0x40] sm:$0xff] %vm5820, %v5637
  %5826 = vst.msk [vmem:[#allocation3 + $0x50] sm:$0xff] %vm5820, %v5639
  %5827 = vst.msk [vmem:[#allocation3 + $0x60] sm:$0xff] %vm5820, %v5641
  %5828 = vst.msk [vmem:[#allocation3 + $0x70] sm:$0xff] %vm5820, %v5643
  %5829 = vst.msk [vmem:[#allocation3 + $0x80] sm:$0xff] %vm5820, %v5645
  %5830 = vst.msk [vmem:[#allocation3 + $0x90] sm:$0xff] %vm5820, %v5647
  %5831 = vst.msk [vmem:[#allocation3 + $0xa0] sm:$0xff] %vm5820, %v5649
  %5832 = vst.msk [vmem:[#allocation3 + $0xb0] sm:$0xff] %vm5820, %v5651
  %5833 = vst.msk [vmem:[#allocation3 + $0xc0] sm:$0xff] %vm5820, %v5653
  %5834 = vst.msk [vmem:[#allocation3 + $0xd0] sm:$0xff] %vm5820, %v5655
  %5835 = vst.msk [vmem:[#allocation3 + $0xe0] sm:$0xff] %vm5820, %v5657
  %5836 = vst.msk [vmem:[#allocation3 + $0xf0] sm:$0xff] %vm5820, %v5659
  %5837 = vst.msk [vmem:[#allocation3 + $0x100] sm:$0xff] %vm5820, %v5661
  %5838 = vst.msk [vmem:[#allocation3 + $0x110] sm:$0xff] %vm5820, %v5663
  %5839 = vst.msk [vmem:[#allocation3 + $0x120] sm:$0xff] %vm5820, %v5665
  %5840 = vst.msk [vmem:[#allocation3 + $0x130] sm:$0xff] %vm5820, %v5667
  %5841 = vst.msk [vmem:[#allocation3 + $0x140] sm:$0xff] %vm5820, %v5669
  %5842 = vst.msk [vmem:[#allocation3 + $0x150] sm:$0xff] %vm5820, %v5671
  %5843 = vst.msk [vmem:[#allocation3 + $0x160] sm:$0xff] %vm5820, %v5673
  %5844 = vst.msk [vmem:[#allocation3 + $0x170] sm:$0xff] %vm5820, %v5675
  %5845 = vst.msk [vmem:[#allocation3 + $0x180] sm:$0xff] %vm5820, %v5677
  %5846 = vst.msk [vmem:[#allocation3 + $0x190] sm:$0xff] %vm5820, %v5679
  %5847 = vst.msk [vmem:[#allocation3 + $0x1a0] sm:$0xff] %vm5820, %v5681
  %5848 = vst.msk [vmem:[#allocation3 + $0x1b0] sm:$0xff] %vm5820, %v5683
  %5849 = vst.msk [vmem:[#allocation3 + $0x1c0] sm:$0xff] %vm5820, %v5685
  %5850 = vst.msk [vmem:[#allocation3 + $0x1d0] sm:$0xff] %vm5820, %v5687
  %5851 = vst.msk [vmem:[#allocation3 + $0x1e0] sm:$0xff] %vm5820, %v5689
  %5852 = vst.msk [vmem:[#allocation3 + $0x1f0] sm:$0xff] %vm5820, %v5691
  %5853 = vst.msk [vmem:[#allocation3 + $0x200] sm:$0xff] %vm5820, %v5693
  %5854 = vst.msk [vmem:[#allocation3 + $0x210] sm:$0xff] %vm5820, %v5695
  %5855 = vst.msk [vmem:[#allocation3 + $0x220] sm:$0xff] %vm5820, %v5697
  %5856 = vst.msk [vmem:[#allocation3 + $0x230] sm:$0xff] %vm5820, %v5699
  %5857 = vst.msk [vmem:[#allocation3 + $0x240] sm:$0xff] %vm5820, %v5701
  %5858 = vst.msk [vmem:[#allocation3 + $0x250] sm:$0xff] %vm5820, %v5703
  %5859 = vst.msk [vmem:[#allocation3 + $0x260] sm:$0xff] %vm5820, %v5705
  %5860 = vst.msk [vmem:[#allocation3 + $0x270] sm:$0xff] %vm5820, %v5707
  %5861 = vst.msk [vmem:[#allocation3 + $0x280] sm:$0xff] %vm5820, %v5709
  %5862 = vst.msk [vmem:[#allocation3 + $0x290] sm:$0xff] %vm5820, %v5711
  %5863 = vst.msk [vmem:[#allocation3 + $0x2a0] sm:$0xff] %vm5820, %v5713
  %5864 = vst.msk [vmem:[#allocation3 + $0x2b0] sm:$0xff] %vm5820, %v5715
  %5865 = vst.msk [vmem:[#allocation3 + $0x2c0] sm:$0xff] %vm5820, %v5717
  %5866 = vst.msk [vmem:[#allocation3 + $0x2d0] sm:$0xff] %vm5820, %v5719
  %5867 = vst.msk [vmem:[#allocation3 + $0x2e0] sm:$0xff] %vm5820, %v5721
  %5868 = vst.msk [vmem:[#allocation3 + $0x2f0] sm:$0xff] %vm5820, %v5723
  %5869 = vst.msk [vmem:[#allocation3 + $0x300] sm:$0xff] %vm5820, %v5725
  %5870 = vst.msk [vmem:[#allocation3 + $0x310] sm:$0xff] %vm5820, %v5727
  %5871 = vst.msk [vmem:[#allocation3 + $0x320] sm:$0xff] %vm5820, %v5729
  %5872 = vst.msk [vmem:[#allocation3 + $0x330] sm:$0xff] %vm5820, %v5731
  %5873 = vst.msk [vmem:[#allocation3 + $0x340] sm:$0xff] %vm5820, %v5733
  %5874 = vst.msk [vmem:[#allocation3 + $0x350] sm:$0xff] %vm5820, %v5735
  %5875 = vst.msk [vmem:[#allocation3 + $0x360] sm:$0xff] %vm5820, %v5737
  %5876 = vst.msk [vmem:[#allocation3 + $0x370] sm:$0xff] %vm5820, %v5739
  %5877 = vst.msk [vmem:[#allocation3 + $0x380] sm:$0xff] %vm5820, %v5741
  %5878 = vst.msk [vmem:[#allocation3 + $0x390] sm:$0xff] %vm5820, %v5743
  %5879 = vst.msk [vmem:[#allocation3 + $0x3a0] sm:$0xff] %vm5820, %v5745
  %5880 = vst.msk [vmem:[#allocation3 + $0x3b0] sm:$0xff] %vm5820, %v5747
  %5881 = vst.msk [vmem:[#allocation3 + $0x3c0] sm:$0xff] %vm5820, %v5749
  %5882 = vst.msk [vmem:[#allocation3 + $0x3d0] sm:$0xff] %vm5820, %v5751
  %5883 = vst.msk [vmem:[#allocation3 + $0x3e0] sm:$0xff] %vm5820, %v5753
  %5884 = vst.msk [vmem:[#allocation3 + $0x3f0] sm:$0xff] %vm5820, %v5755
  %v5885 = vld [vmem:[#allocation2 + $0x17] sm:$0xff]
  %v5886 = vld [vmem:[#allocation2 + $0x1f] sm:$0xff]
  %v5887 = vld [vmem:[#allocation2 + $0x27] sm:$0xff]
  %v5888 = vld [vmem:[#allocation2 + $0x2f] sm:$0xff]
  %v5889 = vld [vmem:[#allocation2 + $0x37] sm:$0xff]
  %v5890 = vld [vmem:[#allocation2 + $0x3f] sm:$0xff]
  %v5891 = vld [vmem:[#allocation2 + $0x47] sm:$0xff]
  %v5892 = vld [vmem:[#allocation2 + $0x4f] sm:$0xff]
  %v5893 = vld [vmem:[#allocation2 + $0x57] sm:$0xff]
  %v5894 = vld [vmem:[#allocation2 + $0x5f] sm:$0xff]
  %v5895 = vld [vmem:[#allocation2 + $0x67] sm:$0xff]
  %v5896 = vld [vmem:[#allocation2 + $0x6f] sm:$0xff]
  %v5897 = vld [vmem:[#allocation2 + $0x77] sm:$0xff]
  %v5898 = vld [vmem:[#allocation2 + $0x7f] sm:$0xff]
  %v5899 = vld [vmem:[#allocation2 + $0x87] sm:$0xff]
  %v5900 = vld [vmem:[#allocation2 + $0x8f] sm:$0xff]
  %v5901 = vld [vmem:[#allocation2 + $0x97] sm:$0xff]
  %v5902 = vld [vmem:[#allocation2 + $0x9f] sm:$0xff]
  %v5903 = vld [vmem:[#allocation2 + $0xa7] sm:$0xff]
  %v5904 = vld [vmem:[#allocation2 + $0xaf] sm:$0xff]
  %v5905 = vld [vmem:[#allocation2 + $0xb7] sm:$0xff]
  %v5906 = vld [vmem:[#allocation2 + $0xbf] sm:$0xff]
  %v5907 = vld [vmem:[#allocation2 + $0xc7] sm:$0xff]
  %v5908 = vld [vmem:[#allocation2 + $0xcf] sm:$0xff]
  %v5909 = vld [vmem:[#allocation2 + $0xd7] sm:$0xff]
  %v5910 = vld [vmem:[#allocation2 + $0xdf] sm:$0xff]
  %v5911 = vld [vmem:[#allocation2 + $0xe7] sm:$0xff]
  %v5912 = vld [vmem:[#allocation2 + $0xef] sm:$0xff]
  %v5913 = vld [vmem:[#allocation2 + $0xf7] sm:$0xff]
  %v5914 = vld [vmem:[#allocation2 + $0xff] sm:$0xff]
  %v5915 = vld [vmem:[#allocation2 + $0x107] sm:$0xff]
  %v5916 = vld [vmem:[#allocation2 + $0x10f] sm:$0xff]
  %v5917 = vld [vmem:[#allocation2 + $0x117] sm:$0xff]
  %v5918 = vld [vmem:[#allocation2 + $0x11f] sm:$0xff]
  %v5919 = vld [vmem:[#allocation2 + $0x127] sm:$0xff]
  %v5920 = vld [vmem:[#allocation2 + $0x12f] sm:$0xff]
  %v5921 = vld [vmem:[#allocation2 + $0x137] sm:$0xff]
  %v5922 = vld [vmem:[#allocation2 + $0x13f] sm:$0xff]
  %v5923 = vld [vmem:[#allocation2 + $0x147] sm:$0xff]
  %v5924 = vld [vmem:[#allocation2 + $0x14f] sm:$0xff]
  %v5925 = vld [vmem:[#allocation2 + $0x157] sm:$0xff]
  %v5926 = vld [vmem:[#allocation2 + $0x15f] sm:$0xff]
  %v5927 = vld [vmem:[#allocation2 + $0x167] sm:$0xff]
  %v5928 = vld [vmem:[#allocation2 + $0x16f] sm:$0xff]
  %v5929 = vld [vmem:[#allocation2 + $0x177] sm:$0xff]
  %v5930 = vld [vmem:[#allocation2 + $0x17f] sm:$0xff]
  %v5931 = vld [vmem:[#allocation2 + $0x187] sm:$0xff]
  %v5932 = vld [vmem:[#allocation2 + $0x18f] sm:$0xff]
  %v5933 = vld [vmem:[#allocation2 + $0x197] sm:$0xff]
  %v5934 = vld [vmem:[#allocation2 + $0x19f] sm:$0xff]
  %v5935 = vld [vmem:[#allocation2 + $0x1a7] sm:$0xff]
  %v5936 = vld [vmem:[#allocation2 + $0x1af] sm:$0xff]
  %v5937 = vld [vmem:[#allocation2 + $0x1b7] sm:$0xff]
  %v5938 = vld [vmem:[#allocation2 + $0x1bf] sm:$0xff]
  %v5939 = vld [vmem:[#allocation2 + $0x1c7] sm:$0xff]
  %v5940 = vld [vmem:[#allocation2 + $0x1cf] sm:$0xff]
  %v5941 = vld [vmem:[#allocation2 + $0x1d7] sm:$0xff]
  %v5942 = vld [vmem:[#allocation2 + $0x1df] sm:$0xff]
  %v5943 = vld [vmem:[#allocation2 + $0x1e7] sm:$0xff]
  %v5944 = vld [vmem:[#allocation2 + $0x1ef] sm:$0xff]
  %v5945 = vld [vmem:[#allocation2 + $0x1f7] sm:$0xff]
  %v5946 = vld [vmem:[#allocation2 + $0x1ff] sm:$0xff]
  %v5947 = vld [vmem:[#allocation2 + $0x207] sm:$0xff]
  %v5948 = vld [vmem:[#allocation2 + $0x20f] sm:$0xff]
  %vm5949 = vcmp.ge.s32.totalorder %v3195, 0
  %vm5950 = vcmp.ge.s32.totalorder %v3196, 0
  %vm5951 = vcmp.ge.s32.totalorder %v3197, 0
  %vm5952 = vcmp.ge.s32.totalorder %v3198, 0
  %vm5953 = vcmp.ge.s32.totalorder %v3199, 0
  %vm5954 = vcmp.ge.s32.totalorder %v3200, 0
  %vm5955 = vcmp.ge.s32.totalorder %v3201, 0
  %vm5956 = vcmp.ge.s32.totalorder %v3202, 0
  %vm5957 = vcmp.ge.s32.totalorder %v3203, 0
  %vm5958 = vcmp.ge.s32.totalorder %v3204, 0
  %vm5959 = vcmp.ge.s32.totalorder %v3205, 0
  %vm5960 = vcmp.ge.s32.totalorder %v3206, 0
  %vm5961 = vcmp.ge.s32.totalorder %v3207, 0
  %vm5962 = vcmp.ge.s32.totalorder %v3208, 0
  %vm5963 = vcmp.ge.s32.totalorder %v3209, 0
  %vm5964 = vcmp.ge.s32.totalorder %v3210, 0
  %vm5965 = vcmp.ge.s32.totalorder %v3211, 0
  %vm5966 = vcmp.ge.s32.totalorder %v3212, 0
  %vm5967 = vcmp.ge.s32.totalorder %v3213, 0
  %vm5968 = vcmp.ge.s32.totalorder %v3214, 0
  %vm5969 = vcmp.ge.s32.totalorder %v3215, 0
  %vm5970 = vcmp.ge.s32.totalorder %v3216, 0
  %vm5971 = vcmp.ge.s32.totalorder %v3217, 0
  %vm5972 = vcmp.ge.s32.totalorder %v3218, 0
  %vm5973 = vcmp.ge.s32.totalorder %v3219, 0
  %vm5974 = vcmp.ge.s32.totalorder %v3220, 0
  %vm5975 = vcmp.ge.s32.totalorder %v3221, 0
  %vm5976 = vcmp.ge.s32.totalorder %v3222, 0
  %vm5977 = vcmp.ge.s32.totalorder %v3223, 0
  %vm5978 = vcmp.ge.s32.totalorder %v3224, 0
  %vm5979 = vcmp.ge.s32.totalorder %v3225, 0
  %vm5980 = vcmp.ge.s32.totalorder %v3226, 0
  %vm5981 = vcmp.ge.s32.totalorder %v3227, 0
  %vm5982 = vcmp.ge.s32.totalorder %v3228, 0
  %vm5983 = vcmp.ge.s32.totalorder %v3229, 0
  %vm5984 = vcmp.ge.s32.totalorder %v3230, 0
  %vm5985 = vcmp.ge.s32.totalorder %v3231, 0
  %vm5986 = vcmp.ge.s32.totalorder %v3232, 0
  %vm5987 = vcmp.ge.s32.totalorder %v3233, 0
  %vm5988 = vcmp.ge.s32.totalorder %v3234, 0
  %vm5989 = vcmp.ge.s32.totalorder %v3235, 0
  %vm5990 = vcmp.ge.s32.totalorder %v3236, 0
  %vm5991 = vcmp.ge.s32.totalorder %v3237, 0
  %vm5992 = vcmp.ge.s32.totalorder %v3238, 0
  %vm5993 = vcmp.ge.s32.totalorder %v3239, 0
  %vm5994 = vcmp.ge.s32.totalorder %v3240, 0
  %vm5995 = vcmp.ge.s32.totalorder %v3241, 0
  %vm5996 = vcmp.ge.s32.totalorder %v3242, 0
  %vm5997 = vcmp.ge.s32.totalorder %v3243, 0
  %vm5998 = vcmp.ge.s32.totalorder %v3244, 0
  %vm5999 = vcmp.ge.s32.totalorder %v3245, 0
  %vm6000 = vcmp.ge.s32.totalorder %v3246, 0
  %vm6001 = vcmp.ge.s32.totalorder %v3247, 0
  %vm6002 = vcmp.ge.s32.totalorder %v3248, 0
  %vm6003 = vcmp.ge.s32.totalorder %v3249, 0
  %vm6004 = vcmp.ge.s32.totalorder %v3250, 0
  %vm6005 = vcmp.ge.s32.totalorder %v3251, 0
  %vm6006 = vcmp.ge.s32.totalorder %v3252, 0
  %vm6007 = vcmp.ge.s32.totalorder %v3253, 0
  %vm6008 = vcmp.ge.s32.totalorder %v3254, 0
  %vm6009 = vcmp.ge.s32.totalorder %v3255, 0
  %vm6010 = vcmp.ge.s32.totalorder %v3256, 0
  %vm6011 = vcmp.ge.s32.totalorder %v3257, 0
  %vm6012 = vcmp.ge.s32.totalorder %v3258, 0
  %vm6013 = vcmp.lt.s32.totalorder %v3195, 256
  %vm6014 = vcmp.lt.s32.totalorder %v3196, 256
  %vm6015 = vcmp.lt.s32.totalorder %v3197, 256
  %vm6016 = vcmp.lt.s32.totalorder %v3198, 256
  %vm6017 = vcmp.lt.s32.totalorder %v3199, 256
  %vm6018 = vcmp.lt.s32.totalorder %v3200, 256
  %vm6019 = vcmp.lt.s32.totalorder %v3201, 256
  %vm6020 = vcmp.lt.s32.totalorder %v3202, 256
  %vm6021 = vcmp.lt.s32.totalorder %v3203, 256
  %vm6022 = vcmp.lt.s32.totalorder %v3204, 256
  %vm6023 = vcmp.lt.s32.totalorder %v3205, 256
  %vm6024 = vcmp.lt.s32.totalorder %v3206, 256
  %vm6025 = vcmp.lt.s32.totalorder %v3207, 256
  %vm6026 = vcmp.lt.s32.totalorder %v3208, 256
  %vm6027 = vcmp.lt.s32.totalorder %v3209, 256
  %vm6028 = vcmp.lt.s32.totalorder %v3210, 256
  %vm6029 = vcmp.lt.s32.totalorder %v3211, 256
  %vm6030 = vcmp.lt.s32.totalorder %v3212, 256
  %vm6031 = vcmp.lt.s32.totalorder %v3213, 256
  %vm6032 = vcmp.lt.s32.totalorder %v3214, 256
  %vm6033 = vcmp.lt.s32.totalorder %v3215, 256
  %vm6034 = vcmp.lt.s32.totalorder %v3216, 256
  %vm6035 = vcmp.lt.s32.totalorder %v3217, 256
  %vm6036 = vcmp.lt.s32.totalorder %v3218, 256
  %vm6037 = vcmp.lt.s32.totalorder %v3219, 256
  %vm6038 = vcmp.lt.s32.totalorder %v3220, 256
  %vm6039 = vcmp.lt.s32.totalorder %v3221, 256
  %vm6040 = vcmp.lt.s32.totalorder %v3222, 256
  %vm6041 = vcmp.lt.s32.totalorder %v3223, 256
  %vm6042 = vcmp.lt.s32.totalorder %v3224, 256
  %vm6043 = vcmp.lt.s32.totalorder %v3225, 256
  %vm6044 = vcmp.lt.s32.totalorder %v3226, 256
  %vm6045 = vcmp.lt.s32.totalorder %v3227, 256
  %vm6046 = vcmp.lt.s32.totalorder %v3228, 256
  %vm6047 = vcmp.lt.s32.totalorder %v3229, 256
  %vm6048 = vcmp.lt.s32.totalorder %v3230, 256
  %vm6049 = vcmp.lt.s32.totalorder %v3231, 256
  %vm6050 = vcmp.lt.s32.totalorder %v3232, 256
  %vm6051 = vcmp.lt.s32.totalorder %v3233, 256
  %vm6052 = vcmp.lt.s32.totalorder %v3234, 256
  %vm6053 = vcmp.lt.s32.totalorder %v3235, 256
  %vm6054 = vcmp.lt.s32.totalorder %v3236, 256
  %vm6055 = vcmp.lt.s32.totalorder %v3237, 256
  %vm6056 = vcmp.lt.s32.totalorder %v3238, 256
  %vm6057 = vcmp.lt.s32.totalorder %v3239, 256
  %vm6058 = vcmp.lt.s32.totalorder %v3240, 256
  %vm6059 = vcmp.lt.s32.totalorder %v3241, 256
  %vm6060 = vcmp.lt.s32.totalorder %v3242, 256
  %vm6061 = vcmp.lt.s32.totalorder %v3243, 256
  %vm6062 = vcmp.lt.s32.totalorder %v3244, 256
  %vm6063 = vcmp.lt.s32.totalorder %v3245, 256
  %vm6064 = vcmp.lt.s32.totalorder %v3246, 256
  %vm6065 = vcmp.lt.s32.totalorder %v3247, 256
  %vm6066 = vcmp.lt.s32.totalorder %v3248, 256
  %vm6067 = vcmp.lt.s32.totalorder %v3249, 256
  %vm6068 = vcmp.lt.s32.totalorder %v3250, 256
  %vm6069 = vcmp.lt.s32.totalorder %v3251, 256
  %vm6070 = vcmp.lt.s32.totalorder %v3252, 256
  %vm6071 = vcmp.lt.s32.totalorder %v3253, 256
  %vm6072 = vcmp.lt.s32.totalorder %v3254, 256
  %vm6073 = vcmp.lt.s32.totalorder %v3255, 256
  %vm6074 = vcmp.lt.s32.totalorder %v3256, 256
  %vm6075 = vcmp.lt.s32.totalorder %v3257, 256
  %vm6076 = vcmp.lt.s32.totalorder %v3258, 256
  %vm6077 = vmand %vm5949, %vm6013
  %vm6078 = vmand %vm5950, %vm6014
  %vm6079 = vmand %vm5951, %vm6015
  %vm6080 = vmand %vm5952, %vm6016
  %vm6081 = vmand %vm5953, %vm6017
  %vm6082 = vmand %vm5954, %vm6018
  %vm6083 = vmand %vm5955, %vm6019
  %vm6084 = vmand %vm5956, %vm6020
  %vm6085 = vmand %vm5957, %vm6021
  %vm6086 = vmand %vm5958, %vm6022
  %vm6087 = vmand %vm5959, %vm6023
  %vm6088 = vmand %vm5960, %vm6024
  %vm6089 = vmand %vm5961, %vm6025
  %vm6090 = vmand %vm5962, %vm6026
  %vm6091 = vmand %vm5963, %vm6027
  %vm6092 = vmand %vm5964, %vm6028
  %vm6093 = vmand %vm5965, %vm6029
  %vm6094 = vmand %vm5966, %vm6030
  %vm6095 = vmand %vm5967, %vm6031
  %vm6096 = vmand %vm5968, %vm6032
  %vm6097 = vmand %vm5969, %vm6033
  %vm6098 = vmand %vm5970, %vm6034
  %vm6099 = vmand %vm5971, %vm6035
  %vm6100 = vmand %vm5972, %vm6036
  %vm6101 = vmand %vm5973, %vm6037
  %vm6102 = vmand %vm5974, %vm6038
  %vm6103 = vmand %vm5975, %vm6039
  %vm6104 = vmand %vm5976, %vm6040
  %vm6105 = vmand %vm5977, %vm6041
  %vm6106 = vmand %vm5978, %vm6042
  %vm6107 = vmand %vm5979, %vm6043
  %vm6108 = vmand %vm5980, %vm6044
  %vm6109 = vmand %vm5981, %vm6045
  %vm6110 = vmand %vm5982, %vm6046
  %vm6111 = vmand %vm5983, %vm6047
  %vm6112 = vmand %vm5984, %vm6048
  %vm6113 = vmand %vm5985, %vm6049
  %vm6114 = vmand %vm5986, %vm6050
  %vm6115 = vmand %vm5987, %vm6051
  %vm6116 = vmand %vm5988, %vm6052
  %vm6117 = vmand %vm5989, %vm6053
  %vm6118 = vmand %vm5990, %vm6054
  %vm6119 = vmand %vm5991, %vm6055
  %vm6120 = vmand %vm5992, %vm6056
  %vm6121 = vmand %vm5993, %vm6057
  %vm6122 = vmand %vm5994, %vm6058
  %vm6123 = vmand %vm5995, %vm6059
  %vm6124 = vmand %vm5996, %vm6060
  %vm6125 = vmand %vm5997, %vm6061
  %vm6126 = vmand %vm5998, %vm6062
  %vm6127 = vmand %vm5999, %vm6063
  %vm6128 = vmand %vm6000, %vm6064
  %vm6129 = vmand %vm6001, %vm6065
  %vm6130 = vmand %vm6002, %vm6066
  %vm6131 = vmand %vm6003, %vm6067
  %vm6132 = vmand %vm6004, %vm6068
  %vm6133 = vmand %vm6005, %vm6069
  %vm6134 = vmand %vm6006, %vm6070
  %vm6135 = vmand %vm6007, %vm6071
  %vm6136 = vmand %vm6008, %vm6072
  %vm6137 = vmand %vm6009, %vm6073
  %vm6138 = vmand %vm6010, %vm6074
  %vm6139 = vmand %vm6011, %vm6075
  %vm6140 = vmand %vm6012, %vm6076
  %vm6141 = vmand %vm6077, %vm3643
  %vm6142 = vmand %vm6078, %vm3644
  %vm6143 = vmand %vm6079, %vm3645
  %vm6144 = vmand %vm6080, %vm3646
  %vm6145 = vmand %vm6081, %vm3647
  %vm6146 = vmand %vm6082, %vm3648
  %vm6147 = vmand %vm6083, %vm3649
  %vm6148 = vmand %vm6084, %vm3650
  %vm6149 = vmand %vm6085, %vm3651
  %vm6150 = vmand %vm6086, %vm3652
  %vm6151 = vmand %vm6087, %vm3653
  %vm6152 = vmand %vm6088, %vm3654
  %vm6153 = vmand %vm6089, %vm3655
  %vm6154 = vmand %vm6090, %vm3656
  %vm6155 = vmand %vm6091, %vm3657
  %vm6156 = vmand %vm6092, %vm3658
  %vm6157 = vmand %vm6093, %vm3659
  %vm6158 = vmand %vm6094, %vm3660
  %vm6159 = vmand %vm6095, %vm3661
  %vm6160 = vmand %vm6096, %vm3662
  %vm6161 = vmand %vm6097, %vm3663
  %vm6162 = vmand %vm6098, %vm3664
  %vm6163 = vmand %vm6099, %vm3665
  %vm6164 = vmand %vm6100, %vm3666
  %vm6165 = vmand %vm6101, %vm3667
  %vm6166 = vmand %vm6102, %vm3668
  %vm6167 = vmand %vm6103, %vm3669
  %vm6168 = vmand %vm6104, %vm3670
  %vm6169 = vmand %vm6105, %vm3671
  %vm6170 = vmand %vm6106, %vm3672
  %vm6171 = vmand %vm6107, %vm3673
  %vm6172 = vmand %vm6108, %vm3674
  %vm6173 = vmand %vm6109, %vm3675
  %vm6174 = vmand %vm6110, %vm3676
  %vm6175 = vmand %vm6111, %vm3677
  %vm6176 = vmand %vm6112, %vm3678
  %vm6177 = vmand %vm6113, %vm3679
  %vm6178 = vmand %vm6114, %vm3680
  %vm6179 = vmand %vm6115, %vm3681
  %vm6180 = vmand %vm6116, %vm3682
  %vm6181 = vmand %vm6117, %vm3683
  %vm6182 = vmand %vm6118, %vm3684
  %vm6183 = vmand %vm6119, %vm3685
  %vm6184 = vmand %vm6120, %vm3686
  %vm6185 = vmand %vm6121, %vm3687
  %vm6186 = vmand %vm6122, %vm3688
  %vm6187 = vmand %vm6123, %vm3689
  %vm6188 = vmand %vm6124, %vm3690
  %vm6189 = vmand %vm6125, %vm3691
  %vm6190 = vmand %vm6126, %vm3692
  %vm6191 = vmand %vm6127, %vm3693
  %vm6192 = vmand %vm6128, %vm3694
  %vm6193 = vmand %vm6129, %vm3695
  %vm6194 = vmand %vm6130, %vm3696
  %vm6195 = vmand %vm6131, %vm3697
  %vm6196 = vmand %vm6132, %vm3698
  %vm6197 = vmand %vm6133, %vm3699
  %vm6198 = vmand %vm6134, %vm3700
  %vm6199 = vmand %vm6135, %vm3701
  %vm6200 = vmand %vm6136, %vm3702
  %vm6201 = vmand %vm6137, %vm3703
  %vm6202 = vmand %vm6138, %vm3704
  %vm6203 = vmand %vm6139, %vm3705
  %vm6204 = vmand %vm6140, %vm3706
  %vm6205 = vmand %vm6141, %vm3771
  %vm6206 = vmand %vm6142, %vm3772
  %vm6207 = vmand %vm6143, %vm3773
  %vm6208 = vmand %vm6144, %vm3774
  %vm6209 = vmand %vm6145, %vm3775
  %vm6210 = vmand %vm6146, %vm3776
  %vm6211 = vmand %vm6147, %vm3777
  %vm6212 = vmand %vm6148, %vm3778
  %vm6213 = vmand %vm6149, %vm3779
  %vm6214 = vmand %vm6150, %vm3780
  %vm6215 = vmand %vm6151, %vm3781
  %vm6216 = vmand %vm6152, %vm3782
  %vm6217 = vmand %vm6153, %vm3783
  %vm6218 = vmand %vm6154, %vm3784
  %vm6219 = vmand %vm6155, %vm3785
  %vm6220 = vmand %vm6156, %vm3786
  %vm6221 = vmand %vm6157, %vm3787
  %vm6222 = vmand %vm6158, %vm3788
  %vm6223 = vmand %vm6159, %vm3789
  %vm6224 = vmand %vm6160, %vm3790
  %vm6225 = vmand %vm6161, %vm3791
  %vm6226 = vmand %vm6162, %vm3792
  %vm6227 = vmand %vm6163, %vm3793
  %vm6228 = vmand %vm6164, %vm3794
  %vm6229 = vmand %vm6165, %vm3795
  %vm6230 = vmand %vm6166, %vm3796
  %vm6231 = vmand %vm6167, %vm3797
  %vm6232 = vmand %vm6168, %vm3798
  %vm6233 = vmand %vm6169, %vm3799
  %vm6234 = vmand %vm6170, %vm3800
  %vm6235 = vmand %vm6171, %vm3801
  %vm6236 = vmand %vm6172, %vm3802
  %vm6237 = vmand %vm6173, %vm3803
  %vm6238 = vmand %vm6174, %vm3804
  %vm6239 = vmand %vm6175, %vm3805
  %vm6240 = vmand %vm6176, %vm3806
  %vm6241 = vmand %vm6177, %vm3807
  %vm6242 = vmand %vm6178, %vm3808
  %vm6243 = vmand %vm6179, %vm3809
  %vm6244 = vmand %vm6180, %vm3810
  %vm6245 = vmand %vm6181, %vm3811
  %vm6246 = vmand %vm6182, %vm3812
  %vm6247 = vmand %vm6183, %vm3813
  %vm6248 = vmand %vm6184, %vm3814
  %vm6249 = vmand %vm6185, %vm3815
  %vm6250 = vmand %vm6186, %vm3816
  %vm6251 = vmand %vm6187, %vm3817
  %vm6252 = vmand %vm6188, %vm3818
  %vm6253 = vmand %vm6189, %vm3819
  %vm6254 = vmand %vm6190, %vm3820
  %vm6255 = vmand %vm6191, %vm3821
  %vm6256 = vmand %vm6192, %vm3822
  %vm6257 = vmand %vm6193, %vm3823
  %vm6258 = vmand %vm6194, %vm3824
  %vm6259 = vmand %vm6195, %vm3825
  %vm6260 = vmand %vm6196, %vm3826
  %vm6261 = vmand %vm6197, %vm3827
  %vm6262 = vmand %vm6198, %vm3828
  %vm6263 = vmand %vm6199, %vm3829
  %vm6264 = vmand %vm6200, %vm3830
  %vm6265 = vmand %vm6201, %vm3831
  %vm6266 = vmand %vm6202, %vm3832
  %vm6267 = vmand %vm6203, %vm3833
  %vm6268 = vmand %vm6204, %vm3834
  %v6269 = vsel %vm6205, 1, 0
  %v6270 = vsel %vm6206, 1, 0
  %v6271 = vsel %vm6207, 1, 0
  %v6272 = vsel %vm6208, 1, 0
  %v6273 = vsel %vm6209, 1, 0
  %v6274 = vsel %vm6210, 1, 0
  %v6275 = vsel %vm6211, 1, 0
  %v6276 = vsel %vm6212, 1, 0
  %v6277 = vsel %vm6213, 1, 0
  %v6278 = vsel %vm6214, 1, 0
  %v6279 = vsel %vm6215, 1, 0
  %v6280 = vsel %vm6216, 1, 0
  %v6281 = vsel %vm6217, 1, 0
  %v6282 = vsel %vm6218, 1, 0
  %v6283 = vsel %vm6219, 1, 0
  %v6284 = vsel %vm6220, 1, 0
  %v6285 = vsel %vm6221, 1, 0
  %v6286 = vsel %vm6222, 1, 0
  %v6287 = vsel %vm6223, 1, 0
  %v6288 = vsel %vm6224, 1, 0
  %v6289 = vsel %vm6225, 1, 0
  %v6290 = vsel %vm6226, 1, 0
  %v6291 = vsel %vm6227, 1, 0
  %v6292 = vsel %vm6228, 1, 0
  %v6293 = vsel %vm6229, 1, 0
  %v6294 = vsel %vm6230, 1, 0
  %v6295 = vsel %vm6231, 1, 0
  %v6296 = vsel %vm6232, 1, 0
  %v6297 = vsel %vm6233, 1, 0
  %v6298 = vsel %vm6234, 1, 0
  %v6299 = vsel %vm6235, 1, 0
  %v6300 = vsel %vm6236, 1, 0
  %v6301 = vsel %vm6237, 1, 0
  %v6302 = vsel %vm6238, 1, 0
  %v6303 = vsel %vm6239, 1, 0
  %v6304 = vsel %vm6240, 1, 0
  %v6305 = vsel %vm6241, 1, 0
  %v6306 = vsel %vm6242, 1, 0
  %v6307 = vsel %vm6243, 1, 0
  %v6308 = vsel %vm6244, 1, 0
  %v6309 = vsel %vm6245, 1, 0
  %v6310 = vsel %vm6246, 1, 0
  %v6311 = vsel %vm6247, 1, 0
  %v6312 = vsel %vm6248, 1, 0
  %v6313 = vsel %vm6249, 1, 0
  %v6314 = vsel %vm6250, 1, 0
  %v6315 = vsel %vm6251, 1, 0
  %v6316 = vsel %vm6252, 1, 0
  %v6317 = vsel %vm6253, 1, 0
  %v6318 = vsel %vm6254, 1, 0
  %v6319 = vsel %vm6255, 1, 0
  %v6320 = vsel %vm6256, 1, 0
  %v6321 = vsel %vm6257, 1, 0
  %v6322 = vsel %vm6258, 1, 0
  %v6323 = vsel %vm6259, 1, 0
  %v6324 = vsel %vm6260, 1, 0
  %v6325 = vsel %vm6261, 1, 0
  %v6326 = vsel %vm6262, 1, 0
  %v6327 = vsel %vm6263, 1, 0
  %v6328 = vsel %vm6264, 1, 0
  %v6329 = vsel %vm6265, 1, 0
  %v6330 = vsel %vm6266, 1, 0
  %v6331 = vsel %vm6267, 1, 0
  %v6332 = vsel %vm6268, 1, 0
  %vm6333 = vcmp.eq.s32.totalorder %v6269, 1
  %vm6334 = vcmp.eq.s32.totalorder %v6270, 1
  %vm6335 = vcmp.eq.s32.totalorder %v6271, 1
  %vm6336 = vcmp.eq.s32.totalorder %v6272, 1
  %vm6337 = vcmp.eq.s32.totalorder %v6273, 1
  %vm6338 = vcmp.eq.s32.totalorder %v6274, 1
  %vm6339 = vcmp.eq.s32.totalorder %v6275, 1
  %vm6340 = vcmp.eq.s32.totalorder %v6276, 1
  %vm6341 = vcmp.eq.s32.totalorder %v6277, 1
  %vm6342 = vcmp.eq.s32.totalorder %v6278, 1
  %vm6343 = vcmp.eq.s32.totalorder %v6279, 1
  %vm6344 = vcmp.eq.s32.totalorder %v6280, 1
  %vm6345 = vcmp.eq.s32.totalorder %v6281, 1
  %vm6346 = vcmp.eq.s32.totalorder %v6282, 1
  %vm6347 = vcmp.eq.s32.totalorder %v6283, 1
  %vm6348 = vcmp.eq.s32.totalorder %v6284, 1
  %vm6349 = vcmp.eq.s32.totalorder %v6285, 1
  %vm6350 = vcmp.eq.s32.totalorder %v6286, 1
  %vm6351 = vcmp.eq.s32.totalorder %v6287, 1
  %vm6352 = vcmp.eq.s32.totalorder %v6288, 1
  %vm6353 = vcmp.eq.s32.totalorder %v6289, 1
  %vm6354 = vcmp.eq.s32.totalorder %v6290, 1
  %vm6355 = vcmp.eq.s32.totalorder %v6291, 1
  %vm6356 = vcmp.eq.s32.totalorder %v6292, 1
  %vm6357 = vcmp.eq.s32.totalorder %v6293, 1
  %vm6358 = vcmp.eq.s32.totalorder %v6294, 1
  %vm6359 = vcmp.eq.s32.totalorder %v6295, 1
  %vm6360 = vcmp.eq.s32.totalorder %v6296, 1
  %vm6361 = vcmp.eq.s32.totalorder %v6297, 1
  %vm6362 = vcmp.eq.s32.totalorder %v6298, 1
  %vm6363 = vcmp.eq.s32.totalorder %v6299, 1
  %vm6364 = vcmp.eq.s32.totalorder %v6300, 1
  %vm6365 = vcmp.eq.s32.totalorder %v6301, 1
  %vm6366 = vcmp.eq.s32.totalorder %v6302, 1
  %vm6367 = vcmp.eq.s32.totalorder %v6303, 1
  %vm6368 = vcmp.eq.s32.totalorder %v6304, 1
  %vm6369 = vcmp.eq.s32.totalorder %v6305, 1
  %vm6370 = vcmp.eq.s32.totalorder %v6306, 1
  %vm6371 = vcmp.eq.s32.totalorder %v6307, 1
  %vm6372 = vcmp.eq.s32.totalorder %v6308, 1
  %vm6373 = vcmp.eq.s32.totalorder %v6309, 1
  %vm6374 = vcmp.eq.s32.totalorder %v6310, 1
  %vm6375 = vcmp.eq.s32.totalorder %v6311, 1
  %vm6376 = vcmp.eq.s32.totalorder %v6312, 1
  %vm6377 = vcmp.eq.s32.totalorder %v6313, 1
  %vm6378 = vcmp.eq.s32.totalorder %v6314, 1
  %vm6379 = vcmp.eq.s32.totalorder %v6315, 1
  %vm6380 = vcmp.eq.s32.totalorder %v6316, 1
  %vm6381 = vcmp.eq.s32.totalorder %v6317, 1
  %vm6382 = vcmp.eq.s32.totalorder %v6318, 1
  %vm6383 = vcmp.eq.s32.totalorder %v6319, 1
  %vm6384 = vcmp.eq.s32.totalorder %v6320, 1
  %vm6385 = vcmp.eq.s32.totalorder %v6321, 1
  %vm6386 = vcmp.eq.s32.totalorder %v6322, 1
  %vm6387 = vcmp.eq.s32.totalorder %v6323, 1
  %vm6388 = vcmp.eq.s32.totalorder %v6324, 1
  %vm6389 = vcmp.eq.s32.totalorder %v6325, 1
  %vm6390 = vcmp.eq.s32.totalorder %v6326, 1
  %vm6391 = vcmp.eq.s32.totalorder %v6327, 1
  %vm6392 = vcmp.eq.s32.totalorder %v6328, 1
  %vm6393 = vcmp.eq.s32.totalorder %v6329, 1
  %vm6394 = vcmp.eq.s32.totalorder %v6330, 1
  %vm6395 = vcmp.eq.s32.totalorder %v6331, 1
  %vm6396 = vcmp.eq.s32.totalorder %v6332, 1
  %v6397 = vsel %vm6333, %v5885, 0.0
  %v6398 = vsel %vm6334, %v5886, 0.0
  %v6399 = vsel %vm6335, %v5887, 0.0
  %v6400 = vsel %vm6336, %v5888, 0.0
  %v6401 = vsel %vm6337, %v5889, 0.0
  %v6402 = vsel %vm6338, %v5890, 0.0
  %v6403 = vsel %vm6339, %v5891, 0.0
  %v6404 = vsel %vm6340, %v5892, 0.0
  %v6405 = vsel %vm6341, %v5893, 0.0
  %v6406 = vsel %vm6342, %v5894, 0.0
  %v6407 = vsel %vm6343, %v5895, 0.0
  %v6408 = vsel %vm6344, %v5896, 0.0
  %v6409 = vsel %vm6345, %v5897, 0.0
  %v6410 = vsel %vm6346, %v5898, 0.0
  %v6411 = vsel %vm6347, %v5899, 0.0
  %v6412 = vsel %vm6348, %v5900, 0.0
  %v6413 = vsel %vm6349, %v5901, 0.0
  %v6414 = vsel %vm6350, %v5902, 0.0
  %v6415 = vsel %vm6351, %v5903, 0.0
  %v6416 = vsel %vm6352, %v5904, 0.0
  %v6417 = vsel %vm6353, %v5905, 0.0
  %v6418 = vsel %vm6354, %v5906, 0.0
  %v6419 = vsel %vm6355, %v5907, 0.0
  %v6420 = vsel %vm6356, %v5908, 0.0
  %v6421 = vsel %vm6357, %v5909, 0.0
  %v6422 = vsel %vm6358, %v5910, 0.0
  %v6423 = vsel %vm6359, %v5911, 0.0
  %v6424 = vsel %vm6360, %v5912, 0.0
  %v6425 = vsel %vm6361, %v5913, 0.0
  %v6426 = vsel %vm6362, %v5914, 0.0
  %v6427 = vsel %vm6363, %v5915, 0.0
  %v6428 = vsel %vm6364, %v5916, 0.0
  %v6429 = vsel %vm6365, %v5917, 0.0
  %v6430 = vsel %vm6366, %v5918, 0.0
  %v6431 = vsel %vm6367, %v5919, 0.0
  %v6432 = vsel %vm6368, %v5920, 0.0
  %v6433 = vsel %vm6369, %v5921, 0.0
  %v6434 = vsel %vm6370, %v5922, 0.0
  %v6435 = vsel %vm6371, %v5923, 0.0
  %v6436 = vsel %vm6372, %v5924, 0.0
  %v6437 = vsel %vm6373, %v5925, 0.0
  %v6438 = vsel %vm6374, %v5926, 0.0
  %v6439 = vsel %vm6375, %v5927, 0.0
  %v6440 = vsel %vm6376, %v5928, 0.0
  %v6441 = vsel %vm6377, %v5929, 0.0
  %v6442 = vsel %vm6378, %v5930, 0.0
  %v6443 = vsel %vm6379, %v5931, 0.0
  %v6444 = vsel %vm6380, %v5932, 0.0
  %v6445 = vsel %vm6381, %v5933, 0.0
  %v6446 = vsel %vm6382, %v5934, 0.0
  %v6447 = vsel %vm6383, %v5935, 0.0
  %v6448 = vsel %vm6384, %v5936, 0.0
  %v6449 = vsel %vm6385, %v5937, 0.0
  %v6450 = vsel %vm6386, %v5938, 0.0
  %v6451 = vsel %vm6387, %v5939, 0.0
  %v6452 = vsel %vm6388, %v5940, 0.0
  %v6453 = vsel %vm6389, %v5941, 0.0
  %v6454 = vsel %vm6390, %v5942, 0.0
  %v6455 = vsel %vm6391, %v5943, 0.0
  %v6456 = vsel %vm6392, %v5944, 0.0
  %v6457 = vsel %vm6393, %v5945, 0.0
  %v6458 = vsel %vm6394, %v5946, 0.0
  %v6459 = vsel %vm6395, %v5947, 0.0
  %v6460 = vsel %vm6396, %v5948, 0.0
  %6525 = vrot.lane.b32.xlu0 %v6397, 48
  %v6526 = vpop.permute.xlu0 %6525
  %6527 = vrot.lane.b32.xlu0 %v6398, 48
  %v6528 = vpop.permute.xlu0 %6527
  %6529 = vrot.lane.b32.xlu0 %v6399, 48
  %v6530 = vpop.permute.xlu0 %6529
  %6531 = vrot.lane.b32.xlu0 %v6400, 48
  %v6532 = vpop.permute.xlu0 %6531
  %6533 = vrot.lane.b32.xlu0 %v6401, 48
  %v6534 = vpop.permute.xlu0 %6533
  %6535 = vrot.lane.b32.xlu0 %v6402, 48
  %v6536 = vpop.permute.xlu0 %6535
  %6537 = vrot.lane.b32.xlu0 %v6403, 48
  %v6538 = vpop.permute.xlu0 %6537
  %6539 = vrot.lane.b32.xlu0 %v6404, 48
  %v6540 = vpop.permute.xlu0 %6539
  %6541 = vrot.lane.b32.xlu0 %v6405, 48
  %v6542 = vpop.permute.xlu0 %6541
  %6543 = vrot.lane.b32.xlu0 %v6406, 48
  %v6544 = vpop.permute.xlu0 %6543
  %6545 = vrot.lane.b32.xlu0 %v6407, 48
  %v6546 = vpop.permute.xlu0 %6545
  %6547 = vrot.lane.b32.xlu0 %v6408, 48
  %v6548 = vpop.permute.xlu0 %6547
  %6549 = vrot.lane.b32.xlu0 %v6409, 48
  %v6550 = vpop.permute.xlu0 %6549
  %6551 = vrot.lane.b32.xlu0 %v6410, 48
  %v6552 = vpop.permute.xlu0 %6551
  %6553 = vrot.lane.b32.xlu0 %v6411, 48
  %v6554 = vpop.permute.xlu0 %6553
  %6555 = vrot.lane.b32.xlu0 %v6412, 48
  %v6556 = vpop.permute.xlu0 %6555
  %6557 = vrot.lane.b32.xlu0 %v6413, 48
  %v6558 = vpop.permute.xlu0 %6557
  %6559 = vrot.lane.b32.xlu0 %v6414, 48
  %v6560 = vpop.permute.xlu0 %6559
  %6561 = vrot.lane.b32.xlu0 %v6415, 48
  %v6562 = vpop.permute.xlu0 %6561
  %6563 = vrot.lane.b32.xlu0 %v6416, 48
  %v6564 = vpop.permute.xlu0 %6563
  %6565 = vrot.lane.b32.xlu0 %v6417, 48
  %v6566 = vpop.permute.xlu0 %6565
  %6567 = vrot.lane.b32.xlu0 %v6418, 48
  %v6568 = vpop.permute.xlu0 %6567
  %6569 = vrot.lane.b32.xlu0 %v6419, 48
  %v6570 = vpop.permute.xlu0 %6569
  %6571 = vrot.lane.b32.xlu0 %v6420, 48
  %v6572 = vpop.permute.xlu0 %6571
  %6573 = vrot.lane.b32.xlu0 %v6421, 48
  %v6574 = vpop.permute.xlu0 %6573
  %6575 = vrot.lane.b32.xlu0 %v6422, 48
  %v6576 = vpop.permute.xlu0 %6575
  %6577 = vrot.lane.b32.xlu0 %v6423, 48
  %v6578 = vpop.permute.xlu0 %6577
  %6579 = vrot.lane.b32.xlu0 %v6424, 48
  %v6580 = vpop.permute.xlu0 %6579
  %6581 = vrot.lane.b32.xlu0 %v6425, 48
  %v6582 = vpop.permute.xlu0 %6581
  %6583 = vrot.lane.b32.xlu0 %v6426, 48
  %v6584 = vpop.permute.xlu0 %6583
  %6585 = vrot.lane.b32.xlu0 %v6427, 48
  %v6586 = vpop.permute.xlu0 %6585
  %6587 = vrot.lane.b32.xlu0 %v6428, 48
  %v6588 = vpop.permute.xlu0 %6587
  %6589 = vrot.lane.b32.xlu0 %v6429, 48
  %v6590 = vpop.permute.xlu0 %6589
  %6591 = vrot.lane.b32.xlu0 %v6430, 48
  %v6592 = vpop.permute.xlu0 %6591
  %6593 = vrot.lane.b32.xlu0 %v6431, 48
  %v6594 = vpop.permute.xlu0 %6593
  %6595 = vrot.lane.b32.xlu0 %v6432, 48
  %v6596 = vpop.permute.xlu0 %6595
  %6597 = vrot.lane.b32.xlu0 %v6433, 48
  %v6598 = vpop.permute.xlu0 %6597
  %6599 = vrot.lane.b32.xlu0 %v6434, 48
  %v6600 = vpop.permute.xlu0 %6599
  %6601 = vrot.lane.b32.xlu0 %v6435, 48
  %v6602 = vpop.permute.xlu0 %6601
  %6603 = vrot.lane.b32.xlu0 %v6436, 48
  %v6604 = vpop.permute.xlu0 %6603
  %6605 = vrot.lane.b32.xlu0 %v6437, 48
  %v6606 = vpop.permute.xlu0 %6605
  %6607 = vrot.lane.b32.xlu0 %v6438, 48
  %v6608 = vpop.permute.xlu0 %6607
  %6609 = vrot.lane.b32.xlu0 %v6439, 48
  %v6610 = vpop.permute.xlu0 %6609
  %6611 = vrot.lane.b32.xlu0 %v6440, 48
  %v6612 = vpop.permute.xlu0 %6611
  %6613 = vrot.lane.b32.xlu0 %v6441, 48
  %v6614 = vpop.permute.xlu0 %6613
  %6615 = vrot.lane.b32.xlu0 %v6442, 48
  %v6616 = vpop.permute.xlu0 %6615
  %6617 = vrot.lane.b32.xlu0 %v6443, 48
  %v6618 = vpop.permute.xlu0 %6617
  %6619 = vrot.lane.b32.xlu0 %v6444, 48
  %v6620 = vpop.permute.xlu0 %6619
  %6621 = vrot.lane.b32.xlu0 %v6445, 48
  %v6622 = vpop.permute.xlu0 %6621
  %6623 = vrot.lane.b32.xlu0 %v6446, 48
  %v6624 = vpop.permute.xlu0 %6623
  %6625 = vrot.lane.b32.xlu0 %v6447, 48
  %v6626 = vpop.permute.xlu0 %6625
  %6627 = vrot.lane.b32.xlu0 %v6448, 48
  %v6628 = vpop.permute.xlu0 %6627
  %6629 = vrot.lane.b32.xlu0 %v6449, 48
  %v6630 = vpop.permute.xlu0 %6629
  %6631 = vrot.lane.b32.xlu0 %v6450, 48
  %v6632 = vpop.permute.xlu0 %6631
  %6633 = vrot.lane.b32.xlu0 %v6451, 48
  %v6634 = vpop.permute.xlu0 %6633
  %6635 = vrot.lane.b32.xlu0 %v6452, 48
  %v6636 = vpop.permute.xlu0 %6635
  %6637 = vrot.lane.b32.xlu0 %v6453, 48
  %v6638 = vpop.permute.xlu0 %6637
  %6639 = vrot.lane.b32.xlu0 %v6454, 48
  %v6640 = vpop.permute.xlu0 %6639
  %6641 = vrot.lane.b32.xlu0 %v6455, 48
  %v6642 = vpop.permute.xlu0 %6641
  %6643 = vrot.lane.b32.xlu0 %v6456, 48
  %v6644 = vpop.permute.xlu0 %6643
  %6645 = vrot.lane.b32.xlu0 %v6457, 48
  %v6646 = vpop.permute.xlu0 %6645
  %6647 = vrot.lane.b32.xlu0 %v6458, 48
  %v6648 = vpop.permute.xlu0 %6647
  %6649 = vrot.lane.b32.xlu0 %v6459, 48
  %v6650 = vpop.permute.xlu0 %6649
  %6651 = vrot.lane.b32.xlu0 %v6460, 48
  %v6652 = vpop.permute.xlu0 %6651
  %vm6717 = vcmask 523648
  %6718 = vst.msk [vmem:[#allocation3] sm:$0xff] %vm6717, %v6526
  %6719 = vst.msk [vmem:[#allocation3 + $0x10] sm:$0xff] %vm6717, %v6528
  %6720 = vst.msk [vmem:[#allocation3 + $0x20] sm:$0xff] %vm6717, %v6530
  %6721 = vst.msk [vmem:[#allocation3 + $0x30] sm:$0xff] %vm6717, %v6532
  %6722 = vst.msk [vmem:[#allocation3 + $0x40] sm:$0xff] %vm6717, %v6534
  %6723 = vst.msk [vmem:[#allocation3 + $0x50] sm:$0xff] %vm6717, %v6536
  %6724 = vst.msk [vmem:[#allocation3 + $0x60] sm:$0xff] %vm6717, %v6538
  %6725 = vst.msk [vmem:[#allocation3 + $0x70] sm:$0xff] %vm6717, %v6540
  %6726 = vst.msk [vmem:[#allocation3 + $0x80] sm:$0xff] %vm6717, %v6542
  %6727 = vst.msk [vmem:[#allocation3 + $0x90] sm:$0xff] %vm6717, %v6544
  %6728 = vst.msk [vmem:[#allocation3 + $0xa0] sm:$0xff] %vm6717, %v6546
  %6729 = vst.msk [vmem:[#allocation3 + $0xb0] sm:$0xff] %vm6717, %v6548
  %6730 = vst.msk [vmem:[#allocation3 + $0xc0] sm:$0xff] %vm6717, %v6550
  %6731 = vst.msk [vmem:[#allocation3 + $0xd0] sm:$0xff] %vm6717, %v6552
  %6732 = vst.msk [vmem:[#allocation3 + $0xe0] sm:$0xff] %vm6717, %v6554
  %6733 = vst.msk [vmem:[#allocation3 + $0xf0] sm:$0xff] %vm6717, %v6556
  %6734 = vst.msk [vmem:[#allocation3 + $0x100] sm:$0xff] %vm6717, %v6558
  %6735 = vst.msk [vmem:[#allocation3 + $0x110] sm:$0xff] %vm6717, %v6560
  %6736 = vst.msk [vmem:[#allocation3 + $0x120] sm:$0xff] %vm6717, %v6562
  %6737 = vst.msk [vmem:[#allocation3 + $0x130] sm:$0xff] %vm6717, %v6564
  %6738 = vst.msk [vmem:[#allocation3 + $0x140] sm:$0xff] %vm6717, %v6566
  %6739 = vst.msk [vmem:[#allocation3 + $0x150] sm:$0xff] %vm6717, %v6568
  %6740 = vst.msk [vmem:[#allocation3 + $0x160] sm:$0xff] %vm6717, %v6570
  %6741 = vst.msk [vmem:[#allocation3 + $0x170] sm:$0xff] %vm6717, %v6572
  %6742 = vst.msk [vmem:[#allocation3 + $0x180] sm:$0xff] %vm6717, %v6574
  %6743 = vst.msk [vmem:[#allocation3 + $0x190] sm:$0xff] %vm6717, %v6576
  %6744 = vst.msk [vmem:[#allocation3 + $0x1a0] sm:$0xff] %vm6717, %v6578
  %6745 = vst.msk [vmem:[#allocation3 + $0x1b0] sm:$0xff] %vm6717, %v6580
  %6746 = vst.msk [vmem:[#allocation3 + $0x1c0] sm:$0xff] %vm6717, %v6582
  %6747 = vst.msk [vmem:[#allocation3 + $0x1d0] sm:$0xff] %vm6717, %v6584
  %6748 = vst.msk [vmem:[#allocation3 + $0x1e0] sm:$0xff] %vm6717, %v6586
  %6749 = vst.msk [vmem:[#allocation3 + $0x1f0] sm:$0xff] %vm6717, %v6588
  %6750 = vst.msk [vmem:[#allocation3 + $0x200] sm:$0xff] %vm6717, %v6590
  %6751 = vst.msk [vmem:[#allocation3 + $0x210] sm:$0xff] %vm6717, %v6592
  %6752 = vst.msk [vmem:[#allocation3 + $0x220] sm:$0xff] %vm6717, %v6594
  %6753 = vst.msk [vmem:[#allocation3 + $0x230] sm:$0xff] %vm6717, %v6596
  %6754 = vst.msk [vmem:[#allocation3 + $0x240] sm:$0xff] %vm6717, %v6598
  %6755 = vst.msk [vmem:[#allocation3 + $0x250] sm:$0xff] %vm6717, %v6600
  %6756 = vst.msk [vmem:[#allocation3 + $0x260] sm:$0xff] %vm6717, %v6602
  %6757 = vst.msk [vmem:[#allocation3 + $0x270] sm:$0xff] %vm6717, %v6604
  %6758 = vst.msk [vmem:[#allocation3 + $0x280] sm:$0xff] %vm6717, %v6606
  %6759 = vst.msk [vmem:[#allocation3 + $0x290] sm:$0xff] %vm6717, %v6608
  %6760 = vst.msk [vmem:[#allocation3 + $0x2a0] sm:$0xff] %vm6717, %v6610
  %6761 = vst.msk [vmem:[#allocation3 + $0x2b0] sm:$0xff] %vm6717, %v6612
  %6762 = vst.msk [vmem:[#allocation3 + $0x2c0] sm:$0xff] %vm6717, %v6614
  %6763 = vst.msk [vmem:[#allocation3 + $0x2d0] sm:$0xff] %vm6717, %v6616
  %6764 = vst.msk [vmem:[#allocation3 + $0x2e0] sm:$0xff] %vm6717, %v6618
  %6765 = vst.msk [vmem:[#allocation3 + $0x2f0] sm:$0xff] %vm6717, %v6620
  %6766 = vst.msk [vmem:[#allocation3 + $0x300] sm:$0xff] %vm6717, %v6622
  %6767 = vst.msk [vmem:[#allocation3 + $0x310] sm:$0xff] %vm6717, %v6624
  %6768 = vst.msk [vmem:[#allocation3 + $0x320] sm:$0xff] %vm6717, %v6626
  %6769 = vst.msk [vmem:[#allocation3 + $0x330] sm:$0xff] %vm6717, %v6628
  %6770 = vst.msk [vmem:[#allocation3 + $0x340] sm:$0xff] %vm6717, %v6630
  %6771 = vst.msk [vmem:[#allocation3 + $0x350] sm:$0xff] %vm6717, %v6632
  %6772 = vst.msk [vmem:[#allocation3 + $0x360] sm:$0xff] %vm6717, %v6634
  %6773 = vst.msk [vmem:[#allocation3 + $0x370] sm:$0xff] %vm6717, %v6636
  %6774 = vst.msk [vmem:[#allocation3 + $0x380] sm:$0xff] %vm6717, %v6638
  %6775 = vst.msk [vmem:[#allocation3 + $0x390] sm:$0xff] %vm6717, %v6640
  %6776 = vst.msk [vmem:[#allocation3 + $0x3a0] sm:$0xff] %vm6717, %v6642
  %6777 = vst.msk [vmem:[#allocation3 + $0x3b0] sm:$0xff] %vm6717, %v6644
  %6778 = vst.msk [vmem:[#allocation3 + $0x3c0] sm:$0xff] %vm6717, %v6646
  %6779 = vst.msk [vmem:[#allocation3 + $0x3d0] sm:$0xff] %vm6717, %v6648
  %6780 = vst.msk [vmem:[#allocation3 + $0x3e0] sm:$0xff] %vm6717, %v6650
  %6781 = vst.msk [vmem:[#allocation3 + $0x3f0] sm:$0xff] %vm6717, %v6652
  %v6782 = vld [vmem:[#allocation2 + $0x18] sm:$0xff]
  %v6783 = vld [vmem:[#allocation2 + $0x20] sm:$0xff]
  %v6784 = vld [vmem:[#allocation2 + $0x28] sm:$0xff]
  %v6785 = vld [vmem:[#allocation2 + $0x30] sm:$0xff]
  %v6786 = vld [vmem:[#allocation2 + $0x38] sm:$0xff]
  %v6787 = vld [vmem:[#allocation2 + $0x40] sm:$0xff]
  %v6788 = vld [vmem:[#allocation2 + $0x48] sm:$0xff]
  %v6789 = vld [vmem:[#allocation2 + $0x50] sm:$0xff]
  %v6790 = vld [vmem:[#allocation2 + $0x58] sm:$0xff]
  %v6791 = vld [vmem:[#allocation2 + $0x60] sm:$0xff]
  %v6792 = vld [vmem:[#allocation2 + $0x68] sm:$0xff]
  %v6793 = vld [vmem:[#allocation2 + $0x70] sm:$0xff]
  %v6794 = vld [vmem:[#allocation2 + $0x78] sm:$0xff]
  %v6795 = vld [vmem:[#allocation2 + $0x80] sm:$0xff]
  %v6796 = vld [vmem:[#allocation2 + $0x88] sm:$0xff]
  %v6797 = vld [vmem:[#allocation2 + $0x90] sm:$0xff]
  %v6798 = vld [vmem:[#allocation2 + $0x98] sm:$0xff]
  %v6799 = vld [vmem:[#allocation2 + $0xa0] sm:$0xff]
  %v6800 = vld [vmem:[#allocation2 + $0xa8] sm:$0xff]
  %v6801 = vld [vmem:[#allocation2 + $0xb0] sm:$0xff]
  %v6802 = vld [vmem:[#allocation2 + $0xb8] sm:$0xff]
  %v6803 = vld [vmem:[#allocation2 + $0xc0] sm:$0xff]
  %v6804 = vld [vmem:[#allocation2 + $0xc8] sm:$0xff]
  %v6805 = vld [vmem:[#allocation2 + $0xd0] sm:$0xff]
  %v6806 = vld [vmem:[#allocation2 + $0xd8] sm:$0xff]
  %v6807 = vld [vmem:[#allocation2 + $0xe0] sm:$0xff]
  %v6808 = vld [vmem:[#allocation2 + $0xe8] sm:$0xff]
  %v6809 = vld [vmem:[#allocation2 + $0xf0] sm:$0xff]
  %v6810 = vld [vmem:[#allocation2 + $0xf8] sm:$0xff]
  %v6811 = vld [vmem:[#allocation2 + $0x100] sm:$0xff]
  %v6812 = vld [vmem:[#allocation2 + $0x108] sm:$0xff]
  %v6813 = vld [vmem:[#allocation2 + $0x110] sm:$0xff]
  %v6814 = vld [vmem:[#allocation2 + $0x118] sm:$0xff]
  %v6815 = vld [vmem:[#allocation2 + $0x120] sm:$0xff]
  %v6816 = vld [vmem:[#allocation2 + $0x128] sm:$0xff]
  %v6817 = vld [vmem:[#allocation2 + $0x130] sm:$0xff]
  %v6818 = vld [vmem:[#allocation2 + $0x138] sm:$0xff]
  %v6819 = vld [vmem:[#allocation2 + $0x140] sm:$0xff]
  %v6820 = vld [vmem:[#allocation2 + $0x148] sm:$0xff]
  %v6821 = vld [vmem:[#allocation2 + $0x150] sm:$0xff]
  %v6822 = vld [vmem:[#allocation2 + $0x158] sm:$0xff]
  %v6823 = vld [vmem:[#allocation2 + $0x160] sm:$0xff]
  %v6824 = vld [vmem:[#allocation2 + $0x168] sm:$0xff]
  %v6825 = vld [vmem:[#allocation2 + $0x170] sm:$0xff]
  %v6826 = vld [vmem:[#allocation2 + $0x178] sm:$0xff]
  %v6827 = vld [vmem:[#allocation2 + $0x180] sm:$0xff]
  %v6828 = vld [vmem:[#allocation2 + $0x188] sm:$0xff]
  %v6829 = vld [vmem:[#allocation2 + $0x190] sm:$0xff]
  %v6830 = vld [vmem:[#allocation2 + $0x198] sm:$0xff]
  %v6831 = vld [vmem:[#allocation2 + $0x1a0] sm:$0xff]
  %v6832 = vld [vmem:[#allocation2 + $0x1a8] sm:$0xff]
  %v6833 = vld [vmem:[#allocation2 + $0x1b0] sm:$0xff]
  %v6834 = vld [vmem:[#allocation2 + $0x1b8] sm:$0xff]
  %v6835 = vld [vmem:[#allocation2 + $0x1c0] sm:$0xff]
  %v6836 = vld [vmem:[#allocation2 + $0x1c8] sm:$0xff]
  %v6837 = vld [vmem:[#allocation2 + $0x1d0] sm:$0xff]
  %v6838 = vld [vmem:[#allocation2 + $0x1d8] sm:$0xff]
  %v6839 = vld [vmem:[#allocation2 + $0x1e0] sm:$0xff]
  %v6840 = vld [vmem:[#allocation2 + $0x1e8] sm:$0xff]
  %v6841 = vld [vmem:[#allocation2 + $0x1f0] sm:$0xff]
  %v6842 = vld [vmem:[#allocation2 + $0x1f8] sm:$0xff]
  %v6843 = vld [vmem:[#allocation2 + $0x200] sm:$0xff]
  %v6844 = vld [vmem:[#allocation2 + $0x208] sm:$0xff]
  %v6845 = vld [vmem:[#allocation2 + $0x210] sm:$0xff]
  %vm6846 = vmand %vm6077, %vm4219
  %vm6847 = vmand %vm6078, %vm4220
  %vm6848 = vmand %vm6079, %vm4221
  %vm6849 = vmand %vm6080, %vm4222
  %vm6850 = vmand %vm6081, %vm4223
  %vm6851 = vmand %vm6082, %vm4224
  %vm6852 = vmand %vm6083, %vm4225
  %vm6853 = vmand %vm6084, %vm4226
  %vm6854 = vmand %vm6085, %vm4227
  %vm6855 = vmand %vm6086, %vm4228
  %vm6856 = vmand %vm6087, %vm4229
  %vm6857 = vmand %vm6088, %vm4230
  %vm6858 = vmand %vm6089, %vm4231
  %vm6859 = vmand %vm6090, %vm4232
  %vm6860 = vmand %vm6091, %vm4233
  %vm6861 = vmand %vm6092, %vm4234
  %vm6862 = vmand %vm6093, %vm4235
  %vm6863 = vmand %vm6094, %vm4236
  %vm6864 = vmand %vm6095, %vm4237
  %vm6865 = vmand %vm6096, %vm4238
  %vm6866 = vmand %vm6097, %vm4239
  %vm6867 = vmand %vm6098, %vm4240
  %vm6868 = vmand %vm6099, %vm4241
  %vm6869 = vmand %vm6100, %vm4242
  %vm6870 = vmand %vm6101, %vm4243
  %vm6871 = vmand %vm6102, %vm4244
  %vm6872 = vmand %vm6103, %vm4245
  %vm6873 = vmand %vm6104, %vm4246
  %vm6874 = vmand %vm6105, %vm4247
  %vm6875 = vmand %vm6106, %vm4248
  %vm6876 = vmand %vm6107, %vm4249
  %vm6877 = vmand %vm6108, %vm4250
  %vm6878 = vmand %vm6109, %vm4251
  %vm6879 = vmand %vm6110, %vm4252
  %vm6880 = vmand %vm6111, %vm4253
  %vm6881 = vmand %vm6112, %vm4254
  %vm6882 = vmand %vm6113, %vm4255
  %vm6883 = vmand %vm6114, %vm4256
  %vm6884 = vmand %vm6115, %vm4257
  %vm6885 = vmand %vm6116, %vm4258
  %vm6886 = vmand %vm6117, %vm4259
  %vm6887 = vmand %vm6118, %vm4260
  %vm6888 = vmand %vm6119, %vm4261
  %vm6889 = vmand %vm6120, %vm4262
  %vm6890 = vmand %vm6121, %vm4263
  %vm6891 = vmand %vm6122, %vm4264
  %vm6892 = vmand %vm6123, %vm4265
  %vm6893 = vmand %vm6124, %vm4266
  %vm6894 = vmand %vm6125, %vm4267
  %vm6895 = vmand %vm6126, %vm4268
  %vm6896 = vmand %vm6127, %vm4269
  %vm6897 = vmand %vm6128, %vm4270
  %vm6898 = vmand %vm6129, %vm4271
  %vm6899 = vmand %vm6130, %vm4272
  %vm6900 = vmand %vm6131, %vm4273
  %vm6901 = vmand %vm6132, %vm4274
  %vm6902 = vmand %vm6133, %vm4275
  %vm6903 = vmand %vm6134, %vm4276
  %vm6904 = vmand %vm6135, %vm4277
  %vm6905 = vmand %vm6136, %vm4278
  %vm6906 = vmand %vm6137, %vm4279
  %vm6907 = vmand %vm6138, %vm4280
  %vm6908 = vmand %vm6139, %vm4281
  %vm6909 = vmand %vm6140, %vm4282
  %vm6910 = vmand %vm6846, %vm4347
  %vm6911 = vmand %vm6847, %vm4348
  %vm6912 = vmand %vm6848, %vm4349
  %vm6913 = vmand %vm6849, %vm4350
  %vm6914 = vmand %vm6850, %vm4351
  %vm6915 = vmand %vm6851, %vm4352
  %vm6916 = vmand %vm6852, %vm4353
  %vm6917 = vmand %vm6853, %vm4354
  %vm6918 = vmand %vm6854, %vm4355
  %vm6919 = vmand %vm6855, %vm4356
  %vm6920 = vmand %vm6856, %vm4357
  %vm6921 = vmand %vm6857, %vm4358
  %vm6922 = vmand %vm6858, %vm4359
  %vm6923 = vmand %vm6859, %vm4360
  %vm6924 = vmand %vm6860, %vm4361
  %vm6925 = vmand %vm6861, %vm4362
  %vm6926 = vmand %vm6862, %vm4363
  %vm6927 = vmand %vm6863, %vm4364
  %vm6928 = vmand %vm6864, %vm4365
  %vm6929 = vmand %vm6865, %vm4366
  %vm6930 = vmand %vm6866, %vm4367
  %vm6931 = vmand %vm6867, %vm4368
  %vm6932 = vmand %vm6868, %vm4369
  %vm6933 = vmand %vm6869, %vm4370
  %vm6934 = vmand %vm6870, %vm4371
  %vm6935 = vmand %vm6871, %vm4372
  %vm6936 = vmand %vm6872, %vm4373
  %vm6937 = vmand %vm6873, %vm4374
  %vm6938 = vmand %vm6874, %vm4375
  %vm6939 = vmand %vm6875, %vm4376
  %vm6940 = vmand %vm6876, %vm4377
  %vm6941 = vmand %vm6877, %vm4378
  %vm6942 = vmand %vm6878, %vm4379
  %vm6943 = vmand %vm6879, %vm4380
  %vm6944 = vmand %vm6880, %vm4381
  %vm6945 = vmand %vm6881, %vm4382
  %vm6946 = vmand %vm6882, %vm4383
  %vm6947 = vmand %vm6883, %vm4384
  %vm6948 = vmand %vm6884, %vm4385
  %vm6949 = vmand %vm6885, %vm4386
  %vm6950 = vmand %vm6886, %vm4387
  %vm6951 = vmand %vm6887, %vm4388
  %vm6952 = vmand %vm6888, %vm4389
  %vm6953 = vmand %vm6889, %vm4390
  %vm6954 = vmand %vm6890, %vm4391
  %vm6955 = vmand %vm6891, %vm4392
  %vm6956 = vmand %vm6892, %vm4393
  %vm6957 = vmand %vm6893, %vm4394
  %vm6958 = vmand %vm6894, %vm4395
  %vm6959 = vmand %vm6895, %vm4396
  %vm6960 = vmand %vm6896, %vm4397
  %vm6961 = vmand %vm6897, %vm4398
  %vm6962 = vmand %vm6898, %vm4399
  %vm6963 = vmand %vm6899, %vm4400
  %vm6964 = vmand %vm6900, %vm4401
  %vm6965 = vmand %vm6901, %vm4402
  %vm6966 = vmand %vm6902, %vm4403
  %vm6967 = vmand %vm6903, %vm4404
  %vm6968 = vmand %vm6904, %vm4405
  %vm6969 = vmand %vm6905, %vm4406
  %vm6970 = vmand %vm6906, %vm4407
  %vm6971 = vmand %vm6907, %vm4408
  %vm6972 = vmand %vm6908, %vm4409
  %vm6973 = vmand %vm6909, %vm4410
  %v6974 = vsel %vm6910, 1, 0
  %v6975 = vsel %vm6911, 1, 0
  %v6976 = vsel %vm6912, 1, 0
  %v6977 = vsel %vm6913, 1, 0
  %v6978 = vsel %vm6914, 1, 0
  %v6979 = vsel %vm6915, 1, 0
  %v6980 = vsel %vm6916, 1, 0
  %v6981 = vsel %vm6917, 1, 0
  %v6982 = vsel %vm6918, 1, 0
  %v6983 = vsel %vm6919, 1, 0
  %v6984 = vsel %vm6920, 1, 0
  %v6985 = vsel %vm6921, 1, 0
  %v6986 = vsel %vm6922, 1, 0
  %v6987 = vsel %vm6923, 1, 0
  %v6988 = vsel %vm6924, 1, 0
  %v6989 = vsel %vm6925, 1, 0
  %v6990 = vsel %vm6926, 1, 0
  %v6991 = vsel %vm6927, 1, 0
  %v6992 = vsel %vm6928, 1, 0
  %v6993 = vsel %vm6929, 1, 0
  %v6994 = vsel %vm6930, 1, 0
  %v6995 = vsel %vm6931, 1, 0
  %v6996 = vsel %vm6932, 1, 0
  %v6997 = vsel %vm6933, 1, 0
  %v6998 = vsel %vm6934, 1, 0
  %v6999 = vsel %vm6935, 1, 0
  %v7000 = vsel %vm6936, 1, 0
  %v7001 = vsel %vm6937, 1, 0
  %v7002 = vsel %vm6938, 1, 0
  %v7003 = vsel %vm6939, 1, 0
  %v7004 = vsel %vm6940, 1, 0
  %v7005 = vsel %vm6941, 1, 0
  %v7006 = vsel %vm6942, 1, 0
  %v7007 = vsel %vm6943, 1, 0
  %v7008 = vsel %vm6944, 1, 0
  %v7009 = vsel %vm6945, 1, 0
  %v7010 = vsel %vm6946, 1, 0
  %v7011 = vsel %vm6947, 1, 0
  %v7012 = vsel %vm6948, 1, 0
  %v7013 = vsel %vm6949, 1, 0
  %v7014 = vsel %vm6950, 1, 0
  %v7015 = vsel %vm6951, 1, 0
  %v7016 = vsel %vm6952, 1, 0
  %v7017 = vsel %vm6953, 1, 0
  %v7018 = vsel %vm6954, 1, 0
  %v7019 = vsel %vm6955, 1, 0
  %v7020 = vsel %vm6956, 1, 0
  %v7021 = vsel %vm6957, 1, 0
  %v7022 = vsel %vm6958, 1, 0
  %v7023 = vsel %vm6959, 1, 0
  %v7024 = vsel %vm6960, 1, 0
  %v7025 = vsel %vm6961, 1, 0
  %v7026 = vsel %vm6962, 1, 0
  %v7027 = vsel %vm6963, 1, 0
  %v7028 = vsel %vm6964, 1, 0
  %v7029 = vsel %vm6965, 1, 0
  %v7030 = vsel %vm6966, 1, 0
  %v7031 = vsel %vm6967, 1, 0
  %v7032 = vsel %vm6968, 1, 0
  %v7033 = vsel %vm6969, 1, 0
  %v7034 = vsel %vm6970, 1, 0
  %v7035 = vsel %vm6971, 1, 0
  %v7036 = vsel %vm6972, 1, 0
  %v7037 = vsel %vm6973, 1, 0
  %vm7038 = vcmp.eq.s32.totalorder %v6974, 1
  %vm7039 = vcmp.eq.s32.totalorder %v6975, 1
  %vm7040 = vcmp.eq.s32.totalorder %v6976, 1
  %vm7041 = vcmp.eq.s32.totalorder %v6977, 1
  %vm7042 = vcmp.eq.s32.totalorder %v6978, 1
  %vm7043 = vcmp.eq.s32.totalorder %v6979, 1
  %vm7044 = vcmp.eq.s32.totalorder %v6980, 1
  %vm7045 = vcmp.eq.s32.totalorder %v6981, 1
  %vm7046 = vcmp.eq.s32.totalorder %v6982, 1
  %vm7047 = vcmp.eq.s32.totalorder %v6983, 1
  %vm7048 = vcmp.eq.s32.totalorder %v6984, 1
  %vm7049 = vcmp.eq.s32.totalorder %v6985, 1
  %vm7050 = vcmp.eq.s32.totalorder %v6986, 1
  %vm7051 = vcmp.eq.s32.totalorder %v6987, 1
  %vm7052 = vcmp.eq.s32.totalorder %v6988, 1
  %vm7053 = vcmp.eq.s32.totalorder %v6989, 1
  %vm7054 = vcmp.eq.s32.totalorder %v6990, 1
  %vm7055 = vcmp.eq.s32.totalorder %v6991, 1
  %vm7056 = vcmp.eq.s32.totalorder %v6992, 1
  %vm7057 = vcmp.eq.s32.totalorder %v6993, 1
  %vm7058 = vcmp.eq.s32.totalorder %v6994, 1
  %vm7059 = vcmp.eq.s32.totalorder %v6995, 1
  %vm7060 = vcmp.eq.s32.totalorder %v6996, 1
  %vm7061 = vcmp.eq.s32.totalorder %v6997, 1
  %vm7062 = vcmp.eq.s32.totalorder %v6998, 1
  %vm7063 = vcmp.eq.s32.totalorder %v6999, 1
  %vm7064 = vcmp.eq.s32.totalorder %v7000, 1
  %vm7065 = vcmp.eq.s32.totalorder %v7001, 1
  %vm7066 = vcmp.eq.s32.totalorder %v7002, 1
  %vm7067 = vcmp.eq.s32.totalorder %v7003, 1
  %vm7068 = vcmp.eq.s32.totalorder %v7004, 1
  %vm7069 = vcmp.eq.s32.totalorder %v7005, 1
  %vm7070 = vcmp.eq.s32.totalorder %v7006, 1
  %vm7071 = vcmp.eq.s32.totalorder %v7007, 1
  %vm7072 = vcmp.eq.s32.totalorder %v7008, 1
  %vm7073 = vcmp.eq.s32.totalorder %v7009, 1
  %vm7074 = vcmp.eq.s32.totalorder %v7010, 1
  %vm7075 = vcmp.eq.s32.totalorder %v7011, 1
  %vm7076 = vcmp.eq.s32.totalorder %v7012, 1
  %vm7077 = vcmp.eq.s32.totalorder %v7013, 1
  %vm7078 = vcmp.eq.s32.totalorder %v7014, 1
  %vm7079 = vcmp.eq.s32.totalorder %v7015, 1
  %vm7080 = vcmp.eq.s32.totalorder %v7016, 1
  %vm7081 = vcmp.eq.s32.totalorder %v7017, 1
  %vm7082 = vcmp.eq.s32.totalorder %v7018, 1
  %vm7083 = vcmp.eq.s32.totalorder %v7019, 1
  %vm7084 = vcmp.eq.s32.totalorder %v7020, 1
  %vm7085 = vcmp.eq.s32.totalorder %v7021, 1
  %vm7086 = vcmp.eq.s32.totalorder %v7022, 1
  %vm7087 = vcmp.eq.s32.totalorder %v7023, 1
  %vm7088 = vcmp.eq.s32.totalorder %v7024, 1
  %vm7089 = vcmp.eq.s32.totalorder %v7025, 1
  %vm7090 = vcmp.eq.s32.totalorder %v7026, 1
  %vm7091 = vcmp.eq.s32.totalorder %v7027, 1
  %vm7092 = vcmp.eq.s32.totalorder %v7028, 1
  %vm7093 = vcmp.eq.s32.totalorder %v7029, 1
  %vm7094 = vcmp.eq.s32.totalorder %v7030, 1
  %vm7095 = vcmp.eq.s32.totalorder %v7031, 1
  %vm7096 = vcmp.eq.s32.totalorder %v7032, 1
  %vm7097 = vcmp.eq.s32.totalorder %v7033, 1
  %vm7098 = vcmp.eq.s32.totalorder %v7034, 1
  %vm7099 = vcmp.eq.s32.totalorder %v7035, 1
  %vm7100 = vcmp.eq.s32.totalorder %v7036, 1
  %vm7101 = vcmp.eq.s32.totalorder %v7037, 1
  %v7102 = vsel %vm7038, %v6782, 0.0
  %v7103 = vsel %vm7039, %v6783, 0.0
  %v7104 = vsel %vm7040, %v6784, 0.0
  %v7105 = vsel %vm7041, %v6785, 0.0
  %v7106 = vsel %vm7042, %v6786, 0.0
  %v7107 = vsel %vm7043, %v6787, 0.0
  %v7108 = vsel %vm7044, %v6788, 0.0
  %v7109 = vsel %vm7045, %v6789, 0.0
  %v7110 = vsel %vm7046, %v6790, 0.0
  %v7111 = vsel %vm7047, %v6791, 0.0
  %v7112 = vsel %vm7048, %v6792, 0.0
  %v7113 = vsel %vm7049, %v6793, 0.0
  %v7114 = vsel %vm7050, %v6794, 0.0
  %v7115 = vsel %vm7051, %v6795, 0.0
  %v7116 = vsel %vm7052, %v6796, 0.0
  %v7117 = vsel %vm7053, %v6797, 0.0
  %v7118 = vsel %vm7054, %v6798, 0.0
  %v7119 = vsel %vm7055, %v6799, 0.0
  %v7120 = vsel %vm7056, %v6800, 0.0
  %v7121 = vsel %vm7057, %v6801, 0.0
  %v7122 = vsel %vm7058, %v6802, 0.0
  %v7123 = vsel %vm7059, %v6803, 0.0
  %v7124 = vsel %vm7060, %v6804, 0.0
  %v7125 = vsel %vm7061, %v6805, 0.0
  %v7126 = vsel %vm7062, %v6806, 0.0
  %v7127 = vsel %vm7063, %v6807, 0.0
  %v7128 = vsel %vm7064, %v6808, 0.0
  %v7129 = vsel %vm7065, %v6809, 0.0
  %v7130 = vsel %vm7066, %v6810, 0.0
  %v7131 = vsel %vm7067, %v6811, 0.0
  %v7132 = vsel %vm7068, %v6812, 0.0
  %v7133 = vsel %vm7069, %v6813, 0.0
  %v7134 = vsel %vm7070, %v6814, 0.0
  %v7135 = vsel %vm7071, %v6815, 0.0
  %v7136 = vsel %vm7072, %v6816, 0.0
  %v7137 = vsel %vm7073, %v6817, 0.0
  %v7138 = vsel %vm7074, %v6818, 0.0
  %v7139 = vsel %vm7075, %v6819, 0.0
  %v7140 = vsel %vm7076, %v6820, 0.0
  %v7141 = vsel %vm7077, %v6821, 0.0
  %v7142 = vsel %vm7078, %v6822, 0.0
  %v7143 = vsel %vm7079, %v6823, 0.0
  %v7144 = vsel %vm7080, %v6824, 0.0
  %v7145 = vsel %vm7081, %v6825, 0.0
  %v7146 = vsel %vm7082, %v6826, 0.0
  %v7147 = vsel %vm7083, %v6827, 0.0
  %v7148 = vsel %vm7084, %v6828, 0.0
  %v7149 = vsel %vm7085, %v6829, 0.0
  %v7150 = vsel %vm7086, %v6830, 0.0
  %v7151 = vsel %vm7087, %v6831, 0.0
  %v7152 = vsel %vm7088, %v6832, 0.0
  %v7153 = vsel %vm7089, %v6833, 0.0
  %v7154 = vsel %vm7090, %v6834, 0.0
  %v7155 = vsel %vm7091, %v6835, 0.0
  %v7156 = vsel %vm7092, %v6836, 0.0
  %v7157 = vsel %vm7093, %v6837, 0.0
  %v7158 = vsel %vm7094, %v6838, 0.0
  %v7159 = vsel %vm7095, %v6839, 0.0
  %v7160 = vsel %vm7096, %v6840, 0.0
  %v7161 = vsel %vm7097, %v6841, 0.0
  %v7162 = vsel %vm7098, %v6842, 0.0
  %v7163 = vsel %vm7099, %v6843, 0.0
  %v7164 = vsel %vm7100, %v6844, 0.0
  %v7165 = vsel %vm7101, %v6845, 0.0
  %7230 = vrot.lane.b32.xlu0 %v7102, 64
  %v7231 = vpop.permute.xlu0 %7230
  %7232 = vrot.lane.b32.xlu0 %v7103, 64
  %v7233 = vpop.permute.xlu0 %7232
  %7234 = vrot.lane.b32.xlu0 %v7104, 64
  %v7235 = vpop.permute.xlu0 %7234
  %7236 = vrot.lane.b32.xlu0 %v7105, 64
  %v7237 = vpop.permute.xlu0 %7236
  %7238 = vrot.lane.b32.xlu0 %v7106, 64
  %v7239 = vpop.permute.xlu0 %7238
  %7240 = vrot.lane.b32.xlu0 %v7107, 64
  %v7241 = vpop.permute.xlu0 %7240
  %7242 = vrot.lane.b32.xlu0 %v7108, 64
  %v7243 = vpop.permute.xlu0 %7242
  %7244 = vrot.lane.b32.xlu0 %v7109, 64
  %v7245 = vpop.permute.xlu0 %7244
  %7246 = vrot.lane.b32.xlu0 %v7110, 64
  %v7247 = vpop.permute.xlu0 %7246
  %7248 = vrot.lane.b32.xlu0 %v7111, 64
  %v7249 = vpop.permute.xlu0 %7248
  %7250 = vrot.lane.b32.xlu0 %v7112, 64
  %v7251 = vpop.permute.xlu0 %7250
  %7252 = vrot.lane.b32.xlu0 %v7113, 64
  %v7253 = vpop.permute.xlu0 %7252
  %7254 = vrot.lane.b32.xlu0 %v7114, 64
  %v7255 = vpop.permute.xlu0 %7254
  %7256 = vrot.lane.b32.xlu0 %v7115, 64
  %v7257 = vpop.permute.xlu0 %7256
  %7258 = vrot.lane.b32.xlu0 %v7116, 64
  %v7259 = vpop.permute.xlu0 %7258
  %7260 = vrot.lane.b32.xlu0 %v7117, 64
  %v7261 = vpop.permute.xlu0 %7260
  %7262 = vrot.lane.b32.xlu0 %v7118, 64
  %v7263 = vpop.permute.xlu0 %7262
  %7264 = vrot.lane.b32.xlu0 %v7119, 64
  %v7265 = vpop.permute.xlu0 %7264
  %7266 = vrot.lane.b32.xlu0 %v7120, 64
  %v7267 = vpop.permute.xlu0 %7266
  %7268 = vrot.lane.b32.xlu0 %v7121, 64
  %v7269 = vpop.permute.xlu0 %7268
  %7270 = vrot.lane.b32.xlu0 %v7122, 64
  %v7271 = vpop.permute.xlu0 %7270
  %7272 = vrot.lane.b32.xlu0 %v7123, 64
  %v7273 = vpop.permute.xlu0 %7272
  %7274 = vrot.lane.b32.xlu0 %v7124, 64
  %v7275 = vpop.permute.xlu0 %7274
  %7276 = vrot.lane.b32.xlu0 %v7125, 64
  %v7277 = vpop.permute.xlu0 %7276
  %7278 = vrot.lane.b32.xlu0 %v7126, 64
  %v7279 = vpop.permute.xlu0 %7278
  %7280 = vrot.lane.b32.xlu0 %v7127, 64
  %v7281 = vpop.permute.xlu0 %7280
  %7282 = vrot.lane.b32.xlu0 %v7128, 64
  %v7283 = vpop.permute.xlu0 %7282
  %7284 = vrot.lane.b32.xlu0 %v7129, 64
  %v7285 = vpop.permute.xlu0 %7284
  %7286 = vrot.lane.b32.xlu0 %v7130, 64
  %v7287 = vpop.permute.xlu0 %7286
  %7288 = vrot.lane.b32.xlu0 %v7131, 64
  %v7289 = vpop.permute.xlu0 %7288
  %7290 = vrot.lane.b32.xlu0 %v7132, 64
  %v7291 = vpop.permute.xlu0 %7290
  %7292 = vrot.lane.b32.xlu0 %v7133, 64
  %v7293 = vpop.permute.xlu0 %7292
  %7294 = vrot.lane.b32.xlu0 %v7134, 64
  %v7295 = vpop.permute.xlu0 %7294
  %7296 = vrot.lane.b32.xlu0 %v7135, 64
  %v7297 = vpop.permute.xlu0 %7296
  %7298 = vrot.lane.b32.xlu0 %v7136, 64
  %v7299 = vpop.permute.xlu0 %7298
  %7300 = vrot.lane.b32.xlu0 %v7137, 64
  %v7301 = vpop.permute.xlu0 %7300
  %7302 = vrot.lane.b32.xlu0 %v7138, 64
  %v7303 = vpop.permute.xlu0 %7302
  %7304 = vrot.lane.b32.xlu0 %v7139, 64
  %v7305 = vpop.permute.xlu0 %7304
  %7306 = vrot.lane.b32.xlu0 %v7140, 64
  %v7307 = vpop.permute.xlu0 %7306
  %7308 = vrot.lane.b32.xlu0 %v7141, 64
  %v7309 = vpop.permute.xlu0 %7308
  %7310 = vrot.lane.b32.xlu0 %v7142, 64
  %v7311 = vpop.permute.xlu0 %7310
  %7312 = vrot.lane.b32.xlu0 %v7143, 64
  %v7313 = vpop.permute.xlu0 %7312
  %7314 = vrot.lane.b32.xlu0 %v7144, 64
  %v7315 = vpop.permute.xlu0 %7314
  %7316 = vrot.lane.b32.xlu0 %v7145, 64
  %v7317 = vpop.permute.xlu0 %7316
  %7318 = vrot.lane.b32.xlu0 %v7146, 64
  %v7319 = vpop.permute.xlu0 %7318
  %7320 = vrot.lane.b32.xlu0 %v7147, 64
  %v7321 = vpop.permute.xlu0 %7320
  %7322 = vrot.lane.b32.xlu0 %v7148, 64
  %v7323 = vpop.permute.xlu0 %7322
  %7324 = vrot.lane.b32.xlu0 %v7149, 64
  %v7325 = vpop.permute.xlu0 %7324
  %7326 = vrot.lane.b32.xlu0 %v7150, 64
  %v7327 = vpop.permute.xlu0 %7326
  %7328 = vrot.lane.b32.xlu0 %v7151, 64
  %v7329 = vpop.permute.xlu0 %7328
  %7330 = vrot.lane.b32.xlu0 %v7152, 64
  %v7331 = vpop.permute.xlu0 %7330
  %7332 = vrot.lane.b32.xlu0 %v7153, 64
  %v7333 = vpop.permute.xlu0 %7332
  %7334 = vrot.lane.b32.xlu0 %v7154, 64
  %v7335 = vpop.permute.xlu0 %7334
  %7336 = vrot.lane.b32.xlu0 %v7155, 64
  %v7337 = vpop.permute.xlu0 %7336
  %7338 = vrot.lane.b32.xlu0 %v7156, 64
  %v7339 = vpop.permute.xlu0 %7338
  %7340 = vrot.lane.b32.xlu0 %v7157, 64
  %v7341 = vpop.permute.xlu0 %7340
  %7342 = vrot.lane.b32.xlu0 %v7158, 64
  %v7343 = vpop.permute.xlu0 %7342
  %7344 = vrot.lane.b32.xlu0 %v7159, 64
  %v7345 = vpop.permute.xlu0 %7344
  %7346 = vrot.lane.b32.xlu0 %v7160, 64
  %v7347 = vpop.permute.xlu0 %7346
  %7348 = vrot.lane.b32.xlu0 %v7161, 64
  %v7349 = vpop.permute.xlu0 %7348
  %7350 = vrot.lane.b32.xlu0 %v7162, 64
  %v7351 = vpop.permute.xlu0 %7350
  %7352 = vrot.lane.b32.xlu0 %v7163, 64
  %v7353 = vpop.permute.xlu0 %7352
  %7354 = vrot.lane.b32.xlu0 %v7164, 64
  %v7355 = vpop.permute.xlu0 %7354
  %7356 = vrot.lane.b32.xlu0 %v7165, 64
  %v7357 = vpop.permute.xlu0 %7356
  %vm7422 = vcmask 654848
  %7423 = vst.msk [vmem:[#allocation3] sm:$0xff] %vm7422, %v7231
  %7424 = vst.msk [vmem:[#allocation3 + $0x10] sm:$0xff] %vm7422, %v7233
  %7425 = vst.msk [vmem:[#allocation3 + $0x20] sm:$0xff] %vm7422, %v7235
  %7426 = vst.msk [vmem:[#allocation3 + $0x30] sm:$0xff] %vm7422, %v7237
  %7427 = vst.msk [vmem:[#allocation3 + $0x40] sm:$0xff] %vm7422, %v7239
  %7428 = vst.msk [vmem:[#allocation3 + $0x50] sm:$0xff] %vm7422, %v7241
  %7429 = vst.msk [vmem:[#allocation3 + $0x60] sm:$0xff] %vm7422, %v7243
  %7430 = vst.msk [vmem:[#allocation3 + $0x70] sm:$0xff] %vm7422, %v7245
  %7431 = vst.msk [vmem:[#allocation3 + $0x80] sm:$0xff] %vm7422, %v7247
  %7432 = vst.msk [vmem:[#allocation3 + $0x90] sm:$0xff] %vm7422, %v7249
  %7433 = vst.msk [vmem:[#allocation3 + $0xa0] sm:$0xff] %vm7422, %v7251
  %7434 = vst.msk [vmem:[#allocation3 + $0xb0] sm:$0xff] %vm7422, %v7253
  %7435 = vst.msk [vmem:[#allocation3 + $0xc0] sm:$0xff] %vm7422, %v7255
  %7436 = vst.msk [vmem:[#allocation3 + $0xd0] sm:$0xff] %vm7422, %v7257
  %7437 = vst.msk [vmem:[#allocation3 + $0xe0] sm:$0xff] %vm7422, %v7259
  %7438 = vst.msk [vmem:[#allocation3 + $0xf0] sm:$0xff] %vm7422, %v7261
  %7439 = vst.msk [vmem:[#allocation3 + $0x100] sm:$0xff] %vm7422, %v7263
  %7440 = vst.msk [vmem:[#allocation3 + $0x110] sm:$0xff] %vm7422, %v7265
  %7441 = vst.msk [vmem:[#allocation3 + $0x120] sm:$0xff] %vm7422, %v7267
  %7442 = vst.msk [vmem:[#allocation3 + $0x130] sm:$0xff] %vm7422, %v7269
  %7443 = vst.msk [vmem:[#allocation3 + $0x140] sm:$0xff] %vm7422, %v7271
  %7444 = vst.msk [vmem:[#allocation3 + $0x150] sm:$0xff] %vm7422, %v7273
  %7445 = vst.msk [vmem:[#allocation3 + $0x160] sm:$0xff] %vm7422, %v7275
  %7446 = vst.msk [vmem:[#allocation3 + $0x170] sm:$0xff] %vm7422, %v7277
  %7447 = vst.msk [vmem:[#allocation3 + $0x180] sm:$0xff] %vm7422, %v7279
  %7448 = vst.msk [vmem:[#allocation3 + $0x190] sm:$0xff] %vm7422, %v7281
  %7449 = vst.msk [vmem:[#allocation3 + $0x1a0] sm:$0xff] %vm7422, %v7283
  %7450 = vst.msk [vmem:[#allocation3 + $0x1b0] sm:$0xff] %vm7422, %v7285
  %7451 = vst.msk [vmem:[#allocation3 + $0x1c0] sm:$0xff] %vm7422, %v7287
  %7452 = vst.msk [vmem:[#allocation3 + $0x1d0] sm:$0xff] %vm7422, %v7289
  %7453 = vst.msk [vmem:[#allocation3 + $0x1e0] sm:$0xff] %vm7422, %v7291
  %7454 = vst.msk [vmem:[#allocation3 + $0x1f0] sm:$0xff] %vm7422, %v7293
  %7455 = vst.msk [vmem:[#allocation3 + $0x200] sm:$0xff] %vm7422, %v7295
  %7456 = vst.msk [vmem:[#allocation3 + $0x210] sm:$0xff] %vm7422, %v7297
  %7457 = vst.msk [vmem:[#allocation3 + $0x220] sm:$0xff] %vm7422, %v7299
  %7458 = vst.msk [vmem:[#allocation3 + $0x230] sm:$0xff] %vm7422, %v7301
  %7459 = vst.msk [vmem:[#allocation3 + $0x240] sm:$0xff] %vm7422, %v7303
  %7460 = vst.msk [vmem:[#allocation3 + $0x250] sm:$0xff] %vm7422, %v7305
  %7461 = vst.msk [vmem:[#allocation3 + $0x260] sm:$0xff] %vm7422, %v7307
  %7462 = vst.msk [vmem:[#allocation3 + $0x270] sm:$0xff] %vm7422, %v7309
  %7463 = vst.msk [vmem:[#allocation3 + $0x280] sm:$0xff] %vm7422, %v7311
  %7464 = vst.msk [vmem:[#allocation3 + $0x290] sm:$0xff] %vm7422, %v7313
  %7465 = vst.msk [vmem:[#allocation3 + $0x2a0] sm:$0xff] %vm7422, %v7315
  %7466 = vst.msk [vmem:[#allocation3 + $0x2b0] sm:$0xff] %vm7422, %v7317
  %7467 = vst.msk [vmem:[#allocation3 + $0x2c0] sm:$0xff] %vm7422, %v7319
  %7468 = vst.msk [vmem:[#allocation3 + $0x2d0] sm:$0xff] %vm7422, %v7321
  %7469 = vst.msk [vmem:[#allocation3 + $0x2e0] sm:$0xff] %vm7422, %v7323
  %7470 = vst.msk [vmem:[#allocation3 + $0x2f0] sm:$0xff] %vm7422, %v7325
  %7471 = vst.msk [vmem:[#allocation3 + $0x300] sm:$0xff] %vm7422, %v7327
  %7472 = vst.msk [vmem:[#allocation3 + $0x310] sm:$0xff] %vm7422, %v7329
  %7473 = vst.msk [vmem:[#allocation3 + $0x320] sm:$0xff] %vm7422, %v7331
  %7474 = vst.msk [vmem:[#allocation3 + $0x330] sm:$0xff] %vm7422, %v7333
  %7475 = vst.msk [vmem:[#allocation3 + $0x340] sm:$0xff] %vm7422, %v7335
  %7476 = vst.msk [vmem:[#allocation3 + $0x350] sm:$0xff] %vm7422, %v7337
  %7477 = vst.msk [vmem:[#allocation3 + $0x360] sm:$0xff] %vm7422, %v7339
  %7478 = vst.msk [vmem:[#allocation3 + $0x370] sm:$0xff] %vm7422, %v7341
  %7479 = vst.msk [vmem:[#allocation3 + $0x380] sm:$0xff] %vm7422, %v7343
  %7480 = vst.msk [vmem:[#allocation3 + $0x390] sm:$0xff] %vm7422, %v7345
  %7481 = vst.msk [vmem:[#allocation3 + $0x3a0] sm:$0xff] %vm7422, %v7347
  %7482 = vst.msk [vmem:[#allocation3 + $0x3b0] sm:$0xff] %vm7422, %v7349
  %7483 = vst.msk [vmem:[#allocation3 + $0x3c0] sm:$0xff] %vm7422, %v7351
  %7484 = vst.msk [vmem:[#allocation3 + $0x3d0] sm:$0xff] %vm7422, %v7353
  %7485 = vst.msk [vmem:[#allocation3 + $0x3e0] sm:$0xff] %vm7422, %v7355
  %7486 = vst.msk [vmem:[#allocation3 + $0x3f0] sm:$0xff] %vm7422, %v7357
  %v7487 = vld [vmem:[#allocation2 + $0x19] sm:$0xff]
  %v7488 = vld [vmem:[#allocation2 + $0x21] sm:$0xff]
  %v7489 = vld [vmem:[#allocation2 + $0x29] sm:$0xff]
  %v7490 = vld [vmem:[#allocation2 + $0x31] sm:$0xff]
  %v7491 = vld [vmem:[#allocation2 + $0x39] sm:$0xff]
  %v7492 = vld [vmem:[#allocation2 + $0x41] sm:$0xff]
  %v7493 = vld [vmem:[#allocation2 + $0x49] sm:$0xff]
  %v7494 = vld [vmem:[#allocation2 + $0x51] sm:$0xff]
  %v7495 = vld [vmem:[#allocation2 + $0x59] sm:$0xff]
  %v7496 = vld [vmem:[#allocation2 + $0x61] sm:$0xff]
  %v7497 = vld [vmem:[#allocation2 + $0x69] sm:$0xff]
  %v7498 = vld [vmem:[#allocation2 + $0x71] sm:$0xff]
  %v7499 = vld [vmem:[#allocation2 + $0x79] sm:$0xff]
  %v7500 = vld [vmem:[#allocation2 + $0x81] sm:$0xff]
  %v7501 = vld [vmem:[#allocation2 + $0x89] sm:$0xff]
  %v7502 = vld [vmem:[#allocation2 + $0x91] sm:$0xff]
  %v7503 = vld [vmem:[#allocation2 + $0x99] sm:$0xff]
  %v7504 = vld [vmem:[#allocation2 + $0xa1] sm:$0xff]
  %v7505 = vld [vmem:[#allocation2 + $0xa9] sm:$0xff]
  %v7506 = vld [vmem:[#allocation2 + $0xb1] sm:$0xff]
  %v7507 = vld [vmem:[#allocation2 + $0xb9] sm:$0xff]
  %v7508 = vld [vmem:[#allocation2 + $0xc1] sm:$0xff]
  %v7509 = vld [vmem:[#allocation2 + $0xc9] sm:$0xff]
  %v7510 = vld [vmem:[#allocation2 + $0xd1] sm:$0xff]
  %v7511 = vld [vmem:[#allocation2 + $0xd9] sm:$0xff]
  %v7512 = vld [vmem:[#allocation2 + $0xe1] sm:$0xff]
  %v7513 = vld [vmem:[#allocation2 + $0xe9] sm:$0xff]
  %v7514 = vld [vmem:[#allocation2 + $0xf1] sm:$0xff]
  %v7515 = vld [vmem:[#allocation2 + $0xf9] sm:$0xff]
  %v7516 = vld [vmem:[#allocation2 + $0x101] sm:$0xff]
  %v7517 = vld [vmem:[#allocation2 + $0x109] sm:$0xff]
  %v7518 = vld [vmem:[#allocation2 + $0x111] sm:$0xff]
  %v7519 = vld [vmem:[#allocation2 + $0x119] sm:$0xff]
  %v7520 = vld [vmem:[#allocation2 + $0x121] sm:$0xff]
  %v7521 = vld [vmem:[#allocation2 + $0x129] sm:$0xff]
  %v7522 = vld [vmem:[#allocation2 + $0x131] sm:$0xff]
  %v7523 = vld [vmem:[#allocation2 + $0x139] sm:$0xff]
  %v7524 = vld [vmem:[#allocation2 + $0x141] sm:$0xff]
  %v7525 = vld [vmem:[#allocation2 + $0x149] sm:$0xff]
  %v7526 = vld [vmem:[#allocation2 + $0x151] sm:$0xff]
  %v7527 = vld [vmem:[#allocation2 + $0x159] sm:$0xff]
  %v7528 = vld [vmem:[#allocation2 + $0x161] sm:$0xff]
  %v7529 = vld [vmem:[#allocation2 + $0x169] sm:$0xff]
  %v7530 = vld [vmem:[#allocation2 + $0x171] sm:$0xff]
  %v7531 = vld [vmem:[#allocation2 + $0x179] sm:$0xff]
  %v7532 = vld [vmem:[#allocation2 + $0x181] sm:$0xff]
  %v7533 = vld [vmem:[#allocation2 + $0x189] sm:$0xff]
  %v7534 = vld [vmem:[#allocation2 + $0x191] sm:$0xff]
  %v7535 = vld [vmem:[#allocation2 + $0x199] sm:$0xff]
  %v7536 = vld [vmem:[#allocation2 + $0x1a1] sm:$0xff]
  %v7537 = vld [vmem:[#allocation2 + $0x1a9] sm:$0xff]
  %v7538 = vld [vmem:[#allocation2 + $0x1b1] sm:$0xff]
  %v7539 = vld [vmem:[#allocation2 + $0x1b9] sm:$0xff]
  %v7540 = vld [vmem:[#allocation2 + $0x1c1] sm:$0xff]
  %v7541 = vld [vmem:[#allocation2 + $0x1c9] sm:$0xff]
  %v7542 = vld [vmem:[#allocation2 + $0x1d1] sm:$0xff]
  %v7543 = vld [vmem:[#allocation2 + $0x1d9] sm:$0xff]
  %v7544 = vld [vmem:[#allocation2 + $0x1e1] sm:$0xff]
  %v7545 = vld [vmem:[#allocation2 + $0x1e9] sm:$0xff]
  %v7546 = vld [vmem:[#allocation2 + $0x1f1] sm:$0xff]
  %v7547 = vld [vmem:[#allocation2 + $0x1f9] sm:$0xff]
  %v7548 = vld [vmem:[#allocation2 + $0x201] sm:$0xff]
  %v7549 = vld [vmem:[#allocation2 + $0x209] sm:$0xff]
  %v7550 = vld [vmem:[#allocation2 + $0x211] sm:$0xff]
  %vm7551 = vmand %vm6077, %vm5116
  %vm7552 = vmand %vm6078, %vm5117
  %vm7553 = vmand %vm6079, %vm5118
  %vm7554 = vmand %vm6080, %vm5119
  %vm7555 = vmand %vm6081, %vm5120
  %vm7556 = vmand %vm6082, %vm5121
  %vm7557 = vmand %vm6083, %vm5122
  %vm7558 = vmand %vm6084, %vm5123
  %vm7559 = vmand %vm6085, %vm5124
  %vm7560 = vmand %vm6086, %vm5125
  %vm7561 = vmand %vm6087, %vm5126
  %vm7562 = vmand %vm6088, %vm5127
  %vm7563 = vmand %vm6089, %vm5128
  %vm7564 = vmand %vm6090, %vm5129
  %vm7565 = vmand %vm6091, %vm5130
  %vm7566 = vmand %vm6092, %vm5131
  %vm7567 = vmand %vm6093, %vm5132
  %vm7568 = vmand %vm6094, %vm5133
  %vm7569 = vmand %vm6095, %vm5134
  %vm7570 = vmand %vm6096, %vm5135
  %vm7571 = vmand %vm6097, %vm5136
  %vm7572 = vmand %vm6098, %vm5137
  %vm7573 = vmand %vm6099, %vm5138
  %vm7574 = vmand %vm6100, %vm5139
  %vm7575 = vmand %vm6101, %vm5140
  %vm7576 = vmand %vm6102, %vm5141
  %vm7577 = vmand %vm6103, %vm5142
  %vm7578 = vmand %vm6104, %vm5143
  %vm7579 = vmand %vm6105, %vm5144
  %vm7580 = vmand %vm6106, %vm5145
  %vm7581 = vmand %vm6107, %vm5146
  %vm7582 = vmand %vm6108, %vm5147
  %vm7583 = vmand %vm6109, %vm5148
  %vm7584 = vmand %vm6110, %vm5149
  %vm7585 = vmand %vm6111, %vm5150
  %vm7586 = vmand %vm6112, %vm5151
  %vm7587 = vmand %vm6113, %vm5152
  %vm7588 = vmand %vm6114, %vm5153
  %vm7589 = vmand %vm6115, %vm5154
  %vm7590 = vmand %vm6116, %vm5155
  %vm7591 = vmand %vm6117, %vm5156
  %vm7592 = vmand %vm6118, %vm5157
  %vm7593 = vmand %vm6119, %vm5158
  %vm7594 = vmand %vm6120, %vm5159
  %vm7595 = vmand %vm6121, %vm5160
  %vm7596 = vmand %vm6122, %vm5161
  %vm7597 = vmand %vm6123, %vm5162
  %vm7598 = vmand %vm6124, %vm5163
  %vm7599 = vmand %vm6125, %vm5164
  %vm7600 = vmand %vm6126, %vm5165
  %vm7601 = vmand %vm6127, %vm5166
  %vm7602 = vmand %vm6128, %vm5167
  %vm7603 = vmand %vm6129, %vm5168
  %vm7604 = vmand %vm6130, %vm5169
  %vm7605 = vmand %vm6131, %vm5170
  %vm7606 = vmand %vm6132, %vm5171
  %vm7607 = vmand %vm6133, %vm5172
  %vm7608 = vmand %vm6134, %vm5173
  %vm7609 = vmand %vm6135, %vm5174
  %vm7610 = vmand %vm6136, %vm5175
  %vm7611 = vmand %vm6137, %vm5176
  %vm7612 = vmand %vm6138, %vm5177
  %vm7613 = vmand %vm6139, %vm5178
  %vm7614 = vmand %vm6140, %vm5179
  %vm7615 = vmand %vm7551, %vm5244
  %vm7616 = vmand %vm7552, %vm5245
  %vm7617 = vmand %vm7553, %vm5246
  %vm7618 = vmand %vm7554, %vm5247
  %vm7619 = vmand %vm7555, %vm5248
  %vm7620 = vmand %vm7556, %vm5249
  %vm7621 = vmand %vm7557, %vm5250
  %vm7622 = vmand %vm7558, %vm5251
  %vm7623 = vmand %vm7559, %vm5252
  %vm7624 = vmand %vm7560, %vm5253
  %vm7625 = vmand %vm7561, %vm5254
  %vm7626 = vmand %vm7562, %vm5255
  %vm7627 = vmand %vm7563, %vm5256
  %vm7628 = vmand %vm7564, %vm5257
  %vm7629 = vmand %vm7565, %vm5258
  %vm7630 = vmand %vm7566, %vm5259
  %vm7631 = vmand %vm7567, %vm5260
  %vm7632 = vmand %vm7568, %vm5261
  %vm7633 = vmand %vm7569, %vm5262
  %vm7634 = vmand %vm7570, %vm5263
  %vm7635 = vmand %vm7571, %vm5264
  %vm7636 = vmand %vm7572, %vm5265
  %vm7637 = vmand %vm7573, %vm5266
  %vm7638 = vmand %vm7574, %vm5267
  %vm7639 = vmand %vm7575, %vm5268
  %vm7640 = vmand %vm7576, %vm5269
  %vm7641 = vmand %vm7577, %vm5270
  %vm7642 = vmand %vm7578, %vm5271
  %vm7643 = vmand %vm7579, %vm5272
  %vm7644 = vmand %vm7580, %vm5273
  %vm7645 = vmand %vm7581, %vm5274
  %vm7646 = vmand %vm7582, %vm5275
  %vm7647 = vmand %vm7583, %vm5276
  %vm7648 = vmand %vm7584, %vm5277
  %vm7649 = vmand %vm7585, %vm5278
  %vm7650 = vmand %vm7586, %vm5279
  %vm7651 = vmand %vm7587, %vm5280
  %vm7652 = vmand %vm7588, %vm5281
  %vm7653 = vmand %vm7589, %vm5282
  %vm7654 = vmand %vm7590, %vm5283
  %vm7655 = vmand %vm7591, %vm5284
  %vm7656 = vmand %vm7592, %vm5285
  %vm7657 = vmand %vm7593, %vm5286
  %vm7658 = vmand %vm7594, %vm5287
  %vm7659 = vmand %vm7595, %vm5288
  %vm7660 = vmand %vm7596, %vm5289
  %vm7661 = vmand %vm7597, %vm5290
  %vm7662 = vmand %vm7598, %vm5291
  %vm7663 = vmand %vm7599, %vm5292
  %vm7664 = vmand %vm7600, %vm5293
  %vm7665 = vmand %vm7601, %vm5294
  %vm7666 = vmand %vm7602, %vm5295
  %vm7667 = vmand %vm7603, %vm5296
  %vm7668 = vmand %vm7604, %vm5297
  %vm7669 = vmand %vm7605, %vm5298
  %vm7670 = vmand %vm7606, %vm5299
  %vm7671 = vmand %vm7607, %vm5300
  %vm7672 = vmand %vm7608, %vm5301
  %vm7673 = vmand %vm7609, %vm5302
  %vm7674 = vmand %vm7610, %vm5303
  %vm7675 = vmand %vm7611, %vm5304
  %vm7676 = vmand %vm7612, %vm5305
  %vm7677 = vmand %vm7613, %vm5306
  %vm7678 = vmand %vm7614, %vm5307
  %v7679 = vsel %vm7615, 1, 0
  %v7680 = vsel %vm7616, 1, 0
  %v7681 = vsel %vm7617, 1, 0
  %v7682 = vsel %vm7618, 1, 0
  %v7683 = vsel %vm7619, 1, 0
  %v7684 = vsel %vm7620, 1, 0
  %v7685 = vsel %vm7621, 1, 0
  %v7686 = vsel %vm7622, 1, 0
  %v7687 = vsel %vm7623, 1, 0
  %v7688 = vsel %vm7624, 1, 0
  %v7689 = vsel %vm7625, 1, 0
  %v7690 = vsel %vm7626, 1, 0
  %v7691 = vsel %vm7627, 1, 0
  %v7692 = vsel %vm7628, 1, 0
  %v7693 = vsel %vm7629, 1, 0
  %v7694 = vsel %vm7630, 1, 0
  %v7695 = vsel %vm7631, 1, 0
  %v7696 = vsel %vm7632, 1, 0
  %v7697 = vsel %vm7633, 1, 0
  %v7698 = vsel %vm7634, 1, 0
  %v7699 = vsel %vm7635, 1, 0
  %v7700 = vsel %vm7636, 1, 0
  %v7701 = vsel %vm7637, 1, 0
  %v7702 = vsel %vm7638, 1, 0
  %v7703 = vsel %vm7639, 1, 0
  %v7704 = vsel %vm7640, 1, 0
  %v7705 = vsel %vm7641, 1, 0
  %v7706 = vsel %vm7642, 1, 0
  %v7707 = vsel %vm7643, 1, 0
  %v7708 = vsel %vm7644, 1, 0
  %v7709 = vsel %vm7645, 1, 0
  %v7710 = vsel %vm7646, 1, 0
  %v7711 = vsel %vm7647, 1, 0
  %v7712 = vsel %vm7648, 1, 0
  %v7713 = vsel %vm7649, 1, 0
  %v7714 = vsel %vm7650, 1, 0
  %v7715 = vsel %vm7651, 1, 0
  %v7716 = vsel %vm7652, 1, 0
  %v7717 = vsel %vm7653, 1, 0
  %v7718 = vsel %vm7654, 1, 0
  %v7719 = vsel %vm7655, 1, 0
  %v7720 = vsel %vm7656, 1, 0
  %v7721 = vsel %vm7657, 1, 0
  %v7722 = vsel %vm7658, 1, 0
  %v7723 = vsel %vm7659, 1, 0
  %v7724 = vsel %vm7660, 1, 0
  %v7725 = vsel %vm7661, 1, 0
  %v7726 = vsel %vm7662, 1, 0
  %v7727 = vsel %vm7663, 1, 0
  %v7728 = vsel %vm7664, 1, 0
  %v7729 = vsel %vm7665, 1, 0
  %v7730 = vsel %vm7666, 1, 0
  %v7731 = vsel %vm7667, 1, 0
  %v7732 = vsel %vm7668, 1, 0
  %v7733 = vsel %vm7669, 1, 0
  %v7734 = vsel %vm7670, 1, 0
  %v7735 = vsel %vm7671, 1, 0
  %v7736 = vsel %vm7672, 1, 0
  %v7737 = vsel %vm7673, 1, 0
  %v7738 = vsel %vm7674, 1, 0
  %v7739 = vsel %vm7675, 1, 0
  %v7740 = vsel %vm7676, 1, 0
  %v7741 = vsel %vm7677, 1, 0
  %v7742 = vsel %vm7678, 1, 0
  %vm7743 = vcmp.eq.s32.totalorder %v7679, 1
  %vm7744 = vcmp.eq.s32.totalorder %v7680, 1
  %vm7745 = vcmp.eq.s32.totalorder %v7681, 1
  %vm7746 = vcmp.eq.s32.totalorder %v7682, 1
  %vm7747 = vcmp.eq.s32.totalorder %v7683, 1
  %vm7748 = vcmp.eq.s32.totalorder %v7684, 1
  %vm7749 = vcmp.eq.s32.totalorder %v7685, 1
  %vm7750 = vcmp.eq.s32.totalorder %v7686, 1
  %vm7751 = vcmp.eq.s32.totalorder %v7687, 1
  %vm7752 = vcmp.eq.s32.totalorder %v7688, 1
  %vm7753 = vcmp.eq.s32.totalorder %v7689, 1
  %vm7754 = vcmp.eq.s32.totalorder %v7690, 1
  %vm7755 = vcmp.eq.s32.totalorder %v7691, 1
  %vm7756 = vcmp.eq.s32.totalorder %v7692, 1
  %vm7757 = vcmp.eq.s32.totalorder %v7693, 1
  %vm7758 = vcmp.eq.s32.totalorder %v7694, 1
  %vm7759 = vcmp.eq.s32.totalorder %v7695, 1
  %vm7760 = vcmp.eq.s32.totalorder %v7696, 1
  %vm7761 = vcmp.eq.s32.totalorder %v7697, 1
  %vm7762 = vcmp.eq.s32.totalorder %v7698, 1
  %vm7763 = vcmp.eq.s32.totalorder %v7699, 1
  %vm7764 = vcmp.eq.s32.totalorder %v7700, 1
  %vm7765 = vcmp.eq.s32.totalorder %v7701, 1
  %vm7766 = vcmp.eq.s32.totalorder %v7702, 1
  %vm7767 = vcmp.eq.s32.totalorder %v7703, 1
  %vm7768 = vcmp.eq.s32.totalorder %v7704, 1
  %vm7769 = vcmp.eq.s32.totalorder %v7705, 1
  %vm7770 = vcmp.eq.s32.totalorder %v7706, 1
  %vm7771 = vcmp.eq.s32.totalorder %v7707, 1
  %vm7772 = vcmp.eq.s32.totalorder %v7708, 1
  %vm7773 = vcmp.eq.s32.totalorder %v7709, 1
  %vm7774 = vcmp.eq.s32.totalorder %v7710, 1
  %vm7775 = vcmp.eq.s32.totalorder %v7711, 1
  %vm7776 = vcmp.eq.s32.totalorder %v7712, 1
  %vm7777 = vcmp.eq.s32.totalorder %v7713, 1
  %vm7778 = vcmp.eq.s32.totalorder %v7714, 1
  %vm7779 = vcmp.eq.s32.totalorder %v7715, 1
  %vm7780 = vcmp.eq.s32.totalorder %v7716, 1
  %vm7781 = vcmp.eq.s32.totalorder %v7717, 1
  %vm7782 = vcmp.eq.s32.totalorder %v7718, 1
  %vm7783 = vcmp.eq.s32.totalorder %v7719, 1
  %vm7784 = vcmp.eq.s32.totalorder %v7720, 1
  %vm7785 = vcmp.eq.s32.totalorder %v7721, 1
  %vm7786 = vcmp.eq.s32.totalorder %v7722, 1
  %vm7787 = vcmp.eq.s32.totalorder %v7723, 1
  %vm7788 = vcmp.eq.s32.totalorder %v7724, 1
  %vm7789 = vcmp.eq.s32.totalorder %v7725, 1
  %vm7790 = vcmp.eq.s32.totalorder %v7726, 1
  %vm7791 = vcmp.eq.s32.totalorder %v7727, 1
  %vm7792 = vcmp.eq.s32.totalorder %v7728, 1
  %vm7793 = vcmp.eq.s32.totalorder %v7729, 1
  %vm7794 = vcmp.eq.s32.totalorder %v7730, 1
  %vm7795 = vcmp.eq.s32.totalorder %v7731, 1
  %vm7796 = vcmp.eq.s32.totalorder %v7732, 1
  %vm7797 = vcmp.eq.s32.totalorder %v7733, 1
  %vm7798 = vcmp.eq.s32.totalorder %v7734, 1
  %vm7799 = vcmp.eq.s32.totalorder %v7735, 1
  %vm7800 = vcmp.eq.s32.totalorder %v7736, 1
  %vm7801 = vcmp.eq.s32.totalorder %v7737, 1
  %vm7802 = vcmp.eq.s32.totalorder %v7738, 1
  %vm7803 = vcmp.eq.s32.totalorder %v7739, 1
  %vm7804 = vcmp.eq.s32.totalorder %v7740, 1
  %vm7805 = vcmp.eq.s32.totalorder %v7741, 1
  %vm7806 = vcmp.eq.s32.totalorder %v7742, 1
  %v7807 = vsel %vm7743, %v7487, 0.0
  %v7808 = vsel %vm7744, %v7488, 0.0
  %v7809 = vsel %vm7745, %v7489, 0.0
  %v7810 = vsel %vm7746, %v7490, 0.0
  %v7811 = vsel %vm7747, %v7491, 0.0
  %v7812 = vsel %vm7748, %v7492, 0.0
  %v7813 = vsel %vm7749, %v7493, 0.0
  %v7814 = vsel %vm7750, %v7494, 0.0
  %v7815 = vsel %vm7751, %v7495, 0.0
  %v7816 = vsel %vm7752, %v7496, 0.0
  %v7817 = vsel %vm7753, %v7497, 0.0
  %v7818 = vsel %vm7754, %v7498, 0.0
  %v7819 = vsel %vm7755, %v7499, 0.0
  %v7820 = vsel %vm7756, %v7500, 0.0
  %v7821 = vsel %vm7757, %v7501, 0.0
  %v7822 = vsel %vm7758, %v7502, 0.0
  %v7823 = vsel %vm7759, %v7503, 0.0
  %v7824 = vsel %vm7760, %v7504, 0.0
  %v7825 = vsel %vm7761, %v7505, 0.0
  %v7826 = vsel %vm7762, %v7506, 0.0
  %v7827 = vsel %vm7763, %v7507, 0.0
  %v7828 = vsel %vm7764, %v7508, 0.0
  %v7829 = vsel %vm7765, %v7509, 0.0
  %v7830 = vsel %vm7766, %v7510, 0.0
  %v7831 = vsel %vm7767, %v7511, 0.0
  %v7832 = vsel %vm7768, %v7512, 0.0
  %v7833 = vsel %vm7769, %v7513, 0.0
  %v7834 = vsel %vm7770, %v7514, 0.0
  %v7835 = vsel %vm7771, %v7515, 0.0
  %v7836 = vsel %vm7772, %v7516, 0.0
  %v7837 = vsel %vm7773, %v7517, 0.0
  %v7838 = vsel %vm7774, %v7518, 0.0
  %v7839 = vsel %vm7775, %v7519, 0.0
  %v7840 = vsel %vm7776, %v7520, 0.0
  %v7841 = vsel %vm7777, %v7521, 0.0
  %v7842 = vsel %vm7778, %v7522, 0.0
  %v7843 = vsel %vm7779, %v7523, 0.0
  %v7844 = vsel %vm7780, %v7524, 0.0
  %v7845 = vsel %vm7781, %v7525, 0.0
  %v7846 = vsel %vm7782, %v7526, 0.0
  %v7847 = vsel %vm7783, %v7527, 0.0
  %v7848 = vsel %vm7784, %v7528, 0.0
  %v7849 = vsel %vm7785, %v7529, 0.0
  %v7850 = vsel %vm7786, %v7530, 0.0
  %v7851 = vsel %vm7787, %v7531, 0.0
  %v7852 = vsel %vm7788, %v7532, 0.0
  %v7853 = vsel %vm7789, %v7533, 0.0
  %v7854 = vsel %vm7790, %v7534, 0.0
  %v7855 = vsel %vm7791, %v7535, 0.0
  %v7856 = vsel %vm7792, %v7536, 0.0
  %v7857 = vsel %vm7793, %v7537, 0.0
  %v7858 = vsel %vm7794, %v7538, 0.0
  %v7859 = vsel %vm7795, %v7539, 0.0
  %v7860 = vsel %vm7796, %v7540, 0.0
  %v7861 = vsel %vm7797, %v7541, 0.0
  %v7862 = vsel %vm7798, %v7542, 0.0
  %v7863 = vsel %vm7799, %v7543, 0.0
  %v7864 = vsel %vm7800, %v7544, 0.0
  %v7865 = vsel %vm7801, %v7545, 0.0
  %v7866 = vsel %vm7802, %v7546, 0.0
  %v7867 = vsel %vm7803, %v7547, 0.0
  %v7868 = vsel %vm7804, %v7548, 0.0
  %v7869 = vsel %vm7805, %v7549, 0.0
  %v7870 = vsel %vm7806, %v7550, 0.0
  %7935 = vrot.lane.b32.xlu0 %v7807, 80
  %v7936 = vpop.permute.xlu0 %7935
  %7937 = vrot.lane.b32.xlu0 %v7808, 80
  %v7938 = vpop.permute.xlu0 %7937
  %7939 = vrot.lane.b32.xlu0 %v7809, 80
  %v7940 = vpop.permute.xlu0 %7939
  %7941 = vrot.lane.b32.xlu0 %v7810, 80
  %v7942 = vpop.permute.xlu0 %7941
  %7943 = vrot.lane.b32.xlu0 %v7811, 80
  %v7944 = vpop.permute.xlu0 %7943
  %7945 = vrot.lane.b32.xlu0 %v7812, 80
  %v7946 = vpop.permute.xlu0 %7945
  %7947 = vrot.lane.b32.xlu0 %v7813, 80
  %v7948 = vpop.permute.xlu0 %7947
  %7949 = vrot.lane.b32.xlu0 %v7814, 80
  %v7950 = vpop.permute.xlu0 %7949
  %7951 = vrot.lane.b32.xlu0 %v7815, 80
  %v7952 = vpop.permute.xlu0 %7951
  %7953 = vrot.lane.b32.xlu0 %v7816, 80
  %v7954 = vpop.permute.xlu0 %7953
  %7955 = vrot.lane.b32.xlu0 %v7817, 80
  %v7956 = vpop.permute.xlu0 %7955
  %7957 = vrot.lane.b32.xlu0 %v7818, 80
  %v7958 = vpop.permute.xlu0 %7957
  %7959 = vrot.lane.b32.xlu0 %v7819, 80
  %v7960 = vpop.permute.xlu0 %7959
  %7961 = vrot.lane.b32.xlu0 %v7820, 80
  %v7962 = vpop.permute.xlu0 %7961
  %7963 = vrot.lane.b32.xlu0 %v7821, 80
  %v7964 = vpop.permute.xlu0 %7963
  %7965 = vrot.lane.b32.xlu0 %v7822, 80
  %v7966 = vpop.permute.xlu0 %7965
  %7967 = vrot.lane.b32.xlu0 %v7823, 80
  %v7968 = vpop.permute.xlu0 %7967
  %7969 = vrot.lane.b32.xlu0 %v7824, 80
  %v7970 = vpop.permute.xlu0 %7969
  %7971 = vrot.lane.b32.xlu0 %v7825, 80
  %v7972 = vpop.permute.xlu0 %7971
  %7973 = vrot.lane.b32.xlu0 %v7826, 80
  %v7974 = vpop.permute.xlu0 %7973
  %7975 = vrot.lane.b32.xlu0 %v7827, 80
  %v7976 = vpop.permute.xlu0 %7975
  %7977 = vrot.lane.b32.xlu0 %v7828, 80
  %v7978 = vpop.permute.xlu0 %7977
  %7979 = vrot.lane.b32.xlu0 %v7829, 80
  %v7980 = vpop.permute.xlu0 %7979
  %7981 = vrot.lane.b32.xlu0 %v7830, 80
  %v7982 = vpop.permute.xlu0 %7981
  %7983 = vrot.lane.b32.xlu0 %v7831, 80
  %v7984 = vpop.permute.xlu0 %7983
  %7985 = vrot.lane.b32.xlu0 %v7832, 80
  %v7986 = vpop.permute.xlu0 %7985
  %7987 = vrot.lane.b32.xlu0 %v7833, 80
  %v7988 = vpop.permute.xlu0 %7987
  %7989 = vrot.lane.b32.xlu0 %v7834, 80
  %v7990 = vpop.permute.xlu0 %7989
  %7991 = vrot.lane.b32.xlu0 %v7835, 80
  %v7992 = vpop.permute.xlu0 %7991
  %7993 = vrot.lane.b32.xlu0 %v7836, 80
  %v7994 = vpop.permute.xlu0 %7993
  %7995 = vrot.lane.b32.xlu0 %v7837, 80
  %v7996 = vpop.permute.xlu0 %7995
  %7997 = vrot.lane.b32.xlu0 %v7838, 80
  %v7998 = vpop.permute.xlu0 %7997
  %7999 = vrot.lane.b32.xlu0 %v7839, 80
  %v8000 = vpop.permute.xlu0 %7999
  %8001 = vrot.lane.b32.xlu0 %v7840, 80
  %v8002 = vpop.permute.xlu0 %8001
  %8003 = vrot.lane.b32.xlu0 %v7841, 80
  %v8004 = vpop.permute.xlu0 %8003
  %8005 = vrot.lane.b32.xlu0 %v7842, 80
  %v8006 = vpop.permute.xlu0 %8005
  %8007 = vrot.lane.b32.xlu0 %v7843, 80
  %v8008 = vpop.permute.xlu0 %8007
  %8009 = vrot.lane.b32.xlu0 %v7844, 80
  %v8010 = vpop.permute.xlu0 %8009
  %8011 = vrot.lane.b32.xlu0 %v7845, 80
  %v8012 = vpop.permute.xlu0 %8011
  %8013 = vrot.lane.b32.xlu0 %v7846, 80
  %v8014 = vpop.permute.xlu0 %8013
  %8015 = vrot.lane.b32.xlu0 %v7847, 80
  %v8016 = vpop.permute.xlu0 %8015
  %8017 = vrot.lane.b32.xlu0 %v7848, 80
  %v8018 = vpop.permute.xlu0 %8017
  %8019 = vrot.lane.b32.xlu0 %v7849, 80
  %v8020 = vpop.permute.xlu0 %8019
  %8021 = vrot.lane.b32.xlu0 %v7850, 80
  %v8022 = vpop.permute.xlu0 %8021
  %8023 = vrot.lane.b32.xlu0 %v7851, 80
  %v8024 = vpop.permute.xlu0 %8023
  %8025 = vrot.lane.b32.xlu0 %v7852, 80
  %v8026 = vpop.permute.xlu0 %8025
  %8027 = vrot.lane.b32.xlu0 %v7853, 80
  %v8028 = vpop.permute.xlu0 %8027
  %8029 = vrot.lane.b32.xlu0 %v7854, 80
  %v8030 = vpop.permute.xlu0 %8029
  %8031 = vrot.lane.b32.xlu0 %v7855, 80
  %v8032 = vpop.permute.xlu0 %8031
  %8033 = vrot.lane.b32.xlu0 %v7856, 80
  %v8034 = vpop.permute.xlu0 %8033
  %8035 = vrot.lane.b32.xlu0 %v7857, 80
  %v8036 = vpop.permute.xlu0 %8035
  %8037 = vrot.lane.b32.xlu0 %v7858, 80
  %v8038 = vpop.permute.xlu0 %8037
  %8039 = vrot.lane.b32.xlu0 %v7859, 80
  %v8040 = vpop.permute.xlu0 %8039
  %8041 = vrot.lane.b32.xlu0 %v7860, 80
  %v8042 = vpop.permute.xlu0 %8041
  %8043 = vrot.lane.b32.xlu0 %v7861, 80
  %v8044 = vpop.permute.xlu0 %8043
  %8045 = vrot.lane.b32.xlu0 %v7862, 80
  %v8046 = vpop.permute.xlu0 %8045
  %8047 = vrot.lane.b32.xlu0 %v7863, 80
  %v8048 = vpop.permute.xlu0 %8047
  %8049 = vrot.lane.b32.xlu0 %v7864, 80
  %v8050 = vpop.permute.xlu0 %8049
  %8051 = vrot.lane.b32.xlu0 %v7865, 80
  %v8052 = vpop.permute.xlu0 %8051
  %8053 = vrot.lane.b32.xlu0 %v7866, 80
  %v8054 = vpop.permute.xlu0 %8053
  %8055 = vrot.lane.b32.xlu0 %v7867, 80
  %v8056 = vpop.permute.xlu0 %8055
  %8057 = vrot.lane.b32.xlu0 %v7868, 80
  %v8058 = vpop.permute.xlu0 %8057
  %8059 = vrot.lane.b32.xlu0 %v7869, 80
  %v8060 = vpop.permute.xlu0 %8059
  %8061 = vrot.lane.b32.xlu0 %v7870, 80
  %v8062 = vpop.permute.xlu0 %8061
  %vm8127 = vcmask 786048
  %8128 = vst.msk [vmem:[#allocation3] sm:$0xff] %vm8127, %v7936
  %8129 = vst.msk [vmem:[#allocation3 + $0x10] sm:$0xff] %vm8127, %v7938
  %8130 = vst.msk [vmem:[#allocation3 + $0x20] sm:$0xff] %vm8127, %v7940
  %8131 = vst.msk [vmem:[#allocation3 + $0x30] sm:$0xff] %vm8127, %v7942
  %8132 = vst.msk [vmem:[#allocation3 + $0x40] sm:$0xff] %vm8127, %v7944
  %8133 = vst.msk [vmem:[#allocation3 + $0x50] sm:$0xff] %vm8127, %v7946
  %8134 = vst.msk [vmem:[#allocation3 + $0x60] sm:$0xff] %vm8127, %v7948
  %8135 = vst.msk [vmem:[#allocation3 + $0x70] sm:$0xff] %vm8127, %v7950
  %8136 = vst.msk [vmem:[#allocation3 + $0x80] sm:$0xff] %vm8127, %v7952
  %8137 = vst.msk [vmem:[#allocation3 + $0x90] sm:$0xff] %vm8127, %v7954
  %8138 = vst.msk [vmem:[#allocation3 + $0xa0] sm:$0xff] %vm8127, %v7956
  %8139 = vst.msk [vmem:[#allocation3 + $0xb0] sm:$0xff] %vm8127, %v7958
  %8140 = vst.msk [vmem:[#allocation3 + $0xc0] sm:$0xff] %vm8127, %v7960
  %8141 = vst.msk [vmem:[#allocation3 + $0xd0] sm:$0xff] %vm8127, %v7962
  %8142 = vst.msk [vmem:[#allocation3 + $0xe0] sm:$0xff] %vm8127, %v7964
  %8143 = vst.msk [vmem:[#allocation3 + $0xf0] sm:$0xff] %vm8127, %v7966
  %8144 = vst.msk [vmem:[#allocation3 + $0x100] sm:$0xff] %vm8127, %v7968
  %8145 = vst.msk [vmem:[#allocation3 + $0x110] sm:$0xff] %vm8127, %v7970
  %8146 = vst.msk [vmem:[#allocation3 + $0x120] sm:$0xff] %vm8127, %v7972
  %8147 = vst.msk [vmem:[#allocation3 + $0x130] sm:$0xff] %vm8127, %v7974
  %8148 = vst.msk [vmem:[#allocation3 + $0x140] sm:$0xff] %vm8127, %v7976
  %8149 = vst.msk [vmem:[#allocation3 + $0x150] sm:$0xff] %vm8127, %v7978
  %8150 = vst.msk [vmem:[#allocation3 + $0x160] sm:$0xff] %vm8127, %v7980
  %8151 = vst.msk [vmem:[#allocation3 + $0x170] sm:$0xff] %vm8127, %v7982
  %8152 = vst.msk [vmem:[#allocation3 + $0x180] sm:$0xff] %vm8127, %v7984
  %8153 = vst.msk [vmem:[#allocation3 + $0x190] sm:$0xff] %vm8127, %v7986
  %8154 = vst.msk [vmem:[#allocation3 + $0x1a0] sm:$0xff] %vm8127, %v7988
  %8155 = vst.msk [vmem:[#allocation3 + $0x1b0] sm:$0xff] %vm8127, %v7990
  %8156 = vst.msk [vmem:[#allocation3 + $0x1c0] sm:$0xff] %vm8127, %v7992
  %8157 = vst.msk [vmem:[#allocation3 + $0x1d0] sm:$0xff] %vm8127, %v7994
  %8158 = vst.msk [vmem:[#allocation3 + $0x1e0] sm:$0xff] %vm8127, %v7996
  %8159 = vst.msk [vmem:[#allocation3 + $0x1f0] sm:$0xff] %vm8127, %v7998
  %8160 = vst.msk [vmem:[#allocation3 + $0x200] sm:$0xff] %vm8127, %v8000
  %8161 = vst.msk [vmem:[#allocation3 + $0x210] sm:$0xff] %vm8127, %v8002
  %8162 = vst.msk [vmem:[#allocation3 + $0x220] sm:$0xff] %vm8127, %v8004
  %8163 = vst.msk [vmem:[#allocation3 + $0x230] sm:$0xff] %vm8127, %v8006
  %8164 = vst.msk [vmem:[#allocation3 + $0x240] sm:$0xff] %vm8127, %v8008
  %8165 = vst.msk [vmem:[#allocation3 + $0x250] sm:$0xff] %vm8127, %v8010
  %8166 = vst.msk [vmem:[#allocation3 + $0x260] sm:$0xff] %vm8127, %v8012
  %8167 = vst.msk [vmem:[#allocation3 + $0x270] sm:$0xff] %vm8127, %v8014
  %8168 = vst.msk [vmem:[#allocation3 + $0x280] sm:$0xff] %vm8127, %v8016
  %8169 = vst.msk [vmem:[#allocation3 + $0x290] sm:$0xff] %vm8127, %v8018
  %8170 = vst.msk [vmem:[#allocation3 + $0x2a0] sm:$0xff] %vm8127, %v8020
  %8171 = vst.msk [vmem:[#allocation3 + $0x2b0] sm:$0xff] %vm8127, %v8022
  %8172 = vst.msk [vmem:[#allocation3 + $0x2c0] sm:$0xff] %vm8127, %v8024
  %8173 = vst.msk [vmem:[#allocation3 + $0x2d0] sm:$0xff] %vm8127, %v8026
  %8174 = vst.msk [vmem:[#allocation3 + $0x2e0] sm:$0xff] %vm8127, %v8028
  %8175 = vst.msk [vmem:[#allocation3 + $0x2f0] sm:$0xff] %vm8127, %v8030
  %8176 = vst.msk [vmem:[#allocation3 + $0x300] sm:$0xff] %vm8127, %v8032
  %8177 = vst.msk [vmem:[#allocation3 + $0x310] sm:$0xff] %vm8127, %v8034
  %8178 = vst.msk [vmem:[#allocation3 + $0x320] sm:$0xff] %vm8127, %v8036
  %8179 = vst.msk [vmem:[#allocation3 + $0x330] sm:$0xff] %vm8127, %v8038
  %8180 = vst.msk [vmem:[#allocation3 + $0x340] sm:$0xff] %vm8127, %v8040
  %8181 = vst.msk [vmem:[#allocation3 + $0x350] sm:$0xff] %vm8127, %v8042
  %8182 = vst.msk [vmem:[#allocation3 + $0x360] sm:$0xff] %vm8127, %v8044
  %8183 = vst.msk [vmem:[#allocation3 + $0x370] sm:$0xff] %vm8127, %v8046
  %8184 = vst.msk [vmem:[#allocation3 + $0x380] sm:$0xff] %vm8127, %v8048
  %8185 = vst.msk [vmem:[#allocation3 + $0x390] sm:$0xff] %vm8127, %v8050
  %8186 = vst.msk [vmem:[#allocation3 + $0x3a0] sm:$0xff] %vm8127, %v8052
  %8187 = vst.msk [vmem:[#allocation3 + $0x3b0] sm:$0xff] %vm8127, %v8054
  %8188 = vst.msk [vmem:[#allocation3 + $0x3c0] sm:$0xff] %vm8127, %v8056
  %8189 = vst.msk [vmem:[#allocation3 + $0x3d0] sm:$0xff] %vm8127, %v8058
  %8190 = vst.msk [vmem:[#allocation3 + $0x3e0] sm:$0xff] %vm8127, %v8060
  %8191 = vst.msk [vmem:[#allocation3 + $0x3f0] sm:$0xff] %vm8127, %v8062
  %v8192 = vld [vmem:[#allocation2 + $0x27] sm:$0xff]
  %v8193 = vld [vmem:[#allocation2 + $0x2f] sm:$0xff]
  %v8194 = vld [vmem:[#allocation2 + $0x37] sm:$0xff]
  %v8195 = vld [vmem:[#allocation2 + $0x3f] sm:$0xff]
  %v8196 = vld [vmem:[#allocation2 + $0x47] sm:$0xff]
  %v8197 = vld [vmem:[#allocation2 + $0x4f] sm:$0xff]
  %v8198 = vld [vmem:[#allocation2 + $0x57] sm:$0xff]
  %v8199 = vld [vmem:[#allocation2 + $0x5f] sm:$0xff]
  %v8200 = vld [vmem:[#allocation2 + $0x67] sm:$0xff]
  %v8201 = vld [vmem:[#allocation2 + $0x6f] sm:$0xff]
  %v8202 = vld [vmem:[#allocation2 + $0x77] sm:$0xff]
  %v8203 = vld [vmem:[#allocation2 + $0x7f] sm:$0xff]
  %v8204 = vld [vmem:[#allocation2 + $0x87] sm:$0xff]
  %v8205 = vld [vmem:[#allocation2 + $0x8f] sm:$0xff]
  %v8206 = vld [vmem:[#allocation2 + $0x97] sm:$0xff]
  %v8207 = vld [vmem:[#allocation2 + $0x9f] sm:$0xff]
  %v8208 = vld [vmem:[#allocation2 + $0xa7] sm:$0xff]
  %v8209 = vld [vmem:[#allocation2 + $0xaf] sm:$0xff]
  %v8210 = vld [vmem:[#allocation2 + $0xb7] sm:$0xff]
  %v8211 = vld [vmem:[#allocation2 + $0xbf] sm:$0xff]
  %v8212 = vld [vmem:[#allocation2 + $0xc7] sm:$0xff]
  %v8213 = vld [vmem:[#allocation2 + $0xcf] sm:$0xff]
  %v8214 = vld [vmem:[#allocation2 + $0xd7] sm:$0xff]
  %v8215 = vld [vmem:[#allocation2 + $0xdf] sm:$0xff]
  %v8216 = vld [vmem:[#allocation2 + $0xe7] sm:$0xff]
  %v8217 = vld [vmem:[#allocation2 + $0xef] sm:$0xff]
  %v8218 = vld [vmem:[#allocation2 + $0xf7] sm:$0xff]
  %v8219 = vld [vmem:[#allocation2 + $0xff] sm:$0xff]
  %v8220 = vld [vmem:[#allocation2 + $0x107] sm:$0xff]
  %v8221 = vld [vmem:[#allocation2 + $0x10f] sm:$0xff]
  %v8222 = vld [vmem:[#allocation2 + $0x117] sm:$0xff]
  %v8223 = vld [vmem:[#allocation2 + $0x11f] sm:$0xff]
  %v8224 = vld [vmem:[#allocation2 + $0x127] sm:$0xff]
  %v8225 = vld [vmem:[#allocation2 + $0x12f] sm:$0xff]
  %v8226 = vld [vmem:[#allocation2 + $0x137] sm:$0xff]
  %v8227 = vld [vmem:[#allocation2 + $0x13f] sm:$0xff]
  %v8228 = vld [vmem:[#allocation2 + $0x147] sm:$0xff]
  %v8229 = vld [vmem:[#allocation2 + $0x14f] sm:$0xff]
  %v8230 = vld [vmem:[#allocation2 + $0x157] sm:$0xff]
  %v8231 = vld [vmem:[#allocation2 + $0x15f] sm:$0xff]
  %v8232 = vld [vmem:[#allocation2 + $0x167] sm:$0xff]
  %v8233 = vld [vmem:[#allocation2 + $0x16f] sm:$0xff]
  %v8234 = vld [vmem:[#allocation2 + $0x177] sm:$0xff]
  %v8235 = vld [vmem:[#allocation2 + $0x17f] sm:$0xff]
  %v8236 = vld [vmem:[#allocation2 + $0x187] sm:$0xff]
  %v8237 = vld [vmem:[#allocation2 + $0x18f] sm:$0xff]
  %v8238 = vld [vmem:[#allocation2 + $0x197] sm:$0xff]
  %v8239 = vld [vmem:[#allocation2 + $0x19f] sm:$0xff]
  %v8240 = vld [vmem:[#allocation2 + $0x1a7] sm:$0xff]
  %v8241 = vld [vmem:[#allocation2 + $0x1af] sm:$0xff]
  %v8242 = vld [vmem:[#allocation2 + $0x1b7] sm:$0xff]
  %v8243 = vld [vmem:[#allocation2 + $0x1bf] sm:$0xff]
  %v8244 = vld [vmem:[#allocation2 + $0x1c7] sm:$0xff]
  %v8245 = vld [vmem:[#allocation2 + $0x1cf] sm:$0xff]
  %v8246 = vld [vmem:[#allocation2 + $0x1d7] sm:$0xff]
  %v8247 = vld [vmem:[#allocation2 + $0x1df] sm:$0xff]
  %v8248 = vld [vmem:[#allocation2 + $0x1e7] sm:$0xff]
  %v8249 = vld [vmem:[#allocation2 + $0x1ef] sm:$0xff]
  %v8250 = vld [vmem:[#allocation2 + $0x1f7] sm:$0xff]
  %v8251 = vld [vmem:[#allocation2 + $0x1ff] sm:$0xff]
  %v8252 = vld [vmem:[#allocation2 + $0x207] sm:$0xff]
  %v8253 = vld [vmem:[#allocation2 + $0x20f] sm:$0xff]
  %v8254 = vld [vmem:[#allocation2 + $0x217] sm:$0xff]
  %v8255 = vld [vmem:[#allocation2 + $0x21f] sm:$0xff]
  %v8256 = vadd.s32 %v3195, 16
  %v8257 = vadd.s32 %v3196, 16
  %v8258 = vadd.s32 %v3197, 16
  %v8259 = vadd.s32 %v3198, 16
  %v8260 = vadd.s32 %v3199, 16
  %v8261 = vadd.s32 %v3200, 16
  %v8262 = vadd.s32 %v3201, 16
  %v8263 = vadd.s32 %v3202, 16
  %v8264 = vadd.s32 %v3203, 16
  %v8265 = vadd.s32 %v3204, 16
  %v8266 = vadd.s32 %v3205, 16
  %v8267 = vadd.s32 %v3206, 16
  %v8268 = vadd.s32 %v3207, 16
  %v8269 = vadd.s32 %v3208, 16
  %v8270 = vadd.s32 %v3209, 16
  %v8271 = vadd.s32 %v3210, 16
  %v8272 = vadd.s32 %v3211, 16
  %v8273 = vadd.s32 %v3212, 16
  %v8274 = vadd.s32 %v3213, 16
  %v8275 = vadd.s32 %v3214, 16
  %v8276 = vadd.s32 %v3215, 16
  %v8277 = vadd.s32 %v3216, 16
  %v8278 = vadd.s32 %v3217, 16
  %v8279 = vadd.s32 %v3218, 16
  %v8280 = vadd.s32 %v3219, 16
  %v8281 = vadd.s32 %v3220, 16
  %v8282 = vadd.s32 %v3221, 16
  %v8283 = vadd.s32 %v3222, 16
  %v8284 = vadd.s32 %v3223, 16
  %v8285 = vadd.s32 %v3224, 16
  %v8286 = vadd.s32 %v3225, 16
  %v8287 = vadd.s32 %v3226, 16
  %v8288 = vadd.s32 %v3227, 16
  %v8289 = vadd.s32 %v3228, 16
  %v8290 = vadd.s32 %v3229, 16
  %v8291 = vadd.s32 %v3230, 16
  %v8292 = vadd.s32 %v3231, 16
  %v8293 = vadd.s32 %v3232, 16
  %v8294 = vadd.s32 %v3233, 16
  %v8295 = vadd.s32 %v3234, 16
  %v8296 = vadd.s32 %v3235, 16
  %v8297 = vadd.s32 %v3236, 16
  %v8298 = vadd.s32 %v3237, 16
  %v8299 = vadd.s32 %v3238, 16
  %v8300 = vadd.s32 %v3239, 16
  %v8301 = vadd.s32 %v3240, 16
  %v8302 = vadd.s32 %v3241, 16
  %v8303 = vadd.s32 %v3242, 16
  %v8304 = vadd.s32 %v3243, 16
  %v8305 = vadd.s32 %v3244, 16
  %v8306 = vadd.s32 %v3245, 16
  %v8307 = vadd.s32 %v3246, 16
  %v8308 = vadd.s32 %v3247, 16
  %v8309 = vadd.s32 %v3248, 16
  %v8310 = vadd.s32 %v3249, 16
  %v8311 = vadd.s32 %v3250, 16
  %v8312 = vadd.s32 %v3251, 16
  %v8313 = vadd.s32 %v3252, 16
  %v8314 = vadd.s32 %v3253, 16
  %v8315 = vadd.s32 %v3254, 16
  %v8316 = vadd.s32 %v3255, 16
  %v8317 = vadd.s32 %v3256, 16
  %v8318 = vadd.s32 %v3257, 16
  %v8319 = vadd.s32 %v3258, 16
  %vm8320 = vcmp.ge.s32.totalorder %v8256, 0
  %vm8321 = vcmp.ge.s32.totalorder %v8257, 0
  %vm8322 = vcmp.ge.s32.totalorder %v8258, 0
  %vm8323 = vcmp.ge.s32.totalorder %v8259, 0
  %vm8324 = vcmp.ge.s32.totalorder %v8260, 0
  %vm8325 = vcmp.ge.s32.totalorder %v8261, 0
  %vm8326 = vcmp.ge.s32.totalorder %v8262, 0
  %vm8327 = vcmp.ge.s32.totalorder %v8263, 0
  %vm8328 = vcmp.ge.s32.totalorder %v8264, 0
  %vm8329 = vcmp.ge.s32.totalorder %v8265, 0
  %vm8330 = vcmp.ge.s32.totalorder %v8266, 0
  %vm8331 = vcmp.ge.s32.totalorder %v8267, 0
  %vm8332 = vcmp.ge.s32.totalorder %v8268, 0
  %vm8333 = vcmp.ge.s32.totalorder %v8269, 0
  %vm8334 = vcmp.ge.s32.totalorder %v8270, 0
  %vm8335 = vcmp.ge.s32.totalorder %v8271, 0
  %vm8336 = vcmp.ge.s32.totalorder %v8272, 0
  %vm8337 = vcmp.ge.s32.totalorder %v8273, 0
  %vm8338 = vcmp.ge.s32.totalorder %v8274, 0
  %vm8339 = vcmp.ge.s32.totalorder %v8275, 0
  %vm8340 = vcmp.ge.s32.totalorder %v8276, 0
  %vm8341 = vcmp.ge.s32.totalorder %v8277, 0
  %vm8342 = vcmp.ge.s32.totalorder %v8278, 0
  %vm8343 = vcmp.ge.s32.totalorder %v8279, 0
  %vm8344 = vcmp.ge.s32.totalorder %v8280, 0
  %vm8345 = vcmp.ge.s32.totalorder %v8281, 0
  %vm8346 = vcmp.ge.s32.totalorder %v8282, 0
  %vm8347 = vcmp.ge.s32.totalorder %v8283, 0
  %vm8348 = vcmp.ge.s32.totalorder %v8284, 0
  %vm8349 = vcmp.ge.s32.totalorder %v8285, 0
  %vm8350 = vcmp.ge.s32.totalorder %v8286, 0
  %vm8351 = vcmp.ge.s32.totalorder %v8287, 0
  %vm8352 = vcmp.ge.s32.totalorder %v8288, 0
  %vm8353 = vcmp.ge.s32.totalorder %v8289, 0
  %vm8354 = vcmp.ge.s32.totalorder %v8290, 0
  %vm8355 = vcmp.ge.s32.totalorder %v8291, 0
  %vm8356 = vcmp.ge.s32.totalorder %v8292, 0
  %vm8357 = vcmp.ge.s32.totalorder %v8293, 0
  %vm8358 = vcmp.ge.s32.totalorder %v8294, 0
  %vm8359 = vcmp.ge.s32.totalorder %v8295, 0
  %vm8360 = vcmp.ge.s32.totalorder %v8296, 0
  %vm8361 = vcmp.ge.s32.totalorder %v8297, 0
  %vm8362 = vcmp.ge.s32.totalorder %v8298, 0
  %vm8363 = vcmp.ge.s32.totalorder %v8299, 0
  %vm8364 = vcmp.ge.s32.totalorder %v8300, 0
  %vm8365 = vcmp.ge.s32.totalorder %v8301, 0
  %vm8366 = vcmp.ge.s32.totalorder %v8302, 0
  %vm8367 = vcmp.ge.s32.totalorder %v8303, 0
  %vm8368 = vcmp.ge.s32.totalorder %v8304, 0
  %vm8369 = vcmp.ge.s32.totalorder %v8305, 0
  %vm8370 = vcmp.ge.s32.totalorder %v8306, 0
  %vm8371 = vcmp.ge.s32.totalorder %v8307, 0
  %vm8372 = vcmp.ge.s32.totalorder %v8308, 0
  %vm8373 = vcmp.ge.s32.totalorder %v8309, 0
  %vm8374 = vcmp.ge.s32.totalorder %v8310, 0
  %vm8375 = vcmp.ge.s32.totalorder %v8311, 0
  %vm8376 = vcmp.ge.s32.totalorder %v8312, 0
  %vm8377 = vcmp.ge.s32.totalorder %v8313, 0
  %vm8378 = vcmp.ge.s32.totalorder %v8314, 0
  %vm8379 = vcmp.ge.s32.totalorder %v8315, 0
  %vm8380 = vcmp.ge.s32.totalorder %v8316, 0
  %vm8381 = vcmp.ge.s32.totalorder %v8317, 0
  %vm8382 = vcmp.ge.s32.totalorder %v8318, 0
  %vm8383 = vcmp.ge.s32.totalorder %v8319, 0
  %vm8384 = vcmp.lt.s32.totalorder %v8256, 256
  %vm8385 = vcmp.lt.s32.totalorder %v8257, 256
  %vm8386 = vcmp.lt.s32.totalorder %v8258, 256
  %vm8387 = vcmp.lt.s32.totalorder %v8259, 256
  %vm8388 = vcmp.lt.s32.totalorder %v8260, 256
  %vm8389 = vcmp.lt.s32.totalorder %v8261, 256
  %vm8390 = vcmp.lt.s32.totalorder %v8262, 256
  %vm8391 = vcmp.lt.s32.totalorder %v8263, 256
  %vm8392 = vcmp.lt.s32.totalorder %v8264, 256
  %vm8393 = vcmp.lt.s32.totalorder %v8265, 256
  %vm8394 = vcmp.lt.s32.totalorder %v8266, 256
  %vm8395 = vcmp.lt.s32.totalorder %v8267, 256
  %vm8396 = vcmp.lt.s32.totalorder %v8268, 256
  %vm8397 = vcmp.lt.s32.totalorder %v8269, 256
  %vm8398 = vcmp.lt.s32.totalorder %v8270, 256
  %vm8399 = vcmp.lt.s32.totalorder %v8271, 256
  %vm8400 = vcmp.lt.s32.totalorder %v8272, 256
  %vm8401 = vcmp.lt.s32.totalorder %v8273, 256
  %vm8402 = vcmp.lt.s32.totalorder %v8274, 256
  %vm8403 = vcmp.lt.s32.totalorder %v8275, 256
  %vm8404 = vcmp.lt.s32.totalorder %v8276, 256
  %vm8405 = vcmp.lt.s32.totalorder %v8277, 256
  %vm8406 = vcmp.lt.s32.totalorder %v8278, 256
  %vm8407 = vcmp.lt.s32.totalorder %v8279, 256
  %vm8408 = vcmp.lt.s32.totalorder %v8280, 256
  %vm8409 = vcmp.lt.s32.totalorder %v8281, 256
  %vm8410 = vcmp.lt.s32.totalorder %v8282, 256
  %vm8411 = vcmp.lt.s32.totalorder %v8283, 256
  %vm8412 = vcmp.lt.s32.totalorder %v8284, 256
  %vm8413 = vcmp.lt.s32.totalorder %v8285, 256
  %vm8414 = vcmp.lt.s32.totalorder %v8286, 256
  %vm8415 = vcmp.lt.s32.totalorder %v8287, 256
  %vm8416 = vcmp.lt.s32.totalorder %v8288, 256
  %vm8417 = vcmp.lt.s32.totalorder %v8289, 256
  %vm8418 = vcmp.lt.s32.totalorder %v8290, 256
  %vm8419 = vcmp.lt.s32.totalorder %v8291, 256
  %vm8420 = vcmp.lt.s32.totalorder %v8292, 256
  %vm8421 = vcmp.lt.s32.totalorder %v8293, 256
  %vm8422 = vcmp.lt.s32.totalorder %v8294, 256
  %vm8423 = vcmp.lt.s32.totalorder %v8295, 256
  %vm8424 = vcmp.lt.s32.totalorder %v8296, 256
  %vm8425 = vcmp.lt.s32.totalorder %v8297, 256
  %vm8426 = vcmp.lt.s32.totalorder %v8298, 256
  %vm8427 = vcmp.lt.s32.totalorder %v8299, 256
  %vm8428 = vcmp.lt.s32.totalorder %v8300, 256
  %vm8429 = vcmp.lt.s32.totalorder %v8301, 256
  %vm8430 = vcmp.lt.s32.totalorder %v8302, 256
  %vm8431 = vcmp.lt.s32.totalorder %v8303, 256
  %vm8432 = vcmp.lt.s32.totalorder %v8304, 256
  %vm8433 = vcmp.lt.s32.totalorder %v8305, 256
  %vm8434 = vcmp.lt.s32.totalorder %v8306, 256
  %vm8435 = vcmp.lt.s32.totalorder %v8307, 256
  %vm8436 = vcmp.lt.s32.totalorder %v8308, 256
  %vm8437 = vcmp.lt.s32.totalorder %v8309, 256
  %vm8438 = vcmp.lt.s32.totalorder %v8310, 256
  %vm8439 = vcmp.lt.s32.totalorder %v8311, 256
  %vm8440 = vcmp.lt.s32.totalorder %v8312, 256
  %vm8441 = vcmp.lt.s32.totalorder %v8313, 256
  %vm8442 = vcmp.lt.s32.totalorder %v8314, 256
  %vm8443 = vcmp.lt.s32.totalorder %v8315, 256
  %vm8444 = vcmp.lt.s32.totalorder %v8316, 256
  %vm8445 = vcmp.lt.s32.totalorder %v8317, 256
  %vm8446 = vcmp.lt.s32.totalorder %v8318, 256
  %vm8447 = vcmp.lt.s32.totalorder %v8319, 256
  %vm8448 = vmand %vm8320, %vm8384
  %vm8449 = vmand %vm8321, %vm8385
  %vm8450 = vmand %vm8322, %vm8386
  %vm8451 = vmand %vm8323, %vm8387
  %vm8452 = vmand %vm8324, %vm8388
  %vm8453 = vmand %vm8325, %vm8389
  %vm8454 = vmand %vm8326, %vm8390
  %vm8455 = vmand %vm8327, %vm8391
  %vm8456 = vmand %vm8328, %vm8392
  %vm8457 = vmand %vm8329, %vm8393
  %vm8458 = vmand %vm8330, %vm8394
  %vm8459 = vmand %vm8331, %vm8395
  %vm8460 = vmand %vm8332, %vm8396
  %vm8461 = vmand %vm8333, %vm8397
  %vm8462 = vmand %vm8334, %vm8398
  %vm8463 = vmand %vm8335, %vm8399
  %vm8464 = vmand %vm8336, %vm8400
  %vm8465 = vmand %vm8337, %vm8401
  %vm8466 = vmand %vm8338, %vm8402
  %vm8467 = vmand %vm8339, %vm8403
  %vm8468 = vmand %vm8340, %vm8404
  %vm8469 = vmand %vm8341, %vm8405
  %vm8470 = vmand %vm8342, %vm8406
  %vm8471 = vmand %vm8343, %vm8407
  %vm8472 = vmand %vm8344, %vm8408
  %vm8473 = vmand %vm8345, %vm8409
  %vm8474 = vmand %vm8346, %vm8410
  %vm8475 = vmand %vm8347, %vm8411
  %vm8476 = vmand %vm8348, %vm8412
  %vm8477 = vmand %vm8349, %vm8413
  %vm8478 = vmand %vm8350, %vm8414
  %vm8479 = vmand %vm8351, %vm8415
  %vm8480 = vmand %vm8352, %vm8416
  %vm8481 = vmand %vm8353, %vm8417
  %vm8482 = vmand %vm8354, %vm8418
  %vm8483 = vmand %vm8355, %vm8419
  %vm8484 = vmand %vm8356, %vm8420
  %vm8485 = vmand %vm8357, %vm8421
  %vm8486 = vmand %vm8358, %vm8422
  %vm8487 = vmand %vm8359, %vm8423
  %vm8488 = vmand %vm8360, %vm8424
  %vm8489 = vmand %vm8361, %vm8425
  %vm8490 = vmand %vm8362, %vm8426
  %vm8491 = vmand %vm8363, %vm8427
  %vm8492 = vmand %vm8364, %vm8428
  %vm8493 = vmand %vm8365, %vm8429
  %vm8494 = vmand %vm8366, %vm8430
  %vm8495 = vmand %vm8367, %vm8431
  %vm8496 = vmand %vm8368, %vm8432
  %vm8497 = vmand %vm8369, %vm8433
  %vm8498 = vmand %vm8370, %vm8434
  %vm8499 = vmand %vm8371, %vm8435
  %vm8500 = vmand %vm8372, %vm8436
  %vm8501 = vmand %vm8373, %vm8437
  %vm8502 = vmand %vm8374, %vm8438
  %vm8503 = vmand %vm8375, %vm8439
  %vm8504 = vmand %vm8376, %vm8440
  %vm8505 = vmand %vm8377, %vm8441
  %vm8506 = vmand %vm8378, %vm8442
  %vm8507 = vmand %vm8379, %vm8443
  %vm8508 = vmand %vm8380, %vm8444
  %vm8509 = vmand %vm8381, %vm8445
  %vm8510 = vmand %vm8382, %vm8446
  %vm8511 = vmand %vm8383, %vm8447
  %vm8512 = vmand %vm8448, %vm3643
  %vm8513 = vmand %vm8449, %vm3644
  %vm8514 = vmand %vm8450, %vm3645
  %vm8515 = vmand %vm8451, %vm3646
  %vm8516 = vmand %vm8452, %vm3647
  %vm8517 = vmand %vm8453, %vm3648
  %vm8518 = vmand %vm8454, %vm3649
  %vm8519 = vmand %vm8455, %vm3650
  %vm8520 = vmand %vm8456, %vm3651
  %vm8521 = vmand %vm8457, %vm3652
  %vm8522 = vmand %vm8458, %vm3653
  %vm8523 = vmand %vm8459, %vm3654
  %vm8524 = vmand %vm8460, %vm3655
  %vm8525 = vmand %vm8461, %vm3656
  %vm8526 = vmand %vm8462, %vm3657
  %vm8527 = vmand %vm8463, %vm3658
  %vm8528 = vmand %vm8464, %vm3659
  %vm8529 = vmand %vm8465, %vm3660
  %vm8530 = vmand %vm8466, %vm3661
  %vm8531 = vmand %vm8467, %vm3662
  %vm8532 = vmand %vm8468, %vm3663
  %vm8533 = vmand %vm8469, %vm3664
  %vm8534 = vmand %vm8470, %vm3665
  %vm8535 = vmand %vm8471, %vm3666
  %vm8536 = vmand %vm8472, %vm3667
  %vm8537 = vmand %vm8473, %vm3668
  %vm8538 = vmand %vm8474, %vm3669
  %vm8539 = vmand %vm8475, %vm3670
  %vm8540 = vmand %vm8476, %vm3671
  %vm8541 = vmand %vm8477, %vm3672
  %vm8542 = vmand %vm8478, %vm3673
  %vm8543 = vmand %vm8479, %vm3674
  %vm8544 = vmand %vm8480, %vm3675
  %vm8545 = vmand %vm8481, %vm3676
  %vm8546 = vmand %vm8482, %vm3677
  %vm8547 = vmand %vm8483, %vm3678
  %vm8548 = vmand %vm8484, %vm3679
  %vm8549 = vmand %vm8485, %vm3680
  %vm8550 = vmand %vm8486, %vm3681
  %vm8551 = vmand %vm8487, %vm3682
  %vm8552 = vmand %vm8488, %vm3683
  %vm8553 = vmand %vm8489, %vm3684
  %vm8554 = vmand %vm8490, %vm3685
  %vm8555 = vmand %vm8491, %vm3686
  %vm8556 = vmand %vm8492, %vm3687
  %vm8557 = vmand %vm8493, %vm3688
  %vm8558 = vmand %vm8494, %vm3689
  %vm8559 = vmand %vm8495, %vm3690
  %vm8560 = vmand %vm8496, %vm3691
  %vm8561 = vmand %vm8497, %vm3692
  %vm8562 = vmand %vm8498, %vm3693
  %vm8563 = vmand %vm8499, %vm3694
  %vm8564 = vmand %vm8500, %vm3695
  %vm8565 = vmand %vm8501, %vm3696
  %vm8566 = vmand %vm8502, %vm3697
  %vm8567 = vmand %vm8503, %vm3698
  %vm8568 = vmand %vm8504, %vm3699
  %vm8569 = vmand %vm8505, %vm3700
  %vm8570 = vmand %vm8506, %vm3701
  %vm8571 = vmand %vm8507, %vm3702
  %vm8572 = vmand %vm8508, %vm3703
  %vm8573 = vmand %vm8509, %vm3704
  %vm8574 = vmand %vm8510, %vm3705
  %vm8575 = vmand %vm8511, %vm3706
  %vm8576 = vmand %vm8512, %vm3771
  %vm8577 = vmand %vm8513, %vm3772
  %vm8578 = vmand %vm8514, %vm3773
  %vm8579 = vmand %vm8515, %vm3774
  %vm8580 = vmand %vm8516, %vm3775
  %vm8581 = vmand %vm8517, %vm3776
  %vm8582 = vmand %vm8518, %vm3777
  %vm8583 = vmand %vm8519, %vm3778
  %vm8584 = vmand %vm8520, %vm3779
  %vm8585 = vmand %vm8521, %vm3780
  %vm8586 = vmand %vm8522, %vm3781
  %vm8587 = vmand %vm8523, %vm3782
  %vm8588 = vmand %vm8524, %vm3783
  %vm8589 = vmand %vm8525, %vm3784
  %vm8590 = vmand %vm8526, %vm3785
  %vm8591 = vmand %vm8527, %vm3786
  %vm8592 = vmand %vm8528, %vm3787
  %vm8593 = vmand %vm8529, %vm3788
  %vm8594 = vmand %vm8530, %vm3789
  %vm8595 = vmand %vm8531, %vm3790
  %vm8596 = vmand %vm8532, %vm3791
  %vm8597 = vmand %vm8533, %vm3792
  %vm8598 = vmand %vm8534, %vm3793
  %vm8599 = vmand %vm8535, %vm3794
  %vm8600 = vmand %vm8536, %vm3795
  %vm8601 = vmand %vm8537, %vm3796
  %vm8602 = vmand %vm8538, %vm3797
  %vm8603 = vmand %vm8539, %vm3798
  %vm8604 = vmand %vm8540, %vm3799
  %vm8605 = vmand %vm8541, %vm3800
  %vm8606 = vmand %vm8542, %vm3801
  %vm8607 = vmand %vm8543, %vm3802
  %vm8608 = vmand %vm8544, %vm3803
  %vm8609 = vmand %vm8545, %vm3804
  %vm8610 = vmand %vm8546, %vm3805
  %vm8611 = vmand %vm8547, %vm3806
  %vm8612 = vmand %vm8548, %vm3807
  %vm8613 = vmand %vm8549, %vm3808
  %vm8614 = vmand %vm8550, %vm3809
  %vm8615 = vmand %vm8551, %vm3810
  %vm8616 = vmand %vm8552, %vm3811
  %vm8617 = vmand %vm8553, %vm3812
  %vm8618 = vmand %vm8554, %vm3813
  %vm8619 = vmand %vm8555, %vm3814
  %vm8620 = vmand %vm8556, %vm3815
  %vm8621 = vmand %vm8557, %vm3816
  %vm8622 = vmand %vm8558, %vm3817
  %vm8623 = vmand %vm8559, %vm3818
  %vm8624 = vmand %vm8560, %vm3819
  %vm8625 = vmand %vm8561, %vm3820
  %vm8626 = vmand %vm8562, %vm3821
  %vm8627 = vmand %vm8563, %vm3822
  %vm8628 = vmand %vm8564, %vm3823
  %vm8629 = vmand %vm8565, %vm3824
  %vm8630 = vmand %vm8566, %vm3825
  %vm8631 = vmand %vm8567, %vm3826
  %vm8632 = vmand %vm8568, %vm3827
  %vm8633 = vmand %vm8569, %vm3828
  %vm8634 = vmand %vm8570, %vm3829
  %vm8635 = vmand %vm8571, %vm3830
  %vm8636 = vmand %vm8572, %vm3831
  %vm8637 = vmand %vm8573, %vm3832
  %vm8638 = vmand %vm8574, %vm3833
  %vm8639 = vmand %vm8575, %vm3834
  %v8640 = vsel %vm8576, 1, 0
  %v8641 = vsel %vm8577, 1, 0
  %v8642 = vsel %vm8578, 1, 0
  %v8643 = vsel %vm8579, 1, 0
  %v8644 = vsel %vm8580, 1, 0
  %v8645 = vsel %vm8581, 1, 0
  %v8646 = vsel %vm8582, 1, 0
  %v8647 = vsel %vm8583, 1, 0
  %v8648 = vsel %vm8584, 1, 0
  %v8649 = vsel %vm8585, 1, 0
  %v8650 = vsel %vm8586, 1, 0
  %v8651 = vsel %vm8587, 1, 0
  %v8652 = vsel %vm8588, 1, 0
  %v8653 = vsel %vm8589, 1, 0
  %v8654 = vsel %vm8590, 1, 0
  %v8655 = vsel %vm8591, 1, 0
  %v8656 = vsel %vm8592, 1, 0
  %v8657 = vsel %vm8593, 1, 0
  %v8658 = vsel %vm8594, 1, 0
  %v8659 = vsel %vm8595, 1, 0
  %v8660 = vsel %vm8596, 1, 0
  %v8661 = vsel %vm8597, 1, 0
  %v8662 = vsel %vm8598, 1, 0
  %v8663 = vsel %vm8599, 1, 0
  %v8664 = vsel %vm8600, 1, 0
  %v8665 = vsel %vm8601, 1, 0
  %v8666 = vsel %vm8602, 1, 0
  %v8667 = vsel %vm8603, 1, 0
  %v8668 = vsel %vm8604, 1, 0
  %v8669 = vsel %vm8605, 1, 0
  %v8670 = vsel %vm8606, 1, 0
  %v8671 = vsel %vm8607, 1, 0
  %v8672 = vsel %vm8608, 1, 0
  %v8673 = vsel %vm8609, 1, 0
  %v8674 = vsel %vm8610, 1, 0
  %v8675 = vsel %vm8611, 1, 0
  %v8676 = vsel %vm8612, 1, 0
  %v8677 = vsel %vm8613, 1, 0
  %v8678 = vsel %vm8614, 1, 0
  %v8679 = vsel %vm8615, 1, 0
  %v8680 = vsel %vm8616, 1, 0
  %v8681 = vsel %vm8617, 1, 0
  %v8682 = vsel %vm8618, 1, 0
  %v8683 = vsel %vm8619, 1, 0
  %v8684 = vsel %vm8620, 1, 0
  %v8685 = vsel %vm8621, 1, 0
  %v8686 = vsel %vm8622, 1, 0
  %v8687 = vsel %vm8623, 1, 0
  %v8688 = vsel %vm8624, 1, 0
  %v8689 = vsel %vm8625, 1, 0
  %v8690 = vsel %vm8626, 1, 0
  %v8691 = vsel %vm8627, 1, 0
  %v8692 = vsel %vm8628, 1, 0
  %v8693 = vsel %vm8629, 1, 0
  %v8694 = vsel %vm8630, 1, 0
  %v8695 = vsel %vm8631, 1, 0
  %v8696 = vsel %vm8632, 1, 0
  %v8697 = vsel %vm8633, 1, 0
  %v8698 = vsel %vm8634, 1, 0
  %v8699 = vsel %vm8635, 1, 0
  %v8700 = vsel %vm8636, 1, 0
  %v8701 = vsel %vm8637, 1, 0
  %v8702 = vsel %vm8638, 1, 0
  %v8703 = vsel %vm8639, 1, 0
  %vm8704 = vcmp.eq.s32.totalorder %v8640, 1
  %vm8705 = vcmp.eq.s32.totalorder %v8641, 1
  %vm8706 = vcmp.eq.s32.totalorder %v8642, 1
  %vm8707 = vcmp.eq.s32.totalorder %v8643, 1
  %vm8708 = vcmp.eq.s32.totalorder %v8644, 1
  %vm8709 = vcmp.eq.s32.totalorder %v8645, 1
  %vm8710 = vcmp.eq.s32.totalorder %v8646, 1
  %vm8711 = vcmp.eq.s32.totalorder %v8647, 1
  %vm8712 = vcmp.eq.s32.totalorder %v8648, 1
  %vm8713 = vcmp.eq.s32.totalorder %v8649, 1
  %vm8714 = vcmp.eq.s32.totalorder %v8650, 1
  %vm8715 = vcmp.eq.s32.totalorder %v8651, 1
  %vm8716 = vcmp.eq.s32.totalorder %v8652, 1
  %vm8717 = vcmp.eq.s32.totalorder %v8653, 1
  %vm8718 = vcmp.eq.s32.totalorder %v8654, 1
  %vm8719 = vcmp.eq.s32.totalorder %v8655, 1
  %vm8720 = vcmp.eq.s32.totalorder %v8656, 1
  %vm8721 = vcmp.eq.s32.totalorder %v8657, 1
  %vm8722 = vcmp.eq.s32.totalorder %v8658, 1
  %vm8723 = vcmp.eq.s32.totalorder %v8659, 1
  %vm8724 = vcmp.eq.s32.totalorder %v8660, 1
  %vm8725 = vcmp.eq.s32.totalorder %v8661, 1
  %vm8726 = vcmp.eq.s32.totalorder %v8662, 1
  %vm8727 = vcmp.eq.s32.totalorder %v8663, 1
  %vm8728 = vcmp.eq.s32.totalorder %v8664, 1
  %vm8729 = vcmp.eq.s32.totalorder %v8665, 1
  %vm8730 = vcmp.eq.s32.totalorder %v8666, 1
  %vm8731 = vcmp.eq.s32.totalorder %v8667, 1
  %vm8732 = vcmp.eq.s32.totalorder %v8668, 1
  %vm8733 = vcmp.eq.s32.totalorder %v8669, 1
  %vm8734 = vcmp.eq.s32.totalorder %v8670, 1
  %vm8735 = vcmp.eq.s32.totalorder %v8671, 1
  %vm8736 = vcmp.eq.s32.totalorder %v8672, 1
  %vm8737 = vcmp.eq.s32.totalorder %v8673, 1
  %vm8738 = vcmp.eq.s32.totalorder %v8674, 1
  %vm8739 = vcmp.eq.s32.totalorder %v8675, 1
  %vm8740 = vcmp.eq.s32.totalorder %v8676, 1
  %vm8741 = vcmp.eq.s32.totalorder %v8677, 1
  %vm8742 = vcmp.eq.s32.totalorder %v8678, 1
  %vm8743 = vcmp.eq.s32.totalorder %v8679, 1
  %vm8744 = vcmp.eq.s32.totalorder %v8680, 1
  %vm8745 = vcmp.eq.s32.totalorder %v8681, 1
  %vm8746 = vcmp.eq.s32.totalorder %v8682, 1
  %vm8747 = vcmp.eq.s32.totalorder %v8683, 1
  %vm8748 = vcmp.eq.s32.totalorder %v8684, 1
  %vm8749 = vcmp.eq.s32.totalorder %v8685, 1
  %vm8750 = vcmp.eq.s32.totalorder %v8686, 1
  %vm8751 = vcmp.eq.s32.totalorder %v8687, 1
  %vm8752 = vcmp.eq.s32.totalorder %v8688, 1
  %vm8753 = vcmp.eq.s32.totalorder %v8689, 1
  %vm8754 = vcmp.eq.s32.totalorder %v8690, 1
  %vm8755 = vcmp.eq.s32.totalorder %v8691, 1
  %vm8756 = vcmp.eq.s32.totalorder %v8692, 1
  %vm8757 = vcmp.eq.s32.totalorder %v8693, 1
  %vm8758 = vcmp.eq.s32.totalorder %v8694, 1
  %vm8759 = vcmp.eq.s32.totalorder %v8695, 1
  %vm8760 = vcmp.eq.s32.totalorder %v8696, 1
  %vm8761 = vcmp.eq.s32.totalorder %v8697, 1
  %vm8762 = vcmp.eq.s32.totalorder %v8698, 1
  %vm8763 = vcmp.eq.s32.totalorder %v8699, 1
  %vm8764 = vcmp.eq.s32.totalorder %v8700, 1
  %vm8765 = vcmp.eq.s32.totalorder %v8701, 1
  %vm8766 = vcmp.eq.s32.totalorder %v8702, 1
  %vm8767 = vcmp.eq.s32.totalorder %v8703, 1
  %v8768 = vsel %vm8704, %v8192, 0.0
  %v8769 = vsel %vm8705, %v8193, 0.0
  %v8770 = vsel %vm8706, %v8194, 0.0
  %v8771 = vsel %vm8707, %v8195, 0.0
  %v8772 = vsel %vm8708, %v8196, 0.0
  %v8773 = vsel %vm8709, %v8197, 0.0
  %v8774 = vsel %vm8710, %v8198, 0.0
  %v8775 = vsel %vm8711, %v8199, 0.0
  %v8776 = vsel %vm8712, %v8200, 0.0
  %v8777 = vsel %vm8713, %v8201, 0.0
  %v8778 = vsel %vm8714, %v8202, 0.0
  %v8779 = vsel %vm8715, %v8203, 0.0
  %v8780 = vsel %vm8716, %v8204, 0.0
  %v8781 = vsel %vm8717, %v8205, 0.0
  %v8782 = vsel %vm8718, %v8206, 0.0
  %v8783 = vsel %vm8719, %v8207, 0.0
  %v8784 = vsel %vm8720, %v8208, 0.0
  %v8785 = vsel %vm8721, %v8209, 0.0
  %v8786 = vsel %vm8722, %v8210, 0.0
  %v8787 = vsel %vm8723, %v8211, 0.0
  %v8788 = vsel %vm8724, %v8212, 0.0
  %v8789 = vsel %vm8725, %v8213, 0.0
  %v8790 = vsel %vm8726, %v8214, 0.0
  %v8791 = vsel %vm8727, %v8215, 0.0
  %v8792 = vsel %vm8728, %v8216, 0.0
  %v8793 = vsel %vm8729, %v8217, 0.0
  %v8794 = vsel %vm8730, %v8218, 0.0
  %v8795 = vsel %vm8731, %v8219, 0.0
  %v8796 = vsel %vm8732, %v8220, 0.0
  %v8797 = vsel %vm8733, %v8221, 0.0
  %v8798 = vsel %vm8734, %v8222, 0.0
  %v8799 = vsel %vm8735, %v8223, 0.0
  %v8800 = vsel %vm8736, %v8224, 0.0
  %v8801 = vsel %vm8737, %v8225, 0.0
  %v8802 = vsel %vm8738, %v8226, 0.0
  %v8803 = vsel %vm8739, %v8227, 0.0
  %v8804 = vsel %vm8740, %v8228, 0.0
  %v8805 = vsel %vm8741, %v8229, 0.0
  %v8806 = vsel %vm8742, %v8230, 0.0
  %v8807 = vsel %vm8743, %v8231, 0.0
  %v8808 = vsel %vm8744, %v8232, 0.0
  %v8809 = vsel %vm8745, %v8233, 0.0
  %v8810 = vsel %vm8746, %v8234, 0.0
  %v8811 = vsel %vm8747, %v8235, 0.0
  %v8812 = vsel %vm8748, %v8236, 0.0
  %v8813 = vsel %vm8749, %v8237, 0.0
  %v8814 = vsel %vm8750, %v8238, 0.0
  %v8815 = vsel %vm8751, %v8239, 0.0
  %v8816 = vsel %vm8752, %v8240, 0.0
  %v8817 = vsel %vm8753, %v8241, 0.0
  %v8818 = vsel %vm8754, %v8242, 0.0
  %v8819 = vsel %vm8755, %v8243, 0.0
  %v8820 = vsel %vm8756, %v8244, 0.0
  %v8821 = vsel %vm8757, %v8245, 0.0
  %v8822 = vsel %vm8758, %v8246, 0.0
  %v8823 = vsel %vm8759, %v8247, 0.0
  %v8824 = vsel %vm8760, %v8248, 0.0
  %v8825 = vsel %vm8761, %v8249, 0.0
  %v8826 = vsel %vm8762, %v8250, 0.0
  %v8827 = vsel %vm8763, %v8251, 0.0
  %v8828 = vsel %vm8764, %v8252, 0.0
  %v8829 = vsel %vm8765, %v8253, 0.0
  %v8830 = vsel %vm8766, %v8254, 0.0
  %v8831 = vsel %vm8767, %v8255, 0.0
  %8896 = vrot.lane.b32.xlu0 %v8768, 96
  %v8897 = vpop.permute.xlu0 %8896
  %8898 = vrot.lane.b32.xlu0 %v8769, 96
  %v8899 = vpop.permute.xlu0 %8898
  %8900 = vrot.lane.b32.xlu0 %v8770, 96
  %v8901 = vpop.permute.xlu0 %8900
  %8902 = vrot.lane.b32.xlu0 %v8771, 96
  %v8903 = vpop.permute.xlu0 %8902
  %8904 = vrot.lane.b32.xlu0 %v8772, 96
  %v8905 = vpop.permute.xlu0 %8904
  %8906 = vrot.lane.b32.xlu0 %v8773, 96
  %v8907 = vpop.permute.xlu0 %8906
  %8908 = vrot.lane.b32.xlu0 %v8774, 96
  %v8909 = vpop.permute.xlu0 %8908
  %8910 = vrot.lane.b32.xlu0 %v8775, 96
  %v8911 = vpop.permute.xlu0 %8910
  %8912 = vrot.lane.b32.xlu0 %v8776, 96
  %v8913 = vpop.permute.xlu0 %8912
  %8914 = vrot.lane.b32.xlu0 %v8777, 96
  %v8915 = vpop.permute.xlu0 %8914
  %8916 = vrot.lane.b32.xlu0 %v8778, 96
  %v8917 = vpop.permute.xlu0 %8916
  %8918 = vrot.lane.b32.xlu0 %v8779, 96
  %v8919 = vpop.permute.xlu0 %8918
  %8920 = vrot.lane.b32.xlu0 %v8780, 96
  %v8921 = vpop.permute.xlu0 %8920
  %8922 = vrot.lane.b32.xlu0 %v8781, 96
  %v8923 = vpop.permute.xlu0 %8922
  %8924 = vrot.lane.b32.xlu0 %v8782, 96
  %v8925 = vpop.permute.xlu0 %8924
  %8926 = vrot.lane.b32.xlu0 %v8783, 96
  %v8927 = vpop.permute.xlu0 %8926
  %8928 = vrot.lane.b32.xlu0 %v8784, 96
  %v8929 = vpop.permute.xlu0 %8928
  %8930 = vrot.lane.b32.xlu0 %v8785, 96
  %v8931 = vpop.permute.xlu0 %8930
  %8932 = vrot.lane.b32.xlu0 %v8786, 96
  %v8933 = vpop.permute.xlu0 %8932
  %8934 = vrot.lane.b32.xlu0 %v8787, 96
  %v8935 = vpop.permute.xlu0 %8934
  %8936 = vrot.lane.b32.xlu0 %v8788, 96
  %v8937 = vpop.permute.xlu0 %8936
  %8938 = vrot.lane.b32.xlu0 %v8789, 96
  %v8939 = vpop.permute.xlu0 %8938
  %8940 = vrot.lane.b32.xlu0 %v8790, 96
  %v8941 = vpop.permute.xlu0 %8940
  %8942 = vrot.lane.b32.xlu0 %v8791, 96
  %v8943 = vpop.permute.xlu0 %8942
  %8944 = vrot.lane.b32.xlu0 %v8792, 96
  %v8945 = vpop.permute.xlu0 %8944
  %8946 = vrot.lane.b32.xlu0 %v8793, 96
  %v8947 = vpop.permute.xlu0 %8946
  %8948 = vrot.lane.b32.xlu0 %v8794, 96
  %v8949 = vpop.permute.xlu0 %8948
  %8950 = vrot.lane.b32.xlu0 %v8795, 96
  %v8951 = vpop.permute.xlu0 %8950
  %8952 = vrot.lane.b32.xlu0 %v8796, 96
  %v8953 = vpop.permute.xlu0 %8952
  %8954 = vrot.lane.b32.xlu0 %v8797, 96
  %v8955 = vpop.permute.xlu0 %8954
  %8956 = vrot.lane.b32.xlu0 %v8798, 96
  %v8957 = vpop.permute.xlu0 %8956
  %8958 = vrot.lane.b32.xlu0 %v8799, 96
  %v8959 = vpop.permute.xlu0 %8958
  %8960 = vrot.lane.b32.xlu0 %v8800, 96
  %v8961 = vpop.permute.xlu0 %8960
  %8962 = vrot.lane.b32.xlu0 %v8801, 96
  %v8963 = vpop.permute.xlu0 %8962
  %8964 = vrot.lane.b32.xlu0 %v8802, 96
  %v8965 = vpop.permute.xlu0 %8964
  %8966 = vrot.lane.b32.xlu0 %v8803, 96
  %v8967 = vpop.permute.xlu0 %8966
  %8968 = vrot.lane.b32.xlu0 %v8804, 96
  %v8969 = vpop.permute.xlu0 %8968
  %8970 = vrot.lane.b32.xlu0 %v8805, 96
  %v8971 = vpop.permute.xlu0 %8970
  %8972 = vrot.lane.b32.xlu0 %v8806, 96
  %v8973 = vpop.permute.xlu0 %8972
  %8974 = vrot.lane.b32.xlu0 %v8807, 96
  %v8975 = vpop.permute.xlu0 %8974
  %8976 = vrot.lane.b32.xlu0 %v8808, 96
  %v8977 = vpop.permute.xlu0 %8976
  %8978 = vrot.lane.b32.xlu0 %v8809, 96
  %v8979 = vpop.permute.xlu0 %8978
  %8980 = vrot.lane.b32.xlu0 %v8810, 96
  %v8981 = vpop.permute.xlu0 %8980
  %8982 = vrot.lane.b32.xlu0 %v8811, 96
  %v8983 = vpop.permute.xlu0 %8982
  %8984 = vrot.lane.b32.xlu0 %v8812, 96
  %v8985 = vpop.permute.xlu0 %8984
  %8986 = vrot.lane.b32.xlu0 %v8813, 96
  %v8987 = vpop.permute.xlu0 %8986
  %8988 = vrot.lane.b32.xlu0 %v8814, 96
  %v8989 = vpop.permute.xlu0 %8988
  %8990 = vrot.lane.b32.xlu0 %v8815, 96
  %v8991 = vpop.permute.xlu0 %8990
  %8992 = vrot.lane.b32.xlu0 %v8816, 96
  %v8993 = vpop.permute.xlu0 %8992
  %8994 = vrot.lane.b32.xlu0 %v8817, 96
  %v8995 = vpop.permute.xlu0 %8994
  %8996 = vrot.lane.b32.xlu0 %v8818, 96
  %v8997 = vpop.permute.xlu0 %8996
  %8998 = vrot.lane.b32.xlu0 %v8819, 96
  %v8999 = vpop.permute.xlu0 %8998
  %9000 = vrot.lane.b32.xlu0 %v8820, 96
  %v9001 = vpop.permute.xlu0 %9000
  %9002 = vrot.lane.b32.xlu0 %v8821, 96
  %v9003 = vpop.permute.xlu0 %9002
  %9004 = vrot.lane.b32.xlu0 %v8822, 96
  %v9005 = vpop.permute.xlu0 %9004
  %9006 = vrot.lane.b32.xlu0 %v8823, 96
  %v9007 = vpop.permute.xlu0 %9006
  %9008 = vrot.lane.b32.xlu0 %v8824, 96
  %v9009 = vpop.permute.xlu0 %9008
  %9010 = vrot.lane.b32.xlu0 %v8825, 96
  %v9011 = vpop.permute.xlu0 %9010
  %9012 = vrot.lane.b32.xlu0 %v8826, 96
  %v9013 = vpop.permute.xlu0 %9012
  %9014 = vrot.lane.b32.xlu0 %v8827, 96
  %v9015 = vpop.permute.xlu0 %9014
  %9016 = vrot.lane.b32.xlu0 %v8828, 96
  %v9017 = vpop.permute.xlu0 %9016
  %9018 = vrot.lane.b32.xlu0 %v8829, 96
  %v9019 = vpop.permute.xlu0 %9018
  %9020 = vrot.lane.b32.xlu0 %v8830, 96
  %v9021 = vpop.permute.xlu0 %9020
  %9022 = vrot.lane.b32.xlu0 %v8831, 96
  %v9023 = vpop.permute.xlu0 %9022
  %vm9088 = vcmask 917248
  %9089 = vst.msk [vmem:[#allocation3] sm:$0xff] %vm9088, %v8897
  %9090 = vst.msk [vmem:[#allocation3 + $0x10] sm:$0xff] %vm9088, %v8899
  %9091 = vst.msk [vmem:[#allocation3 + $0x20] sm:$0xff] %vm9088, %v8901
  %9092 = vst.msk [vmem:[#allocation3 + $0x30] sm:$0xff] %vm9088, %v8903
  %9093 = vst.msk [vmem:[#allocation3 + $0x40] sm:$0xff] %vm9088, %v8905
  %9094 = vst.msk [vmem:[#allocation3 + $0x50] sm:$0xff] %vm9088, %v8907
  %9095 = vst.msk [vmem:[#allocation3 + $0x60] sm:$0xff] %vm9088, %v8909
  %9096 = vst.msk [vmem:[#allocation3 + $0x70] sm:$0xff] %vm9088, %v8911
  %9097 = vst.msk [vmem:[#allocation3 + $0x80] sm:$0xff] %vm9088, %v8913
  %9098 = vst.msk [vmem:[#allocation3 + $0x90] sm:$0xff] %vm9088, %v8915
  %9099 = vst.msk [vmem:[#allocation3 + $0xa0] sm:$0xff] %vm9088, %v8917
  %9100 = vst.msk [vmem:[#allocation3 + $0xb0] sm:$0xff] %vm9088, %v8919
  %9101 = vst.msk [vmem:[#allocation3 + $0xc0] sm:$0xff] %vm9088, %v8921
  %9102 = vst.msk [vmem:[#allocation3 + $0xd0] sm:$0xff] %vm9088, %v8923
  %9103 = vst.msk [vmem:[#allocation3 + $0xe0] sm:$0xff] %vm9088, %v8925
  %9104 = vst.msk [vmem:[#allocation3 + $0xf0] sm:$0xff] %vm9088, %v8927
  %9105 = vst.msk [vmem:[#allocation3 + $0x100] sm:$0xff] %vm9088, %v8929
  %9106 = vst.msk [vmem:[#allocation3 + $0x110] sm:$0xff] %vm9088, %v8931
  %9107 = vst.msk [vmem:[#allocation3 + $0x120] sm:$0xff] %vm9088, %v8933
  %9108 = vst.msk [vmem:[#allocation3 + $0x130] sm:$0xff] %vm9088, %v8935
  %9109 = vst.msk [vmem:[#allocation3 + $0x140] sm:$0xff] %vm9088, %v8937
  %9110 = vst.msk [vmem:[#allocation3 + $0x150] sm:$0xff] %vm9088, %v8939
  %9111 = vst.msk [vmem:[#allocation3 + $0x160] sm:$0xff] %vm9088, %v8941
  %9112 = vst.msk [vmem:[#allocation3 + $0x170] sm:$0xff] %vm9088, %v8943
  %9113 = vst.msk [vmem:[#allocation3 + $0x180] sm:$0xff] %vm9088, %v8945
  %9114 = vst.msk [vmem:[#allocation3 + $0x190] sm:$0xff] %vm9088, %v8947
  %9115 = vst.msk [vmem:[#allocation3 + $0x1a0] sm:$0xff] %vm9088, %v8949
  %9116 = vst.msk [vmem:[#allocation3 + $0x1b0] sm:$0xff] %vm9088, %v8951
  %9117 = vst.msk [vmem:[#allocation3 + $0x1c0] sm:$0xff] %vm9088, %v8953
  %9118 = vst.msk [vmem:[#allocation3 + $0x1d0] sm:$0xff] %vm9088, %v8955
  %9119 = vst.msk [vmem:[#allocation3 + $0x1e0] sm:$0xff] %vm9088, %v8957
  %9120 = vst.msk [vmem:[#allocation3 + $0x1f0] sm:$0xff] %vm9088, %v8959
  %9121 = vst.msk [vmem:[#allocation3 + $0x200] sm:$0xff] %vm9088, %v8961
  %9122 = vst.msk [vmem:[#allocation3 + $0x210] sm:$0xff] %vm9088, %v8963
  %9123 = vst.msk [vmem:[#allocation3 + $0x220] sm:$0xff] %vm9088, %v8965
  %9124 = vst.msk [vmem:[#allocation3 + $0x230] sm:$0xff] %vm9088, %v8967
  %9125 = vst.msk [vmem:[#allocation3 + $0x240] sm:$0xff] %vm9088, %v8969
  %9126 = vst.msk [vmem:[#allocation3 + $0x250] sm:$0xff] %vm9088, %v8971
  %9127 = vst.msk [vmem:[#allocation3 + $0x260] sm:$0xff] %vm9088, %v8973
  %9128 = vst.msk [vmem:[#allocation3 + $0x270] sm:$0xff] %vm9088, %v8975
  %9129 = vst.msk [vmem:[#allocation3 + $0x280] sm:$0xff] %vm9088, %v8977
  %9130 = vst.msk [vmem:[#allocation3 + $0x290] sm:$0xff] %vm9088, %v8979
  %9131 = vst.msk [vmem:[#allocation3 + $0x2a0] sm:$0xff] %vm9088, %v8981
  %9132 = vst.msk [vmem:[#allocation3 + $0x2b0] sm:$0xff] %vm9088, %v8983
  %9133 = vst.msk [vmem:[#allocation3 + $0x2c0] sm:$0xff] %vm9088, %v8985
  %9134 = vst.msk [vmem:[#allocation3 + $0x2d0] sm:$0xff] %vm9088, %v8987
  %9135 = vst.msk [vmem:[#allocation3 + $0x2e0] sm:$0xff] %vm9088, %v8989
  %9136 = vst.msk [vmem:[#allocation3 + $0x2f0] sm:$0xff] %vm9088, %v8991
  %9137 = vst.msk [vmem:[#allocation3 + $0x300] sm:$0xff] %vm9088, %v8993
  %9138 = vst.msk [vmem:[#allocation3 + $0x310] sm:$0xff] %vm9088, %v8995
  %9139 = vst.msk [vmem:[#allocation3 + $0x320] sm:$0xff] %vm9088, %v8997
  %9140 = vst.msk [vmem:[#allocation3 + $0x330] sm:$0xff] %vm9088, %v8999
  %9141 = vst.msk [vmem:[#allocation3 + $0x340] sm:$0xff] %vm9088, %v9001
  %9142 = vst.msk [vmem:[#allocation3 + $0x350] sm:$0xff] %vm9088, %v9003
  %9143 = vst.msk [vmem:[#allocation3 + $0x360] sm:$0xff] %vm9088, %v9005
  %9144 = vst.msk [vmem:[#allocation3 + $0x370] sm:$0xff] %vm9088, %v9007
  %9145 = vst.msk [vmem:[#allocation3 + $0x380] sm:$0xff] %vm9088, %v9009
  %9146 = vst.msk [vmem:[#allocation3 + $0x390] sm:$0xff] %vm9088, %v9011
  %9147 = vst.msk [vmem:[#allocation3 + $0x3a0] sm:$0xff] %vm9088, %v9013
  %9148 = vst.msk [vmem:[#allocation3 + $0x3b0] sm:$0xff] %vm9088, %v9015
  %9149 = vst.msk [vmem:[#allocation3 + $0x3c0] sm:$0xff] %vm9088, %v9017
  %9150 = vst.msk [vmem:[#allocation3 + $0x3d0] sm:$0xff] %vm9088, %v9019
  %9151 = vst.msk [vmem:[#allocation3 + $0x3e0] sm:$0xff] %vm9088, %v9021
  %9152 = vst.msk [vmem:[#allocation3 + $0x3f0] sm:$0xff] %vm9088, %v9023
  %v9153 = vld [vmem:[#allocation2 + $0x28] sm:$0xff]
  %v9154 = vld [vmem:[#allocation2 + $0x30] sm:$0xff]
  %v9155 = vld [vmem:[#allocation2 + $0x38] sm:$0xff]
  %v9156 = vld [vmem:[#allocation2 + $0x40] sm:$0xff]
  %v9157 = vld [vmem:[#allocation2 + $0x48] sm:$0xff]
  %v9158 = vld [vmem:[#allocation2 + $0x50] sm:$0xff]
  %v9159 = vld [vmem:[#allocation2 + $0x58] sm:$0xff]
  %v9160 = vld [vmem:[#allocation2 + $0x60] sm:$0xff]
  %v9161 = vld [vmem:[#allocation2 + $0x68] sm:$0xff]
  %v9162 = vld [vmem:[#allocation2 + $0x70] sm:$0xff]
  %v9163 = vld [vmem:[#allocation2 + $0x78] sm:$0xff]
  %v9164 = vld [vmem:[#allocation2 + $0x80] sm:$0xff]
  %v9165 = vld [vmem:[#allocation2 + $0x88] sm:$0xff]
  %v9166 = vld [vmem:[#allocation2 + $0x90] sm:$0xff]
  %v9167 = vld [vmem:[#allocation2 + $0x98] sm:$0xff]
  %v9168 = vld [vmem:[#allocation2 + $0xa0] sm:$0xff]
  %v9169 = vld [vmem:[#allocation2 + $0xa8] sm:$0xff]
  %v9170 = vld [vmem:[#allocation2 + $0xb0] sm:$0xff]
  %v9171 = vld [vmem:[#allocation2 + $0xb8] sm:$0xff]
  %v9172 = vld [vmem:[#allocation2 + $0xc0] sm:$0xff]
  %v9173 = vld [vmem:[#allocation2 + $0xc8] sm:$0xff]
  %v9174 = vld [vmem:[#allocation2 + $0xd0] sm:$0xff]
  %v9175 = vld [vmem:[#allocation2 + $0xd8] sm:$0xff]
  %v9176 = vld [vmem:[#allocation2 + $0xe0] sm:$0xff]
  %v9177 = vld [vmem:[#allocation2 + $0xe8] sm:$0xff]
  %v9178 = vld [vmem:[#allocation2 + $0xf0] sm:$0xff]
  %v9179 = vld [vmem:[#allocation2 + $0xf8] sm:$0xff]
  %v9180 = vld [vmem:[#allocation2 + $0x100] sm:$0xff]
  %v9181 = vld [vmem:[#allocation2 + $0x108] sm:$0xff]
  %v9182 = vld [vmem:[#allocation2 + $0x110] sm:$0xff]
  %v9183 = vld [vmem:[#allocation2 + $0x118] sm:$0xff]
  %v9184 = vld [vmem:[#allocation2 + $0x120] sm:$0xff]
  %v9185 = vld [vmem:[#allocation2 + $0x128] sm:$0xff]
  %v9186 = vld [vmem:[#allocation2 + $0x130] sm:$0xff]
  %v9187 = vld [vmem:[#allocation2 + $0x138] sm:$0xff]
  %v9188 = vld [vmem:[#allocation2 + $0x140] sm:$0xff]
  %v9189 = vld [vmem:[#allocation2 + $0x148] sm:$0xff]
  %v9190 = vld [vmem:[#allocation2 + $0x150] sm:$0xff]
  %v9191 = vld [vmem:[#allocation2 + $0x158] sm:$0xff]
  %v9192 = vld [vmem:[#allocation2 + $0x160] sm:$0xff]
  %v9193 = vld [vmem:[#allocation2 + $0x168] sm:$0xff]
  %v9194 = vld [vmem:[#allocation2 + $0x170] sm:$0xff]
  %v9195 = vld [vmem:[#allocation2 + $0x178] sm:$0xff]
  %v9196 = vld [vmem:[#allocation2 + $0x180] sm:$0xff]
  %v9197 = vld [vmem:[#allocation2 + $0x188] sm:$0xff]
  %v9198 = vld [vmem:[#allocation2 + $0x190] sm:$0xff]
  %v9199 = vld [vmem:[#allocation2 + $0x198] sm:$0xff]
  %v9200 = vld [vmem:[#allocation2 + $0x1a0] sm:$0xff]
  %v9201 = vld [vmem:[#allocation2 + $0x1a8] sm:$0xff]
  %v9202 = vld [vmem:[#allocation2 + $0x1b0] sm:$0xff]
  %v9203 = vld [vmem:[#allocation2 + $0x1b8] sm:$0xff]
  %v9204 = vld [vmem:[#allocation2 + $0x1c0] sm:$0xff]
  %v9205 = vld [vmem:[#allocation2 + $0x1c8] sm:$0xff]
  %v9206 = vld [vmem:[#allocation2 + $0x1d0] sm:$0xff]
  %v9207 = vld [vmem:[#allocation2 + $0x1d8] sm:$0xff]
  %v9208 = vld [vmem:[#allocation2 + $0x1e0] sm:$0xff]
  %v9209 = vld [vmem:[#allocation2 + $0x1e8] sm:$0xff]
  %v9210 = vld [vmem:[#allocation2 + $0x1f0] sm:$0xff]
  %v9211 = vld [vmem:[#allocation2 + $0x1f8] sm:$0xff]
  %v9212 = vld [vmem:[#allocation2 + $0x200] sm:$0xff]
  %v9213 = vld [vmem:[#allocation2 + $0x208] sm:$0xff]
  %v9214 = vld [vmem:[#allocation2 + $0x210] sm:$0xff]
  %v9215 = vld [vmem:[#allocation2 + $0x218] sm:$0xff]
  %v9216 = vld [vmem:[#allocation2 + $0x220] sm:$0xff]
  %vm9217 = vmand %vm8448, %vm4219
  %vm9218 = vmand %vm8449, %vm4220
  %vm9219 = vmand %vm8450, %vm4221
  %vm9220 = vmand %vm8451, %vm4222
  %vm9221 = vmand %vm8452, %vm4223
  %vm9222 = vmand %vm8453, %vm4224
  %vm9223 = vmand %vm8454, %vm4225
  %vm9224 = vmand %vm8455, %vm4226
  %vm9225 = vmand %vm8456, %vm4227
  %vm9226 = vmand %vm8457, %vm4228
  %vm9227 = vmand %vm8458, %vm4229
  %vm9228 = vmand %vm8459, %vm4230
  %vm9229 = vmand %vm8460, %vm4231
  %vm9230 = vmand %vm8461, %vm4232
  %vm9231 = vmand %vm8462, %vm4233
  %vm9232 = vmand %vm8463, %vm4234
  %vm9233 = vmand %vm8464, %vm4235
  %vm9234 = vmand %vm8465, %vm4236
  %vm9235 = vmand %vm8466, %vm4237
  %vm9236 = vmand %vm8467, %vm4238
  %vm9237 = vmand %vm8468, %vm4239
  %vm9238 = vmand %vm8469, %vm4240
  %vm9239 = vmand %vm8470, %vm4241
  %vm9240 = vmand %vm8471, %vm4242
  %vm9241 = vmand %vm8472, %vm4243
  %vm9242 = vmand %vm8473, %vm4244
  %vm9243 = vmand %vm8474, %vm4245
  %vm9244 = vmand %vm8475, %vm4246
  %vm9245 = vmand %vm8476, %vm4247
  %vm9246 = vmand %vm8477, %vm4248
  %vm9247 = vmand %vm8478, %vm4249
  %vm9248 = vmand %vm8479, %vm4250
  %vm9249 = vmand %vm8480, %vm4251
  %vm9250 = vmand %vm8481, %vm4252
  %vm9251 = vmand %vm8482, %vm4253
  %vm9252 = vmand %vm8483, %vm4254
  %vm9253 = vmand %vm8484, %vm4255
  %vm9254 = vmand %vm8485, %vm4256
  %vm9255 = vmand %vm8486, %vm4257
  %vm9256 = vmand %vm8487, %vm4258
  %vm9257 = vmand %vm8488, %vm4259
  %vm9258 = vmand %vm8489, %vm4260
  %vm9259 = vmand %vm8490, %vm4261
  %vm9260 = vmand %vm8491, %vm4262
  %vm9261 = vmand %vm8492, %vm4263
  %vm9262 = vmand %vm8493, %vm4264
  %vm9263 = vmand %vm8494, %vm4265
  %vm9264 = vmand %vm8495, %vm4266
  %vm9265 = vmand %vm8496, %vm4267
  %vm9266 = vmand %vm8497, %vm4268
  %vm9267 = vmand %vm8498, %vm4269
  %vm9268 = vmand %vm8499, %vm4270
  %vm9269 = vmand %vm8500, %vm4271
  %vm9270 = vmand %vm8501, %vm4272
  %vm9271 = vmand %vm8502, %vm4273
  %vm9272 = vmand %vm8503, %vm4274
  %vm9273 = vmand %vm8504, %vm4275
  %vm9274 = vmand %vm8505, %vm4276
  %vm9275 = vmand %vm8506, %vm4277
  %vm9276 = vmand %vm8507, %vm4278
  %vm9277 = vmand %vm8508, %vm4279
  %vm9278 = vmand %vm8509, %vm4280
  %vm9279 = vmand %vm8510, %vm4281
  %vm9280 = vmand %vm8511, %vm4282
  %vm9281 = vmand %vm9217, %vm4347
  %vm9282 = vmand %vm9218, %vm4348
  %vm9283 = vmand %vm9219, %vm4349
  %vm9284 = vmand %vm9220, %vm4350
  %vm9285 = vmand %vm9221, %vm4351
  %vm9286 = vmand %vm9222, %vm4352
  %vm9287 = vmand %vm9223, %vm4353
  %vm9288 = vmand %vm9224, %vm4354
  %vm9289 = vmand %vm9225, %vm4355
  %vm9290 = vmand %vm9226, %vm4356
  %vm9291 = vmand %vm9227, %vm4357
  %vm9292 = vmand %vm9228, %vm4358
  %vm9293 = vmand %vm9229, %vm4359
  %vm9294 = vmand %vm9230, %vm4360
  %vm9295 = vmand %vm9231, %vm4361
  %vm9296 = vmand %vm9232, %vm4362
  %vm9297 = vmand %vm9233, %vm4363
  %vm9298 = vmand %vm9234, %vm4364
  %vm9299 = vmand %vm9235, %vm4365
  %vm9300 = vmand %vm9236, %vm4366
  %vm9301 = vmand %vm9237, %vm4367
  %vm9302 = vmand %vm9238, %vm4368
  %vm9303 = vmand %vm9239, %vm4369
  %vm9304 = vmand %vm9240, %vm4370
  %vm9305 = vmand %vm9241, %vm4371
  %vm9306 = vmand %vm9242, %vm4372
  %vm9307 = vmand %vm9243, %vm4373
  %vm9308 = vmand %vm9244, %vm4374
  %vm9309 = vmand %vm9245, %vm4375
  %vm9310 = vmand %vm9246, %vm4376
  %vm9311 = vmand %vm9247, %vm4377
  %vm9312 = vmand %vm9248, %vm4378
  %vm9313 = vmand %vm9249, %vm4379
  %vm9314 = vmand %vm9250, %vm4380
  %vm9315 = vmand %vm9251, %vm4381
  %vm9316 = vmand %vm9252, %vm4382
  %vm9317 = vmand %vm9253, %vm4383
  %vm9318 = vmand %vm9254, %vm4384
  %vm9319 = vmand %vm9255, %vm4385
  %vm9320 = vmand %vm9256, %vm4386
  %vm9321 = vmand %vm9257, %vm4387
  %vm9322 = vmand %vm9258, %vm4388
  %vm9323 = vmand %vm9259, %vm4389
  %vm9324 = vmand %vm9260, %vm4390
  %vm9325 = vmand %vm9261, %vm4391
  %vm9326 = vmand %vm9262, %vm4392
  %vm9327 = vmand %vm9263, %vm4393
  %vm9328 = vmand %vm9264, %vm4394
  %vm9329 = vmand %vm9265, %vm4395
  %vm9330 = vmand %vm9266, %vm4396
  %vm9331 = vmand %vm9267, %vm4397
  %vm9332 = vmand %vm9268, %vm4398
  %vm9333 = vmand %vm9269, %vm4399
  %vm9334 = vmand %vm9270, %vm4400
  %vm9335 = vmand %vm9271, %vm4401
  %vm9336 = vmand %vm9272, %vm4402
  %vm9337 = vmand %vm9273, %vm4403
  %vm9338 = vmand %vm9274, %vm4404
  %vm9339 = vmand %vm9275, %vm4405
  %vm9340 = vmand %vm9276, %vm4406
  %vm9341 = vmand %vm9277, %vm4407
  %vm9342 = vmand %vm9278, %vm4408
  %vm9343 = vmand %vm9279, %vm4409
  %vm9344 = vmand %vm9280, %vm4410
  %v9345 = vsel %vm9281, 1, 0
  %v9346 = vsel %vm9282, 1, 0
  %v9347 = vsel %vm9283, 1, 0
  %v9348 = vsel %vm9284, 1, 0
  %v9349 = vsel %vm9285, 1, 0
  %v9350 = vsel %vm9286, 1, 0
  %v9351 = vsel %vm9287, 1, 0
  %v9352 = vsel %vm9288, 1, 0
  %v9353 = vsel %vm9289, 1, 0
  %v9354 = vsel %vm9290, 1, 0
  %v9355 = vsel %vm9291, 1, 0
  %v9356 = vsel %vm9292, 1, 0
  %v9357 = vsel %vm9293, 1, 0
  %v9358 = vsel %vm9294, 1, 0
  %v9359 = vsel %vm9295, 1, 0
  %v9360 = vsel %vm9296, 1, 0
  %v9361 = vsel %vm9297, 1, 0
  %v9362 = vsel %vm9298, 1, 0
  %v9363 = vsel %vm9299, 1, 0
  %v9364 = vsel %vm9300, 1, 0
  %v9365 = vsel %vm9301, 1, 0
  %v9366 = vsel %vm9302, 1, 0
  %v9367 = vsel %vm9303, 1, 0
  %v9368 = vsel %vm9304, 1, 0
  %v9369 = vsel %vm9305, 1, 0
  %v9370 = vsel %vm9306, 1, 0
  %v9371 = vsel %vm9307, 1, 0
  %v9372 = vsel %vm9308, 1, 0
  %v9373 = vsel %vm9309, 1, 0
  %v9374 = vsel %vm9310, 1, 0
  %v9375 = vsel %vm9311, 1, 0
  %v9376 = vsel %vm9312, 1, 0
  %v9377 = vsel %vm9313, 1, 0
  %v9378 = vsel %vm9314, 1, 0
  %v9379 = vsel %vm9315, 1, 0
  %v9380 = vsel %vm9316, 1, 0
  %v9381 = vsel %vm9317, 1, 0
  %v9382 = vsel %vm9318, 1, 0
  %v9383 = vsel %vm9319, 1, 0
  %v9384 = vsel %vm9320, 1, 0
  %v9385 = vsel %vm9321, 1, 0
  %v9386 = vsel %vm9322, 1, 0
  %v9387 = vsel %vm9323, 1, 0
  %v9388 = vsel %vm9324, 1, 0
  %v9389 = vsel %vm9325, 1, 0
  %v9390 = vsel %vm9326, 1, 0
  %v9391 = vsel %vm9327, 1, 0
  %v9392 = vsel %vm9328, 1, 0
  %v9393 = vsel %vm9329, 1, 0
  %v9394 = vsel %vm9330, 1, 0
  %v9395 = vsel %vm9331, 1, 0
  %v9396 = vsel %vm9332, 1, 0
  %v9397 = vsel %vm9333, 1, 0
  %v9398 = vsel %vm9334, 1, 0
  %v9399 = vsel %vm9335, 1, 0
  %v9400 = vsel %vm9336, 1, 0
  %v9401 = vsel %vm9337, 1, 0
  %v9402 = vsel %vm9338, 1, 0
  %v9403 = vsel %vm9339, 1, 0
  %v9404 = vsel %vm9340, 1, 0
  %v9405 = vsel %vm9341, 1, 0
  %v9406 = vsel %vm9342, 1, 0
  %v9407 = vsel %vm9343, 1, 0
  %v9408 = vsel %vm9344, 1, 0
  %vm9409 = vcmp.eq.s32.totalorder %v9345, 1
  %vm9410 = vcmp.eq.s32.totalorder %v9346, 1
  %vm9411 = vcmp.eq.s32.totalorder %v9347, 1
  %vm9412 = vcmp.eq.s32.totalorder %v9348, 1
  %vm9413 = vcmp.eq.s32.totalorder %v9349, 1
  %vm9414 = vcmp.eq.s32.totalorder %v9350, 1
  %vm9415 = vcmp.eq.s32.totalorder %v9351, 1
  %vm9416 = vcmp.eq.s32.totalorder %v9352, 1
  %vm9417 = vcmp.eq.s32.totalorder %v9353, 1
  %vm9418 = vcmp.eq.s32.totalorder %v9354, 1
  %vm9419 = vcmp.eq.s32.totalorder %v9355, 1
  %vm9420 = vcmp.eq.s32.totalorder %v9356, 1
  %vm9421 = vcmp.eq.s32.totalorder %v9357, 1
  %vm9422 = vcmp.eq.s32.totalorder %v9358, 1
  %vm9423 = vcmp.eq.s32.totalorder %v9359, 1
  %vm9424 = vcmp.eq.s32.totalorder %v9360, 1
  %vm9425 = vcmp.eq.s32.totalorder %v9361, 1
  %vm9426 = vcmp.eq.s32.totalorder %v9362, 1
  %vm9427 = vcmp.eq.s32.totalorder %v9363, 1
  %vm9428 = vcmp.eq.s32.totalorder %v9364, 1
  %vm9429 = vcmp.eq.s32.totalorder %v9365, 1
  %vm9430 = vcmp.eq.s32.totalorder %v9366, 1
  %vm9431 = vcmp.eq.s32.totalorder %v9367, 1
  %vm9432 = vcmp.eq.s32.totalorder %v9368, 1
  %vm9433 = vcmp.eq.s32.totalorder %v9369, 1
  %vm9434 = vcmp.eq.s32.totalorder %v9370, 1
  %vm9435 = vcmp.eq.s32.totalorder %v9371, 1
  %vm9436 = vcmp.eq.s32.totalorder %v9372, 1
  %vm9437 = vcmp.eq.s32.totalorder %v9373, 1
  %vm9438 = vcmp.eq.s32.totalorder %v9374, 1
  %vm9439 = vcmp.eq.s32.totalorder %v9375, 1
  %vm9440 = vcmp.eq.s32.totalorder %v9376, 1
  %vm9441 = vcmp.eq.s32.totalorder %v9377, 1
  %vm9442 = vcmp.eq.s32.totalorder %v9378, 1
  %vm9443 = vcmp.eq.s32.totalorder %v9379, 1
  %vm9444 = vcmp.eq.s32.totalorder %v9380, 1
  %vm9445 = vcmp.eq.s32.totalorder %v9381, 1
  %vm9446 = vcmp.eq.s32.totalorder %v9382, 1
  %vm9447 = vcmp.eq.s32.totalorder %v9383, 1
  %vm9448 = vcmp.eq.s32.totalorder %v9384, 1
  %vm9449 = vcmp.eq.s32.totalorder %v9385, 1
  %vm9450 = vcmp.eq.s32.totalorder %v9386, 1
  %vm9451 = vcmp.eq.s32.totalorder %v9387, 1
  %vm9452 = vcmp.eq.s32.totalorder %v9388, 1
  %vm9453 = vcmp.eq.s32.totalorder %v9389, 1
  %vm9454 = vcmp.eq.s32.totalorder %v9390, 1
  %vm9455 = vcmp.eq.s32.totalorder %v9391, 1
  %vm9456 = vcmp.eq.s32.totalorder %v9392, 1
  %vm9457 = vcmp.eq.s32.totalorder %v9393, 1
  %vm9458 = vcmp.eq.s32.totalorder %v9394, 1
  %vm9459 = vcmp.eq.s32.totalorder %v9395, 1
  %vm9460 = vcmp.eq.s32.totalorder %v9396, 1
  %vm9461 = vcmp.eq.s32.totalorder %v9397, 1
  %vm9462 = vcmp.eq.s32.totalorder %v9398, 1
  %vm9463 = vcmp.eq.s32.totalorder %v9399, 1
  %vm9464 = vcmp.eq.s32.totalorder %v9400, 1
  %vm9465 = vcmp.eq.s32.totalorder %v9401, 1
  %vm9466 = vcmp.eq.s32.totalorder %v9402, 1
  %vm9467 = vcmp.eq.s32.totalorder %v9403, 1
  %vm9468 = vcmp.eq.s32.totalorder %v9404, 1
  %vm9469 = vcmp.eq.s32.totalorder %v9405, 1
  %vm9470 = vcmp.eq.s32.totalorder %v9406, 1
  %vm9471 = vcmp.eq.s32.totalorder %v9407, 1
  %vm9472 = vcmp.eq.s32.totalorder %v9408, 1
  %v9473 = vsel %vm9409, %v9153, 0.0
  %v9474 = vsel %vm9410, %v9154, 0.0
  %v9475 = vsel %vm9411, %v9155, 0.0
  %v9476 = vsel %vm9412, %v9156, 0.0
  %v9477 = vsel %vm9413, %v9157, 0.0
  %v9478 = vsel %vm9414, %v9158, 0.0
  %v9479 = vsel %vm9415, %v9159, 0.0
  %v9480 = vsel %vm9416, %v9160, 0.0
  %v9481 = vsel %vm9417, %v9161, 0.0
  %v9482 = vsel %vm9418, %v9162, 0.0
  %v9483 = vsel %vm9419, %v9163, 0.0
  %v9484 = vsel %vm9420, %v9164, 0.0
  %v9485 = vsel %vm9421, %v9165, 0.0
  %v9486 = vsel %vm9422, %v9166, 0.0
  %v9487 = vsel %vm9423, %v9167, 0.0
  %v9488 = vsel %vm9424, %v9168, 0.0
  %v9489 = vsel %vm9425, %v9169, 0.0
  %v9490 = vsel %vm9426, %v9170, 0.0
  %v9491 = vsel %vm9427, %v9171, 0.0
  %v9492 = vsel %vm9428, %v9172, 0.0
  %v9493 = vsel %vm9429, %v9173, 0.0
  %v9494 = vsel %vm9430, %v9174, 0.0
  %v9495 = vsel %vm9431, %v9175, 0.0
  %v9496 = vsel %vm9432, %v9176, 0.0
  %v9497 = vsel %vm9433, %v9177, 0.0
  %v9498 = vsel %vm9434, %v9178, 0.0
  %v9499 = vsel %vm9435, %v9179, 0.0
  %v9500 = vsel %vm9436, %v9180, 0.0
  %v9501 = vsel %vm9437, %v9181, 0.0
  %v9502 = vsel %vm9438, %v9182, 0.0
  %v9503 = vsel %vm9439, %v9183, 0.0
  %v9504 = vsel %vm9440, %v9184, 0.0
  %v9505 = vsel %vm9441, %v9185, 0.0
  %v9506 = vsel %vm9442, %v9186, 0.0
  %v9507 = vsel %vm9443, %v9187, 0.0
  %v9508 = vsel %vm9444, %v9188, 0.0
  %v9509 = vsel %vm9445, %v9189, 0.0
  %v9510 = vsel %vm9446, %v9190, 0.0
  %v9511 = vsel %vm9447, %v9191, 0.0
  %v9512 = vsel %vm9448, %v9192, 0.0
  %v9513 = vsel %vm9449, %v9193, 0.0
  %v9514 = vsel %vm9450, %v9194, 0.0
  %v9515 = vsel %vm9451, %v9195, 0.0
  %v9516 = vsel %vm9452, %v9196, 0.0
  %v9517 = vsel %vm9453, %v9197, 0.0
  %v9518 = vsel %vm9454, %v9198, 0.0
  %v9519 = vsel %vm9455, %v9199, 0.0
  %v9520 = vsel %vm9456, %v9200, 0.0
  %v9521 = vsel %vm9457, %v9201, 0.0
  %v9522 = vsel %vm9458, %v9202, 0.0
  %v9523 = vsel %vm9459, %v9203, 0.0
  %v9524 = vsel %vm9460, %v9204, 0.0
  %v9525 = vsel %vm9461, %v9205, 0.0
  %v9526 = vsel %vm9462, %v9206, 0.0
  %v9527 = vsel %vm9463, %v9207, 0.0
  %v9528 = vsel %vm9464, %v9208, 0.0
  %v9529 = vsel %vm9465, %v9209, 0.0
  %v9530 = vsel %vm9466, %v9210, 0.0
  %v9531 = vsel %vm9467, %v9211, 0.0
  %v9532 = vsel %vm9468, %v9212, 0.0
  %v9533 = vsel %vm9469, %v9213, 0.0
  %v9534 = vsel %vm9470, %v9214, 0.0
  %v9535 = vsel %vm9471, %v9215, 0.0
  %v9536 = vsel %vm9472, %v9216, 0.0
  %9601 = vrot.lane.b32.xlu0 %v9473, 112
  %v9602 = vpop.permute.xlu0 %9601
  %9603 = vrot.lane.b32.xlu0 %v9474, 112
  %v9604 = vpop.permute.xlu0 %9603
  %9605 = vrot.lane.b32.xlu0 %v9475, 112
  %v9606 = vpop.permute.xlu0 %9605
  %9607 = vrot.lane.b32.xlu0 %v9476, 112
  %v9608 = vpop.permute.xlu0 %9607
  %9609 = vrot.lane.b32.xlu0 %v9477, 112
  %v9610 = vpop.permute.xlu0 %9609
  %9611 = vrot.lane.b32.xlu0 %v9478, 112
  %v9612 = vpop.permute.xlu0 %9611
  %9613 = vrot.lane.b32.xlu0 %v9479, 112
  %v9614 = vpop.permute.xlu0 %9613
  %9615 = vrot.lane.b32.xlu0 %v9480, 112
  %v9616 = vpop.permute.xlu0 %9615
  %9617 = vrot.lane.b32.xlu0 %v9481, 112
  %v9618 = vpop.permute.xlu0 %9617
  %9619 = vrot.lane.b32.xlu0 %v9482, 112
  %v9620 = vpop.permute.xlu0 %9619
  %9621 = vrot.lane.b32.xlu0 %v9483, 112
  %v9622 = vpop.permute.xlu0 %9621
  %9623 = vrot.lane.b32.xlu0 %v9484, 112
  %v9624 = vpop.permute.xlu0 %9623
  %9625 = vrot.lane.b32.xlu0 %v9485, 112
  %v9626 = vpop.permute.xlu0 %9625
  %9627 = vrot.lane.b32.xlu0 %v9486, 112
  %v9628 = vpop.permute.xlu0 %9627
  %9629 = vrot.lane.b32.xlu0 %v9487, 112
  %v9630 = vpop.permute.xlu0 %9629
  %9631 = vrot.lane.b32.xlu0 %v9488, 112
  %v9632 = vpop.permute.xlu0 %9631
  %9633 = vrot.lane.b32.xlu0 %v9489, 112
  %v9634 = vpop.permute.xlu0 %9633
  %9635 = vrot.lane.b32.xlu0 %v9490, 112
  %v9636 = vpop.permute.xlu0 %9635
  %9637 = vrot.lane.b32.xlu0 %v9491, 112
  %v9638 = vpop.permute.xlu0 %9637
  %9639 = vrot.lane.b32.xlu0 %v9492, 112
  %v9640 = vpop.permute.xlu0 %9639
  %9641 = vrot.lane.b32.xlu0 %v9493, 112
  %v9642 = vpop.permute.xlu0 %9641
  %9643 = vrot.lane.b32.xlu0 %v9494, 112
  %v9644 = vpop.permute.xlu0 %9643
  %9645 = vrot.lane.b32.xlu0 %v9495, 112
  %v9646 = vpop.permute.xlu0 %9645
  %9647 = vrot.lane.b32.xlu0 %v9496, 112
  %v9648 = vpop.permute.xlu0 %9647
  %9649 = vrot.lane.b32.xlu0 %v9497, 112
  %v9650 = vpop.permute.xlu0 %9649
  %9651 = vrot.lane.b32.xlu0 %v9498, 112
  %v9652 = vpop.permute.xlu0 %9651
  %9653 = vrot.lane.b32.xlu0 %v9499, 112
  %v9654 = vpop.permute.xlu0 %9653
  %9655 = vrot.lane.b32.xlu0 %v9500, 112
  %v9656 = vpop.permute.xlu0 %9655
  %9657 = vrot.lane.b32.xlu0 %v9501, 112
  %v9658 = vpop.permute.xlu0 %9657
  %9659 = vrot.lane.b32.xlu0 %v9502, 112
  %v9660 = vpop.permute.xlu0 %9659
  %9661 = vrot.lane.b32.xlu0 %v9503, 112
  %v9662 = vpop.permute.xlu0 %9661
  %9663 = vrot.lane.b32.xlu0 %v9504, 112
  %v9664 = vpop.permute.xlu0 %9663
  %9665 = vrot.lane.b32.xlu0 %v9505, 112
  %v9666 = vpop.permute.xlu0 %9665
  %9667 = vrot.lane.b32.xlu0 %v9506, 112
  %v9668 = vpop.permute.xlu0 %9667
  %9669 = vrot.lane.b32.xlu0 %v9507, 112
  %v9670 = vpop.permute.xlu0 %9669
  %9671 = vrot.lane.b32.xlu0 %v9508, 112
  %v9672 = vpop.permute.xlu0 %9671
  %9673 = vrot.lane.b32.xlu0 %v9509, 112
  %v9674 = vpop.permute.xlu0 %9673
  %9675 = vrot.lane.b32.xlu0 %v9510, 112
  %v9676 = vpop.permute.xlu0 %9675
  %9677 = vrot.lane.b32.xlu0 %v9511, 112
  %v9678 = vpop.permute.xlu0 %9677
  %9679 = vrot.lane.b32.xlu0 %v9512, 112
  %v9680 = vpop.permute.xlu0 %9679
  %9681 = vrot.lane.b32.xlu0 %v9513, 112
  %v9682 = vpop.permute.xlu0 %9681
  %9683 = vrot.lane.b32.xlu0 %v9514, 112
  %v9684 = vpop.permute.xlu0 %9683
  %9685 = vrot.lane.b32.xlu0 %v9515, 112
  %v9686 = vpop.permute.xlu0 %9685
  %9687 = vrot.lane.b32.xlu0 %v9516, 112
  %v9688 = vpop.permute.xlu0 %9687
  %9689 = vrot.lane.b32.xlu0 %v9517, 112
  %v9690 = vpop.permute.xlu0 %9689
  %9691 = vrot.lane.b32.xlu0 %v9518, 112
  %v9692 = vpop.permute.xlu0 %9691
  %9693 = vrot.lane.b32.xlu0 %v9519, 112
  %v9694 = vpop.permute.xlu0 %9693
  %9695 = vrot.lane.b32.xlu0 %v9520, 112
  %v9696 = vpop.permute.xlu0 %9695
  %9697 = vrot.lane.b32.xlu0 %v9521, 112
  %v9698 = vpop.permute.xlu0 %9697
  %9699 = vrot.lane.b32.xlu0 %v9522, 112
  %v9700 = vpop.permute.xlu0 %9699
  %9701 = vrot.lane.b32.xlu0 %v9523, 112
  %v9702 = vpop.permute.xlu0 %9701
  %9703 = vrot.lane.b32.xlu0 %v9524, 112
  %v9704 = vpop.permute.xlu0 %9703
  %9705 = vrot.lane.b32.xlu0 %v9525, 112
  %v9706 = vpop.permute.xlu0 %9705
  %9707 = vrot.lane.b32.xlu0 %v9526, 112
  %v9708 = vpop.permute.xlu0 %9707
  %9709 = vrot.lane.b32.xlu0 %v9527, 112
  %v9710 = vpop.permute.xlu0 %9709
  %9711 = vrot.lane.b32.xlu0 %v9528, 112
  %v9712 = vpop.permute.xlu0 %9711
  %9713 = vrot.lane.b32.xlu0 %v9529, 112
  %v9714 = vpop.permute.xlu0 %9713
  %9715 = vrot.lane.b32.xlu0 %v9530, 112
  %v9716 = vpop.permute.xlu0 %9715
  %9717 = vrot.lane.b32.xlu0 %v9531, 112
  %v9718 = vpop.permute.xlu0 %9717
  %9719 = vrot.lane.b32.xlu0 %v9532, 112
  %v9720 = vpop.permute.xlu0 %9719
  %9721 = vrot.lane.b32.xlu0 %v9533, 112
  %v9722 = vpop.permute.xlu0 %9721
  %9723 = vrot.lane.b32.xlu0 %v9534, 112
  %v9724 = vpop.permute.xlu0 %9723
  %9725 = vrot.lane.b32.xlu0 %v9535, 112
  %v9726 = vpop.permute.xlu0 %9725
  %9727 = vrot.lane.b32.xlu0 %v9536, 112
  %v9728 = vpop.permute.xlu0 %9727
  %vm9793 = vcmask 1048448
  %9794 = vst.msk [vmem:[#allocation3] sm:$0xff] %vm9793, %v9602
  %9795 = vst.msk [vmem:[#allocation3 + $0x10] sm:$0xff] %vm9793, %v9604
  %9796 = vst.msk [vmem:[#allocation3 + $0x20] sm:$0xff] %vm9793, %v9606
  %9797 = vst.msk [vmem:[#allocation3 + $0x30] sm:$0xff] %vm9793, %v9608
  %9798 = vst.msk [vmem:[#allocation3 + $0x40] sm:$0xff] %vm9793, %v9610
  %9799 = vst.msk [vmem:[#allocation3 + $0x50] sm:$0xff] %vm9793, %v9612
  %9800 = vst.msk [vmem:[#allocation3 + $0x60] sm:$0xff] %vm9793, %v9614
  %9801 = vst.msk [vmem:[#allocation3 + $0x70] sm:$0xff] %vm9793, %v9616
  %9802 = vst.msk [vmem:[#allocation3 + $0x80] sm:$0xff] %vm9793, %v9618
  %9803 = vst.msk [vmem:[#allocation3 + $0x90] sm:$0xff] %vm9793, %v9620
  %9804 = vst.msk [vmem:[#allocation3 + $0xa0] sm:$0xff] %vm9793, %v9622
  %9805 = vst.msk [vmem:[#allocation3 + $0xb0] sm:$0xff] %vm9793, %v9624
  %9806 = vst.msk [vmem:[#allocation3 + $0xc0] sm:$0xff] %vm9793, %v9626
  %9807 = vst.msk [vmem:[#allocation3 + $0xd0] sm:$0xff] %vm9793, %v9628
  %9808 = vst.msk [vmem:[#allocation3 + $0xe0] sm:$0xff] %vm9793, %v9630
  %9809 = vst.msk [vmem:[#allocation3 + $0xf0] sm:$0xff] %vm9793, %v9632
  %9810 = vst.msk [vmem:[#allocation3 + $0x100] sm:$0xff] %vm9793, %v9634
  %9811 = vst.msk [vmem:[#allocation3 + $0x110] sm:$0xff] %vm9793, %v9636
  %9812 = vst.msk [vmem:[#allocation3 + $0x120] sm:$0xff] %vm9793, %v9638
  %9813 = vst.msk [vmem:[#allocation3 + $0x130] sm:$0xff] %vm9793, %v9640
  %9814 = vst.msk [vmem:[#allocation3 + $0x140] sm:$0xff] %vm9793, %v9642
  %9815 = vst.msk [vmem:[#allocation3 + $0x150] sm:$0xff] %vm9793, %v9644
  %9816 = vst.msk [vmem:[#allocation3 + $0x160] sm:$0xff] %vm9793, %v9646
  %9817 = vst.msk [vmem:[#allocation3 + $0x170] sm:$0xff] %vm9793, %v9648
  %9818 = vst.msk [vmem:[#allocation3 + $0x180] sm:$0xff] %vm9793, %v9650
  %9819 = vst.msk [vmem:[#allocation3 + $0x190] sm:$0xff] %vm9793, %v9652
  %9820 = vst.msk [vmem:[#allocation3 + $0x1a0] sm:$0xff] %vm9793, %v9654
  %9821 = vst.msk [vmem:[#allocation3 + $0x1b0] sm:$0xff] %vm9793, %v9656
  %9822 = vst.msk [vmem:[#allocation3 + $0x1c0] sm:$0xff] %vm9793, %v9658
  %9823 = vst.msk [vmem:[#allocation3 + $0x1d0] sm:$0xff] %vm9793, %v9660
  %9824 = vst.msk [vmem:[#allocation3 + $0x1e0] sm:$0xff] %vm9793, %v9662
  %9825 = vst.msk [vmem:[#allocation3 + $0x1f0] sm:$0xff] %vm9793, %v9664
  %9826 = vst.msk [vmem:[#allocation3 + $0x200] sm:$0xff] %vm9793, %v9666
  %9827 = vst.msk [vmem:[#allocation3 + $0x210] sm:$0xff] %vm9793, %v9668
  %9828 = vst.msk [vmem:[#allocation3 + $0x220] sm:$0xff] %vm9793, %v9670
  %9829 = vst.msk [vmem:[#allocation3 + $0x230] sm:$0xff] %vm9793, %v9672
  %9830 = vst.msk [vmem:[#allocation3 + $0x240] sm:$0xff] %vm9793, %v9674
  %9831 = vst.msk [vmem:[#allocation3 + $0x250] sm:$0xff] %vm9793, %v9676
  %9832 = vst.msk [vmem:[#allocation3 + $0x260] sm:$0xff] %vm9793, %v9678
  %9833 = vst.msk [vmem:[#allocation3 + $0x270] sm:$0xff] %vm9793, %v9680
  %9834 = vst.msk [vmem:[#allocation3 + $0x280] sm:$0xff] %vm9793, %v9682
  %9835 = vst.msk [vmem:[#allocation3 + $0x290] sm:$0xff] %vm9793, %v9684
  %9836 = vst.msk [vmem:[#allocation3 + $0x2a0] sm:$0xff] %vm9793, %v9686
  %9837 = vst.msk [vmem:[#allocation3 + $0x2b0] sm:$0xff] %vm9793, %v9688
  %9838 = vst.msk [vmem:[#allocation3 + $0x2c0] sm:$0xff] %vm9793, %v9690
  %9839 = vst.msk [vmem:[#allocation3 + $0x2d0] sm:$0xff] %vm9793, %v9692
  %9840 = vst.msk [vmem:[#allocation3 + $0x2e0] sm:$0xff] %vm9793, %v9694
  %9841 = vst.msk [vmem:[#allocation3 + $0x2f0] sm:$0xff] %vm9793, %v9696
  %9842 = vst.msk [vmem:[#allocation3 + $0x300] sm:$0xff] %vm9793, %v9698
  %9843 = vst.msk [vmem:[#allocation3 + $0x310] sm:$0xff] %vm9793, %v9700
  %9844 = vst.msk [vmem:[#allocation3 + $0x320] sm:$0xff] %vm9793, %v9702
  %9845 = vst.msk [vmem:[#allocation3 + $0x330] sm:$0xff] %vm9793, %v9704
  %9846 = vst.msk [vmem:[#allocation3 + $0x340] sm:$0xff] %vm9793, %v9706
  %9847 = vst.msk [vmem:[#allocation3 + $0x350] sm:$0xff] %vm9793, %v9708
  %9848 = vst.msk [vmem:[#allocation3 + $0x360] sm:$0xff] %vm9793, %v9710
  %9849 = vst.msk [vmem:[#allocation3 + $0x370] sm:$0xff] %vm9793, %v9712
  %9850 = vst.msk [vmem:[#allocation3 + $0x380] sm:$0xff] %vm9793, %v9714
  %9851 = vst.msk [vmem:[#allocation3 + $0x390] sm:$0xff] %vm9793, %v9716
  %9852 = vst.msk [vmem:[#allocation3 + $0x3a0] sm:$0xff] %vm9793, %v9718
  %9853 = vst.msk [vmem:[#allocation3 + $0x3b0] sm:$0xff] %vm9793, %v9720
  %9854 = vst.msk [vmem:[#allocation3 + $0x3c0] sm:$0xff] %vm9793, %v9722
  %9855 = vst.msk [vmem:[#allocation3 + $0x3d0] sm:$0xff] %vm9793, %v9724
  %9856 = vst.msk [vmem:[#allocation3 + $0x3e0] sm:$0xff] %vm9793, %v9726
  %9857 = vst.msk [vmem:[#allocation3 + $0x3f0] sm:$0xff] %vm9793, %v9728
  %v9858 = vld [vmem:[#allocation2 + $0x29] sm:$0xff]
  %v9859 = vld [vmem:[#allocation2 + $0x31] sm:$0xff]
  %v9860 = vld [vmem:[#allocation2 + $0x39] sm:$0xff]
  %v9861 = vld [vmem:[#allocation2 + $0x41] sm:$0xff]
  %v9862 = vld [vmem:[#allocation2 + $0x49] sm:$0xff]
  %v9863 = vld [vmem:[#allocation2 + $0x51] sm:$0xff]
  %v9864 = vld [vmem:[#allocation2 + $0x59] sm:$0xff]
  %v9865 = vld [vmem:[#allocation2 + $0x61] sm:$0xff]
  %v9866 = vld [vmem:[#allocation2 + $0x69] sm:$0xff]
  %v9867 = vld [vmem:[#allocation2 + $0x71] sm:$0xff]
  %v9868 = vld [vmem:[#allocation2 + $0x79] sm:$0xff]
  %v9869 = vld [vmem:[#allocation2 + $0x81] sm:$0xff]
  %v9870 = vld [vmem:[#allocation2 + $0x89] sm:$0xff]
  %v9871 = vld [vmem:[#allocation2 + $0x91] sm:$0xff]
  %v9872 = vld [vmem:[#allocation2 + $0x99] sm:$0xff]
  %v9873 = vld [vmem:[#allocation2 + $0xa1] sm:$0xff]
  %v9874 = vld [vmem:[#allocation2 + $0xa9] sm:$0xff]
  %v9875 = vld [vmem:[#allocation2 + $0xb1] sm:$0xff]
  %v9876 = vld [vmem:[#allocation2 + $0xb9] sm:$0xff]
  %v9877 = vld [vmem:[#allocation2 + $0xc1] sm:$0xff]
  %v9878 = vld [vmem:[#allocation2 + $0xc9] sm:$0xff]
  %v9879 = vld [vmem:[#allocation2 + $0xd1] sm:$0xff]
  %v9880 = vld [vmem:[#allocation2 + $0xd9] sm:$0xff]
  %v9881 = vld [vmem:[#allocation2 + $0xe1] sm:$0xff]
  %v9882 = vld [vmem:[#allocation2 + $0xe9] sm:$0xff]
  %v9883 = vld [vmem:[#allocation2 + $0xf1] sm:$0xff]
  %v9884 = vld [vmem:[#allocation2 + $0xf9] sm:$0xff]
  %v9885 = vld [vmem:[#allocation2 + $0x101] sm:$0xff]
  %v9886 = vld [vmem:[#allocation2 + $0x109] sm:$0xff]
  %v9887 = vld [vmem:[#allocation2 + $0x111] sm:$0xff]
  %v9888 = vld [vmem:[#allocation2 + $0x119] sm:$0xff]
  %v9889 = vld [vmem:[#allocation2 + $0x121] sm:$0xff]
  %v9890 = vld [vmem:[#allocation2 + $0x129] sm:$0xff]
  %v9891 = vld [vmem:[#allocation2 + $0x131] sm:$0xff]
  %v9892 = vld [vmem:[#allocation2 + $0x139] sm:$0xff]
  %v9893 = vld [vmem:[#allocation2 + $0x141] sm:$0xff]
  %v9894 = vld [vmem:[#allocation2 + $0x149] sm:$0xff]
  %v9895 = vld [vmem:[#allocation2 + $0x151] sm:$0xff]
  %v9896 = vld [vmem:[#allocation2 + $0x159] sm:$0xff]
  %v9897 = vld [vmem:[#allocation2 + $0x161] sm:$0xff]
  %v9898 = vld [vmem:[#allocation2 + $0x169] sm:$0xff]
  %v9899 = vld [vmem:[#allocation2 + $0x171] sm:$0xff]
  %v9900 = vld [vmem:[#allocation2 + $0x179] sm:$0xff]
  %v9901 = vld [vmem:[#allocation2 + $0x181] sm:$0xff]
  %v9902 = vld [vmem:[#allocation2 + $0x189] sm:$0xff]
  %v9903 = vld [vmem:[#allocation2 + $0x191] sm:$0xff]
  %v9904 = vld [vmem:[#allocation2 + $0x199] sm:$0xff]
  %v9905 = vld [vmem:[#allocation2 + $0x1a1] sm:$0xff]
  %v9906 = vld [vmem:[#allocation2 + $0x1a9] sm:$0xff]
  %v9907 = vld [vmem:[#allocation2 + $0x1b1] sm:$0xff]
  %v9908 = vld [vmem:[#allocation2 + $0x1b9] sm:$0xff]
  %v9909 = vld [vmem:[#allocation2 + $0x1c1] sm:$0xff]
  %v9910 = vld [vmem:[#allocation2 + $0x1c9] sm:$0xff]
  %v9911 = vld [vmem:[#allocation2 + $0x1d1] sm:$0xff]
  %v9912 = vld [vmem:[#allocation2 + $0x1d9] sm:$0xff]
  %v9913 = vld [vmem:[#allocation2 + $0x1e1] sm:$0xff]
  %v9914 = vld [vmem:[#allocation2 + $0x1e9] sm:$0xff]
  %v9915 = vld [vmem:[#allocation2 + $0x1f1] sm:$0xff]
  %v9916 = vld [vmem:[#allocation2 + $0x1f9] sm:$0xff]
  %v9917 = vld [vmem:[#allocation2 + $0x201] sm:$0xff]
  %v9918 = vld [vmem:[#allocation2 + $0x209] sm:$0xff]
  %v9919 = vld [vmem:[#allocation2 + $0x211] sm:$0xff]
  %v9920 = vld [vmem:[#allocation2 + $0x219] sm:$0xff]
  %v9921 = vld [vmem:[#allocation2 + $0x221] sm:$0xff]
  %vm9922 = vmand %vm8448, %vm5116
  %vm9923 = vmand %vm8449, %vm5117
  %vm9924 = vmand %vm8450, %vm5118
  %vm9925 = vmand %vm8451, %vm5119
  %vm9926 = vmand %vm8452, %vm5120
  %vm9927 = vmand %vm8453, %vm5121
  %vm9928 = vmand %vm8454, %vm5122
  %vm9929 = vmand %vm8455, %vm5123
  %vm9930 = vmand %vm8456, %vm5124
  %vm9931 = vmand %vm8457, %vm5125
  %vm9932 = vmand %vm8458, %vm5126
  %vm9933 = vmand %vm8459, %vm5127
  %vm9934 = vmand %vm8460, %vm5128
  %vm9935 = vmand %vm8461, %vm5129
  %vm9936 = vmand %vm8462, %vm5130
  %vm9937 = vmand %vm8463, %vm5131
  %vm9938 = vmand %vm8464, %vm5132
  %vm9939 = vmand %vm8465, %vm5133
  %vm9940 = vmand %vm8466, %vm5134
  %vm9941 = vmand %vm8467, %vm5135
  %vm9942 = vmand %vm8468, %vm5136
  %vm9943 = vmand %vm8469, %vm5137
  %vm9944 = vmand %vm8470, %vm5138
  %vm9945 = vmand %vm8471, %vm5139
  %vm9946 = vmand %vm8472, %vm5140
  %vm9947 = vmand %vm8473, %vm5141
  %vm9948 = vmand %vm8474, %vm5142
  %vm9949 = vmand %vm8475, %vm5143
  %vm9950 = vmand %vm8476, %vm5144
  %vm9951 = vmand %vm8477, %vm5145
  %vm9952 = vmand %vm8478, %vm5146
  %vm9953 = vmand %vm8479, %vm5147
  %vm9954 = vmand %vm8480, %vm5148
  %vm9955 = vmand %vm8481, %vm5149
  %vm9956 = vmand %vm8482, %vm5150
  %vm9957 = vmand %vm8483, %vm5151
  %vm9958 = vmand %vm8484, %vm5152
  %vm9959 = vmand %vm8485, %vm5153
  %vm9960 = vmand %vm8486, %vm5154
  %vm9961 = vmand %vm8487, %vm5155
  %vm9962 = vmand %vm8488, %vm5156
  %vm9963 = vmand %vm8489, %vm5157
  %vm9964 = vmand %vm8490, %vm5158
  %vm9965 = vmand %vm8491, %vm5159
  %vm9966 = vmand %vm8492, %vm5160
  %vm9967 = vmand %vm8493, %vm5161
  %vm9968 = vmand %vm8494, %vm5162
  %vm9969 = vmand %vm8495, %vm5163
  %vm9970 = vmand %vm8496, %vm5164
  %vm9971 = vmand %vm8497, %vm5165
  %vm9972 = vmand %vm8498, %vm5166
  %vm9973 = vmand %vm8499, %vm5167
  %vm9974 = vmand %vm8500, %vm5168
  %vm9975 = vmand %vm8501, %vm5169
  %vm9976 = vmand %vm8502, %vm5170
  %vm9977 = vmand %vm8503, %vm5171
  %vm9978 = vmand %vm8504, %vm5172
  %vm9979 = vmand %vm8505, %vm5173
  %vm9980 = vmand %vm8506, %vm5174
  %vm9981 = vmand %vm8507, %vm5175
  %vm9982 = vmand %vm8508, %vm5176
  %vm9983 = vmand %vm8509, %vm5177
  %vm9984 = vmand %vm8510, %vm5178
  %vm9985 = vmand %vm8511, %vm5179
  %vm9986 = vmand %vm9922, %vm5244
  %vm9987 = vmand %vm9923, %vm5245
  %vm9988 = vmand %vm9924, %vm5246
  %vm9989 = vmand %vm9925, %vm5247
  %vm9990 = vmand %vm9926, %vm5248
  %vm9991 = vmand %vm9927, %vm5249
  %vm9992 = vmand %vm9928, %vm5250
  %vm9993 = vmand %vm9929, %vm5251
  %vm9994 = vmand %vm9930, %vm5252
  %vm9995 = vmand %vm9931, %vm5253
  %vm9996 = vmand %vm9932, %vm5254
  %vm9997 = vmand %vm9933, %vm5255
  %vm9998 = vmand %vm9934, %vm5256
  %vm9999 = vmand %vm9935, %vm5257
  %vm10000 = vmand %vm9936, %vm5258
  %vm10001 = vmand %vm9937, %vm5259
  %vm10002 = vmand %vm9938, %vm5260
  %vm10003 = vmand %vm9939, %vm5261
  %vm10004 = vmand %vm9940, %vm5262
  %vm10005 = vmand %vm9941, %vm5263
  %vm10006 = vmand %vm9942, %vm5264
  %vm10007 = vmand %vm9943, %vm5265
  %vm10008 = vmand %vm9944, %vm5266
  %vm10009 = vmand %vm9945, %vm5267
  %vm10010 = vmand %vm9946, %vm5268
  %vm10011 = vmand %vm9947, %vm5269
  %vm10012 = vmand %vm9948, %vm5270
  %vm10013 = vmand %vm9949, %vm5271
  %vm10014 = vmand %vm9950, %vm5272
  %vm10015 = vmand %vm9951, %vm5273
  %vm10016 = vmand %vm9952, %vm5274
  %vm10017 = vmand %vm9953, %vm5275
  %vm10018 = vmand %vm9954, %vm5276
  %vm10019 = vmand %vm9955, %vm5277
  %vm10020 = vmand %vm9956, %vm5278
  %vm10021 = vmand %vm9957, %vm5279
  %vm10022 = vmand %vm9958, %vm5280
  %vm10023 = vmand %vm9959, %vm5281
  %vm10024 = vmand %vm9960, %vm5282
  %vm10025 = vmand %vm9961, %vm5283
  %vm10026 = vmand %vm9962, %vm5284
  %vm10027 = vmand %vm9963, %vm5285
  %vm10028 = vmand %vm9964, %vm5286
  %vm10029 = vmand %vm9965, %vm5287
  %vm10030 = vmand %vm9966, %vm5288
  %vm10031 = vmand %vm9967, %vm5289
  %vm10032 = vmand %vm9968, %vm5290
  %vm10033 = vmand %vm9969, %vm5291
  %vm10034 = vmand %vm9970, %vm5292
  %vm10035 = vmand %vm9971, %vm5293
  %vm10036 = vmand %vm9972, %vm5294
  %vm10037 = vmand %vm9973, %vm5295
  %vm10038 = vmand %vm9974, %vm5296
  %vm10039 = vmand %vm9975, %vm5297
  %vm10040 = vmand %vm9976, %vm5298
  %vm10041 = vmand %vm9977, %vm5299
  %vm10042 = vmand %vm9978, %vm5300
  %vm10043 = vmand %vm9979, %vm5301
  %vm10044 = vmand %vm9980, %vm5302
  %vm10045 = vmand %vm9981, %vm5303
  %vm10046 = vmand %vm9982, %vm5304
  %vm10047 = vmand %vm9983, %vm5305
  %vm10048 = vmand %vm9984, %vm5306
  %vm10049 = vmand %vm9985, %vm5307
  %v10050 = vsel %vm9986, 1, 0
  %v10051 = vsel %vm9987, 1, 0
  %v10052 = vsel %vm9988, 1, 0
  %v10053 = vsel %vm9989, 1, 0
  %v10054 = vsel %vm9990, 1, 0
  %v10055 = vsel %vm9991, 1, 0
  %v10056 = vsel %vm9992, 1, 0
  %v10057 = vsel %vm9993, 1, 0
  %v10058 = vsel %vm9994, 1, 0
  %v10059 = vsel %vm9995, 1, 0
  %v10060 = vsel %vm9996, 1, 0
  %v10061 = vsel %vm9997, 1, 0
  %v10062 = vsel %vm9998, 1, 0
  %v10063 = vsel %vm9999, 1, 0
  %v10064 = vsel %vm10000, 1, 0
  %v10065 = vsel %vm10001, 1, 0
  %v10066 = vsel %vm10002, 1, 0
  %v10067 = vsel %vm10003, 1, 0
  %v10068 = vsel %vm10004, 1, 0
  %v10069 = vsel %vm10005, 1, 0
  %v10070 = vsel %vm10006, 1, 0
  %v10071 = vsel %vm10007, 1, 0
  %v10072 = vsel %vm10008, 1, 0
  %v10073 = vsel %vm10009, 1, 0
  %v10074 = vsel %vm10010, 1, 0
  %v10075 = vsel %vm10011, 1, 0
  %v10076 = vsel %vm10012, 1, 0
  %v10077 = vsel %vm10013, 1, 0
  %v10078 = vsel %vm10014, 1, 0
  %v10079 = vsel %vm10015, 1, 0
  %v10080 = vsel %vm10016, 1, 0
  %v10081 = vsel %vm10017, 1, 0
  %v10082 = vsel %vm10018, 1, 0
  %v10083 = vsel %vm10019, 1, 0
  %v10084 = vsel %vm10020, 1, 0
  %v10085 = vsel %vm10021, 1, 0
  %v10086 = vsel %vm10022, 1, 0
  %v10087 = vsel %vm10023, 1, 0
  %v10088 = vsel %vm10024, 1, 0
  %v10089 = vsel %vm10025, 1, 0
  %v10090 = vsel %vm10026, 1, 0
  %v10091 = vsel %vm10027, 1, 0
  %v10092 = vsel %vm10028, 1, 0
  %v10093 = vsel %vm10029, 1, 0
  %v10094 = vsel %vm10030, 1, 0
  %v10095 = vsel %vm10031, 1, 0
  %v10096 = vsel %vm10032, 1, 0
  %v10097 = vsel %vm10033, 1, 0
  %v10098 = vsel %vm10034, 1, 0
  %v10099 = vsel %vm10035, 1, 0
  %v10100 = vsel %vm10036, 1, 0
  %v10101 = vsel %vm10037, 1, 0
  %v10102 = vsel %vm10038, 1, 0
  %v10103 = vsel %vm10039, 1, 0
  %v10104 = vsel %vm10040, 1, 0
  %v10105 = vsel %vm10041, 1, 0
  %v10106 = vsel %vm10042, 1, 0
  %v10107 = vsel %vm10043, 1, 0
  %v10108 = vsel %vm10044, 1, 0
  %v10109 = vsel %vm10045, 1, 0
  %v10110 = vsel %vm10046, 1, 0
  %v10111 = vsel %vm10047, 1, 0
  %v10112 = vsel %vm10048, 1, 0
  %v10113 = vsel %vm10049, 1, 0
  %vm10114 = vcmp.eq.s32.totalorder %v10050, 1
  %vm10115 = vcmp.eq.s32.totalorder %v10051, 1
  %vm10116 = vcmp.eq.s32.totalorder %v10052, 1
  %vm10117 = vcmp.eq.s32.totalorder %v10053, 1
  %vm10118 = vcmp.eq.s32.totalorder %v10054, 1
  %vm10119 = vcmp.eq.s32.totalorder %v10055, 1
  %vm10120 = vcmp.eq.s32.totalorder %v10056, 1
  %vm10121 = vcmp.eq.s32.totalorder %v10057, 1
  %vm10122 = vcmp.eq.s32.totalorder %v10058, 1
  %vm10123 = vcmp.eq.s32.totalorder %v10059, 1
  %vm10124 = vcmp.eq.s32.totalorder %v10060, 1
  %vm10125 = vcmp.eq.s32.totalorder %v10061, 1
  %vm10126 = vcmp.eq.s32.totalorder %v10062, 1
  %vm10127 = vcmp.eq.s32.totalorder %v10063, 1
  %vm10128 = vcmp.eq.s32.totalorder %v10064, 1
  %vm10129 = vcmp.eq.s32.totalorder %v10065, 1
  %vm10130 = vcmp.eq.s32.totalorder %v10066, 1
  %vm10131 = vcmp.eq.s32.totalorder %v10067, 1
  %vm10132 = vcmp.eq.s32.totalorder %v10068, 1
  %vm10133 = vcmp.eq.s32.totalorder %v10069, 1
  %vm10134 = vcmp.eq.s32.totalorder %v10070, 1
  %vm10135 = vcmp.eq.s32.totalorder %v10071, 1
  %vm10136 = vcmp.eq.s32.totalorder %v10072, 1
  %vm10137 = vcmp.eq.s32.totalorder %v10073, 1
  %vm10138 = vcmp.eq.s32.totalorder %v10074, 1
  %vm10139 = vcmp.eq.s32.totalorder %v10075, 1
  %vm10140 = vcmp.eq.s32.totalorder %v10076, 1
  %vm10141 = vcmp.eq.s32.totalorder %v10077, 1
  %vm10142 = vcmp.eq.s32.totalorder %v10078, 1
  %vm10143 = vcmp.eq.s32.totalorder %v10079, 1
  %vm10144 = vcmp.eq.s32.totalorder %v10080, 1
  %vm10145 = vcmp.eq.s32.totalorder %v10081, 1
  %vm10146 = vcmp.eq.s32.totalorder %v10082, 1
  %vm10147 = vcmp.eq.s32.totalorder %v10083, 1
  %vm10148 = vcmp.eq.s32.totalorder %v10084, 1
  %vm10149 = vcmp.eq.s32.totalorder %v10085, 1
  %vm10150 = vcmp.eq.s32.totalorder %v10086, 1
  %vm10151 = vcmp.eq.s32.totalorder %v10087, 1
  %vm10152 = vcmp.eq.s32.totalorder %v10088, 1
  %vm10153 = vcmp.eq.s32.totalorder %v10089, 1
  %vm10154 = vcmp.eq.s32.totalorder %v10090, 1
  %vm10155 = vcmp.eq.s32.totalorder %v10091, 1
  %vm10156 = vcmp.eq.s32.totalorder %v10092, 1
  %vm10157 = vcmp.eq.s32.totalorder %v10093, 1
  %vm10158 = vcmp.eq.s32.totalorder %v10094, 1
  %vm10159 = vcmp.eq.s32.totalorder %v10095, 1
  %vm10160 = vcmp.eq.s32.totalorder %v10096, 1
  %vm10161 = vcmp.eq.s32.totalorder %v10097, 1
  %vm10162 = vcmp.eq.s32.totalorder %v10098, 1
  %vm10163 = vcmp.eq.s32.totalorder %v10099, 1
  %vm10164 = vcmp.eq.s32.totalorder %v10100, 1
  %vm10165 = vcmp.eq.s32.totalorder %v10101, 1
  %vm10166 = vcmp.eq.s32.totalorder %v10102, 1
  %vm10167 = vcmp.eq.s32.totalorder %v10103, 1
  %vm10168 = vcmp.eq.s32.totalorder %v10104, 1
  %vm10169 = vcmp.eq.s32.totalorder %v10105, 1
  %vm10170 = vcmp.eq.s32.totalorder %v10106, 1
  %vm10171 = vcmp.eq.s32.totalorder %v10107, 1
  %vm10172 = vcmp.eq.s32.totalorder %v10108, 1
  %vm10173 = vcmp.eq.s32.totalorder %v10109, 1
  %vm10174 = vcmp.eq.s32.totalorder %v10110, 1
  %vm10175 = vcmp.eq.s32.totalorder %v10111, 1
  %vm10176 = vcmp.eq.s32.totalorder %v10112, 1
  %vm10177 = vcmp.eq.s32.totalorder %v10113, 1
  %v10178 = vsel %vm10114, %v9858, 0.0
  %v10179 = vsel %vm10115, %v9859, 0.0
  %v10180 = vsel %vm10116, %v9860, 0.0
  %v10181 = vsel %vm10117, %v9861, 0.0
  %v10182 = vsel %vm10118, %v9862, 0.0
  %v10183 = vsel %vm10119, %v9863, 0.0
  %v10184 = vsel %vm10120, %v9864, 0.0
  %v10185 = vsel %vm10121, %v9865, 0.0
  %v10186 = vsel %vm10122, %v9866, 0.0
  %v10187 = vsel %vm10123, %v9867, 0.0
  %v10188 = vsel %vm10124, %v9868, 0.0
  %v10189 = vsel %vm10125, %v9869, 0.0
  %v10190 = vsel %vm10126, %v9870, 0.0
  %v10191 = vsel %vm10127, %v9871, 0.0
  %v10192 = vsel %vm10128, %v9872, 0.0
  %v10193 = vsel %vm10129, %v9873, 0.0
  %v10194 = vsel %vm10130, %v9874, 0.0
  %v10195 = vsel %vm10131, %v9875, 0.0
  %v10196 = vsel %vm10132, %v9876, 0.0
  %v10197 = vsel %vm10133, %v9877, 0.0
  %v10198 = vsel %vm10134, %v9878, 0.0
  %v10199 = vsel %vm10135, %v9879, 0.0
  %v10200 = vsel %vm10136, %v9880, 0.0
  %v10201 = vsel %vm10137, %v9881, 0.0
  %v10202 = vsel %vm10138, %v9882, 0.0
  %v10203 = vsel %vm10139, %v9883, 0.0
  %v10204 = vsel %vm10140, %v9884, 0.0
  %v10205 = vsel %vm10141, %v9885, 0.0
  %v10206 = vsel %vm10142, %v9886, 0.0
  %v10207 = vsel %vm10143, %v9887, 0.0
  %v10208 = vsel %vm10144, %v9888, 0.0
  %v10209 = vsel %vm10145, %v9889, 0.0
  %v10210 = vsel %vm10146, %v9890, 0.0
  %v10211 = vsel %vm10147, %v9891, 0.0
  %v10212 = vsel %vm10148, %v9892, 0.0
  %v10213 = vsel %vm10149, %v9893, 0.0
  %v10214 = vsel %vm10150, %v9894, 0.0
  %v10215 = vsel %vm10151, %v9895, 0.0
  %v10216 = vsel %vm10152, %v9896, 0.0
  %v10217 = vsel %vm10153, %v9897, 0.0
  %v10218 = vsel %vm10154, %v9898, 0.0
  %v10219 = vsel %vm10155, %v9899, 0.0
  %v10220 = vsel %vm10156, %v9900, 0.0
  %v10221 = vsel %vm10157, %v9901, 0.0
  %v10222 = vsel %vm10158, %v9902, 0.0
  %v10223 = vsel %vm10159, %v9903, 0.0
  %v10224 = vsel %vm10160, %v9904, 0.0
  %v10225 = vsel %vm10161, %v9905, 0.0
  %v10226 = vsel %vm10162, %v9906, 0.0
  %v10227 = vsel %vm10163, %v9907, 0.0
  %v10228 = vsel %vm10164, %v9908, 0.0
  %v10229 = vsel %vm10165, %v9909, 0.0
  %v10230 = vsel %vm10166, %v9910, 0.0
  %v10231 = vsel %vm10167, %v9911, 0.0
  %v10232 = vsel %vm10168, %v9912, 0.0
  %v10233 = vsel %vm10169, %v9913, 0.0
  %v10234 = vsel %vm10170, %v9914, 0.0
  %v10235 = vsel %vm10171, %v9915, 0.0
  %v10236 = vsel %vm10172, %v9916, 0.0
  %v10237 = vsel %vm10173, %v9917, 0.0
  %v10238 = vsel %vm10174, %v9918, 0.0
  %v10239 = vsel %vm10175, %v9919, 0.0
  %v10240 = vsel %vm10176, %v9920, 0.0
  %v10241 = vsel %vm10177, %v9921, 0.0
  %10242 = vst.msk [vmem:[#allocation3 + $0x8] sm:$0xff] %vm1045, %v10178
  %10243 = vst.msk [vmem:[#allocation3 + $0x18] sm:$0xff] %vm1045, %v10179
  %10244 = vst.msk [vmem:[#allocation3 + $0x28] sm:$0xff] %vm1045, %v10180
  %10245 = vst.msk [vmem:[#allocation3 + $0x38] sm:$0xff] %vm1045, %v10181
  %10246 = vst.msk [vmem:[#allocation3 + $0x48] sm:$0xff] %vm1045, %v10182
  %10247 = vst.msk [vmem:[#allocation3 + $0x58] sm:$0xff] %vm1045, %v10183
  %10248 = vst.msk [vmem:[#allocation3 + $0x68] sm:$0xff] %vm1045, %v10184
  %10249 = vst.msk [vmem:[#allocation3 + $0x78] sm:$0xff] %vm1045, %v10185
  %10250 = vst.msk [vmem:[#allocation3 + $0x88] sm:$0xff] %vm1045, %v10186
  %10251 = vst.msk [vmem:[#allocation3 + $0x98] sm:$0xff] %vm1045, %v10187
  %10252 = vst.msk [vmem:[#allocation3 + $0xa8] sm:$0xff] %vm1045, %v10188
  %10253 = vst.msk [vmem:[#allocation3 + $0xb8] sm:$0xff] %vm1045, %v10189
  %10254 = vst.msk [vmem:[#allocation3 + $0xc8] sm:$0xff] %vm1045, %v10190
  %10255 = vst.msk [vmem:[#allocation3 + $0xd8] sm:$0xff] %vm1045, %v10191
  %10256 = vst.msk [vmem:[#allocation3 + $0xe8] sm:$0xff] %vm1045, %v10192
  %10257 = vst.msk [vmem:[#allocation3 + $0xf8] sm:$0xff] %vm1045, %v10193
  %10258 = vst.msk [vmem:[#allocation3 + $0x108] sm:$0xff] %vm1045, %v10194
  %10259 = vst.msk [vmem:[#allocation3 + $0x118] sm:$0xff] %vm1045, %v10195
  %10260 = vst.msk [vmem:[#allocation3 + $0x128] sm:$0xff] %vm1045, %v10196
  %10261 = vst.msk [vmem:[#allocation3 + $0x138] sm:$0xff] %vm1045, %v10197
  %10262 = vst.msk [vmem:[#allocation3 + $0x148] sm:$0xff] %vm1045, %v10198
  %10263 = vst.msk [vmem:[#allocation3 + $0x158] sm:$0xff] %vm1045, %v10199
  %10264 = vst.msk [vmem:[#allocation3 + $0x168] sm:$0xff] %vm1045, %v10200
  %10265 = vst.msk [vmem:[#allocation3 + $0x178] sm:$0xff] %vm1045, %v10201
  %10266 = vst.msk [vmem:[#allocation3 + $0x188] sm:$0xff] %vm1045, %v10202
  %10267 = vst.msk [vmem:[#allocation3 + $0x198] sm:$0xff] %vm1045, %v10203
  %10268 = vst.msk [vmem:[#allocation3 + $0x1a8] sm:$0xff] %vm1045, %v10204
  %10269 = vst.msk [vmem:[#allocation3 + $0x1b8] sm:$0xff] %vm1045, %v10205
  %10270 = vst.msk [vmem:[#allocation3 + $0x1c8] sm:$0xff] %vm1045, %v10206
  %10271 = vst.msk [vmem:[#allocation3 + $0x1d8] sm:$0xff] %vm1045, %v10207
  %10272 = vst.msk [vmem:[#allocation3 + $0x1e8] sm:$0xff] %vm1045, %v10208
  %10273 = vst.msk [vmem:[#allocation3 + $0x1f8] sm:$0xff] %vm1045, %v10209
  %10274 = vst.msk [vmem:[#allocation3 + $0x208] sm:$0xff] %vm1045, %v10210
  %10275 = vst.msk [vmem:[#allocation3 + $0x218] sm:$0xff] %vm1045, %v10211
  %10276 = vst.msk [vmem:[#allocation3 + $0x228] sm:$0xff] %vm1045, %v10212
  %10277 = vst.msk [vmem:[#allocation3 + $0x238] sm:$0xff] %vm1045, %v10213
  %10278 = vst.msk [vmem:[#allocation3 + $0x248] sm:$0xff] %vm1045, %v10214
  %10279 = vst.msk [vmem:[#allocation3 + $0x258] sm:$0xff] %vm1045, %v10215
  %10280 = vst.msk [vmem:[#allocation3 + $0x268] sm:$0xff] %vm1045, %v10216
  %10281 = vst.msk [vmem:[#allocation3 + $0x278] sm:$0xff] %vm1045, %v10217
  %10282 = vst.msk [vmem:[#allocation3 + $0x288] sm:$0xff] %vm1045, %v10218
  %10283 = vst.msk [vmem:[#allocation3 + $0x298] sm:$0xff] %vm1045, %v10219
  %10284 = vst.msk [vmem:[#allocation3 + $0x2a8] sm:$0xff] %vm1045, %v10220
  %10285 = vst.msk [vmem:[#allocation3 + $0x2b8] sm:$0xff] %vm1045, %v10221
  %10286 = vst.msk [vmem:[#allocation3 + $0x2c8] sm:$0xff] %vm1045, %v10222
  %10287 = vst.msk [vmem:[#allocation3 + $0x2d8] sm:$0xff] %vm1045, %v10223
  %10288 = vst.msk [vmem:[#allocation3 + $0x2e8] sm:$0xff] %vm1045, %v10224
  %10289 = vst.msk [vmem:[#allocation3 + $0x2f8] sm:$0xff] %vm1045, %v10225
  %10290 = vst.msk [vmem:[#allocation3 + $0x308] sm:$0xff] %vm1045, %v10226
  %10291 = vst.msk [vmem:[#allocation3 + $0x318] sm:$0xff] %vm1045, %v10227
  %10292 = vst.msk [vmem:[#allocation3 + $0x328] sm:$0xff] %vm1045, %v10228
  %10293 = vst.msk [vmem:[#allocation3 + $0x338] sm:$0xff] %vm1045, %v10229
  %10294 = vst.msk [vmem:[#allocation3 + $0x348] sm:$0xff] %vm1045, %v10230
  %10295 = vst.msk [vmem:[#allocation3 + $0x358] sm:$0xff] %vm1045, %v10231
  %10296 = vst.msk [vmem:[#allocation3 + $0x368] sm:$0xff] %vm1045, %v10232
  %10297 = vst.msk [vmem:[#allocation3 + $0x378] sm:$0xff] %vm1045, %v10233
  %10298 = vst.msk [vmem:[#allocation3 + $0x388] sm:$0xff] %vm1045, %v10234
  %10299 = vst.msk [vmem:[#allocation3 + $0x398] sm:$0xff] %vm1045, %v10235
  %10300 = vst.msk [vmem:[#allocation3 + $0x3a8] sm:$0xff] %vm1045, %v10236
  %10301 = vst.msk [vmem:[#allocation3 + $0x3b8] sm:$0xff] %vm1045, %v10237
  %10302 = vst.msk [vmem:[#allocation3 + $0x3c8] sm:$0xff] %vm1045, %v10238
  %10303 = vst.msk [vmem:[#allocation3 + $0x3d8] sm:$0xff] %vm1045, %v10239
  %10304 = vst.msk [vmem:[#allocation3 + $0x3e8] sm:$0xff] %vm1045, %v10240
  %10305 = vst.msk [vmem:[#allocation3 + $0x3f8] sm:$0xff] %vm1045, %v10241
  %v10306 = vld [vmem:[#allocation3] sm:$0xff]
  %v10307 = vld [vmem:[#allocation3 + $0x8] sm:$0xff]
  %v10308 = vld [vmem:[#allocation3 + $0x10] sm:$0xff]
  %v10309 = vld [vmem:[#allocation3 + $0x18] sm:$0xff]
  %v10310 = vld [vmem:[#allocation3 + $0x20] sm:$0xff]
  %v10311 = vld [vmem:[#allocation3 + $0x28] sm:$0xff]
  %v10312 = vld [vmem:[#allocation3 + $0x30] sm:$0xff]
  %v10313 = vld [vmem:[#allocation3 + $0x38] sm:$0xff]
  %v10314 = vld [vmem:[#allocation3 + $0x40] sm:$0xff]
  %v10315 = vld [vmem:[#allocation3 + $0x48] sm:$0xff]
  %v10316 = vld [vmem:[#allocation3 + $0x50] sm:$0xff]
  %v10317 = vld [vmem:[#allocation3 + $0x58] sm:$0xff]
  %v10318 = vld [vmem:[#allocation3 + $0x60] sm:$0xff]
  %v10319 = vld [vmem:[#allocation3 + $0x68] sm:$0xff]
  %v10320 = vld [vmem:[#allocation3 + $0x70] sm:$0xff]
  %v10321 = vld [vmem:[#allocation3 + $0x78] sm:$0xff]
  %v10322 = vld [vmem:[#allocation3 + $0x80] sm:$0xff]
  %v10323 = vld [vmem:[#allocation3 + $0x88] sm:$0xff]
  %v10324 = vld [vmem:[#allocation3 + $0x90] sm:$0xff]
  %v10325 = vld [vmem:[#allocation3 + $0x98] sm:$0xff]
  %v10326 = vld [vmem:[#allocation3 + $0xa0] sm:$0xff]
  %v10327 = vld [vmem:[#allocation3 + $0xa8] sm:$0xff]
  %v10328 = vld [vmem:[#allocation3 + $0xb0] sm:$0xff]
  %v10329 = vld [vmem:[#allocation3 + $0xb8] sm:$0xff]
  %v10330 = vld [vmem:[#allocation3 + $0xc0] sm:$0xff]
  %v10331 = vld [vmem:[#allocation3 + $0xc8] sm:$0xff]
  %v10332 = vld [vmem:[#allocation3 + $0xd0] sm:$0xff]
  %v10333 = vld [vmem:[#allocation3 + $0xd8] sm:$0xff]
  %v10334 = vld [vmem:[#allocation3 + $0xe0] sm:$0xff]
  %v10335 = vld [vmem:[#allocation3 + $0xe8] sm:$0xff]
  %v10336 = vld [vmem:[#allocation3 + $0xf0] sm:$0xff]
  %v10337 = vld [vmem:[#allocation3 + $0xf8] sm:$0xff]
  %v10338 = vld [vmem:[#allocation3 + $0x100] sm:$0xff]
  %v10339 = vld [vmem:[#allocation3 + $0x108] sm:$0xff]
  %v10340 = vld [vmem:[#allocation3 + $0x110] sm:$0xff]
  %v10341 = vld [vmem:[#allocation3 + $0x118] sm:$0xff]
  %v10342 = vld [vmem:[#allocation3 + $0x120] sm:$0xff]
  %v10343 = vld [vmem:[#allocation3 + $0x128] sm:$0xff]
  %v10344 = vld [vmem:[#allocation3 + $0x130] sm:$0xff]
  %v10345 = vld [vmem:[#allocation3 + $0x138] sm:$0xff]
  %v10346 = vld [vmem:[#allocation3 + $0x140] sm:$0xff]
  %v10347 = vld [vmem:[#allocation3 + $0x148] sm:$0xff]
  %v10348 = vld [vmem:[#allocation3 + $0x150] sm:$0xff]
  %v10349 = vld [vmem:[#allocation3 + $0x158] sm:$0xff]
  %v10350 = vld [vmem:[#allocation3 + $0x160] sm:$0xff]
  %v10351 = vld [vmem:[#allocation3 + $0x168] sm:$0xff]
  %v10352 = vld [vmem:[#allocation3 + $0x170] sm:$0xff]
  %v10353 = vld [vmem:[#allocation3 + $0x178] sm:$0xff]
  %v10354 = vld [vmem:[#allocation3 + $0x180] sm:$0xff]
  %v10355 = vld [vmem:[#allocation3 + $0x188] sm:$0xff]
  %v10356 = vld [vmem:[#allocation3 + $0x190] sm:$0xff]
  %v10357 = vld [vmem:[#allocation3 + $0x198] sm:$0xff]
  %v10358 = vld [vmem:[#allocation3 + $0x1a0] sm:$0xff]
  %v10359 = vld [vmem:[#allocation3 + $0x1a8] sm:$0xff]
  %v10360 = vld [vmem:[#allocation3 + $0x1b0] sm:$0xff]
  %v10361 = vld [vmem:[#allocation3 + $0x1b8] sm:$0xff]
  %v10362 = vld [vmem:[#allocation3 + $0x1c0] sm:$0xff]
  %v10363 = vld [vmem:[#allocation3 + $0x1c8] sm:$0xff]
  %v10364 = vld [vmem:[#allocation3 + $0x1d0] sm:$0xff]
  %v10365 = vld [vmem:[#allocation3 + $0x1d8] sm:$0xff]
  %v10366 = vld [vmem:[#allocation3 + $0x1e0] sm:$0xff]
  %v10367 = vld [vmem:[#allocation3 + $0x1e8] sm:$0xff]
  %v10368 = vld [vmem:[#allocation3 + $0x1f0] sm:$0xff]
  %v10369 = vld [vmem:[#allocation3 + $0x1f8] sm:$0xff]
  %v10370 = vld [vmem:[#allocation3 + $0x200] sm:$0xff]
  %v10371 = vld [vmem:[#allocation3 + $0x208] sm:$0xff]
  %v10372 = vld [vmem:[#allocation3 + $0x210] sm:$0xff]
  %v10373 = vld [vmem:[#allocation3 + $0x218] sm:$0xff]
  %v10374 = vld [vmem:[#allocation3 + $0x220] sm:$0xff]
  %v10375 = vld [vmem:[#allocation3 + $0x228] sm:$0xff]
  %v10376 = vld [vmem:[#allocation3 + $0x230] sm:$0xff]
  %v10377 = vld [vmem:[#allocation3 + $0x238] sm:$0xff]
  %v10378 = vld [vmem:[#allocation3 + $0x240] sm:$0xff]
  %v10379 = vld [vmem:[#allocation3 + $0x248] sm:$0xff]
  %v10380 = vld [vmem:[#allocation3 + $0x250] sm:$0xff]
  %v10381 = vld [vmem:[#allocation3 + $0x258] sm:$0xff]
  %v10382 = vld [vmem:[#allocation3 + $0x260] sm:$0xff]
  %v10383 = vld [vmem:[#allocation3 + $0x268] sm:$0xff]
  %v10384 = vld [vmem:[#allocation3 + $0x270] sm:$0xff]
  %v10385 = vld [vmem:[#allocation3 + $0x278] sm:$0xff]
  %v10386 = vld [vmem:[#allocation3 + $0x280] sm:$0xff]
  %v10387 = vld [vmem:[#allocation3 + $0x288] sm:$0xff]
  %v10388 = vld [vmem:[#allocation3 + $0x290] sm:$0xff]
  %v10389 = vld [vmem:[#allocation3 + $0x298] sm:$0xff]
  %v10390 = vld [vmem:[#allocation3 + $0x2a0] sm:$0xff]
  %v10391 = vld [vmem:[#allocation3 + $0x2a8] sm:$0xff]
  %v10392 = vld [vmem:[#allocation3 + $0x2b0] sm:$0xff]
  %v10393 = vld [vmem:[#allocation3 + $0x2b8] sm:$0xff]
  %v10394 = vld [vmem:[#allocation3 + $0x2c0] sm:$0xff]
  %v10395 = vld [vmem:[#allocation3 + $0x2c8] sm:$0xff]
  %v10396 = vld [vmem:[#allocation3 + $0x2d0] sm:$0xff]
  %v10397 = vld [vmem:[#allocation3 + $0x2d8] sm:$0xff]
  %v10398 = vld [vmem:[#allocation3 + $0x2e0] sm:$0xff]
  %v10399 = vld [vmem:[#allocation3 + $0x2e8] sm:$0xff]
  %v10400 = vld [vmem:[#allocation3 + $0x2f0] sm:$0xff]
  %v10401 = vld [vmem:[#allocation3 + $0x2f8] sm:$0xff]
  %v10402 = vld [vmem:[#allocation3 + $0x300] sm:$0xff]
  %v10403 = vld [vmem:[#allocation3 + $0x308] sm:$0xff]
  %v10404 = vld [vmem:[#allocation3 + $0x310] sm:$0xff]
  %v10405 = vld [vmem:[#allocation3 + $0x318] sm:$0xff]
  %v10406 = vld [vmem:[#allocation3 + $0x320] sm:$0xff]
  %v10407 = vld [vmem:[#allocation3 + $0x328] sm:$0xff]
  %v10408 = vld [vmem:[#allocation3 + $0x330] sm:$0xff]
  %v10409 = vld [vmem:[#allocation3 + $0x338] sm:$0xff]
  %v10410 = vld [vmem:[#allocation3 + $0x340] sm:$0xff]
  %v10411 = vld [vmem:[#allocation3 + $0x348] sm:$0xff]
  %v10412 = vld [vmem:[#allocation3 + $0x350] sm:$0xff]
  %v10413 = vld [vmem:[#allocation3 + $0x358] sm:$0xff]
  %v10414 = vld [vmem:[#allocation3 + $0x360] sm:$0xff]
  %v10415 = vld [vmem:[#allocation3 + $0x368] sm:$0xff]
  %v10416 = vld [vmem:[#allocation3 + $0x370] sm:$0xff]
  %v10417 = vld [vmem:[#allocation3 + $0x378] sm:$0xff]
  %v10418 = vld [vmem:[#allocation3 + $0x380] sm:$0xff]
  %v10419 = vld [vmem:[#allocation3 + $0x388] sm:$0xff]
  %v10420 = vld [vmem:[#allocation3 + $0x390] sm:$0xff]
  %v10421 = vld [vmem:[#allocation3 + $0x398] sm:$0xff]
  %v10422 = vld [vmem:[#allocation3 + $0x3a0] sm:$0xff]
  %v10423 = vld [vmem:[#allocation3 + $0x3a8] sm:$0xff]
  %v10424 = vld [vmem:[#allocation3 + $0x3b0] sm:$0xff]
  %v10425 = vld [vmem:[#allocation3 + $0x3b8] sm:$0xff]
  %v10426 = vld [vmem:[#allocation3 + $0x3c0] sm:$0xff]
  %v10427 = vld [vmem:[#allocation3 + $0x3c8] sm:$0xff]
  %v10428 = vld [vmem:[#allocation3 + $0x3d0] sm:$0xff]
  %v10429 = vld [vmem:[#allocation3 + $0x3d8] sm:$0xff]
  %v10430 = vld [vmem:[#allocation3 + $0x3e0] sm:$0xff]
  %v10431 = vld [vmem:[#allocation3 + $0x3e8] sm:$0xff]
  %v10432 = vld [vmem:[#allocation3 + $0x3f0] sm:$0xff]
  %v10433 = vld [vmem:[#allocation3 + $0x3f8] sm:$0xff]
  %v10434 = vld [vmem:[%s6] sm:$0xff]
  %v10435 = vld [vmem:[%s6 + $0x8] sm:$0xff]
  %v10436 = vld [vmem:[%s6 + $0x10] sm:$0xff]
  %v10437 = vld [vmem:[%s6 + $0x18] sm:$0xff]
  %v10438 = vld [vmem:[%s6 + $0x20] sm:$0xff]
  %v10439 = vld [vmem:[%s6 + $0x28] sm:$0xff]
  %v10440 = vld [vmem:[%s6 + $0x30] sm:$0xff]
  %v10441 = vld [vmem:[%s6 + $0x38] sm:$0xff]
  %v10442 = vld [vmem:[%s6 + $0x40] sm:$0xff]
  %v10443 = vld [vmem:[%s6 + $0x48] sm:$0xff]
  %v10444 = vld [vmem:[%s6 + $0x50] sm:$0xff]
  %v10445 = vld [vmem:[%s6 + $0x58] sm:$0xff]
  %v10446 = vld [vmem:[%s6 + $0x60] sm:$0xff]
  %v10447 = vld [vmem:[%s6 + $0x68] sm:$0xff]
  %v10448 = vld [vmem:[%s6 + $0x70] sm:$0xff]
  %v10449 = vld [vmem:[%s6 + $0x78] sm:$0xff]
  %v10450 = vld [vmem:[%s6 + $0x80] sm:$0xff]
  %v10451 = vld [vmem:[%s6 + $0x88] sm:$0xff]
  %v10453 = vsel %vm1045, %v10307, 0
  %v10456 = vsel %vm1045, %v10309, 0
  %v10459 = vsel %vm1045, %v10311, 0
  %v10462 = vsel %vm1045, %v10313, 0
  %v10465 = vsel %vm1045, %v10315, 0
  %v10468 = vsel %vm1045, %v10317, 0
  %v10471 = vsel %vm1045, %v10319, 0
  %v10474 = vsel %vm1045, %v10321, 0
  %v10477 = vsel %vm1045, %v10323, 0
  %v10480 = vsel %vm1045, %v10325, 0
  %v10483 = vsel %vm1045, %v10327, 0
  %v10486 = vsel %vm1045, %v10329, 0
  %v10489 = vsel %vm1045, %v10331, 0
  %v10492 = vsel %vm1045, %v10333, 0
  %v10495 = vsel %vm1045, %v10335, 0
  %v10498 = vsel %vm1045, %v10337, 0
  %v10501 = vsel %vm1045, %v10339, 0
  %v10504 = vsel %vm1045, %v10341, 0
  %v10507 = vsel %vm1045, %v10343, 0
  %v10510 = vsel %vm1045, %v10345, 0
  %v10513 = vsel %vm1045, %v10347, 0
  %v10516 = vsel %vm1045, %v10349, 0
  %v10519 = vsel %vm1045, %v10351, 0
  %v10522 = vsel %vm1045, %v10353, 0
  %v10525 = vsel %vm1045, %v10355, 0
  %v10528 = vsel %vm1045, %v10357, 0
  %v10531 = vsel %vm1045, %v10359, 0
  %v10534 = vsel %vm1045, %v10361, 0
  %v10537 = vsel %vm1045, %v10363, 0
  %v10540 = vsel %vm1045, %v10365, 0
  %v10543 = vsel %vm1045, %v10367, 0
  %v10546 = vsel %vm1045, %v10369, 0
  %v10549 = vsel %vm1045, %v10371, 0
  %v10552 = vsel %vm1045, %v10373, 0
  %v10555 = vsel %vm1045, %v10375, 0
  %v10558 = vsel %vm1045, %v10377, 0
  %v10561 = vsel %vm1045, %v10379, 0
  %v10564 = vsel %vm1045, %v10381, 0
  %v10567 = vsel %vm1045, %v10383, 0
  %v10570 = vsel %vm1045, %v10385, 0
  %v10573 = vsel %vm1045, %v10387, 0
  %v10576 = vsel %vm1045, %v10389, 0
  %v10579 = vsel %vm1045, %v10391, 0
  %v10582 = vsel %vm1045, %v10393, 0
  %v10585 = vsel %vm1045, %v10395, 0
  %v10588 = vsel %vm1045, %v10397, 0
  %v10591 = vsel %vm1045, %v10399, 0
  %v10594 = vsel %vm1045, %v10401, 0
  %v10597 = vsel %vm1045, %v10403, 0
  %v10600 = vsel %vm1045, %v10405, 0
  %v10603 = vsel %vm1045, %v10407, 0
  %v10606 = vsel %vm1045, %v10409, 0
  %v10609 = vsel %vm1045, %v10411, 0
  %v10612 = vsel %vm1045, %v10413, 0
  %v10615 = vsel %vm1045, %v10415, 0
  %v10618 = vsel %vm1045, %v10417, 0
  %v10621 = vsel %vm1045, %v10419, 0
  %v10624 = vsel %vm1045, %v10421, 0
  %v10627 = vsel %vm1045, %v10423, 0
  %v10630 = vsel %vm1045, %v10425, 0
  %v10633 = vsel %vm1045, %v10427, 0
  %v10636 = vsel %vm1045, %v10429, 0
  %v10639 = vsel %vm1045, %v10431, 0
  %v10642 = vsel %vm1045, %v10433, 0
  %10644 = vmatpush.msra.mxu0 %v10449
  %10645 = vmatpush.msra.mxu0 %v10448
  %10646 = vmatpush.msra.mxu0 %v10447
  %10647 = vmatpush.msra.mxu0 %v10446
  %10648 = vmatpush.msra.mxu0 %v10445
  %10649 = vmatpush.msra.mxu0 %v10444
  %10650 = vmatpush.msra.mxu0 %v10443
  %10651 = vmatpush.msra.mxu0 %v10442
  %10652 = vmatpush.msra.mxu0 %v10441
  %10653 = vmatpush.msra.mxu0 %v10440
  %10654 = vmatpush.msra.mxu0 %v10439
  %10655 = vmatpush.msra.mxu0 %v10438
  %10656 = vmatpush.msra.mxu0 %v10437
  %10657 = vmatpush.msra.mxu0 %v10436
  %10658 = vmatpush.msra.mxu0 %v10435
  %10659 = vmatpush.msra.mxu0 %v10434
  %10660 = vmatmul.f32.gmra.mxu0 %v10306
  %v10661 = vpop.f32.mrf.mxu0
  %v10662 = vadd.f32 0.0, %v10661
  %10663 = vmatmul.f32.gmra.mxu0 %v10308
  %v10664 = vpop.f32.mrf.mxu0
  %v10665 = vadd.f32 0.0, %v10664
  %10666 = vmatmul.f32.gmra.mxu0 %v10310
  %v10667 = vpop.f32.mrf.mxu0
  %v10668 = vadd.f32 0.0, %v10667
  %10669 = vmatmul.f32.gmra.mxu0 %v10312
  %v10670 = vpop.f32.mrf.mxu0
  %v10671 = vadd.f32 0.0, %v10670
  %10672 = vmatmul.f32.gmra.mxu0 %v10314
  %v10673 = vpop.f32.mrf.mxu0
  %v10674 = vadd.f32 0.0, %v10673
  %10675 = vmatmul.f32.gmra.mxu0 %v10316
  %v10676 = vpop.f32.mrf.mxu0
  %v10677 = vadd.f32 0.0, %v10676
  %10678 = vmatmul.f32.gmra.mxu0 %v10318
  %v10679 = vpop.f32.mrf.mxu0
  %v10680 = vadd.f32 0.0, %v10679
  %10681 = vmatmul.f32.gmra.mxu0 %v10320
  %v10682 = vpop.f32.mrf.mxu0
  %v10683 = vadd.f32 0.0, %v10682
  %10684 = vmatmul.f32.gmra.mxu0 %v10322
  %v10685 = vpop.f32.mrf.mxu0
  %v10686 = vadd.f32 0.0, %v10685
  %10687 = vmatmul.f32.gmra.mxu0 %v10324
  %v10688 = vpop.f32.mrf.mxu0
  %v10689 = vadd.f32 0.0, %v10688
  %10690 = vmatmul.f32.gmra.mxu0 %v10326
  %v10691 = vpop.f32.mrf.mxu0
  %v10692 = vadd.f32 0.0, %v10691
  %10693 = vmatmul.f32.gmra.mxu0 %v10328
  %v10694 = vpop.f32.mrf.mxu0
  %v10695 = vadd.f32 0.0, %v10694
  %10696 = vmatmul.f32.gmra.mxu0 %v10330
  %v10697 = vpop.f32.mrf.mxu0
  %v10698 = vadd.f32 0.0, %v10697
  %10699 = vmatmul.f32.gmra.mxu0 %v10332
  %v10700 = vpop.f32.mrf.mxu0
  %v10701 = vadd.f32 0.0, %v10700
  %10702 = vmatmul.f32.gmra.mxu0 %v10334
  %v10703 = vpop.f32.mrf.mxu0
  %v10704 = vadd.f32 0.0, %v10703
  %10705 = vmatmul.f32.gmra.mxu0 %v10336
  %v10706 = vpop.f32.mrf.mxu0
  %v10707 = vadd.f32 0.0, %v10706
  %10708 = vmatmul.f32.gmra.mxu0 %v10338
  %v10709 = vpop.f32.mrf.mxu0
  %v10710 = vadd.f32 0.0, %v10709
  %10711 = vmatmul.f32.gmra.mxu0 %v10340
  %v10712 = vpop.f32.mrf.mxu0
  %v10713 = vadd.f32 0.0, %v10712
  %10714 = vmatmul.f32.gmra.mxu0 %v10342
  %v10715 = vpop.f32.mrf.mxu0
  %v10716 = vadd.f32 0.0, %v10715
  %10717 = vmatmul.f32.gmra.mxu0 %v10344
  %v10718 = vpop.f32.mrf.mxu0
  %v10719 = vadd.f32 0.0, %v10718
  %10720 = vmatmul.f32.gmra.mxu0 %v10346
  %v10721 = vpop.f32.mrf.mxu0
  %v10722 = vadd.f32 0.0, %v10721
  %10723 = vmatmul.f32.gmra.mxu0 %v10348
  %v10724 = vpop.f32.mrf.mxu0
  %v10725 = vadd.f32 0.0, %v10724
  %10726 = vmatmul.f32.gmra.mxu0 %v10350
  %v10727 = vpop.f32.mrf.mxu0
  %v10728 = vadd.f32 0.0, %v10727
  %10729 = vmatmul.f32.gmra.mxu0 %v10352
  %v10730 = vpop.f32.mrf.mxu0
  %v10731 = vadd.f32 0.0, %v10730
  %10732 = vmatmul.f32.gmra.mxu0 %v10354
  %v10733 = vpop.f32.mrf.mxu0
  %v10734 = vadd.f32 0.0, %v10733
  %10735 = vmatmul.f32.gmra.mxu0 %v10356
  %v10736 = vpop.f32.mrf.mxu0
  %v10737 = vadd.f32 0.0, %v10736
  %10738 = vmatmul.f32.gmra.mxu0 %v10358
  %v10739 = vpop.f32.mrf.mxu0
  %v10740 = vadd.f32 0.0, %v10739
  %10741 = vmatmul.f32.gmra.mxu0 %v10360
  %v10742 = vpop.f32.mrf.mxu0
  %v10743 = vadd.f32 0.0, %v10742
  %10744 = vmatmul.f32.gmra.mxu0 %v10362
  %v10745 = vpop.f32.mrf.mxu0
  %v10746 = vadd.f32 0.0, %v10745
  %10747 = vmatmul.f32.gmra.mxu0 %v10364
  %v10748 = vpop.f32.mrf.mxu0
  %v10749 = vadd.f32 0.0, %v10748
  %10750 = vmatmul.f32.gmra.mxu0 %v10366
  %v10751 = vpop.f32.mrf.mxu0
  %v10752 = vadd.f32 0.0, %v10751
  %10753 = vmatmul.f32.gmra.mxu0 %v10368
  %v10754 = vpop.f32.mrf.mxu0
  %v10755 = vadd.f32 0.0, %v10754
  %10756 = vmatmul.f32.gmra.mxu0 %v10370
  %v10757 = vpop.f32.mrf.mxu0
  %v10758 = vadd.f32 0.0, %v10757
  %10759 = vmatmul.f32.gmra.mxu0 %v10372
  %v10760 = vpop.f32.mrf.mxu0
  %v10761 = vadd.f32 0.0, %v10760
  %10762 = vmatmul.f32.gmra.mxu0 %v10374
  %v10763 = vpop.f32.mrf.mxu0
  %v10764 = vadd.f32 0.0, %v10763
  %10765 = vmatmul.f32.gmra.mxu0 %v10376
  %v10766 = vpop.f32.mrf.mxu0
  %v10767 = vadd.f32 0.0, %v10766
  %10768 = vmatmul.f32.gmra.mxu0 %v10378
  %v10769 = vpop.f32.mrf.mxu0
  %v10770 = vadd.f32 0.0, %v10769
  %10771 = vmatmul.f32.gmra.mxu0 %v10380
  %v10772 = vpop.f32.mrf.mxu0
  %v10773 = vadd.f32 0.0, %v10772
  %10774 = vmatmul.f32.gmra.mxu0 %v10382
  %v10775 = vpop.f32.mrf.mxu0
  %v10776 = vadd.f32 0.0, %v10775
  %10777 = vmatmul.f32.gmra.mxu0 %v10384
  %v10778 = vpop.f32.mrf.mxu0
  %v10779 = vadd.f32 0.0, %v10778
  %10780 = vmatmul.f32.gmra.mxu0 %v10386
  %v10781 = vpop.f32.mrf.mxu0
  %v10782 = vadd.f32 0.0, %v10781
  %10783 = vmatmul.f32.gmra.mxu0 %v10388
  %v10784 = vpop.f32.mrf.mxu0
  %v10785 = vadd.f32 0.0, %v10784
  %10786 = vmatmul.f32.gmra.mxu0 %v10390
  %v10787 = vpop.f32.mrf.mxu0
  %v10788 = vadd.f32 0.0, %v10787
  %10789 = vmatmul.f32.gmra.mxu0 %v10392
  %v10790 = vpop.f32.mrf.mxu0
  %v10791 = vadd.f32 0.0, %v10790
  %10792 = vmatmul.f32.gmra.mxu0 %v10394
  %v10793 = vpop.f32.mrf.mxu0
  %v10794 = vadd.f32 0.0, %v10793
  %10795 = vmatmul.f32.gmra.mxu0 %v10396
  %v10796 = vpop.f32.mrf.mxu0
  %v10797 = vadd.f32 0.0, %v10796
  %10798 = vmatmul.f32.gmra.mxu0 %v10398
  %v10799 = vpop.f32.mrf.mxu0
  %v10800 = vadd.f32 0.0, %v10799
  %10801 = vmatmul.f32.gmra.mxu0 %v10400
  %v10802 = vpop.f32.mrf.mxu0
  %v10803 = vadd.f32 0.0, %v10802
  %10804 = vmatmul.f32.gmra.mxu0 %v10402
  %v10805 = vpop.f32.mrf.mxu0
  %v10806 = vadd.f32 0.0, %v10805
  %10807 = vmatmul.f32.gmra.mxu0 %v10404
  %v10808 = vpop.f32.mrf.mxu0
  %v10809 = vadd.f32 0.0, %v10808
  %10810 = vmatmul.f32.gmra.mxu0 %v10406
  %v10811 = vpop.f32.mrf.mxu0
  %v10812 = vadd.f32 0.0, %v10811
  %10813 = vmatmul.f32.gmra.mxu0 %v10408
  %v10814 = vpop.f32.mrf.mxu0
  %v10815 = vadd.f32 0.0, %v10814
  %10816 = vmatmul.f32.gmra.mxu0 %v10410
  %v10817 = vpop.f32.mrf.mxu0
  %v10818 = vadd.f32 0.0, %v10817
  %10819 = vmatmul.f32.gmra.mxu0 %v10412
  %v10820 = vpop.f32.mrf.mxu0
  %v10821 = vadd.f32 0.0, %v10820
  %10822 = vmatmul.f32.gmra.mxu0 %v10414
  %v10823 = vpop.f32.mrf.mxu0
  %v10824 = vadd.f32 0.0, %v10823
  %10825 = vmatmul.f32.gmra.mxu0 %v10416
  %v10826 = vpop.f32.mrf.mxu0
  %v10827 = vadd.f32 0.0, %v10826
  %10828 = vmatmul.f32.gmra.mxu0 %v10418
  %v10829 = vpop.f32.mrf.mxu0
  %v10830 = vadd.f32 0.0, %v10829
  %10831 = vmatmul.f32.gmra.mxu0 %v10420
  %v10832 = vpop.f32.mrf.mxu0
  %v10833 = vadd.f32 0.0, %v10832
  %10834 = vmatmul.f32.gmra.mxu0 %v10422
  %v10835 = vpop.f32.mrf.mxu0
  %v10836 = vadd.f32 0.0, %v10835
  %10837 = vmatmul.f32.gmra.mxu0 %v10424
  %v10838 = vpop.f32.mrf.mxu0
  %v10839 = vadd.f32 0.0, %v10838
  %10840 = vmatmul.f32.gmra.mxu0 %v10426
  %v10841 = vpop.f32.mrf.mxu0
  %v10842 = vadd.f32 0.0, %v10841
  %10843 = vmatmul.f32.gmra.mxu0 %v10428
  %v10844 = vpop.f32.mrf.mxu0
  %v10845 = vadd.f32 0.0, %v10844
  %10846 = vmatmul.f32.gmra.mxu0 %v10430
  %v10847 = vpop.f32.mrf.mxu0
  %v10848 = vadd.f32 0.0, %v10847
  %10849 = vmatmul.f32.gmra.mxu0 %v10432
  %v10850 = vpop.f32.mrf.mxu0
  %v10851 = vadd.f32 0.0, %v10850
  %10852 = vdwg.mxu0
  %10853 = vmatpush.msra.mxu0 0.0
  %10854 = vmatpush.msra.mxu0 0.0
  %10855 = vmatpush.msra.mxu0 0.0
  %10856 = vmatpush.msra.mxu0 0.0
  %10857 = vmatpush.msra.mxu0 0.0
  %10858 = vmatpush.msra.mxu0 0.0
  %10859 = vmatpush.msra.mxu0 0.0
  %10860 = vmatpush.msra.mxu0 0.0
  %10861 = vmatpush.msra.mxu0 0.0
  %10862 = vmatpush.msra.mxu0 0.0
  %10863 = vmatpush.msra.mxu0 0.0
  %10864 = vmatpush.msra.mxu0 0.0
  %10865 = vmatpush.msra.mxu0 0.0
  %10866 = vmatpush.msra.mxu0 0.0
  %10867 = vmatpush.msra.mxu0 %v10451
  %10868 = vmatpush.msra.mxu0 %v10450
  %10869 = vmatmul.f32.gmra.mxu0 %v10453
  %v10870 = vpop.f32.mrf.mxu0
  %v10871 = vadd.f32 %v10662, %v10870
  %10872 = vmatmul.f32.gmra.mxu0 %v10456
  %v10873 = vpop.f32.mrf.mxu0
  %v10874 = vadd.f32 %v10665, %v10873
  %10875 = vmatmul.f32.gmra.mxu0 %v10459
  %v10876 = vpop.f32.mrf.mxu0
  %v10877 = vadd.f32 %v10668, %v10876
  %10878 = vmatmul.f32.gmra.mxu0 %v10462
  %v10879 = vpop.f32.mrf.mxu0
  %v10880 = vadd.f32 %v10671, %v10879
  %10881 = vmatmul.f32.gmra.mxu0 %v10465
  %v10882 = vpop.f32.mrf.mxu0
  %v10883 = vadd.f32 %v10674, %v10882
  %10884 = vmatmul.f32.gmra.mxu0 %v10468
  %v10885 = vpop.f32.mrf.mxu0
  %v10886 = vadd.f32 %v10677, %v10885
  %10887 = vmatmul.f32.gmra.mxu0 %v10471
  %v10888 = vpop.f32.mrf.mxu0
  %v10889 = vadd.f32 %v10680, %v10888
  %10890 = vmatmul.f32.gmra.mxu0 %v10474
  %v10891 = vpop.f32.mrf.mxu0
  %v10892 = vadd.f32 %v10683, %v10891
  %10893 = vmatmul.f32.gmra.mxu0 %v10477
  %v10894 = vpop.f32.mrf.mxu0
  %v10895 = vadd.f32 %v10686, %v10894
  %10896 = vmatmul.f32.gmra.mxu0 %v10480
  %v10897 = vpop.f32.mrf.mxu0
  %v10898 = vadd.f32 %v10689, %v10897
  %10899 = vmatmul.f32.gmra.mxu0 %v10483
  %v10900 = vpop.f32.mrf.mxu0
  %v10901 = vadd.f32 %v10692, %v10900
  %10902 = vmatmul.f32.gmra.mxu0 %v10486
  %v10903 = vpop.f32.mrf.mxu0
  %v10904 = vadd.f32 %v10695, %v10903
  %10905 = vmatmul.f32.gmra.mxu0 %v10489
  %v10906 = vpop.f32.mrf.mxu0
  %v10907 = vadd.f32 %v10698, %v10906
  %10908 = vmatmul.f32.gmra.mxu0 %v10492
  %v10909 = vpop.f32.mrf.mxu0
  %v10910 = vadd.f32 %v10701, %v10909
  %10911 = vmatmul.f32.gmra.mxu0 %v10495
  %v10912 = vpop.f32.mrf.mxu0
  %v10913 = vadd.f32 %v10704, %v10912
  %10914 = vmatmul.f32.gmra.mxu0 %v10498
  %v10915 = vpop.f32.mrf.mxu0
  %v10916 = vadd.f32 %v10707, %v10915
  %10917 = vmatmul.f32.gmra.mxu0 %v10501
  %v10918 = vpop.f32.mrf.mxu0
  %v10919 = vadd.f32 %v10710, %v10918
  %10920 = vmatmul.f32.gmra.mxu0 %v10504
  %v10921 = vpop.f32.mrf.mxu0
  %v10922 = vadd.f32 %v10713, %v10921
  %10923 = vmatmul.f32.gmra.mxu0 %v10507
  %v10924 = vpop.f32.mrf.mxu0
  %v10925 = vadd.f32 %v10716, %v10924
  %10926 = vmatmul.f32.gmra.mxu0 %v10510
  %v10927 = vpop.f32.mrf.mxu0
  %v10928 = vadd.f32 %v10719, %v10927
  %10929 = vmatmul.f32.gmra.mxu0 %v10513
  %v10930 = vpop.f32.mrf.mxu0
  %v10931 = vadd.f32 %v10722, %v10930
  %10932 = vmatmul.f32.gmra.mxu0 %v10516
  %v10933 = vpop.f32.mrf.mxu0
  %v10934 = vadd.f32 %v10725, %v10933
  %10935 = vmatmul.f32.gmra.mxu0 %v10519
  %v10936 = vpop.f32.mrf.mxu0
  %v10937 = vadd.f32 %v10728, %v10936
  %10938 = vmatmul.f32.gmra.mxu0 %v10522
  %v10939 = vpop.f32.mrf.mxu0
  %v10940 = vadd.f32 %v10731, %v10939
  %10941 = vmatmul.f32.gmra.mxu0 %v10525
  %v10942 = vpop.f32.mrf.mxu0
  %v10943 = vadd.f32 %v10734, %v10942
  %10944 = vmatmul.f32.gmra.mxu0 %v10528
  %v10945 = vpop.f32.mrf.mxu0
  %v10946 = vadd.f32 %v10737, %v10945
  %10947 = vmatmul.f32.gmra.mxu0 %v10531
  %v10948 = vpop.f32.mrf.mxu0
  %v10949 = vadd.f32 %v10740, %v10948
  %10950 = vmatmul.f32.gmra.mxu0 %v10534
  %v10951 = vpop.f32.mrf.mxu0
  %v10952 = vadd.f32 %v10743, %v10951
  %10953 = vmatmul.f32.gmra.mxu0 %v10537
  %v10954 = vpop.f32.mrf.mxu0
  %v10955 = vadd.f32 %v10746, %v10954
  %10956 = vmatmul.f32.gmra.mxu0 %v10540
  %v10957 = vpop.f32.mrf.mxu0
  %v10958 = vadd.f32 %v10749, %v10957
  %10959 = vmatmul.f32.gmra.mxu0 %v10543
  %v10960 = vpop.f32.mrf.mxu0
  %v10961 = vadd.f32 %v10752, %v10960
  %10962 = vmatmul.f32.gmra.mxu0 %v10546
  %v10963 = vpop.f32.mrf.mxu0
  %v10964 = vadd.f32 %v10755, %v10963
  %10965 = vmatmul.f32.gmra.mxu0 %v10549
  %v10966 = vpop.f32.mrf.mxu0
  %v10967 = vadd.f32 %v10758, %v10966
  %10968 = vmatmul.f32.gmra.mxu0 %v10552
  %v10969 = vpop.f32.mrf.mxu0
  %v10970 = vadd.f32 %v10761, %v10969
  %10971 = vmatmul.f32.gmra.mxu0 %v10555
  %v10972 = vpop.f32.mrf.mxu0
  %v10973 = vadd.f32 %v10764, %v10972
  %10974 = vmatmul.f32.gmra.mxu0 %v10558
  %v10975 = vpop.f32.mrf.mxu0
  %v10976 = vadd.f32 %v10767, %v10975
  %10977 = vmatmul.f32.gmra.mxu0 %v10561
  %v10978 = vpop.f32.mrf.mxu0
  %v10979 = vadd.f32 %v10770, %v10978
  %10980 = vmatmul.f32.gmra.mxu0 %v10564
  %v10981 = vpop.f32.mrf.mxu0
  %v10982 = vadd.f32 %v10773, %v10981
  %10983 = vmatmul.f32.gmra.mxu0 %v10567
  %v10984 = vpop.f32.mrf.mxu0
  %v10985 = vadd.f32 %v10776, %v10984
  %10986 = vmatmul.f32.gmra.mxu0 %v10570
  %v10987 = vpop.f32.mrf.mxu0
  %v10988 = vadd.f32 %v10779, %v10987
  %10989 = vmatmul.f32.gmra.mxu0 %v10573
  %v10990 = vpop.f32.mrf.mxu0
  %v10991 = vadd.f32 %v10782, %v10990
  %10992 = vmatmul.f32.gmra.mxu0 %v10576
  %v10993 = vpop.f32.mrf.mxu0
  %v10994 = vadd.f32 %v10785, %v10993
  %10995 = vmatmul.f32.gmra.mxu0 %v10579
  %v10996 = vpop.f32.mrf.mxu0
  %v10997 = vadd.f32 %v10788, %v10996
  %10998 = vmatmul.f32.gmra.mxu0 %v10582
  %v10999 = vpop.f32.mrf.mxu0
  %v11000 = vadd.f32 %v10791, %v10999
  %11001 = vmatmul.f32.gmra.mxu0 %v10585
  %v11002 = vpop.f32.mrf.mxu0
  %v11003 = vadd.f32 %v10794, %v11002
  %11004 = vmatmul.f32.gmra.mxu0 %v10588
  %v11005 = vpop.f32.mrf.mxu0
  %v11006 = vadd.f32 %v10797, %v11005
  %11007 = vmatmul.f32.gmra.mxu0 %v10591
  %v11008 = vpop.f32.mrf.mxu0
  %v11009 = vadd.f32 %v10800, %v11008
  %11010 = vmatmul.f32.gmra.mxu0 %v10594
  %v11011 = vpop.f32.mrf.mxu0
  %v11012 = vadd.f32 %v10803, %v11011
  %11013 = vmatmul.f32.gmra.mxu0 %v10597
  %v11014 = vpop.f32.mrf.mxu0
  %v11015 = vadd.f32 %v10806, %v11014
  %11016 = vmatmul.f32.gmra.mxu0 %v10600
  %v11017 = vpop.f32.mrf.mxu0
  %v11018 = vadd.f32 %v10809, %v11017
  %11019 = vmatmul.f32.gmra.mxu0 %v10603
  %v11020 = vpop.f32.mrf.mxu0
  %v11021 = vadd.f32 %v10812, %v11020
  %11022 = vmatmul.f32.gmra.mxu0 %v10606
  %v11023 = vpop.f32.mrf.mxu0
  %v11024 = vadd.f32 %v10815, %v11023
  %11025 = vmatmul.f32.gmra.mxu0 %v10609
  %v11026 = vpop.f32.mrf.mxu0
  %v11027 = vadd.f32 %v10818, %v11026
  %11028 = vmatmul.f32.gmra.mxu0 %v10612
  %v11029 = vpop.f32.mrf.mxu0
  %v11030 = vadd.f32 %v10821, %v11029
  %11031 = vmatmul.f32.gmra.mxu0 %v10615
  %v11032 = vpop.f32.mrf.mxu0
  %v11033 = vadd.f32 %v10824, %v11032
  %11034 = vmatmul.f32.gmra.mxu0 %v10618
  %v11035 = vpop.f32.mrf.mxu0
  %v11036 = vadd.f32 %v10827, %v11035
  %11037 = vmatmul.f32.gmra.mxu0 %v10621
  %v11038 = vpop.f32.mrf.mxu0
  %v11039 = vadd.f32 %v10830, %v11038
  %11040 = vmatmul.f32.gmra.mxu0 %v10624
  %v11041 = vpop.f32.mrf.mxu0
  %v11042 = vadd.f32 %v10833, %v11041
  %11043 = vmatmul.f32.gmra.mxu0 %v10627
  %v11044 = vpop.f32.mrf.mxu0
  %v11045 = vadd.f32 %v10836, %v11044
  %11046 = vmatmul.f32.gmra.mxu0 %v10630
  %v11047 = vpop.f32.mrf.mxu0
  %v11048 = vadd.f32 %v10839, %v11047
  %11049 = vmatmul.f32.gmra.mxu0 %v10633
  %v11050 = vpop.f32.mrf.mxu0
  %v11051 = vadd.f32 %v10842, %v11050
  %11052 = vmatmul.f32.gmra.mxu0 %v10636
  %v11053 = vpop.f32.mrf.mxu0
  %v11054 = vadd.f32 %v10845, %v11053
  %11055 = vmatmul.f32.gmra.mxu0 %v10639
  %v11056 = vpop.f32.mrf.mxu0
  %v11057 = vadd.f32 %v10848, %v11056
  %11058 = vmatmul.f32.gmra.mxu0 %v10642
  %v11059 = vpop.f32.mrf.mxu0
  %v11060 = vadd.f32 %v10851, %v11059
  %11061 = vdwg.mxu0
  %11062 = vst.msk [vmem:[%s7] sm:$0xff] %vm90, %v10871
  %11063 = vst.msk [vmem:[%s7 + $0x8] sm:$0xff] %vm90, %v10874
  %11064 = vst.msk [vmem:[%s7 + $0x10] sm:$0xff] %vm90, %v10877
  %11065 = vst.msk [vmem:[%s7 + $0x18] sm:$0xff] %vm90, %v10880
  %11066 = vst.msk [vmem:[%s7 + $0x20] sm:$0xff] %vm90, %v10883
  %11067 = vst.msk [vmem:[%s7 + $0x28] sm:$0xff] %vm90, %v10886
  %11068 = vst.msk [vmem:[%s7 + $0x30] sm:$0xff] %vm90, %v10889
  %11069 = vst.msk [vmem:[%s7 + $0x38] sm:$0xff] %vm90, %v10892
  %11070 = vst.msk [vmem:[%s7 + $0x40] sm:$0xff] %vm90, %v10895
  %11071 = vst.msk [vmem:[%s7 + $0x48] sm:$0xff] %vm90, %v10898
  %11072 = vst.msk [vmem:[%s7 + $0x50] sm:$0xff] %vm90, %v10901
  %11073 = vst.msk [vmem:[%s7 + $0x58] sm:$0xff] %vm90, %v10904
  %11074 = vst.msk [vmem:[%s7 + $0x60] sm:$0xff] %vm90, %v10907
  %11075 = vst.msk [vmem:[%s7 + $0x68] sm:$0xff] %vm90, %v10910
  %11076 = vst.msk [vmem:[%s7 + $0x70] sm:$0xff] %vm90, %v10913
  %11077 = vst.msk [vmem:[%s7 + $0x78] sm:$0xff] %vm90, %v10916
  %11078 = vst.msk [vmem:[%s7 + $0x80] sm:$0xff] %vm90, %v10919
  %11079 = vst.msk [vmem:[%s7 + $0x88] sm:$0xff] %vm90, %v10922
  %11080 = vst.msk [vmem:[%s7 + $0x90] sm:$0xff] %vm90, %v10925
  %11081 = vst.msk [vmem:[%s7 + $0x98] sm:$0xff] %vm90, %v10928
  %11082 = vst.msk [vmem:[%s7 + $0xa0] sm:$0xff] %vm90, %v10931
  %11083 = vst.msk [vmem:[%s7 + $0xa8] sm:$0xff] %vm90, %v10934
  %11084 = vst.msk [vmem:[%s7 + $0xb0] sm:$0xff] %vm90, %v10937
  %11085 = vst.msk [vmem:[%s7 + $0xb8] sm:$0xff] %vm90, %v10940
  %11086 = vst.msk [vmem:[%s7 + $0xc0] sm:$0xff] %vm90, %v10943
  %11087 = vst.msk [vmem:[%s7 + $0xc8] sm:$0xff] %vm90, %v10946
  %11088 = vst.msk [vmem:[%s7 + $0xd0] sm:$0xff] %vm90, %v10949
  %11089 = vst.msk [vmem:[%s7 + $0xd8] sm:$0xff] %vm90, %v10952
  %11090 = vst.msk [vmem:[%s7 + $0xe0] sm:$0xff] %vm90, %v10955
  %11091 = vst.msk [vmem:[%s7 + $0xe8] sm:$0xff] %vm90, %v10958
  %11092 = vst.msk [vmem:[%s7 + $0xf0] sm:$0xff] %vm90, %v10961
  %11093 = vst.msk [vmem:[%s7 + $0xf8] sm:$0xff] %vm90, %v10964
  %11094 = vst.msk [vmem:[%s7 + $0x100] sm:$0xff] %vm90, %v10967
  %11095 = vst.msk [vmem:[%s7 + $0x108] sm:$0xff] %vm90, %v10970
  %11096 = vst.msk [vmem:[%s7 + $0x110] sm:$0xff] %vm90, %v10973
  %11097 = vst.msk [vmem:[%s7 + $0x118] sm:$0xff] %vm90, %v10976
  %11098 = vst.msk [vmem:[%s7 + $0x120] sm:$0xff] %vm90, %v10979
  %11099 = vst.msk [vmem:[%s7 + $0x128] sm:$0xff] %vm90, %v10982
  %11100 = vst.msk [vmem:[%s7 + $0x130] sm:$0xff] %vm90, %v10985
  %11101 = vst.msk [vmem:[%s7 + $0x138] sm:$0xff] %vm90, %v10988
  %11102 = vst.msk [vmem:[%s7 + $0x140] sm:$0xff] %vm90, %v10991
  %11103 = vst.msk [vmem:[%s7 + $0x148] sm:$0xff] %vm90, %v10994
  %11104 = vst.msk [vmem:[%s7 + $0x150] sm:$0xff] %vm90, %v10997
  %11105 = vst.msk [vmem:[%s7 + $0x158] sm:$0xff] %vm90, %v11000
  %11106 = vst.msk [vmem:[%s7 + $0x160] sm:$0xff] %vm90, %v11003
  %11107 = vst.msk [vmem:[%s7 + $0x168] sm:$0xff] %vm90, %v11006
  %11108 = vst.msk [vmem:[%s7 + $0x170] sm:$0xff] %vm90, %v11009
  %11109 = vst.msk [vmem:[%s7 + $0x178] sm:$0xff] %vm90, %v11012
  %11110 = vst.msk [vmem:[%s7 + $0x180] sm:$0xff] %vm90, %v11015
  %11111 = vst.msk [vmem:[%s7 + $0x188] sm:$0xff] %vm90, %v11018
  %11112 = vst.msk [vmem:[%s7 + $0x190] sm:$0xff] %vm90, %v11021
  %11113 = vst.msk [vmem:[%s7 + $0x198] sm:$0xff] %vm90, %v11024
  %11114 = vst.msk [vmem:[%s7 + $0x1a0] sm:$0xff] %vm90, %v11027
  %11115 = vst.msk [vmem:[%s7 + $0x1a8] sm:$0xff] %vm90, %v11030
  %11116 = vst.msk [vmem:[%s7 + $0x1b0] sm:$0xff] %vm90, %v11033
  %11117 = vst.msk [vmem:[%s7 + $0x1b8] sm:$0xff] %vm90, %v11036
  %11118 = vst.msk [vmem:[%s7 + $0x1c0] sm:$0xff] %vm90, %v11039
  %11119 = vst.msk [vmem:[%s7 + $0x1c8] sm:$0xff] %vm90, %v11042
  %11120 = vst.msk [vmem:[%s7 + $0x1d0] sm:$0xff] %vm90, %v11045
  %11121 = vst.msk [vmem:[%s7 + $0x1d8] sm:$0xff] %vm90, %v11048
  %11122 = vst.msk [vmem:[%s7 + $0x1e0] sm:$0xff] %vm90, %v11051
  %11123 = vst.msk [vmem:[%s7 + $0x1e8] sm:$0xff] %vm90, %v11054
  %11124 = vst.msk [vmem:[%s7 + $0x1f0] sm:$0xff] %vm90, %v11057
  %11125 = vst.msk [vmem:[%s7 + $0x1f8] sm:$0xff] %vm90, %v11060
  // Predicated region
  $region30: #{bottleneck_pallas.1} parent=0 // pred_check
    _
  $region31: #{bottleneck_pallas.1} parent=0 // pred_check_branch
    %11127 = sbr.rel (0) target = $region33
  $region32: #{bottleneck_pallas.1} parent=0 // pred_region
    _
  $region33: #{bottleneck_pallas.1} parent=0 // pred_fallthru
    _
  // Predicated region
  $region34: #{bottleneck_pallas.1} parent=0 // pred_check
    _
  $region35: #{bottleneck_pallas.1} parent=0 // pred_check_branch
    %11129 = sbr.rel (0) target = $region37
  $region36: #{bottleneck_pallas.1} parent=0 // pred_region
    _
  $region37: #{bottleneck_pallas.1} parent=0 // pred_fallthru
    _

</llo_original>
